<compile_context>
chip_gen: v7x
topology: tpu7x:2x2x1
jax: 0.10.0
libtpu: 0.0.40
codegen_flags: <defaults>
</compile_context>

<pallas_src>
import jax
import jax.numpy as jnp
from jax.experimental import pallas as pl
from jax.experimental.pallas import tpu as pltpu

# Small synthetic sizes consistent with the module (real: 16 / 1024 / 5120).
IN_CHANNELS = 16
HIDDEN = 128          # multiple of 128 -> lane-aligned position slices
OUT_CHANNELS = 256


# --------------------------------------------------------------------------
# Pallas kernel: fused [concat -> 1x1x1 conv -> SiLU -> 1x1x1 conv -> SiLU ->
#                       1x1x1 conv -> (1,2,2)-stride-(1,2,2) patch embedding]
# --------------------------------------------------------------------------
def _camvid_kernel(x_ref, w1_ref, b1_ref, w2_ref, b2_ref, w3_ref, b3_ref,
                   wpe_ref, bpe_ref, o_ref, h_ref):
    n = pl.program_id(1)        # out-channel tile index (innermost)
    q = h_ref.shape[0]          # patches per row tile
    hidden = w2_ref.shape[0]

    # The pointwise MLP depends only on the row tile.  Compute it once per row
    # tile and cache it in VMEM scratch, reused for every out-channel tile.
    # NOTE: this relies on the out-channel axis being the innermost,
    # sequentially executed ("arbitrary") grid axis and the scratch being
    # per-core (true for megacore sharding of the row axis).
    @pl.when(n == 0)
    def _compute_mlp():
        # (4, q, 2C) -> (4q, 2C): leading-dim merge, layout-free (q % 8 == 0).
        x = x_ref[...].reshape(4 * q, x_ref.shape[2])
        h = jnp.dot(x, w1_ref[...],
                    preferred_element_type=jnp.float32) + b1_ref[...]
        h = h * jax.nn.sigmoid(h)                      # SiLU (f32 math)
        h = jnp.dot(h.astype(w2_ref.dtype), w2_ref[...],
                    preferred_element_type=jnp.float32) + b2_ref[...]
        h = h * jax.nn.sigmoid(h)                      # SiLU
        h = jnp.dot(h.astype(w3_ref.dtype), w3_ref[...],
                    preferred_element_type=jnp.float32) + b3_ref[...]
        h = h.astype(h_ref.dtype)
        # Relayout to position-major lanes for the single long-K patch-embed
        # matmul.  Slices are lane-aligned when hidden % 128 == 0 (true for
        # both the test size 128 and the real size 1024) -> unmasked stores.
        for p in range(4):
            h_ref[:, p * hidden:(p + 1) * hidden] = h[p * q:(p + 1) * q, :]

    # Patch embedding: ONE K = 4*hidden matmul against the position-major
    # weight slab for this out-channel tile (MXU-internal accumulation).
    acc = jnp.dot(h_ref[...], wpe_ref[...], preferred_element_type=jnp.float32)
    o_ref[...] = (acc + bpe_ref[...]).astype(o_ref.dtype)


# --------------------------------------------------------------------------
# Parameter construction (deterministic, matching PyTorch module shapes)
# --------------------------------------------------------------------------
def init_params(key, in_channels, hidden, out_ch, zero_patch_embed=True):
    """Conv weights in PyTorch layout (O, I, kD, kH, kW)."""
    keys = jax.random.split(key, 8)
    c2 = 2 * in_channels

    def u(k, shape, fan_in):
        bound = 1.0 / jnp.sqrt(jnp.float32(fan_in))
        return jax.random.uniform(k, shape, jnp.float32, -bound, bound)

    w1 = u(keys[0], (hidden, c2, 1, 1, 1), c2)
    b1 = u(keys[1], (hidden,), c2)
    w2 = u(keys[2], (hidden, hidden, 1, 1, 1), hidden)
    b2 = u(keys[3], (hidden,), hidden)
    w3 = u(keys[4], (hidden, hidden, 1, 1, 1), hidden)
    b3 = u(keys[5], (hidden,), hidden)
    if zero_patch_embed:  # nn.init.zeros_ in the module's __init__
        wpe = jnp.zeros((out_ch, hidden, 1, 2, 2), jnp.float32)
        bpe = jnp.zeros((out_ch,), jnp.float32)
    else:  # only used for a numerical self-test of the kernel path
        wpe = u(keys[6], (out_ch, hidden, 1, 2, 2), hidden * 4)
        bpe = u(keys[7], (out_ch,), hidden * 4)
    return (w1, b1, w2, b2, w3, b3, wpe, bpe)


def to_matmul_params(conv_params, dtype=jnp.float32):
    """PyTorch-layout conv weights -> the matmul layout the kernel uses.

    * Layer-1 weight keeps the [video | mask] channel split order but folds
      the mask affine (x*2-1): W1_mask' = 2*W1_mask, b1' = b1 - sum(W1_mask).
    * The patch-embedding weight is reshaped to position-major (4*hidden, O),
      row index = (kh*2 + kw)*hidden + c, matching the kernel's h scratch.
    * Matmul operands are cast to `dtype` (bf16 recommended on v6e/v7x);
      biases stay f32 (added after f32 MXU accumulation).
    """
    w1, b1, w2, b2, w3, b3, wpe, bpe = conv_params
    hidden = w1.shape[0]
    c2 = w1.shape[1]
    c = c2 // 2
    out_ch = wpe.shape[0]

    W1 = w1.reshape(hidden, c2).T                     # (2C, hidden)
    W1v, W1m = W1[:c], W1[c:]
    W1f = jnp.concatenate([W1v, 2.0 * W1m], axis=0).astype(dtype)
    b1f = (b1 - W1m.sum(axis=0)).reshape(1, -1).astype(jnp.float32)

    W2 = w2.reshape(hidden, hidden).T.astype(dtype)
    W3 = w3.reshape(hidden, hidden).T.astype(dtype)
    # (O, C, 1, kh, kw) -> (1, kh, kw, C, O) -> (4*C, O), position-major.
    Wpe = wpe.transpose(2, 3, 4, 1, 0).reshape(4 * hidden, out_ch).astype(dtype)
    return (W1f, b1f,
            W2, b2.reshape(1, -1).astype(jnp.float32),
            W3, b3.reshape(1, -1).astype(jnp.float32),
            Wpe, bpe.reshape(1, -1).astype(jnp.float32))


def _to_patch_layout(x):
    """(B, C, T, H, W) NCDHW -> (4, B*T*(H//2)*(W//2), C).

    Axis 0 is the (kh, kw) position inside each 2x2 spatial patch
    (p = kh*2 + kw); axis 1 is patch raster order (B, T, H//2, W//2).
    Reshape-transpose-reshape => exactly one XLA transpose.
    """
    B, C, T, H, W = x.shape
    x = x.reshape(B, C, T, H // 2, 2, W // 2, 2)
    x = x.transpose(4, 6, 0, 2, 3, 5, 1)            # (kh, kw, B, T, Hh, Wh, C)
    return x.reshape(4, B * T * (H // 2) * (W // 2), C)


# --------------------------------------------------------------------------
# Wrapper
# --------------------------------------------------------------------------
def camvid_encoder_pallas(video, mask, mm_params, *, patch_tile=1024,
                          out_tile=None, out_dtype=None, channels_last=False,
                          wpe_single_buffer=False):
    """video/mask: (B, C, T, H, W) pre-encoded latents (NCDHW, like PyTorch).

    out_tile=None -> patch-embedding weight fully VMEM-resident (v5e/v6e).
    On v7x (64 MiB VMEM) pass out_tile=512 to stream it in lane-dense tiles.
    """
    (W1, b1, W2, b2, W3, b3, Wpe, bpe) = mm_params
    compute_dtype = W2.dtype
    out_dtype = compute_dtype if out_dtype is None else out_dtype

    B, C, T, H, W = video.shape
    assert mask.shape == video.shape
    assert H % 2 == 0 and W % 2 == 0
    c2 = 2 * C
    hidden = W2.shape[0]
    out_ch = Wpe.shape[-1]
    assert W1.shape == (c2, hidden) and Wpe.shape == (4 * hidden, out_ch)

    # One host concat (inputs are tiny vs the output) + one transpose.
    # mask*2-1 is already folded into W1/b1 (to_matmul_params).
    x = jnp.concatenate([video, mask], axis=1)               # (B, 2C, T, H, W)
    xp = _to_patch_layout(x).astype(compute_dtype)           # (4, n_patches, 2C)
    n_patches = xp.shape[1]

    q = min(patch_tile, n_patches)                 # patches per row tile
    # TODO(synk): real video shapes where n_patches % patch_tile != 0 need a
    # padded / ragged last tile; not handled here.
    assert n_patches % q == 0 and q % 8 == 0
    tn = out_ch if out_tile is None else min(out_tile, out_ch)
    assert out_ch % tn == 0 and tn % 128 == 0
    n_row_tiles = n_patches // q
    n_out_tiles = out_ch // tn

    rows = 4 * n_patches
    flops = (2 * rows * (c2 + 2 * hidden) * hidden            # pointwise MLP
             + 2 * n_patches * (4 * hidden) * out_ch)         # patch embedding
    transcendentals = 2 * rows * hidden                       # two SiLU layers
    csize = jnp.dtype(compute_dtype).itemsize
    osize = jnp.dtype(out_dtype).itemsize
    wpe_reads = 1 if n_out_tiles == 1 else n_row_tiles        # HBM re-streams
    bytes_accessed = (xp.size * csize
                      + (W1.size + W2.size + W3.size) * csize
                      + (b1.size + b2.size + b3.size + bpe.size) * 4
                      + wpe_reads * Wpe.size * csize
                      + n_patches * out_ch * osize)

    # VMEM budget derived from the actual tile footprint (double-buffered
    # tiles + constant weights + the h scratch), clamped to a sane range.
    small_w = ((W1.size + W2.size + W3.size) * csize
               + (b1.size + b2.size + b3.size + bpe.size) * 4)
    wpe_bufs = 1 if (wpe_single_buffer and n_out_tiles == 1) else 2
    vmem_est = (2 * 4 * q * c2 * csize                        # input tiles
                + wpe_bufs * 4 * hidden * tn * csize          # Wpe tile(s)
                + 2 * q * tn * osize                          # output tiles
                + 2 * small_w                                 # constant weights
                + q * 4 * hidden * csize)                     # h scratch
    vmem_limit = int(min(100 * 2**20, max(32 * 2**20, 1.3 * vmem_est)))

    const = lambda i, n: (0, 0)
    wpe_kwargs = {}
    if wpe_single_buffer and n_out_tiles == 1:
        # Single-buffer the VMEM-resident Wpe (40 MiB bf16 at real sizes on
        # v5e/v6e); leave default pipelining when it is streamed (v7x).
        wpe_kwargs["pipeline_mode"] = pl.Buffered(1)

    out = pl.pallas_call(
        _camvid_kernel,
        out_shape=jax.ShapeDtypeStruct((n_patches, out_ch), out_dtype),
        grid=(n_row_tiles, n_out_tiles),
        in_specs=[
            pl.BlockSpec((4, q, c2), lambda i, n: (0, i, 0)),       # latent rows
            pl.BlockSpec((c2, hidden), const),                      # W1 (folded)
            pl.BlockSpec((1, hidden), const),                       # b1 (folded)
            pl.BlockSpec((hidden, hidden), const),                  # W2
            pl.BlockSpec((1, hidden), const),                       # b2
            pl.BlockSpec((hidden, hidden), const),                  # W3
            pl.BlockSpec((1, hidden), const),                       # b3
            pl.BlockSpec((4 * hidden, tn), lambda i, n: (0, n),     # Wpe tile
                         **wpe_kwargs),
            pl.BlockSpec((1, tn), lambda i, n: (0, n)),             # bpe tile
        ],
        out_specs=pl.BlockSpec((q, tn), lambda i, n: (i, n)),
        scratch_shapes=[pltpu.VMEM((q, 4 * hidden), compute_dtype)],  # MLP cache
        compiler_params=pltpu.CompilerParams(
            dimension_semantics=("parallel", "arbitrary"),
            vmem_limit_bytes=vmem_limit),
        cost_estimate=pl.CostEstimate(flops=int(flops),
                                      transcendentals=int(transcendentals),
                                      bytes_accessed=int(bytes_accessed)),
    )(xp, W1, b1, W2, b2, W3, b3, Wpe, bpe)

    out = out.reshape(B, T, H // 2, W // 2, out_ch)
    if channels_last:
        return out                         # (B, T, H/2, W/2, out): no transpose
    return out.transpose(0, 4, 1, 2, 3)    # PyTorch NCDHW (B, out, T, H/2, W/2)


# --------------------------------------------------------------------------
# Pure-JAX reference (lax conv, PyTorch NCDHW semantics)
# --------------------------------------------------------------------------
def camvid_encoder_ref(video, mask, conv_params):
    w1, b1, w2, b2, w3, b3, wpe, bpe = conv_params
    x = jnp.concatenate([video, mask * 2.0 - 1.0], axis=1)

    def conv(x, w, b, stride):
        y = jax.lax.conv_general_dilated(
            x, w, window_strides=stride, padding="VALID",
            dimension_numbers=("NCDHW", "OIDHW", "NCDHW"),
            precision=jax.lax.Precision.HIGHEST)
        return y + b.reshape(1, -1, 1, 1, 1)

    x = jax.nn.silu(conv(x, w1, b1, (1, 1, 1)))
    x = jax.nn.silu(conv(x, w2, b2, (1, 1, 1)))
    x = conv(x, w3, b3, (1, 1, 1))
    x = conv(x, wpe, bpe, (1, 2, 2))
    return x


if __name__ == "__main__":
    key = jax.random.PRNGKey(0)
    k_vid, k_msk, k_par = jax.random.split(key, 3)

    B, C, T, H, W = 2, IN_CHANNELS, 4, 16, 16
    video = jax.random.normal(k_vid, (B, C, T, H, W), jnp.float32)
    mask = jax.random.uniform(k_msk, (B, C, T, H, W), jnp.float32)

    # 1) Faithful init: latent_patch_embedding weight/bias zero-initialized,
    #    default (Wpe-resident, big row tile) configuration, f32.
    conv_params = init_params(k_par, C, HIDDEN, OUT_CHANNELS, zero_patch_embed=True)
    out = camvid_encoder_pallas(video, mask, to_matmul_params(conv_params))
    out = jax.block_until_ready(out)
    ref = camvid_encoder_ref(video, mask, conv_params)
    assert out.shape == (B, OUT_CHANNELS, T, H // 2, W // 2), out.shape
    assert jnp.allclose(out, ref, atol=1e-4, rtol=1e-4)

    # 2) Non-zero patch-embedding weights, f32, small tiles: exercises both
    #    grid axes, the streamed-Wpe path and h-scratch reuse across out tiles.
    test_params = init_params(k_par, C, HIDDEN, OUT_CHANNELS, zero_patch_embed=False)
    out2 = camvid_encoder_pallas(video, mask, to_matmul_params(test_params),
                                 patch_tile=64, out_tile=128)
    out2 = jax.block_until_ready(out2)
    ref2 = camvid_encoder_ref(video, mask, test_params)
    assert jnp.allclose(out2, ref2, atol=2e-2, rtol=2e-2)

    # 3) Performance configuration: bf16 matmul operands, bf16 channels-last
    #    output (skips the post-kernel NCDHW transpose), f32 MXU accumulation.
    out3 = camvid_encoder_pallas(video, mask,
                                 to_matmul_params(test_params, jnp.bfloat16),
                                 channels_last=True)
    out3 = jax.block_until_ready(out3)
    assert out3.dtype == jnp.bfloat16
    assert out3.shape == (B, T, H // 2, W // 2, OUT_CHANNELS)
    ref3 = ref2.transpose(0, 2, 3, 4, 1)
    assert jnp.allclose(out3.astype(jnp.float32), ref3, atol=1e-1, rtol=1e-1)

    print("KERNEL_OK")
</pallas_src>

<mosaic_0001>
module attributes {stable_mosaic.version = 11 : i64} {
  func.func @_camvid_kernel(%arg0: i32, %arg1: i32, %arg2: memref<4x512x32xf32, #tpu.memory_space<vmem>>, %arg3: memref<32x128xf32, #tpu.memory_space<vmem>>, %arg4: memref<1x128xf32, #tpu.memory_space<vmem>>, %arg5: memref<128x128xf32, #tpu.memory_space<vmem>>, %arg6: memref<1x128xf32, #tpu.memory_space<vmem>>, %arg7: memref<128x128xf32, #tpu.memory_space<vmem>>, %arg8: memref<1x128xf32, #tpu.memory_space<vmem>>, %arg9: memref<512x256xf32, #tpu.memory_space<vmem>>, %arg10: memref<1x256xf32, #tpu.memory_space<vmem>>, %arg11: memref<512x256xf32, #tpu.memory_space<vmem>>, %arg12: memref<512x512xf32, #tpu.memory_space<vmem>>) attributes {dimension_semantics = [#tpu.dimension_semantics<parallel>, #tpu.dimension_semantics<arbitrary>], iteration_bounds = array<i64: 1, 1>, scalar_prefetch = 0 : i64, scratch_operands = 1 : i64, tpu.core_type = #tpu.core_type<tc>, window_params = [{transform_indices = @transform_0, window_bounds = array<i64: 4, 512, 32>}, {pipeline_mode = #tpu.pipeline_mode<synchronous>, transform_indices = @transform_1, window_bounds = array<i64: 32, 128>}, {pipeline_mode = #tpu.pipeline_mode<synchronous>, transform_indices = @transform_2, window_bounds = array<i64: 1, 128>}, {pipeline_mode = #tpu.pipeline_mode<synchronous>, transform_indices = @transform_3, window_bounds = array<i64: 128, 128>}, {pipeline_mode = #tpu.pipeline_mode<synchronous>, transform_indices = @transform_4, window_bounds = array<i64: 1, 128>}, {pipeline_mode = #tpu.pipeline_mode<synchronous>, transform_indices = @transform_5, window_bounds = array<i64: 128, 128>}, {pipeline_mode = #tpu.pipeline_mode<synchronous>, transform_indices = @transform_6, window_bounds = array<i64: 1, 128>}, {transform_indices = @transform_7, window_bounds = array<i64: 512, 256>}, {transform_indices = @transform_8, window_bounds = array<i64: 1, 256>}, {transform_indices = @transform_9, window_bounds = array<i64: 512, 256>}]} {
    %c0_i32 = arith.constant 0 : i32
    %0 = arith.cmpi eq, %arg1, %c0_i32 : i32
    %1 = arith.extui %0 : i1 to i32
    %c0_i32_0 = arith.constant 0 : i32
    %2 = arith.cmpi ne, %1, %c0_i32_0 : i32
    scf.if %2 {
      %c0_8 = arith.constant 0 : index
      %c0_9 = arith.constant 0 : index
      %c0_10 = arith.constant 0 : index
      %10 = vector.load %arg2[%c0_8, %c0_9, %c0_10] : memref<4x512x32xf32, #tpu.memory_space<vmem>>, vector<4x512x32xf32>
      %11 = vector.shape_cast %10 : vector<4x512x32xf32> to vector<2048x32xf32>
      %c0_11 = arith.constant 0 : index
      %c0_12 = arith.constant 0 : index
      %12 = vector.load %arg3[%c0_11, %c0_12] : memref<32x128xf32, #tpu.memory_space<vmem>>, vector<32x128xf32>
      %cst_13 = arith.constant dense<0.000000e+00> : vector<2048x128xf32>
      %13 = tpu.matmul %11, %12, %cst_13 {dimension_numbers = #tpu.dot_dimension_numbers<[1], [0], [0], [1], [0, 0, 1, 1], [], []>} : vector<2048x32xf32>, vector<32x128xf32>, vector<2048x128xf32> -> vector<2048x128xf32>
      %c0_14 = arith.constant 0 : index
      %c0_15 = arith.constant 0 : index
      %14 = vector.load %arg4[%c0_14, %c0_15] : memref<1x128xf32, #tpu.memory_space<vmem>>, vector<1x128xf32>
      %15 = vector.broadcast %14 : vector<1x128xf32> to vector<2048x128xf32>
      %16 = arith.addf %13, %15 : vector<2048x128xf32>
      %17 = arith.negf %16 : vector<2048x128xf32>
      %18 = math.exp %17 : vector<2048x128xf32>
      %cst_16 = arith.constant 1.000000e+00 : f32
      %19 = vector.broadcast %cst_16 : f32 to vector<2048x128xf32>
      %20 = arith.addf %19, %18 : vector<2048x128xf32>
      %21 = arith.divf %19, %20 : vector<2048x128xf32>
      %22 = arith.mulf %16, %21 : vector<2048x128xf32>
      %c0_17 = arith.constant 0 : index
      %c0_18 = arith.constant 0 : index
      %23 = vector.load %arg5[%c0_17, %c0_18] : memref<128x128xf32, #tpu.memory_space<vmem>>, vector<128x128xf32>
      %cst_19 = arith.constant dense<0.000000e+00> : vector<2048x128xf32>
      %24 = tpu.matmul %22, %23, %cst_19 {dimension_numbers = #tpu.dot_dimension_numbers<[1], [0], [0], [1], [0, 0, 1, 1], [], []>} : vector<2048x128xf32>, vector<128x128xf32>, vector<2048x128xf32> -> vector<2048x128xf32>
      %c0_20 = arith.constant 0 : index
      %c0_21 = arith.constant 0 : index
      %25 = vector.load %arg6[%c0_20, %c0_21] : memref<1x128xf32, #tpu.memory_space<vmem>>, vector<1x128xf32>
      %26 = vector.broadcast %25 : vector<1x128xf32> to vector<2048x128xf32>
      %27 = arith.addf %24, %26 : vector<2048x128xf32>
      %28 = arith.negf %27 : vector<2048x128xf32>
      %29 = math.exp %28 : vector<2048x128xf32>
      %cst_22 = arith.constant 1.000000e+00 : f32
      %30 = vector.broadcast %cst_22 : f32 to vector<2048x128xf32>
      %31 = arith.addf %30, %29 : vector<2048x128xf32>
      %32 = arith.divf %30, %31 : vector<2048x128xf32>
      %33 = arith.mulf %27, %32 : vector<2048x128xf32>
      %c0_23 = arith.constant 0 : index
      %c0_24 = arith.constant 0 : index
      %34 = vector.load %arg7[%c0_23, %c0_24] : memref<128x128xf32, #tpu.memory_space<vmem>>, vector<128x128xf32>
      %cst_25 = arith.constant dense<0.000000e+00> : vector<2048x128xf32>
      %35 = tpu.matmul %33, %34, %cst_25 {dimension_numbers = #tpu.dot_dimension_numbers<[1], [0], [0], [1], [0, 0, 1, 1], [], []>} : vector<2048x128xf32>, vector<128x128xf32>, vector<2048x128xf32> -> vector<2048x128xf32>
      %c0_26 = arith.constant 0 : index
      %c0_27 = arith.constant 0 : index
      %36 = vector.load %arg8[%c0_26, %c0_27] : memref<1x128xf32, #tpu.memory_space<vmem>>, vector<1x128xf32>
      %37 = vector.broadcast %36 : vector<1x128xf32> to vector<2048x128xf32>
      %38 = arith.addf %35, %37 : vector<2048x128xf32>
      %39 = vector.extract_strided_slice %38 {offsets = [0, 0], sizes = [512, 128], strides = [1, 1]} : vector<2048x128xf32> to vector<512x128xf32>
      %c0_28 = arith.constant 0 : index
      %c0_29 = arith.constant 0 : index
      %40 = vector.load %arg12[%c0_28, %c0_29] : memref<512x512xf32, #tpu.memory_space<vmem>>, vector<512x128xf32>
      tpu.vector_store %arg12[%c0_28, %c0_29], %39 {strides = array<i32>} : memref<512x512xf32, #tpu.memory_space<vmem>>, vector<512x128xf32>,
      %41 = vector.extract_strided_slice %38 {offsets = [512, 0], sizes = [512, 128], strides = [1, 1]} : vector<2048x128xf32> to vector<512x128xf32>
      %c0_30 = arith.constant 0 : index
      %c128 = arith.constant 128 : index
      %42 = vector.load %arg12[%c0_30, %c128] : memref<512x512xf32, #tpu.memory_space<vmem>>, vector<512x128xf32>
      tpu.vector_store %arg12[%c0_30, %c128], %41 {strides = array<i32>} : memref<512x512xf32, #tpu.memory_space<vmem>>, vector<512x128xf32>,
      %43 = vector.extract_strided_slice %38 {offsets = [1024, 0], sizes = [512, 128], strides = [1, 1]} : vector<2048x128xf32> to vector<512x128xf32>
      %c0_31 = arith.constant 0 : index
      %c256 = arith.constant 256 : index
      %44 = vector.load %arg12[%c0_31, %c256] : memref<512x512xf32, #tpu.memory_space<vmem>>, vector<512x128xf32>
      tpu.vector_store %arg12[%c0_31, %c256], %43 {strides = array<i32>} : memref<512x512xf32, #tpu.memory_space<vmem>>, vector<512x128xf32>,
      %45 = vector.extract_strided_slice %38 {offsets = [1536, 0], sizes = [512, 128], strides = [1, 1]} : vector<2048x128xf32> to vector<512x128xf32>
      %c0_32 = arith.constant 0 : index
      %c384 = arith.constant 384 : index
      %46 = vector.load %arg12[%c0_32, %c384] : memref<512x512xf32, #tpu.memory_space<vmem>>, vector<512x128xf32>
      tpu.vector_store %arg12[%c0_32, %c384], %45 {strides = array<i32>} : memref<512x512xf32, #tpu.memory_space<vmem>>, vector<512x128xf32>,
    } else {
    }
    %c0 = arith.constant 0 : index
    %c0_1 = arith.constant 0 : index
    %3 = vector.load %arg12[%c0, %c0_1] : memref<512x512xf32, #tpu.memory_space<vmem>>, vector<512x512xf32>
    %c0_2 = arith.constant 0 : index
    %c0_3 = arith.constant 0 : index
    %4 = vector.load %arg9[%c0_2, %c0_3] : memref<512x256xf32, #tpu.memory_space<vmem>>, vector<512x256xf32>
    %cst = arith.constant dense<0.000000e+00> : vector<512x256xf32>
    %5 = tpu.matmul %3, %4, %cst {dimension_numbers = #tpu.dot_dimension_numbers<[1], [0], [0], [1], [0, 0, 1, 1], [], []>} : vector<512x512xf32>, vector<512x256xf32>, vector<512x256xf32> -> vector<512x256xf32>
    %c0_4 = arith.constant 0 : index
    %c0_5 = arith.constant 0 : index
    %6 = vector.load %arg10[%c0_4, %c0_5] : memref<1x256xf32, #tpu.memory_space<vmem>>, vector<1x256xf32>
    %7 = vector.broadcast %6 : vector<1x256xf32> to vector<512x256xf32>
    %8 = arith.addf %5, %7 : vector<512x256xf32>
    %c0_6 = arith.constant 0 : index
    %c0_7 = arith.constant 0 : index
    %9 = vector.load %arg11[%c0_6, %c0_7] : memref<512x256xf32, #tpu.memory_space<vmem>>, vector<512x256xf32>
    tpu.vector_store %arg11[%c0_6, %c0_7], %8 {strides = array<i32>} : memref<512x256xf32, #tpu.memory_space<vmem>>, vector<512x256xf32>,
    return
  }
  func.func @transform_0(%arg0: i32, %arg1: i32) -> (i32, i32, i32) {
    %c0_i32 = arith.constant 0 : i32
    %c0_i32_0 = arith.constant 0 : i32
    %c0_i32_1 = arith.constant 0 : i32
    return %c0_i32, %arg0, %c0_i32_0 : i32, i32, i32
  }
  func.func @transform_1(%arg0: i32, %arg1: i32) -> (i32, i32) {
    %c0_i32 = arith.constant 0 : i32
    %c0_i32_0 = arith.constant 0 : i32
    %c0_i32_1 = arith.constant 0 : i32
    return %c0_i32, %c0_i32_0 : i32, i32
  }
  func.func @transform_2(%arg0: i32, %arg1: i32) -> (i32, i32) {
    %c0_i32 = arith.constant 0 : i32
    %c0_i32_0 = arith.constant 0 : i32
    %c0_i32_1 = arith.constant 0 : i32
    return %c0_i32, %c0_i32_0 : i32, i32
  }
  func.func @transform_3(%arg0: i32, %arg1: i32) -> (i32, i32) {
    %c0_i32 = arith.constant 0 : i32
    %c0_i32_0 = arith.constant 0 : i32
    %c0_i32_1 = arith.constant 0 : i32
    return %c0_i32, %c0_i32_0 : i32, i32
  }
  func.func @transform_4(%arg0: i32, %arg1: i32) -> (i32, i32) {
    %c0_i32 = arith.constant 0 : i32
    %c0_i32_0 = arith.constant 0 : i32
    %c0_i32_1 = arith.constant 0 : i32
    return %c0_i32, %c0_i32_0 : i32, i32
  }
  func.func @transform_5(%arg0: i32, %arg1: i32) -> (i32, i32) {
    %c0_i32 = arith.constant 0 : i32
    %c0_i32_0 = arith.constant 0 : i32
    %c0_i32_1 = arith.constant 0 : i32
    return %c0_i32, %c0_i32_0 : i32, i32
  }
  func.func @transform_6(%arg0: i32, %arg1: i32) -> (i32, i32) {
    %c0_i32 = arith.constant 0 : i32
    %c0_i32_0 = arith.constant 0 : i32
    %c0_i32_1 = arith.constant 0 : i32
    return %c0_i32, %c0_i32_0 : i32, i32
  }
  func.func @transform_7(%arg0: i32, %arg1: i32) -> (i32, i32) {
    %c0_i32 = arith.constant 0 : i32
    %c0_i32_0 = arith.constant 0 : i32
    return %c0_i32, %arg1 : i32, i32
  }
  func.func @transform_8(%arg0: i32, %arg1: i32) -> (i32, i32) {
    %c0_i32 = arith.constant 0 : i32
    %c0_i32_0 = arith.constant 0 : i32
    return %c0_i32, %arg1 : i32, i32
  }
  func.func @transform_9(%arg0: i32, %arg1: i32) -> (i32, i32) {
    %c0_i32 = arith.constant 0 : i32
    return %arg0, %arg1 : i32, i32
  }
}

</mosaic_0001>

<llo_original>
// kernel: tpu_custom_call.1
$region0: #{tpu_custom_call.1}
  #allocation0 [shape = 'u32[]', space=smem, size = 0x4, offset = 0x4, fixed_abs, tag = 'smem constant byte address 0x4 - core index']
  #allocation1 [shape = 'u32[144,128]{1,0:T(1,128)}', space=vmem, size = 0x12000, scoped, tag = 'internal scratch']
  #allocation2 [shape = 'f32[512,512]{1,0:T(8,128)}', space=vmem, size = 0x100000, scoped, tag = 'scratch operand']
  %s0 = inlined_call_operand.vmem [shape: f32[4,512,32], index: 0, kind: input, shape index: {}]
  %s1 = inlined_call_operand.vmem [shape: f32[32,128], index: 1, kind: input, shape index: {}]
  %s2 = inlined_call_operand.vmem [shape: f32[1,128], index: 2, kind: input, shape index: {}]
  %s3 = inlined_call_operand.vmem [shape: f32[128,128], index: 3, kind: input, shape index: {}]
  %s4 = inlined_call_operand.vmem [shape: f32[1,128], index: 4, kind: input, shape index: {}]
  %s5 = inlined_call_operand.vmem [shape: f32[128,128], index: 5, kind: input, shape index: {}]
  %s6 = inlined_call_operand.vmem [shape: f32[1,128], index: 6, kind: input, shape index: {}]
  %s7 = inlined_call_operand.vmem [shape: f32[512,256], index: 7, kind: input, shape index: {}]
  %s8 = inlined_call_operand.vmem [shape: f32[1,256], index: 8, kind: input, shape index: {}]
  %s9 = inlined_call_operand.hbm [shape: f32[512,256], index: 9, kind: output, shape index: {}]
  %s10 = sld [smem:[#allocation0]]
  $region50: #{tpu_custom_call.1} parent=0
    _
  %s12 = ssub.s32 1, %s10
  %s13 = scalar_select 0, %s12, %s10
  $region1: #{tpu_custom_call.1} parent=0
    #allocation3 [shape = 'u8[524288]{0}', space=vmem, size = 0x80000, scoped, tag = 'output window, operand 0, single buffered']
    #allocation4 [shape = 's32[1]{0}', space=sflag, size = 0x4, scoped, tag = 'scoped memory for tpu_custom_call.1']
    %14 = vsyncpa [#allocation4], 0
    // Predicated region
    $region2: #{tpu_custom_call.1} parent=1 // pred_check
      _
    $region3: #{tpu_custom_call.1} parent=1 // pred_check_branch
      %16 = sbr.rel (0) target = $region5
    $region4: #{tpu_custom_call.1} parent=1 // pred_region
      _
    $region5: #{tpu_custom_call.1} parent=1 // pred_fallthru
      _
    // Predicated region
    $region6: #{tpu_custom_call.1} parent=1 // pred_check
      _
    $region7: #{tpu_custom_call.1} parent=1 // pred_check_branch
      %18 = sbr.rel (0) target = $region9
    $region8: #{tpu_custom_call.1} parent=1 // pred_region
      _
    $region9: #{tpu_custom_call.1} parent=1 // pred_fallthru
      _
    // Predicated region
    $region10: #{tpu_custom_call.1} parent=1 // pred_check
      _
    $region11: #{tpu_custom_call.1} parent=1 // pred_check_branch
      %20 = sbr.rel (0) target = $region13
    $region12: #{tpu_custom_call.1} parent=1 // pred_region
      _
    $region13: #{tpu_custom_call.1} parent=1 // pred_fallthru
      _
    // Predicated region
    $region14: #{tpu_custom_call.1} parent=1 // pred_check
      _
    $region15: #{tpu_custom_call.1} parent=1 // pred_check_branch
      %22 = sbr.rel (0) target = $region17
    $region16: #{tpu_custom_call.1} parent=1 // pred_region
      _
    $region17: #{tpu_custom_call.1} parent=1 // pred_fallthru
      _
    // Predicated region
    $region18: #{tpu_custom_call.1} parent=1 // pred_check
      _
    $region19: #{tpu_custom_call.1} parent=1 // pred_check_branch
      %24 = sbr.rel (0) target = $region21
    $region20: #{tpu_custom_call.1} parent=1 // pred_region
      _
    $region21: #{tpu_custom_call.1} parent=1 // pred_fallthru
      _
    // Predicated region
    $region22: #{tpu_custom_call.1} parent=1 // pred_check
      _
    $region23: #{tpu_custom_call.1} parent=1 // pred_check_branch
      %26 = sbr.rel (0) target = $region25
    $region24: #{tpu_custom_call.1} parent=1 // pred_region
      _
    $region25: #{tpu_custom_call.1} parent=1 // pred_fallthru
      _
    // Predicated region
    $region26: #{tpu_custom_call.1} parent=1 // pred_check
      _
    $region27: #{tpu_custom_call.1} parent=1 // pred_check_branch
      %28 = sbr.rel (0) target = $region29
    $region28: #{tpu_custom_call.1} parent=1 // pred_region
      _
    $region29: #{tpu_custom_call.1} parent=1 // pred_fallthru
      _
    // Predicated region
    $region30: #{tpu_custom_call.1} parent=1 // pred_check
      _
    $region31: #{tpu_custom_call.1} parent=1 // pred_check_branch
      %30 = sbr.rel (0) target = $region33
    $region32: #{tpu_custom_call.1} parent=1 // pred_region
      _
    $region33: #{tpu_custom_call.1} parent=1 // pred_fallthru
      _
    // Predicated region
    $region34: #{tpu_custom_call.1} parent=1 // pred_check
      _
    $region35: #{tpu_custom_call.1} parent=1 // pred_check_branch
      %32 = sbr.rel (0) target = $region37
    $region36: #{tpu_custom_call.1} parent=1 // pred_region
      _
    $region37: #{tpu_custom_call.1} parent=1 // pred_fallthru
      _
    %p33 = scmp.eq.s32.totalorder 0, 0
    // Predicated region
    $region38: #{tpu_custom_call.1} parent=1 // pred_check
      %p34 = pneg %p33
    $region39: #{tpu_custom_call.1} parent=1 // pred_check_branch
      %36 = sbr.rel (%p34) target = $region41
    $region40: #{tpu_custom_call.1} parent=1 // pred_region
      %v37 = vld [vmem:[%s0] sm:$0xff]
      %v38 = vld [vmem:[%s0 + $0x8] sm:$0xff]
      %v39 = vld [vmem:[%s0 + $0x10] sm:$0xff]
      %v40 = vld [vmem:[%s0 + $0x18] sm:$0xff]
      %v41 = vld [vmem:[%s0 + $0x20] sm:$0xff]
      %v42 = vld [vmem:[%s0 + $0x28] sm:$0xff]
      %v43 = vld [vmem:[%s0 + $0x30] sm:$0xff]
      %v44 = vld [vmem:[%s0 + $0x38] sm:$0xff]
      %v45 = vld [vmem:[%s0 + $0x40] sm:$0xff]
      %v46 = vld [vmem:[%s0 + $0x48] sm:$0xff]
      %v47 = vld [vmem:[%s0 + $0x50] sm:$0xff]
      %v48 = vld [vmem:[%s0 + $0x58] sm:$0xff]
      %v49 = vld [vmem:[%s0 + $0x60] sm:$0xff]
      %v50 = vld [vmem:[%s0 + $0x68] sm:$0xff]
      %v51 = vld [vmem:[%s0 + $0x70] sm:$0xff]
      %v52 = vld [vmem:[%s0 + $0x78] sm:$0xff]
      %v53 = vld [vmem:[%s0 + $0x80] sm:$0xff]
      %v54 = vld [vmem:[%s0 + $0x88] sm:$0xff]
      %v55 = vld [vmem:[%s0 + $0x90] sm:$0xff]
      %v56 = vld [vmem:[%s0 + $0x98] sm:$0xff]
      %v57 = vld [vmem:[%s0 + $0xa0] sm:$0xff]
      %v58 = vld [vmem:[%s0 + $0xa8] sm:$0xff]
      %v59 = vld [vmem:[%s0 + $0xb0] sm:$0xff]
      %v60 = vld [vmem:[%s0 + $0xb8] sm:$0xff]
      %v61 = vld [vmem:[%s0 + $0xc0] sm:$0xff]
      %v62 = vld [vmem:[%s0 + $0xc8] sm:$0xff]
      %v63 = vld [vmem:[%s0 + $0xd0] sm:$0xff]
      %v64 = vld [vmem:[%s0 + $0xd8] sm:$0xff]
      %v65 = vld [vmem:[%s0 + $0xe0] sm:$0xff]
      %v66 = vld [vmem:[%s0 + $0xe8] sm:$0xff]
      %v67 = vld [vmem:[%s0 + $0xf0] sm:$0xff]
      %v68 = vld [vmem:[%s0 + $0xf8] sm:$0xff]
      %v69 = vld [vmem:[%s0 + $0x100] sm:$0xff]
      %v70 = vld [vmem:[%s0 + $0x108] sm:$0xff]
      %v71 = vld [vmem:[%s0 + $0x110] sm:$0xff]
      %v72 = vld [vmem:[%s0 + $0x118] sm:$0xff]
      %v73 = vld [vmem:[%s0 + $0x120] sm:$0xff]
      %v74 = vld [vmem:[%s0 + $0x128] sm:$0xff]
      %v75 = vld [vmem:[%s0 + $0x130] sm:$0xff]
      %v76 = vld [vmem:[%s0 + $0x138] sm:$0xff]
      %v77 = vld [vmem:[%s0 + $0x140] sm:$0xff]
      %v78 = vld [vmem:[%s0 + $0x148] sm:$0xff]
      %v79 = vld [vmem:[%s0 + $0x150] sm:$0xff]
      %v80 = vld [vmem:[%s0 + $0x158] sm:$0xff]
      %v81 = vld [vmem:[%s0 + $0x160] sm:$0xff]
      %v82 = vld [vmem:[%s0 + $0x168] sm:$0xff]
      %v83 = vld [vmem:[%s0 + $0x170] sm:$0xff]
      %v84 = vld [vmem:[%s0 + $0x178] sm:$0xff]
      %v85 = vld [vmem:[%s0 + $0x180] sm:$0xff]
      %v86 = vld [vmem:[%s0 + $0x188] sm:$0xff]
      %v87 = vld [vmem:[%s0 + $0x190] sm:$0xff]
      %v88 = vld [vmem:[%s0 + $0x198] sm:$0xff]
      %v89 = vld [vmem:[%s0 + $0x1a0] sm:$0xff]
      %v90 = vld [vmem:[%s0 + $0x1a8] sm:$0xff]
      %v91 = vld [vmem:[%s0 + $0x1b0] sm:$0xff]
      %v92 = vld [vmem:[%s0 + $0x1b8] sm:$0xff]
      %v93 = vld [vmem:[%s0 + $0x1c0] sm:$0xff]
      %v94 = vld [vmem:[%s0 + $0x1c8] sm:$0xff]
      %v95 = vld [vmem:[%s0 + $0x1d0] sm:$0xff]
      %v96 = vld [vmem:[%s0 + $0x1d8] sm:$0xff]
      %v97 = vld [vmem:[%s0 + $0x1e0] sm:$0xff]
      %v98 = vld [vmem:[%s0 + $0x1e8] sm:$0xff]
      %v99 = vld [vmem:[%s0 + $0x1f0] sm:$0xff]
      %v100 = vld [vmem:[%s0 + $0x1f8] sm:$0xff]
      %v101 = vld [vmem:[%s0 + $0x200] sm:$0xff]
      %v102 = vld [vmem:[%s0 + $0x208] sm:$0xff]
      %v103 = vld [vmem:[%s0 + $0x210] sm:$0xff]
      %v104 = vld [vmem:[%s0 + $0x218] sm:$0xff]
      %v105 = vld [vmem:[%s0 + $0x220] sm:$0xff]
      %v106 = vld [vmem:[%s0 + $0x228] sm:$0xff]
      %v107 = vld [vmem:[%s0 + $0x230] sm:$0xff]
      %v108 = vld [vmem:[%s0 + $0x238] sm:$0xff]
      %v109 = vld [vmem:[%s0 + $0x240] sm:$0xff]
      %v110 = vld [vmem:[%s0 + $0x248] sm:$0xff]
      %v111 = vld [vmem:[%s0 + $0x250] sm:$0xff]
      %v112 = vld [vmem:[%s0 + $0x258] sm:$0xff]
      %v113 = vld [vmem:[%s0 + $0x260] sm:$0xff]
      %v114 = vld [vmem:[%s0 + $0x268] sm:$0xff]
      %v115 = vld [vmem:[%s0 + $0x270] sm:$0xff]
      %v116 = vld [vmem:[%s0 + $0x278] sm:$0xff]
      %v117 = vld [vmem:[%s0 + $0x280] sm:$0xff]
      %v118 = vld [vmem:[%s0 + $0x288] sm:$0xff]
      %v119 = vld [vmem:[%s0 + $0x290] sm:$0xff]
      %v120 = vld [vmem:[%s0 + $0x298] sm:$0xff]
      %v121 = vld [vmem:[%s0 + $0x2a0] sm:$0xff]
      %v122 = vld [vmem:[%s0 + $0x2a8] sm:$0xff]
      %v123 = vld [vmem:[%s0 + $0x2b0] sm:$0xff]
      %v124 = vld [vmem:[%s0 + $0x2b8] sm:$0xff]
      %v125 = vld [vmem:[%s0 + $0x2c0] sm:$0xff]
      %v126 = vld [vmem:[%s0 + $0x2c8] sm:$0xff]
      %v127 = vld [vmem:[%s0 + $0x2d0] sm:$0xff]
      %v128 = vld [vmem:[%s0 + $0x2d8] sm:$0xff]
      %v129 = vld [vmem:[%s0 + $0x2e0] sm:$0xff]
      %v130 = vld [vmem:[%s0 + $0x2e8] sm:$0xff]
      %v131 = vld [vmem:[%s0 + $0x2f0] sm:$0xff]
      %v132 = vld [vmem:[%s0 + $0x2f8] sm:$0xff]
      %v133 = vld [vmem:[%s0 + $0x300] sm:$0xff]
      %v134 = vld [vmem:[%s0 + $0x308] sm:$0xff]
      %v135 = vld [vmem:[%s0 + $0x310] sm:$0xff]
      %v136 = vld [vmem:[%s0 + $0x318] sm:$0xff]
      %v137 = vld [vmem:[%s0 + $0x320] sm:$0xff]
      %v138 = vld [vmem:[%s0 + $0x328] sm:$0xff]
      %v139 = vld [vmem:[%s0 + $0x330] sm:$0xff]
      %v140 = vld [vmem:[%s0 + $0x338] sm:$0xff]
      %v141 = vld [vmem:[%s0 + $0x340] sm:$0xff]
      %v142 = vld [vmem:[%s0 + $0x348] sm:$0xff]
      %v143 = vld [vmem:[%s0 + $0x350] sm:$0xff]
      %v144 = vld [vmem:[%s0 + $0x358] sm:$0xff]
      %v145 = vld [vmem:[%s0 + $0x360] sm:$0xff]
      %v146 = vld [vmem:[%s0 + $0x368] sm:$0xff]
      %v147 = vld [vmem:[%s0 + $0x370] sm:$0xff]
      %v148 = vld [vmem:[%s0 + $0x378] sm:$0xff]
      %v149 = vld [vmem:[%s0 + $0x380] sm:$0xff]
      %v150 = vld [vmem:[%s0 + $0x388] sm:$0xff]
      %v151 = vld [vmem:[%s0 + $0x390] sm:$0xff]
      %v152 = vld [vmem:[%s0 + $0x398] sm:$0xff]
      %v153 = vld [vmem:[%s0 + $0x3a0] sm:$0xff]
      %v154 = vld [vmem:[%s0 + $0x3a8] sm:$0xff]
      %v155 = vld [vmem:[%s0 + $0x3b0] sm:$0xff]
      %v156 = vld [vmem:[%s0 + $0x3b8] sm:$0xff]
      %v157 = vld [vmem:[%s0 + $0x3c0] sm:$0xff]
      %v158 = vld [vmem:[%s0 + $0x3c8] sm:$0xff]
      %v159 = vld [vmem:[%s0 + $0x3d0] sm:$0xff]
      %v160 = vld [vmem:[%s0 + $0x3d8] sm:$0xff]
      %v161 = vld [vmem:[%s0 + $0x3e0] sm:$0xff]
      %v162 = vld [vmem:[%s0 + $0x3e8] sm:$0xff]
      %v163 = vld [vmem:[%s0 + $0x3f0] sm:$0xff]
      %v164 = vld [vmem:[%s0 + $0x3f8] sm:$0xff]
      %v165 = vld [vmem:[%s0 + $0x400] sm:$0xff]
      %v166 = vld [vmem:[%s0 + $0x408] sm:$0xff]
      %v167 = vld [vmem:[%s0 + $0x410] sm:$0xff]
      %v168 = vld [vmem:[%s0 + $0x418] sm:$0xff]
      %v169 = vld [vmem:[%s0 + $0x420] sm:$0xff]
      %v170 = vld [vmem:[%s0 + $0x428] sm:$0xff]
      %v171 = vld [vmem:[%s0 + $0x430] sm:$0xff]
      %v172 = vld [vmem:[%s0 + $0x438] sm:$0xff]
      %v173 = vld [vmem:[%s0 + $0x440] sm:$0xff]
      %v174 = vld [vmem:[%s0 + $0x448] sm:$0xff]
      %v175 = vld [vmem:[%s0 + $0x450] sm:$0xff]
      %v176 = vld [vmem:[%s0 + $0x458] sm:$0xff]
      %v177 = vld [vmem:[%s0 + $0x460] sm:$0xff]
      %v178 = vld [vmem:[%s0 + $0x468] sm:$0xff]
      %v179 = vld [vmem:[%s0 + $0x470] sm:$0xff]
      %v180 = vld [vmem:[%s0 + $0x478] sm:$0xff]
      %v181 = vld [vmem:[%s0 + $0x480] sm:$0xff]
      %v182 = vld [vmem:[%s0 + $0x488] sm:$0xff]
      %v183 = vld [vmem:[%s0 + $0x490] sm:$0xff]
      %v184 = vld [vmem:[%s0 + $0x498] sm:$0xff]
      %v185 = vld [vmem:[%s0 + $0x4a0] sm:$0xff]
      %v186 = vld [vmem:[%s0 + $0x4a8] sm:$0xff]
      %v187 = vld [vmem:[%s0 + $0x4b0] sm:$0xff]
      %v188 = vld [vmem:[%s0 + $0x4b8] sm:$0xff]
      %v189 = vld [vmem:[%s0 + $0x4c0] sm:$0xff]
      %v190 = vld [vmem:[%s0 + $0x4c8] sm:$0xff]
      %v191 = vld [vmem:[%s0 + $0x4d0] sm:$0xff]
      %v192 = vld [vmem:[%s0 + $0x4d8] sm:$0xff]
      %v193 = vld [vmem:[%s0 + $0x4e0] sm:$0xff]
      %v194 = vld [vmem:[%s0 + $0x4e8] sm:$0xff]
      %v195 = vld [vmem:[%s0 + $0x4f0] sm:$0xff]
      %v196 = vld [vmem:[%s0 + $0x4f8] sm:$0xff]
      %v197 = vld [vmem:[%s0 + $0x500] sm:$0xff]
      %v198 = vld [vmem:[%s0 + $0x508] sm:$0xff]
      %v199 = vld [vmem:[%s0 + $0x510] sm:$0xff]
      %v200 = vld [vmem:[%s0 + $0x518] sm:$0xff]
      %v201 = vld [vmem:[%s0 + $0x520] sm:$0xff]
      %v202 = vld [vmem:[%s0 + $0x528] sm:$0xff]
      %v203 = vld [vmem:[%s0 + $0x530] sm:$0xff]
      %v204 = vld [vmem:[%s0 + $0x538] sm:$0xff]
      %v205 = vld [vmem:[%s0 + $0x540] sm:$0xff]
      %v206 = vld [vmem:[%s0 + $0x548] sm:$0xff]
      %v207 = vld [vmem:[%s0 + $0x550] sm:$0xff]
      %v208 = vld [vmem:[%s0 + $0x558] sm:$0xff]
      %v209 = vld [vmem:[%s0 + $0x560] sm:$0xff]
      %v210 = vld [vmem:[%s0 + $0x568] sm:$0xff]
      %v211 = vld [vmem:[%s0 + $0x570] sm:$0xff]
      %v212 = vld [vmem:[%s0 + $0x578] sm:$0xff]
      %v213 = vld [vmem:[%s0 + $0x580] sm:$0xff]
      %v214 = vld [vmem:[%s0 + $0x588] sm:$0xff]
      %v215 = vld [vmem:[%s0 + $0x590] sm:$0xff]
      %v216 = vld [vmem:[%s0 + $0x598] sm:$0xff]
      %v217 = vld [vmem:[%s0 + $0x5a0] sm:$0xff]
      %v218 = vld [vmem:[%s0 + $0x5a8] sm:$0xff]
      %v219 = vld [vmem:[%s0 + $0x5b0] sm:$0xff]
      %v220 = vld [vmem:[%s0 + $0x5b8] sm:$0xff]
      %v221 = vld [vmem:[%s0 + $0x5c0] sm:$0xff]
      %v222 = vld [vmem:[%s0 + $0x5c8] sm:$0xff]
      %v223 = vld [vmem:[%s0 + $0x5d0] sm:$0xff]
      %v224 = vld [vmem:[%s0 + $0x5d8] sm:$0xff]
      %v225 = vld [vmem:[%s0 + $0x5e0] sm:$0xff]
      %v226 = vld [vmem:[%s0 + $0x5e8] sm:$0xff]
      %v227 = vld [vmem:[%s0 + $0x5f0] sm:$0xff]
      %v228 = vld [vmem:[%s0 + $0x5f8] sm:$0xff]
      %v229 = vld [vmem:[%s0 + $0x600] sm:$0xff]
      %v230 = vld [vmem:[%s0 + $0x608] sm:$0xff]
      %v231 = vld [vmem:[%s0 + $0x610] sm:$0xff]
      %v232 = vld [vmem:[%s0 + $0x618] sm:$0xff]
      %v233 = vld [vmem:[%s0 + $0x620] sm:$0xff]
      %v234 = vld [vmem:[%s0 + $0x628] sm:$0xff]
      %v235 = vld [vmem:[%s0 + $0x630] sm:$0xff]
      %v236 = vld [vmem:[%s0 + $0x638] sm:$0xff]
      %v237 = vld [vmem:[%s0 + $0x640] sm:$0xff]
      %v238 = vld [vmem:[%s0 + $0x648] sm:$0xff]
      %v239 = vld [vmem:[%s0 + $0x650] sm:$0xff]
      %v240 = vld [vmem:[%s0 + $0x658] sm:$0xff]
      %v241 = vld [vmem:[%s0 + $0x660] sm:$0xff]
      %v242 = vld [vmem:[%s0 + $0x668] sm:$0xff]
      %v243 = vld [vmem:[%s0 + $0x670] sm:$0xff]
      %v244 = vld [vmem:[%s0 + $0x678] sm:$0xff]
      %v245 = vld [vmem:[%s0 + $0x680] sm:$0xff]
      %v246 = vld [vmem:[%s0 + $0x688] sm:$0xff]
      %v247 = vld [vmem:[%s0 + $0x690] sm:$0xff]
      %v248 = vld [vmem:[%s0 + $0x698] sm:$0xff]
      %v249 = vld [vmem:[%s0 + $0x6a0] sm:$0xff]
      %v250 = vld [vmem:[%s0 + $0x6a8] sm:$0xff]
      %v251 = vld [vmem:[%s0 + $0x6b0] sm:$0xff]
      %v252 = vld [vmem:[%s0 + $0x6b8] sm:$0xff]
      %v253 = vld [vmem:[%s0 + $0x6c0] sm:$0xff]
      %v254 = vld [vmem:[%s0 + $0x6c8] sm:$0xff]
      %v255 = vld [vmem:[%s0 + $0x6d0] sm:$0xff]
      %v256 = vld [vmem:[%s0 + $0x6d8] sm:$0xff]
      %v257 = vld [vmem:[%s0 + $0x6e0] sm:$0xff]
      %v258 = vld [vmem:[%s0 + $0x6e8] sm:$0xff]
      %v259 = vld [vmem:[%s0 + $0x6f0] sm:$0xff]
      %v260 = vld [vmem:[%s0 + $0x6f8] sm:$0xff]
      %v261 = vld [vmem:[%s0 + $0x700] sm:$0xff]
      %v262 = vld [vmem:[%s0 + $0x708] sm:$0xff]
      %v263 = vld [vmem:[%s0 + $0x710] sm:$0xff]
      %v264 = vld [vmem:[%s0 + $0x718] sm:$0xff]
      %v265 = vld [vmem:[%s0 + $0x720] sm:$0xff]
      %v266 = vld [vmem:[%s0 + $0x728] sm:$0xff]
      %v267 = vld [vmem:[%s0 + $0x730] sm:$0xff]
      %v268 = vld [vmem:[%s0 + $0x738] sm:$0xff]
      %v269 = vld [vmem:[%s0 + $0x740] sm:$0xff]
      %v270 = vld [vmem:[%s0 + $0x748] sm:$0xff]
      %v271 = vld [vmem:[%s0 + $0x750] sm:$0xff]
      %v272 = vld [vmem:[%s0 + $0x758] sm:$0xff]
      %v273 = vld [vmem:[%s0 + $0x760] sm:$0xff]
      %v274 = vld [vmem:[%s0 + $0x768] sm:$0xff]
      %v275 = vld [vmem:[%s0 + $0x770] sm:$0xff]
      %v276 = vld [vmem:[%s0 + $0x778] sm:$0xff]
      %v277 = vld [vmem:[%s0 + $0x780] sm:$0xff]
      %v278 = vld [vmem:[%s0 + $0x788] sm:$0xff]
      %v279 = vld [vmem:[%s0 + $0x790] sm:$0xff]
      %v280 = vld [vmem:[%s0 + $0x798] sm:$0xff]
      %v281 = vld [vmem:[%s0 + $0x7a0] sm:$0xff]
      %v282 = vld [vmem:[%s0 + $0x7a8] sm:$0xff]
      %v283 = vld [vmem:[%s0 + $0x7b0] sm:$0xff]
      %v284 = vld [vmem:[%s0 + $0x7b8] sm:$0xff]
      %v285 = vld [vmem:[%s0 + $0x7c0] sm:$0xff]
      %v286 = vld [vmem:[%s0 + $0x7c8] sm:$0xff]
      %v287 = vld [vmem:[%s0 + $0x7d0] sm:$0xff]
      %v288 = vld [vmem:[%s0 + $0x7d8] sm:$0xff]
      %v289 = vld [vmem:[%s0 + $0x7e0] sm:$0xff]
      %v290 = vld [vmem:[%s0 + $0x7e8] sm:$0xff]
      %v291 = vld [vmem:[%s0 + $0x7f0] sm:$0xff]
      %v292 = vld [vmem:[%s0 + $0x7f8] sm:$0xff]
      %v293 = vld [vmem:[%s1] sm:$0xff]
      %v294 = vld [vmem:[%s1 + $0x8] sm:$0xff]
      %v295 = vld [vmem:[%s1 + $0x10] sm:$0xff]
      %v296 = vld [vmem:[%s1 + $0x18] sm:$0xff]
      %v297 = vld [vmem:[%s2] sm:$0x1]
      %v299 = vlaneseq
      %v300 = vshrl.u32 %v299, 7
      %v301 = vsub.s32 0, %v300
      %v302 = vrot.slane %v297, %v301
      %vm304 = vcmask 261120
      %v306 = vsel %vm304, %v37, 0
      %v309 = vsel %vm304, %v38, 0
      %v312 = vsel %vm304, %v39, 0
      %v315 = vsel %vm304, %v40, 0
      %v318 = vsel %vm304, %v41, 0
      %v321 = vsel %vm304, %v42, 0
      %v324 = vsel %vm304, %v43, 0
      %v327 = vsel %vm304, %v44, 0
      %v330 = vsel %vm304, %v45, 0
      %v333 = vsel %vm304, %v46, 0
      %v336 = vsel %vm304, %v47, 0
      %v339 = vsel %vm304, %v48, 0
      %v342 = vsel %vm304, %v49, 0
      %v345 = vsel %vm304, %v50, 0
      %v348 = vsel %vm304, %v51, 0
      %v351 = vsel %vm304, %v52, 0
      %v354 = vsel %vm304, %v53, 0
      %v357 = vsel %vm304, %v54, 0
      %v360 = vsel %vm304, %v55, 0
      %v363 = vsel %vm304, %v56, 0
      %v366 = vsel %vm304, %v57, 0
      %v369 = vsel %vm304, %v58, 0
      %v372 = vsel %vm304, %v59, 0
      %v375 = vsel %vm304, %v60, 0
      %v378 = vsel %vm304, %v61, 0
      %v381 = vsel %vm304, %v62, 0
      %v384 = vsel %vm304, %v63, 0
      %v387 = vsel %vm304, %v64, 0
      %v390 = vsel %vm304, %v65, 0
      %v393 = vsel %vm304, %v66, 0
      %v396 = vsel %vm304, %v67, 0
      %v399 = vsel %vm304, %v68, 0
      %v402 = vsel %vm304, %v69, 0
      %v405 = vsel %vm304, %v70, 0
      %v408 = vsel %vm304, %v71, 0
      %v411 = vsel %vm304, %v72, 0
      %v414 = vsel %vm304, %v73, 0
      %v417 = vsel %vm304, %v74, 0
      %v420 = vsel %vm304, %v75, 0
      %v423 = vsel %vm304, %v76, 0
      %v426 = vsel %vm304, %v77, 0
      %v429 = vsel %vm304, %v78, 0
      %v432 = vsel %vm304, %v79, 0
      %v435 = vsel %vm304, %v80, 0
      %v438 = vsel %vm304, %v81, 0
      %v441 = vsel %vm304, %v82, 0
      %v444 = vsel %vm304, %v83, 0
      %v447 = vsel %vm304, %v84, 0
      %v450 = vsel %vm304, %v85, 0
      %v453 = vsel %vm304, %v86, 0
      %v456 = vsel %vm304, %v87, 0
      %v459 = vsel %vm304, %v88, 0
      %v462 = vsel %vm304, %v89, 0
      %v465 = vsel %vm304, %v90, 0
      %v468 = vsel %vm304, %v91, 0
      %v471 = vsel %vm304, %v92, 0
      %v474 = vsel %vm304, %v93, 0
      %v477 = vsel %vm304, %v94, 0
      %v480 = vsel %vm304, %v95, 0
      %v483 = vsel %vm304, %v96, 0
      %v486 = vsel %vm304, %v97, 0
      %v489 = vsel %vm304, %v98, 0
      %v492 = vsel %vm304, %v99, 0
      %v495 = vsel %vm304, %v100, 0
      %v498 = vsel %vm304, %v101, 0
      %v501 = vsel %vm304, %v102, 0
      %v504 = vsel %vm304, %v103, 0
      %v507 = vsel %vm304, %v104, 0
      %v510 = vsel %vm304, %v105, 0
      %v513 = vsel %vm304, %v106, 0
      %v516 = vsel %vm304, %v107, 0
      %v519 = vsel %vm304, %v108, 0
      %v522 = vsel %vm304, %v109, 0
      %v525 = vsel %vm304, %v110, 0
      %v528 = vsel %vm304, %v111, 0
      %v531 = vsel %vm304, %v112, 0
      %v534 = vsel %vm304, %v113, 0
      %v537 = vsel %vm304, %v114, 0
      %v540 = vsel %vm304, %v115, 0
      %v543 = vsel %vm304, %v116, 0
      %v546 = vsel %vm304, %v117, 0
      %v549 = vsel %vm304, %v118, 0
      %v552 = vsel %vm304, %v119, 0
      %v555 = vsel %vm304, %v120, 0
      %v558 = vsel %vm304, %v121, 0
      %v561 = vsel %vm304, %v122, 0
      %v564 = vsel %vm304, %v123, 0
      %v567 = vsel %vm304, %v124, 0
      %v570 = vsel %vm304, %v125, 0
      %v573 = vsel %vm304, %v126, 0
      %v576 = vsel %vm304, %v127, 0
      %v579 = vsel %vm304, %v128, 0
      %v582 = vsel %vm304, %v129, 0
      %v585 = vsel %vm304, %v130, 0
      %v588 = vsel %vm304, %v131, 0
      %v591 = vsel %vm304, %v132, 0
      %v594 = vsel %vm304, %v133, 0
      %v597 = vsel %vm304, %v134, 0
      %v600 = vsel %vm304, %v135, 0
      %v603 = vsel %vm304, %v136, 0
      %v606 = vsel %vm304, %v137, 0
      %v609 = vsel %vm304, %v138, 0
      %v612 = vsel %vm304, %v139, 0
      %v615 = vsel %vm304, %v140, 0
      %v618 = vsel %vm304, %v141, 0
      %v621 = vsel %vm304, %v142, 0
      %v624 = vsel %vm304, %v143, 0
      %v627 = vsel %vm304, %v144, 0
      %v630 = vsel %vm304, %v145, 0
      %v633 = vsel %vm304, %v146, 0
      %v636 = vsel %vm304, %v147, 0
      %v639 = vsel %vm304, %v148, 0
      %v642 = vsel %vm304, %v149, 0
      %v645 = vsel %vm304, %v150, 0
      %v648 = vsel %vm304, %v151, 0
      %v651 = vsel %vm304, %v152, 0
      %v654 = vsel %vm304, %v153, 0
      %v657 = vsel %vm304, %v154, 0
      %v660 = vsel %vm304, %v155, 0
      %v663 = vsel %vm304, %v156, 0
      %v666 = vsel %vm304, %v157, 0
      %v669 = vsel %vm304, %v158, 0
      %v672 = vsel %vm304, %v159, 0
      %v675 = vsel %vm304, %v160, 0
      %v678 = vsel %vm304, %v161, 0
      %v681 = vsel %vm304, %v162, 0
      %v684 = vsel %vm304, %v163, 0
      %v687 = vsel %vm304, %v164, 0
      %v690 = vsel %vm304, %v165, 0
      %v693 = vsel %vm304, %v166, 0
      %v696 = vsel %vm304, %v167, 0
      %v699 = vsel %vm304, %v168, 0
      %v702 = vsel %vm304, %v169, 0
      %v705 = vsel %vm304, %v170, 0
      %v708 = vsel %vm304, %v171, 0
      %v711 = vsel %vm304, %v172, 0
      %v714 = vsel %vm304, %v173, 0
      %v717 = vsel %vm304, %v174, 0
      %v720 = vsel %vm304, %v175, 0
      %v723 = vsel %vm304, %v176, 0
      %v726 = vsel %vm304, %v177, 0
      %v729 = vsel %vm304, %v178, 0
      %v732 = vsel %vm304, %v179, 0
      %v735 = vsel %vm304, %v180, 0
      %v738 = vsel %vm304, %v181, 0
      %v741 = vsel %vm304, %v182, 0
      %v744 = vsel %vm304, %v183, 0
      %v747 = vsel %vm304, %v184, 0
      %v750 = vsel %vm304, %v185, 0
      %v753 = vsel %vm304, %v186, 0
      %v756 = vsel %vm304, %v187, 0
      %v759 = vsel %vm304, %v188, 0
      %v762 = vsel %vm304, %v189, 0
      %v765 = vsel %vm304, %v190, 0
      %v768 = vsel %vm304, %v191, 0
      %v771 = vsel %vm304, %v192, 0
      %v774 = vsel %vm304, %v193, 0
      %v777 = vsel %vm304, %v194, 0
      %v780 = vsel %vm304, %v195, 0
      %v783 = vsel %vm304, %v196, 0
      %v786 = vsel %vm304, %v197, 0
      %v789 = vsel %vm304, %v198, 0
      %v792 = vsel %vm304, %v199, 0
      %v795 = vsel %vm304, %v200, 0
      %v798 = vsel %vm304, %v201, 0
      %v801 = vsel %vm304, %v202, 0
      %v804 = vsel %vm304, %v203, 0
      %v807 = vsel %vm304, %v204, 0
      %v810 = vsel %vm304, %v205, 0
      %v813 = vsel %vm304, %v206, 0
      %v816 = vsel %vm304, %v207, 0
      %v819 = vsel %vm304, %v208, 0
      %v822 = vsel %vm304, %v209, 0
      %v825 = vsel %vm304, %v210, 0
      %v828 = vsel %vm304, %v211, 0
      %v831 = vsel %vm304, %v212, 0
      %v834 = vsel %vm304, %v213, 0
      %v837 = vsel %vm304, %v214, 0
      %v840 = vsel %vm304, %v215, 0
      %v843 = vsel %vm304, %v216, 0
      %v846 = vsel %vm304, %v217, 0
      %v849 = vsel %vm304, %v218, 0
      %v852 = vsel %vm304, %v219, 0
      %v855 = vsel %vm304, %v220, 0
      %v858 = vsel %vm304, %v221, 0
      %v861 = vsel %vm304, %v222, 0
      %v864 = vsel %vm304, %v223, 0
      %v867 = vsel %vm304, %v224, 0
      %v870 = vsel %vm304, %v225, 0
      %v873 = vsel %vm304, %v226, 0
      %v876 = vsel %vm304, %v227, 0
      %v879 = vsel %vm304, %v228, 0
      %v882 = vsel %vm304, %v229, 0
      %v885 = vsel %vm304, %v230, 0
      %v888 = vsel %vm304, %v231, 0
      %v891 = vsel %vm304, %v232, 0
      %v894 = vsel %vm304, %v233, 0
      %v897 = vsel %vm304, %v234, 0
      %v900 = vsel %vm304, %v235, 0
      %v903 = vsel %vm304, %v236, 0
      %v906 = vsel %vm304, %v237, 0
      %v909 = vsel %vm304, %v238, 0
      %v912 = vsel %vm304, %v239, 0
      %v915 = vsel %vm304, %v240, 0
      %v918 = vsel %vm304, %v241, 0
      %v921 = vsel %vm304, %v242, 0
      %v924 = vsel %vm304, %v243, 0
      %v927 = vsel %vm304, %v244, 0
      %v930 = vsel %vm304, %v245, 0
      %v933 = vsel %vm304, %v246, 0
      %v936 = vsel %vm304, %v247, 0
      %v939 = vsel %vm304, %v248, 0
      %v942 = vsel %vm304, %v249, 0
      %v945 = vsel %vm304, %v250, 0
      %v948 = vsel %vm304, %v251, 0
      %v951 = vsel %vm304, %v252, 0
      %v954 = vsel %vm304, %v253, 0
      %v957 = vsel %vm304, %v254, 0
      %v960 = vsel %vm304, %v255, 0
      %v963 = vsel %vm304, %v256, 0
      %v966 = vsel %vm304, %v257, 0
      %v969 = vsel %vm304, %v258, 0
      %v972 = vsel %vm304, %v259, 0
      %v975 = vsel %vm304, %v260, 0
      %v978 = vsel %vm304, %v261, 0
      %v981 = vsel %vm304, %v262, 0
      %v984 = vsel %vm304, %v263, 0
      %v987 = vsel %vm304, %v264, 0
      %v990 = vsel %vm304, %v265, 0
      %v993 = vsel %vm304, %v266, 0
      %v996 = vsel %vm304, %v267, 0
      %v999 = vsel %vm304, %v268, 0
      %v1002 = vsel %vm304, %v269, 0
      %v1005 = vsel %vm304, %v270, 0
      %v1008 = vsel %vm304, %v271, 0
      %v1011 = vsel %vm304, %v272, 0
      %v1014 = vsel %vm304, %v273, 0
      %v1017 = vsel %vm304, %v274, 0
      %v1020 = vsel %vm304, %v275, 0
      %v1023 = vsel %vm304, %v276, 0
      %v1026 = vsel %vm304, %v277, 0
      %v1029 = vsel %vm304, %v278, 0
      %v1032 = vsel %vm304, %v279, 0
      %v1035 = vsel %vm304, %v280, 0
      %v1038 = vsel %vm304, %v281, 0
      %v1041 = vsel %vm304, %v282, 0
      %v1044 = vsel %vm304, %v283, 0
      %v1047 = vsel %vm304, %v284, 0
      %v1050 = vsel %vm304, %v285, 0
      %v1053 = vsel %vm304, %v286, 0
      %v1056 = vsel %vm304, %v287, 0
      %v1059 = vsel %vm304, %v288, 0
      %v1062 = vsel %vm304, %v289, 0
      %v1065 = vsel %vm304, %v290, 0
      %v1068 = vsel %vm304, %v291, 0
      %v1071 = vsel %vm304, %v292, 0
      %1073 = vmatprep.subr.mxu0 0.0
      %1074 = vmatpush1.msra.mxu0 %v293
      %1075 = vmatprep.subr.mxu0 0.0
      %1076 = vmatpush1.msra.mxu0 %v294
      %1077 = vmatprep.subr.mxu0 0.0
      %1078 = vmatpush1.msra.mxu0 %v295
      %1079 = vmatprep.subr.mxu0 0.0
      %1080 = vmatpush1.msra.mxu0 %v296
      %1081 = vmatprep.subr.mxu0 0.0
      %1082 = vmatpush1.msra.mxu0 0.0
      %1083 = vmatprep.subr.mxu0 0.0
      %1084 = vmatpush1.msra.mxu0 0.0
      %1085 = vmatprep.subr.mxu0 0.0
      %1086 = vmatpush1.msra.mxu0 0.0
      %1087 = vmatprep.subr.mxu0 0.0
      %1088 = vmatpush1.msra.mxu0 0.0
      %1089 = vmatprep.subr.mxu0 0.0
      %1090 = vmatpush1.msra.mxu0 0.0
      %1091 = vmatprep.subr.mxu0 0.0
      %1092 = vmatpush1.msra.mxu0 0.0
      %1093 = vmatprep.subr.mxu0 0.0
      %1094 = vmatpush1.msra.mxu0 0.0
      %1095 = vmatprep.subr.mxu0 0.0
      %1096 = vmatpush1.msra.mxu0 0.0
      %1097 = vmatprep.subr.mxu0 0.0
      %1098 = vmatpush1.msra.mxu0 0.0
      %1099 = vmatprep.subr.mxu0 0.0
      %1100 = vmatpush1.msra.mxu0 0.0
      %1101 = vmatprep.subr.mxu0 0.0
      %1102 = vmatpush1.msra.mxu0 0.0
      %1103 = vmatprep.subr.mxu0 0.0
      %1104 = vmatpush1.msra.mxu0 0.0
      %1105 = vmatprep.subr.mxu0 0.0
      %1106 = vmatpush1.msra.mxu0 0.0
      %1107 = vmatprep.subr.mxu0 0.0
      %1108 = vmatpush1.msra.mxu0 0.0
      %1109 = vmatprep.subr.mxu0 0.0
      %1110 = vmatpush1.msra.mxu0 0.0
      %1111 = vmatprep.subr.mxu0 0.0
      %1112 = vmatpush1.msra.mxu0 0.0
      %1113 = vmatprep.subr.mxu0 0.0
      %1114 = vmatpush1.msra.mxu0 0.0
      %1115 = vmatprep.subr.mxu0 0.0
      %1116 = vmatpush1.msra.mxu0 0.0
      %1117 = vmatprep.subr.mxu0 0.0
      %1118 = vmatpush1.msra.mxu0 0.0
      %1119 = vmatprep.subr.mxu0 0.0
      %1120 = vmatpush1.msra.mxu0 0.0
      %1121 = vmatprep.subr.mxu0 0.0
      %1122 = vmatpush1.msra.mxu0 0.0
      %1123 = vmatprep.subr.mxu0 0.0
      %1124 = vmatpush1.msra.mxu0 0.0
      %1125 = vmatprep.subr.mxu0 0.0
      %1126 = vmatpush1.msra.mxu0 0.0
      %1127 = vmatprep.subr.mxu0 0.0
      %1128 = vmatpush1.msra.mxu0 0.0
      %1129 = vmatprep.subr.mxu0 0.0
      %1130 = vmatpush1.msra.mxu0 0.0
      %1131 = vmatprep.subr.mxu0 0.0
      %1132 = vmatpush1.msra.mxu0 0.0
      %1133 = vmatprep.subr.mxu0 0.0
      %1134 = vmatpush1.msra.mxu0 0.0
      %1135 = vmatprep.subr.mxu0 0.0
      %1136 = vmatpush1.msra.mxu0 0.0
      %1137 = vmatprep.mubr.f32.mxu0 0.0
      %1138 = vmatmul.mubr.f32.gmra.mrb[0].mxu0 %v306
      %v1139 = vpop.f32.mrb[0].mxu0
      %v1140 = vadd.f32 %v302, %v1139
      %v1141 = vpop.f32.mrb[0].mxu0
      %1142 = vmatprep.mubr.f32.mxu0 0.0
      %1143 = vmatmul.mubr.f32.gmra.mrb[0].mxu0 %v309
      %v1144 = vpop.f32.mrb[0].mxu0
      %v1145 = vadd.f32 %v302, %v1144
      %v1146 = vpop.f32.mrb[0].mxu0
      %1147 = vmatprep.mubr.f32.mxu0 0.0
      %1148 = vmatmul.mubr.f32.gmra.mrb[0].mxu0 %v312
      %v1149 = vpop.f32.mrb[0].mxu0
      %v1150 = vadd.f32 %v302, %v1149
      %v1151 = vpop.f32.mrb[0].mxu0
      %1152 = vmatprep.mubr.f32.mxu0 0.0
      %1153 = vmatmul.mubr.f32.gmra.mrb[0].mxu0 %v315
      %v1154 = vpop.f32.mrb[0].mxu0
      %v1155 = vadd.f32 %v302, %v1154
      %v1156 = vpop.f32.mrb[0].mxu0
      %1157 = vmatprep.mubr.f32.mxu0 0.0
      %1158 = vmatmul.mubr.f32.gmra.mrb[0].mxu0 %v318
      %v1159 = vpop.f32.mrb[0].mxu0
      %v1160 = vadd.f32 %v302, %v1159
      %v1161 = vpop.f32.mrb[0].mxu0
      %1162 = vmatprep.mubr.f32.mxu0 0.0
      %1163 = vmatmul.mubr.f32.gmra.mrb[0].mxu0 %v321
      %v1164 = vpop.f32.mrb[0].mxu0
      %v1165 = vadd.f32 %v302, %v1164
      %v1166 = vpop.f32.mrb[0].mxu0
      %1167 = vmatprep.mubr.f32.mxu0 0.0
      %1168 = vmatmul.mubr.f32.gmra.mrb[0].mxu0 %v324
      %v1169 = vpop.f32.mrb[0].mxu0
      %v1170 = vadd.f32 %v302, %v1169
      %v1171 = vpop.f32.mrb[0].mxu0
      %1172 = vmatprep.mubr.f32.mxu0 0.0
      %1173 = vmatmul.mubr.f32.gmra.mrb[0].mxu0 %v327
      %v1174 = vpop.f32.mrb[0].mxu0
      %v1175 = vadd.f32 %v302, %v1174
      %v1176 = vpop.f32.mrb[0].mxu0
      %1177 = vmatprep.mubr.f32.mxu0 0.0
      %1178 = vmatmul.mubr.f32.gmra.mrb[0].mxu0 %v330
      %v1179 = vpop.f32.mrb[0].mxu0
      %v1180 = vadd.f32 %v302, %v1179
      %v1181 = vpop.f32.mrb[0].mxu0
      %1182 = vmatprep.mubr.f32.mxu0 0.0
      %1183 = vmatmul.mubr.f32.gmra.mrb[0].mxu0 %v333
      %v1184 = vpop.f32.mrb[0].mxu0
      %v1185 = vadd.f32 %v302, %v1184
      %v1186 = vpop.f32.mrb[0].mxu0
      %1187 = vmatprep.mubr.f32.mxu0 0.0
      %1188 = vmatmul.mubr.f32.gmra.mrb[0].mxu0 %v336
      %v1189 = vpop.f32.mrb[0].mxu0
      %v1190 = vadd.f32 %v302, %v1189
      %v1191 = vpop.f32.mrb[0].mxu0
      %1192 = vmatprep.mubr.f32.mxu0 0.0
      %1193 = vmatmul.mubr.f32.gmra.mrb[0].mxu0 %v339
      %v1194 = vpop.f32.mrb[0].mxu0
      %v1195 = vadd.f32 %v302, %v1194
      %v1196 = vpop.f32.mrb[0].mxu0
      %1197 = vmatprep.mubr.f32.mxu0 0.0
      %1198 = vmatmul.mubr.f32.gmra.mrb[0].mxu0 %v342
      %v1199 = vpop.f32.mrb[0].mxu0
      %v1200 = vadd.f32 %v302, %v1199
      %v1201 = vpop.f32.mrb[0].mxu0
      %1202 = vmatprep.mubr.f32.mxu0 0.0
      %1203 = vmatmul.mubr.f32.gmra.mrb[0].mxu0 %v345
      %v1204 = vpop.f32.mrb[0].mxu0
      %v1205 = vadd.f32 %v302, %v1204
      %v1206 = vpop.f32.mrb[0].mxu0
      %1207 = vmatprep.mubr.f32.mxu0 0.0
      %1208 = vmatmul.mubr.f32.gmra.mrb[0].mxu0 %v348
      %v1209 = vpop.f32.mrb[0].mxu0
      %v1210 = vadd.f32 %v302, %v1209
      %v1211 = vpop.f32.mrb[0].mxu0
      %1212 = vmatprep.mubr.f32.mxu0 0.0
      %1213 = vmatmul.mubr.f32.gmra.mrb[0].mxu0 %v351
      %v1214 = vpop.f32.mrb[0].mxu0
      %v1215 = vadd.f32 %v302, %v1214
      %v1216 = vpop.f32.mrb[0].mxu0
      %1217 = vmatprep.mubr.f32.mxu0 0.0
      %1218 = vmatmul.mubr.f32.gmra.mrb[0].mxu0 %v354
      %v1219 = vpop.f32.mrb[0].mxu0
      %v1220 = vadd.f32 %v302, %v1219
      %v1221 = vpop.f32.mrb[0].mxu0
      %1222 = vmatprep.mubr.f32.mxu0 0.0
      %1223 = vmatmul.mubr.f32.gmra.mrb[0].mxu0 %v357
      %v1224 = vpop.f32.mrb[0].mxu0
      %v1225 = vadd.f32 %v302, %v1224
      %v1226 = vpop.f32.mrb[0].mxu0
      %1227 = vmatprep.mubr.f32.mxu0 0.0
      %1228 = vmatmul.mubr.f32.gmra.mrb[0].mxu0 %v360
      %v1229 = vpop.f32.mrb[0].mxu0
      %v1230 = vadd.f32 %v302, %v1229
      %v1231 = vpop.f32.mrb[0].mxu0
      %1232 = vmatprep.mubr.f32.mxu0 0.0
      %1233 = vmatmul.mubr.f32.gmra.mrb[0].mxu0 %v363
      %v1234 = vpop.f32.mrb[0].mxu0
      %v1235 = vadd.f32 %v302, %v1234
      %v1236 = vpop.f32.mrb[0].mxu0
      %1237 = vmatprep.mubr.f32.mxu0 0.0
      %1238 = vmatmul.mubr.f32.gmra.mrb[0].mxu0 %v366
      %v1239 = vpop.f32.mrb[0].mxu0
      %v1240 = vadd.f32 %v302, %v1239
      %v1241 = vpop.f32.mrb[0].mxu0
      %1242 = vmatprep.mubr.f32.mxu0 0.0
      %1243 = vmatmul.mubr.f32.gmra.mrb[0].mxu0 %v369
      %v1244 = vpop.f32.mrb[0].mxu0
      %v1245 = vadd.f32 %v302, %v1244
      %v1246 = vpop.f32.mrb[0].mxu0
      %1247 = vmatprep.mubr.f32.mxu0 0.0
      %1248 = vmatmul.mubr.f32.gmra.mrb[0].mxu0 %v372
      %v1249 = vpop.f32.mrb[0].mxu0
      %v1250 = vadd.f32 %v302, %v1249
      %v1251 = vpop.f32.mrb[0].mxu0
      %1252 = vmatprep.mubr.f32.mxu0 0.0
      %1253 = vmatmul.mubr.f32.gmra.mrb[0].mxu0 %v375
      %v1254 = vpop.f32.mrb[0].mxu0
      %v1255 = vadd.f32 %v302, %v1254
      %v1256 = vpop.f32.mrb[0].mxu0
      %1257 = vmatprep.mubr.f32.mxu0 0.0
      %1258 = vmatmul.mubr.f32.gmra.mrb[0].mxu0 %v378
      %v1259 = vpop.f32.mrb[0].mxu0
      %v1260 = vadd.f32 %v302, %v1259
      %v1261 = vpop.f32.mrb[0].mxu0
      %1262 = vmatprep.mubr.f32.mxu0 0.0
      %1263 = vmatmul.mubr.f32.gmra.mrb[0].mxu0 %v381
      %v1264 = vpop.f32.mrb[0].mxu0
      %v1265 = vadd.f32 %v302, %v1264
      %v1266 = vpop.f32.mrb[0].mxu0
      %1267 = vmatprep.mubr.f32.mxu0 0.0
      %1268 = vmatmul.mubr.f32.gmra.mrb[0].mxu0 %v384
      %v1269 = vpop.f32.mrb[0].mxu0
      %v1270 = vadd.f32 %v302, %v1269
      %v1271 = vpop.f32.mrb[0].mxu0
      %1272 = vmatprep.mubr.f32.mxu0 0.0
      %1273 = vmatmul.mubr.f32.gmra.mrb[0].mxu0 %v387
      %v1274 = vpop.f32.mrb[0].mxu0
      %v1275 = vadd.f32 %v302, %v1274
      %v1276 = vpop.f32.mrb[0].mxu0
      %1277 = vmatprep.mubr.f32.mxu0 0.0
      %1278 = vmatmul.mubr.f32.gmra.mrb[0].mxu0 %v390
      %v1279 = vpop.f32.mrb[0].mxu0
      %v1280 = vadd.f32 %v302, %v1279
      %v1281 = vpop.f32.mrb[0].mxu0
      %1282 = vmatprep.mubr.f32.mxu0 0.0
      %1283 = vmatmul.mubr.f32.gmra.mrb[0].mxu0 %v393
      %v1284 = vpop.f32.mrb[0].mxu0
      %v1285 = vadd.f32 %v302, %v1284
      %v1286 = vpop.f32.mrb[0].mxu0
      %1287 = vmatprep.mubr.f32.mxu0 0.0
      %1288 = vmatmul.mubr.f32.gmra.mrb[0].mxu0 %v396
      %v1289 = vpop.f32.mrb[0].mxu0
      %v1290 = vadd.f32 %v302, %v1289
      %v1291 = vpop.f32.mrb[0].mxu0
      %1292 = vmatprep.mubr.f32.mxu0 0.0
      %1293 = vmatmul.mubr.f32.gmra.mrb[0].mxu0 %v399
      %v1294 = vpop.f32.mrb[0].mxu0
      %v1295 = vadd.f32 %v302, %v1294
      %v1296 = vpop.f32.mrb[0].mxu0
      %1297 = vmatprep.mubr.f32.mxu0 0.0
      %1298 = vmatmul.mubr.f32.gmra.mrb[0].mxu0 %v402
      %v1299 = vpop.f32.mrb[0].mxu0
      %v1300 = vadd.f32 %v302, %v1299
      %v1301 = vpop.f32.mrb[0].mxu0
      %1302 = vmatprep.mubr.f32.mxu0 0.0
      %1303 = vmatmul.mubr.f32.gmra.mrb[0].mxu0 %v405
      %v1304 = vpop.f32.mrb[0].mxu0
      %v1305 = vadd.f32 %v302, %v1304
      %v1306 = vpop.f32.mrb[0].mxu0
      %1307 = vmatprep.mubr.f32.mxu0 0.0
      %1308 = vmatmul.mubr.f32.gmra.mrb[0].mxu0 %v408
      %v1309 = vpop.f32.mrb[0].mxu0
      %v1310 = vadd.f32 %v302, %v1309
      %v1311 = vpop.f32.mrb[0].mxu0
      %1312 = vmatprep.mubr.f32.mxu0 0.0
      %1313 = vmatmul.mubr.f32.gmra.mrb[0].mxu0 %v411
      %v1314 = vpop.f32.mrb[0].mxu0
      %v1315 = vadd.f32 %v302, %v1314
      %v1316 = vpop.f32.mrb[0].mxu0
      %1317 = vmatprep.mubr.f32.mxu0 0.0
      %1318 = vmatmul.mubr.f32.gmra.mrb[0].mxu0 %v414
      %v1319 = vpop.f32.mrb[0].mxu0
      %v1320 = vadd.f32 %v302, %v1319
      %v1321 = vpop.f32.mrb[0].mxu0
      %1322 = vmatprep.mubr.f32.mxu0 0.0
      %1323 = vmatmul.mubr.f32.gmra.mrb[0].mxu0 %v417
      %v1324 = vpop.f32.mrb[0].mxu0
      %v1325 = vadd.f32 %v302, %v1324
      %v1326 = vpop.f32.mrb[0].mxu0
      %1327 = vmatprep.mubr.f32.mxu0 0.0
      %1328 = vmatmul.mubr.f32.gmra.mrb[0].mxu0 %v420
      %v1329 = vpop.f32.mrb[0].mxu0
      %v1330 = vadd.f32 %v302, %v1329
      %v1331 = vpop.f32.mrb[0].mxu0
      %1332 = vmatprep.mubr.f32.mxu0 0.0
      %1333 = vmatmul.mubr.f32.gmra.mrb[0].mxu0 %v423
      %v1334 = vpop.f32.mrb[0].mxu0
      %v1335 = vadd.f32 %v302, %v1334
      %v1336 = vpop.f32.mrb[0].mxu0
      %1337 = vmatprep.mubr.f32.mxu0 0.0
      %1338 = vmatmul.mubr.f32.gmra.mrb[0].mxu0 %v426
      %v1339 = vpop.f32.mrb[0].mxu0
      %v1340 = vadd.f32 %v302, %v1339
      %v1341 = vpop.f32.mrb[0].mxu0
      %1342 = vmatprep.mubr.f32.mxu0 0.0
      %1343 = vmatmul.mubr.f32.gmra.mrb[0].mxu0 %v429
      %v1344 = vpop.f32.mrb[0].mxu0
      %v1345 = vadd.f32 %v302, %v1344
      %v1346 = vpop.f32.mrb[0].mxu0
      %1347 = vmatprep.mubr.f32.mxu0 0.0
      %1348 = vmatmul.mubr.f32.gmra.mrb[0].mxu0 %v432
      %v1349 = vpop.f32.mrb[0].mxu0
      %v1350 = vadd.f32 %v302, %v1349
      %v1351 = vpop.f32.mrb[0].mxu0
      %1352 = vmatprep.mubr.f32.mxu0 0.0
      %1353 = vmatmul.mubr.f32.gmra.mrb[0].mxu0 %v435
      %v1354 = vpop.f32.mrb[0].mxu0
      %v1355 = vadd.f32 %v302, %v1354
      %v1356 = vpop.f32.mrb[0].mxu0
      %1357 = vmatprep.mubr.f32.mxu0 0.0
      %1358 = vmatmul.mubr.f32.gmra.mrb[0].mxu0 %v438
      %v1359 = vpop.f32.mrb[0].mxu0
      %v1360 = vadd.f32 %v302, %v1359
      %v1361 = vpop.f32.mrb[0].mxu0
      %1362 = vmatprep.mubr.f32.mxu0 0.0
      %1363 = vmatmul.mubr.f32.gmra.mrb[0].mxu0 %v441
      %v1364 = vpop.f32.mrb[0].mxu0
      %v1365 = vadd.f32 %v302, %v1364
      %v1366 = vpop.f32.mrb[0].mxu0
      %1367 = vmatprep.mubr.f32.mxu0 0.0
      %1368 = vmatmul.mubr.f32.gmra.mrb[0].mxu0 %v444
      %v1369 = vpop.f32.mrb[0].mxu0
      %v1370 = vadd.f32 %v302, %v1369
      %v1371 = vpop.f32.mrb[0].mxu0
      %1372 = vmatprep.mubr.f32.mxu0 0.0
      %1373 = vmatmul.mubr.f32.gmra.mrb[0].mxu0 %v447
      %v1374 = vpop.f32.mrb[0].mxu0
      %v1375 = vadd.f32 %v302, %v1374
      %v1376 = vpop.f32.mrb[0].mxu0
      %1377 = vmatprep.mubr.f32.mxu0 0.0
      %1378 = vmatmul.mubr.f32.gmra.mrb[0].mxu0 %v450
      %v1379 = vpop.f32.mrb[0].mxu0
      %v1380 = vadd.f32 %v302, %v1379
      %v1381 = vpop.f32.mrb[0].mxu0
      %1382 = vmatprep.mubr.f32.mxu0 0.0
      %1383 = vmatmul.mubr.f32.gmra.mrb[0].mxu0 %v453
      %v1384 = vpop.f32.mrb[0].mxu0
      %v1385 = vadd.f32 %v302, %v1384
      %v1386 = vpop.f32.mrb[0].mxu0
      %1387 = vmatprep.mubr.f32.mxu0 0.0
      %1388 = vmatmul.mubr.f32.gmra.mrb[0].mxu0 %v456
      %v1389 = vpop.f32.mrb[0].mxu0
      %v1390 = vadd.f32 %v302, %v1389
      %v1391 = vpop.f32.mrb[0].mxu0
      %1392 = vmatprep.mubr.f32.mxu0 0.0
      %1393 = vmatmul.mubr.f32.gmra.mrb[0].mxu0 %v459
      %v1394 = vpop.f32.mrb[0].mxu0
      %v1395 = vadd.f32 %v302, %v1394
      %v1396 = vpop.f32.mrb[0].mxu0
      %1397 = vmatprep.mubr.f32.mxu0 0.0
      %1398 = vmatmul.mubr.f32.gmra.mrb[0].mxu0 %v462
      %v1399 = vpop.f32.mrb[0].mxu0
      %v1400 = vadd.f32 %v302, %v1399
      %v1401 = vpop.f32.mrb[0].mxu0
      %1402 = vmatprep.mubr.f32.mxu0 0.0
      %1403 = vmatmul.mubr.f32.gmra.mrb[0].mxu0 %v465
      %v1404 = vpop.f32.mrb[0].mxu0
      %v1405 = vadd.f32 %v302, %v1404
      %v1406 = vpop.f32.mrb[0].mxu0
      %1407 = vmatprep.mubr.f32.mxu0 0.0
      %1408 = vmatmul.mubr.f32.gmra.mrb[0].mxu0 %v468
      %v1409 = vpop.f32.mrb[0].mxu0
      %v1410 = vadd.f32 %v302, %v1409
      %v1411 = vpop.f32.mrb[0].mxu0
      %1412 = vmatprep.mubr.f32.mxu0 0.0
      %1413 = vmatmul.mubr.f32.gmra.mrb[0].mxu0 %v471
      %v1414 = vpop.f32.mrb[0].mxu0
      %v1415 = vadd.f32 %v302, %v1414
      %v1416 = vpop.f32.mrb[0].mxu0
      %1417 = vmatprep.mubr.f32.mxu0 0.0
      %1418 = vmatmul.mubr.f32.gmra.mrb[0].mxu0 %v474
      %v1419 = vpop.f32.mrb[0].mxu0
      %v1420 = vadd.f32 %v302, %v1419
      %v1421 = vpop.f32.mrb[0].mxu0
      %1422 = vmatprep.mubr.f32.mxu0 0.0
      %1423 = vmatmul.mubr.f32.gmra.mrb[0].mxu0 %v477
      %v1424 = vpop.f32.mrb[0].mxu0
      %v1425 = vadd.f32 %v302, %v1424
      %v1426 = vpop.f32.mrb[0].mxu0
      %1427 = vmatprep.mubr.f32.mxu0 0.0
      %1428 = vmatmul.mubr.f32.gmra.mrb[0].mxu0 %v480
      %v1429 = vpop.f32.mrb[0].mxu0
      %v1430 = vadd.f32 %v302, %v1429
      %v1431 = vpop.f32.mrb[0].mxu0
      %1432 = vmatprep.mubr.f32.mxu0 0.0
      %1433 = vmatmul.mubr.f32.gmra.mrb[0].mxu0 %v483
      %v1434 = vpop.f32.mrb[0].mxu0
      %v1435 = vadd.f32 %v302, %v1434
      %v1436 = vpop.f32.mrb[0].mxu0
      %1437 = vmatprep.mubr.f32.mxu0 0.0
      %1438 = vmatmul.mubr.f32.gmra.mrb[0].mxu0 %v486
      %v1439 = vpop.f32.mrb[0].mxu0
      %v1440 = vadd.f32 %v302, %v1439
      %v1441 = vpop.f32.mrb[0].mxu0
      %1442 = vmatprep.mubr.f32.mxu0 0.0
      %1443 = vmatmul.mubr.f32.gmra.mrb[0].mxu0 %v489
      %v1444 = vpop.f32.mrb[0].mxu0
      %v1445 = vadd.f32 %v302, %v1444
      %v1446 = vpop.f32.mrb[0].mxu0
      %1447 = vmatprep.mubr.f32.mxu0 0.0
      %1448 = vmatmul.mubr.f32.gmra.mrb[0].mxu0 %v492
      %v1449 = vpop.f32.mrb[0].mxu0
      %v1450 = vadd.f32 %v302, %v1449
      %v1451 = vpop.f32.mrb[0].mxu0
      %1452 = vmatprep.mubr.f32.mxu0 0.0
      %1453 = vmatmul.mubr.f32.gmra.mrb[0].mxu0 %v495
      %v1454 = vpop.f32.mrb[0].mxu0
      %v1455 = vadd.f32 %v302, %v1454
      %v1456 = vpop.f32.mrb[0].mxu0
      %1457 = vmatprep.mubr.f32.mxu0 0.0
      %1458 = vmatmul.mubr.f32.gmra.mrb[0].mxu0 %v498
      %v1459 = vpop.f32.mrb[0].mxu0
      %v1460 = vadd.f32 %v302, %v1459
      %v1461 = vpop.f32.mrb[0].mxu0
      %1462 = vmatprep.mubr.f32.mxu0 0.0
      %1463 = vmatmul.mubr.f32.gmra.mrb[0].mxu0 %v501
      %v1464 = vpop.f32.mrb[0].mxu0
      %v1465 = vadd.f32 %v302, %v1464
      %v1466 = vpop.f32.mrb[0].mxu0
      %1467 = vmatprep.mubr.f32.mxu0 0.0
      %1468 = vmatmul.mubr.f32.gmra.mrb[0].mxu0 %v504
      %v1469 = vpop.f32.mrb[0].mxu0
      %v1470 = vadd.f32 %v302, %v1469
      %v1471 = vpop.f32.mrb[0].mxu0
      %1472 = vmatprep.mubr.f32.mxu0 0.0
      %1473 = vmatmul.mubr.f32.gmra.mrb[0].mxu0 %v507
      %v1474 = vpop.f32.mrb[0].mxu0
      %v1475 = vadd.f32 %v302, %v1474
      %v1476 = vpop.f32.mrb[0].mxu0
      %1477 = vmatprep.mubr.f32.mxu0 0.0
      %1478 = vmatmul.mubr.f32.gmra.mrb[0].mxu0 %v510
      %v1479 = vpop.f32.mrb[0].mxu0
      %v1480 = vadd.f32 %v302, %v1479
      %v1481 = vpop.f32.mrb[0].mxu0
      %1482 = vmatprep.mubr.f32.mxu0 0.0
      %1483 = vmatmul.mubr.f32.gmra.mrb[0].mxu0 %v513
      %v1484 = vpop.f32.mrb[0].mxu0
      %v1485 = vadd.f32 %v302, %v1484
      %v1486 = vpop.f32.mrb[0].mxu0
      %1487 = vmatprep.mubr.f32.mxu0 0.0
      %1488 = vmatmul.mubr.f32.gmra.mrb[0].mxu0 %v516
      %v1489 = vpop.f32.mrb[0].mxu0
      %v1490 = vadd.f32 %v302, %v1489
      %v1491 = vpop.f32.mrb[0].mxu0
      %1492 = vmatprep.mubr.f32.mxu0 0.0
      %1493 = vmatmul.mubr.f32.gmra.mrb[0].mxu0 %v519
      %v1494 = vpop.f32.mrb[0].mxu0
      %v1495 = vadd.f32 %v302, %v1494
      %v1496 = vpop.f32.mrb[0].mxu0
      %1497 = vmatprep.mubr.f32.mxu0 0.0
      %1498 = vmatmul.mubr.f32.gmra.mrb[0].mxu0 %v522
      %v1499 = vpop.f32.mrb[0].mxu0
      %v1500 = vadd.f32 %v302, %v1499
      %v1501 = vpop.f32.mrb[0].mxu0
      %1502 = vmatprep.mubr.f32.mxu0 0.0
      %1503 = vmatmul.mubr.f32.gmra.mrb[0].mxu0 %v525
      %v1504 = vpop.f32.mrb[0].mxu0
      %v1505 = vadd.f32 %v302, %v1504
      %v1506 = vpop.f32.mrb[0].mxu0
      %1507 = vmatprep.mubr.f32.mxu0 0.0
      %1508 = vmatmul.mubr.f32.gmra.mrb[0].mxu0 %v528
      %v1509 = vpop.f32.mrb[0].mxu0
      %v1510 = vadd.f32 %v302, %v1509
      %v1511 = vpop.f32.mrb[0].mxu0
      %1512 = vmatprep.mubr.f32.mxu0 0.0
      %1513 = vmatmul.mubr.f32.gmra.mrb[0].mxu0 %v531
      %v1514 = vpop.f32.mrb[0].mxu0
      %v1515 = vadd.f32 %v302, %v1514
      %v1516 = vpop.f32.mrb[0].mxu0
      %1517 = vmatprep.mubr.f32.mxu0 0.0
      %1518 = vmatmul.mubr.f32.gmra.mrb[0].mxu0 %v534
      %v1519 = vpop.f32.mrb[0].mxu0
      %v1520 = vadd.f32 %v302, %v1519
      %v1521 = vpop.f32.mrb[0].mxu0
      %1522 = vmatprep.mubr.f32.mxu0 0.0
      %1523 = vmatmul.mubr.f32.gmra.mrb[0].mxu0 %v537
      %v1524 = vpop.f32.mrb[0].mxu0
      %v1525 = vadd.f32 %v302, %v1524
      %v1526 = vpop.f32.mrb[0].mxu0
      %1527 = vmatprep.mubr.f32.mxu0 0.0
      %1528 = vmatmul.mubr.f32.gmra.mrb[0].mxu0 %v540
      %v1529 = vpop.f32.mrb[0].mxu0
      %v1530 = vadd.f32 %v302, %v1529
      %v1531 = vpop.f32.mrb[0].mxu0
      %1532 = vmatprep.mubr.f32.mxu0 0.0
      %1533 = vmatmul.mubr.f32.gmra.mrb[0].mxu0 %v543
      %v1534 = vpop.f32.mrb[0].mxu0
      %v1535 = vadd.f32 %v302, %v1534
      %v1536 = vpop.f32.mrb[0].mxu0
      %1537 = vmatprep.mubr.f32.mxu0 0.0
      %1538 = vmatmul.mubr.f32.gmra.mrb[0].mxu0 %v546
      %v1539 = vpop.f32.mrb[0].mxu0
      %v1540 = vadd.f32 %v302, %v1539
      %v1541 = vpop.f32.mrb[0].mxu0
      %1542 = vmatprep.mubr.f32.mxu0 0.0
      %1543 = vmatmul.mubr.f32.gmra.mrb[0].mxu0 %v549
      %v1544 = vpop.f32.mrb[0].mxu0
      %v1545 = vadd.f32 %v302, %v1544
      %v1546 = vpop.f32.mrb[0].mxu0
      %1547 = vmatprep.mubr.f32.mxu0 0.0
      %1548 = vmatmul.mubr.f32.gmra.mrb[0].mxu0 %v552
      %v1549 = vpop.f32.mrb[0].mxu0
      %v1550 = vadd.f32 %v302, %v1549
      %v1551 = vpop.f32.mrb[0].mxu0
      %1552 = vmatprep.mubr.f32.mxu0 0.0
      %1553 = vmatmul.mubr.f32.gmra.mrb[0].mxu0 %v555
      %v1554 = vpop.f32.mrb[0].mxu0
      %v1555 = vadd.f32 %v302, %v1554
      %v1556 = vpop.f32.mrb[0].mxu0
      %1557 = vmatprep.mubr.f32.mxu0 0.0
      %1558 = vmatmul.mubr.f32.gmra.mrb[0].mxu0 %v558
      %v1559 = vpop.f32.mrb[0].mxu0
      %v1560 = vadd.f32 %v302, %v1559
      %v1561 = vpop.f32.mrb[0].mxu0
      %1562 = vmatprep.mubr.f32.mxu0 0.0
      %1563 = vmatmul.mubr.f32.gmra.mrb[0].mxu0 %v561
      %v1564 = vpop.f32.mrb[0].mxu0
      %v1565 = vadd.f32 %v302, %v1564
      %v1566 = vpop.f32.mrb[0].mxu0
      %1567 = vmatprep.mubr.f32.mxu0 0.0
      %1568 = vmatmul.mubr.f32.gmra.mrb[0].mxu0 %v564
      %v1569 = vpop.f32.mrb[0].mxu0
      %v1570 = vadd.f32 %v302, %v1569
      %v1571 = vpop.f32.mrb[0].mxu0
      %1572 = vmatprep.mubr.f32.mxu0 0.0
      %1573 = vmatmul.mubr.f32.gmra.mrb[0].mxu0 %v567
      %v1574 = vpop.f32.mrb[0].mxu0
      %v1575 = vadd.f32 %v302, %v1574
      %v1576 = vpop.f32.mrb[0].mxu0
      %1577 = vmatprep.mubr.f32.mxu0 0.0
      %1578 = vmatmul.mubr.f32.gmra.mrb[0].mxu0 %v570
      %v1579 = vpop.f32.mrb[0].mxu0
      %v1580 = vadd.f32 %v302, %v1579
      %v1581 = vpop.f32.mrb[0].mxu0
      %1582 = vmatprep.mubr.f32.mxu0 0.0
      %1583 = vmatmul.mubr.f32.gmra.mrb[0].mxu0 %v573
      %v1584 = vpop.f32.mrb[0].mxu0
      %v1585 = vadd.f32 %v302, %v1584
      %v1586 = vpop.f32.mrb[0].mxu0
      %1587 = vmatprep.mubr.f32.mxu0 0.0
      %1588 = vmatmul.mubr.f32.gmra.mrb[0].mxu0 %v576
      %v1589 = vpop.f32.mrb[0].mxu0
      %v1590 = vadd.f32 %v302, %v1589
      %v1591 = vpop.f32.mrb[0].mxu0
      %1592 = vmatprep.mubr.f32.mxu0 0.0
      %1593 = vmatmul.mubr.f32.gmra.mrb[0].mxu0 %v579
      %v1594 = vpop.f32.mrb[0].mxu0
      %v1595 = vadd.f32 %v302, %v1594
      %v1596 = vpop.f32.mrb[0].mxu0
      %1597 = vmatprep.mubr.f32.mxu0 0.0
      %1598 = vmatmul.mubr.f32.gmra.mrb[0].mxu0 %v582
      %v1599 = vpop.f32.mrb[0].mxu0
      %v1600 = vadd.f32 %v302, %v1599
      %v1601 = vpop.f32.mrb[0].mxu0
      %1602 = vmatprep.mubr.f32.mxu0 0.0
      %1603 = vmatmul.mubr.f32.gmra.mrb[0].mxu0 %v585
      %v1604 = vpop.f32.mrb[0].mxu0
      %v1605 = vadd.f32 %v302, %v1604
      %v1606 = vpop.f32.mrb[0].mxu0
      %1607 = vmatprep.mubr.f32.mxu0 0.0
      %1608 = vmatmul.mubr.f32.gmra.mrb[0].mxu0 %v588
      %v1609 = vpop.f32.mrb[0].mxu0
      %v1610 = vadd.f32 %v302, %v1609
      %v1611 = vpop.f32.mrb[0].mxu0
      %1612 = vmatprep.mubr.f32.mxu0 0.0
      %1613 = vmatmul.mubr.f32.gmra.mrb[0].mxu0 %v591
      %v1614 = vpop.f32.mrb[0].mxu0
      %v1615 = vadd.f32 %v302, %v1614
      %v1616 = vpop.f32.mrb[0].mxu0
      %1617 = vmatprep.mubr.f32.mxu0 0.0
      %1618 = vmatmul.mubr.f32.gmra.mrb[0].mxu0 %v594
      %v1619 = vpop.f32.mrb[0].mxu0
      %v1620 = vadd.f32 %v302, %v1619
      %v1621 = vpop.f32.mrb[0].mxu0
      %1622 = vmatprep.mubr.f32.mxu0 0.0
      %1623 = vmatmul.mubr.f32.gmra.mrb[0].mxu0 %v597
      %v1624 = vpop.f32.mrb[0].mxu0
      %v1625 = vadd.f32 %v302, %v1624
      %v1626 = vpop.f32.mrb[0].mxu0
      %1627 = vmatprep.mubr.f32.mxu0 0.0
      %1628 = vmatmul.mubr.f32.gmra.mrb[0].mxu0 %v600
      %v1629 = vpop.f32.mrb[0].mxu0
      %v1630 = vadd.f32 %v302, %v1629
      %v1631 = vpop.f32.mrb[0].mxu0
      %1632 = vmatprep.mubr.f32.mxu0 0.0
      %1633 = vmatmul.mubr.f32.gmra.mrb[0].mxu0 %v603
      %v1634 = vpop.f32.mrb[0].mxu0
      %v1635 = vadd.f32 %v302, %v1634
      %v1636 = vpop.f32.mrb[0].mxu0
      %1637 = vmatprep.mubr.f32.mxu0 0.0
      %1638 = vmatmul.mubr.f32.gmra.mrb[0].mxu0 %v606
      %v1639 = vpop.f32.mrb[0].mxu0
      %v1640 = vadd.f32 %v302, %v1639
      %v1641 = vpop.f32.mrb[0].mxu0
      %1642 = vmatprep.mubr.f32.mxu0 0.0
      %1643 = vmatmul.mubr.f32.gmra.mrb[0].mxu0 %v609
      %v1644 = vpop.f32.mrb[0].mxu0
      %v1645 = vadd.f32 %v302, %v1644
      %v1646 = vpop.f32.mrb[0].mxu0
      %1647 = vmatprep.mubr.f32.mxu0 0.0
      %1648 = vmatmul.mubr.f32.gmra.mrb[0].mxu0 %v612
      %v1649 = vpop.f32.mrb[0].mxu0
      %v1650 = vadd.f32 %v302, %v1649
      %v1651 = vpop.f32.mrb[0].mxu0
      %1652 = vmatprep.mubr.f32.mxu0 0.0
      %1653 = vmatmul.mubr.f32.gmra.mrb[0].mxu0 %v615
      %v1654 = vpop.f32.mrb[0].mxu0
      %v1655 = vadd.f32 %v302, %v1654
      %v1656 = vpop.f32.mrb[0].mxu0
      %1657 = vmatprep.mubr.f32.mxu0 0.0
      %1658 = vmatmul.mubr.f32.gmra.mrb[0].mxu0 %v618
      %v1659 = vpop.f32.mrb[0].mxu0
      %v1660 = vadd.f32 %v302, %v1659
      %v1661 = vpop.f32.mrb[0].mxu0
      %1662 = vmatprep.mubr.f32.mxu0 0.0
      %1663 = vmatmul.mubr.f32.gmra.mrb[0].mxu0 %v621
      %v1664 = vpop.f32.mrb[0].mxu0
      %v1665 = vadd.f32 %v302, %v1664
      %v1666 = vpop.f32.mrb[0].mxu0
      %1667 = vmatprep.mubr.f32.mxu0 0.0
      %1668 = vmatmul.mubr.f32.gmra.mrb[0].mxu0 %v624
      %v1669 = vpop.f32.mrb[0].mxu0
      %v1670 = vadd.f32 %v302, %v1669
      %v1671 = vpop.f32.mrb[0].mxu0
      %1672 = vmatprep.mubr.f32.mxu0 0.0
      %1673 = vmatmul.mubr.f32.gmra.mrb[0].mxu0 %v627
      %v1674 = vpop.f32.mrb[0].mxu0
      %v1675 = vadd.f32 %v302, %v1674
      %v1676 = vpop.f32.mrb[0].mxu0
      %1677 = vmatprep.mubr.f32.mxu0 0.0
      %1678 = vmatmul.mubr.f32.gmra.mrb[0].mxu0 %v630
      %v1679 = vpop.f32.mrb[0].mxu0
      %v1680 = vadd.f32 %v302, %v1679
      %v1681 = vpop.f32.mrb[0].mxu0
      %1682 = vmatprep.mubr.f32.mxu0 0.0
      %1683 = vmatmul.mubr.f32.gmra.mrb[0].mxu0 %v633
      %v1684 = vpop.f32.mrb[0].mxu0
      %v1685 = vadd.f32 %v302, %v1684
      %v1686 = vpop.f32.mrb[0].mxu0
      %1687 = vmatprep.mubr.f32.mxu0 0.0
      %1688 = vmatmul.mubr.f32.gmra.mrb[0].mxu0 %v636
      %v1689 = vpop.f32.mrb[0].mxu0
      %v1690 = vadd.f32 %v302, %v1689
      %v1691 = vpop.f32.mrb[0].mxu0
      %1692 = vmatprep.mubr.f32.mxu0 0.0
      %1693 = vmatmul.mubr.f32.gmra.mrb[0].mxu0 %v639
      %v1694 = vpop.f32.mrb[0].mxu0
      %v1695 = vadd.f32 %v302, %v1694
      %v1696 = vpop.f32.mrb[0].mxu0
      %1697 = vmatprep.mubr.f32.mxu0 0.0
      %1698 = vmatmul.mubr.f32.gmra.mrb[0].mxu0 %v642
      %v1699 = vpop.f32.mrb[0].mxu0
      %v1700 = vadd.f32 %v302, %v1699
      %v1701 = vpop.f32.mrb[0].mxu0
      %1702 = vmatprep.mubr.f32.mxu0 0.0
      %1703 = vmatmul.mubr.f32.gmra.mrb[0].mxu0 %v645
      %v1704 = vpop.f32.mrb[0].mxu0
      %v1705 = vadd.f32 %v302, %v1704
      %v1706 = vpop.f32.mrb[0].mxu0
      %1707 = vmatprep.mubr.f32.mxu0 0.0
      %1708 = vmatmul.mubr.f32.gmra.mrb[0].mxu0 %v648
      %v1709 = vpop.f32.mrb[0].mxu0
      %v1710 = vadd.f32 %v302, %v1709
      %v1711 = vpop.f32.mrb[0].mxu0
      %1712 = vmatprep.mubr.f32.mxu0 0.0
      %1713 = vmatmul.mubr.f32.gmra.mrb[0].mxu0 %v651
      %v1714 = vpop.f32.mrb[0].mxu0
      %v1715 = vadd.f32 %v302, %v1714
      %v1716 = vpop.f32.mrb[0].mxu0
      %1717 = vmatprep.mubr.f32.mxu0 0.0
      %1718 = vmatmul.mubr.f32.gmra.mrb[0].mxu0 %v654
      %v1719 = vpop.f32.mrb[0].mxu0
      %v1720 = vadd.f32 %v302, %v1719
      %v1721 = vpop.f32.mrb[0].mxu0
      %1722 = vmatprep.mubr.f32.mxu0 0.0
      %1723 = vmatmul.mubr.f32.gmra.mrb[0].mxu0 %v657
      %v1724 = vpop.f32.mrb[0].mxu0
      %v1725 = vadd.f32 %v302, %v1724
      %v1726 = vpop.f32.mrb[0].mxu0
      %1727 = vmatprep.mubr.f32.mxu0 0.0
      %1728 = vmatmul.mubr.f32.gmra.mrb[0].mxu0 %v660
      %v1729 = vpop.f32.mrb[0].mxu0
      %v1730 = vadd.f32 %v302, %v1729
      %v1731 = vpop.f32.mrb[0].mxu0
      %1732 = vmatprep.mubr.f32.mxu0 0.0
      %1733 = vmatmul.mubr.f32.gmra.mrb[0].mxu0 %v663
      %v1734 = vpop.f32.mrb[0].mxu0
      %v1735 = vadd.f32 %v302, %v1734
      %v1736 = vpop.f32.mrb[0].mxu0
      %1737 = vmatprep.mubr.f32.mxu0 0.0
      %1738 = vmatmul.mubr.f32.gmra.mrb[0].mxu0 %v666
      %v1739 = vpop.f32.mrb[0].mxu0
      %v1740 = vadd.f32 %v302, %v1739
      %v1741 = vpop.f32.mrb[0].mxu0
      %1742 = vmatprep.mubr.f32.mxu0 0.0
      %1743 = vmatmul.mubr.f32.gmra.mrb[0].mxu0 %v669
      %v1744 = vpop.f32.mrb[0].mxu0
      %v1745 = vadd.f32 %v302, %v1744
      %v1746 = vpop.f32.mrb[0].mxu0
      %1747 = vmatprep.mubr.f32.mxu0 0.0
      %1748 = vmatmul.mubr.f32.gmra.mrb[0].mxu0 %v672
      %v1749 = vpop.f32.mrb[0].mxu0
      %v1750 = vadd.f32 %v302, %v1749
      %v1751 = vpop.f32.mrb[0].mxu0
      %1752 = vmatprep.mubr.f32.mxu0 0.0
      %1753 = vmatmul.mubr.f32.gmra.mrb[0].mxu0 %v675
      %v1754 = vpop.f32.mrb[0].mxu0
      %v1755 = vadd.f32 %v302, %v1754
      %v1756 = vpop.f32.mrb[0].mxu0
      %1757 = vmatprep.mubr.f32.mxu0 0.0
      %1758 = vmatmul.mubr.f32.gmra.mrb[0].mxu0 %v678
      %v1759 = vpop.f32.mrb[0].mxu0
      %v1760 = vadd.f32 %v302, %v1759
      %v1761 = vpop.f32.mrb[0].mxu0
      %1762 = vmatprep.mubr.f32.mxu0 0.0
      %1763 = vmatmul.mubr.f32.gmra.mrb[0].mxu0 %v681
      %v1764 = vpop.f32.mrb[0].mxu0
      %v1765 = vadd.f32 %v302, %v1764
      %v1766 = vpop.f32.mrb[0].mxu0
      %1767 = vmatprep.mubr.f32.mxu0 0.0
      %1768 = vmatmul.mubr.f32.gmra.mrb[0].mxu0 %v684
      %v1769 = vpop.f32.mrb[0].mxu0
      %v1770 = vadd.f32 %v302, %v1769
      %v1771 = vpop.f32.mrb[0].mxu0
      %1772 = vmatprep.mubr.f32.mxu0 0.0
      %1773 = vmatmul.mubr.f32.gmra.mrb[0].mxu0 %v687
      %v1774 = vpop.f32.mrb[0].mxu0
      %v1775 = vadd.f32 %v302, %v1774
      %v1776 = vpop.f32.mrb[0].mxu0
      %1777 = vmatprep.mubr.f32.mxu0 0.0
      %1778 = vmatmul.mubr.f32.gmra.mrb[0].mxu0 %v690
      %v1779 = vpop.f32.mrb[0].mxu0
      %v1780 = vadd.f32 %v302, %v1779
      %v1781 = vpop.f32.mrb[0].mxu0
      %1782 = vmatprep.mubr.f32.mxu0 0.0
      %1783 = vmatmul.mubr.f32.gmra.mrb[0].mxu0 %v693
      %v1784 = vpop.f32.mrb[0].mxu0
      %v1785 = vadd.f32 %v302, %v1784
      %v1786 = vpop.f32.mrb[0].mxu0
      %1787 = vmatprep.mubr.f32.mxu0 0.0
      %1788 = vmatmul.mubr.f32.gmra.mrb[0].mxu0 %v696
      %v1789 = vpop.f32.mrb[0].mxu0
      %v1790 = vadd.f32 %v302, %v1789
      %v1791 = vpop.f32.mrb[0].mxu0
      %1792 = vmatprep.mubr.f32.mxu0 0.0
      %1793 = vmatmul.mubr.f32.gmra.mrb[0].mxu0 %v699
      %v1794 = vpop.f32.mrb[0].mxu0
      %v1795 = vadd.f32 %v302, %v1794
      %v1796 = vpop.f32.mrb[0].mxu0
      %1797 = vmatprep.mubr.f32.mxu0 0.0
      %1798 = vmatmul.mubr.f32.gmra.mrb[0].mxu0 %v702
      %v1799 = vpop.f32.mrb[0].mxu0
      %v1800 = vadd.f32 %v302, %v1799
      %v1801 = vpop.f32.mrb[0].mxu0
      %1802 = vmatprep.mubr.f32.mxu0 0.0
      %1803 = vmatmul.mubr.f32.gmra.mrb[0].mxu0 %v705
      %v1804 = vpop.f32.mrb[0].mxu0
      %v1805 = vadd.f32 %v302, %v1804
      %v1806 = vpop.f32.mrb[0].mxu0
      %1807 = vmatprep.mubr.f32.mxu0 0.0
      %1808 = vmatmul.mubr.f32.gmra.mrb[0].mxu0 %v708
      %v1809 = vpop.f32.mrb[0].mxu0
      %v1810 = vadd.f32 %v302, %v1809
      %v1811 = vpop.f32.mrb[0].mxu0
      %1812 = vmatprep.mubr.f32.mxu0 0.0
      %1813 = vmatmul.mubr.f32.gmra.mrb[0].mxu0 %v711
      %v1814 = vpop.f32.mrb[0].mxu0
      %v1815 = vadd.f32 %v302, %v1814
      %v1816 = vpop.f32.mrb[0].mxu0
      %1817 = vmatprep.mubr.f32.mxu0 0.0
      %1818 = vmatmul.mubr.f32.gmra.mrb[0].mxu0 %v714
      %v1819 = vpop.f32.mrb[0].mxu0
      %v1820 = vadd.f32 %v302, %v1819
      %v1821 = vpop.f32.mrb[0].mxu0
      %1822 = vmatprep.mubr.f32.mxu0 0.0
      %1823 = vmatmul.mubr.f32.gmra.mrb[0].mxu0 %v717
      %v1824 = vpop.f32.mrb[0].mxu0
      %v1825 = vadd.f32 %v302, %v1824
      %v1826 = vpop.f32.mrb[0].mxu0
      %1827 = vmatprep.mubr.f32.mxu0 0.0
      %1828 = vmatmul.mubr.f32.gmra.mrb[0].mxu0 %v720
      %v1829 = vpop.f32.mrb[0].mxu0
      %v1830 = vadd.f32 %v302, %v1829
      %v1831 = vpop.f32.mrb[0].mxu0
      %1832 = vmatprep.mubr.f32.mxu0 0.0
      %1833 = vmatmul.mubr.f32.gmra.mrb[0].mxu0 %v723
      %v1834 = vpop.f32.mrb[0].mxu0
      %v1835 = vadd.f32 %v302, %v1834
      %v1836 = vpop.f32.mrb[0].mxu0
      %1837 = vmatprep.mubr.f32.mxu0 0.0
      %1838 = vmatmul.mubr.f32.gmra.mrb[0].mxu0 %v726
      %v1839 = vpop.f32.mrb[0].mxu0
      %v1840 = vadd.f32 %v302, %v1839
      %v1841 = vpop.f32.mrb[0].mxu0
      %1842 = vmatprep.mubr.f32.mxu0 0.0
      %1843 = vmatmul.mubr.f32.gmra.mrb[0].mxu0 %v729
      %v1844 = vpop.f32.mrb[0].mxu0
      %v1845 = vadd.f32 %v302, %v1844
      %v1846 = vpop.f32.mrb[0].mxu0
      %1847 = vmatprep.mubr.f32.mxu0 0.0
      %1848 = vmatmul.mubr.f32.gmra.mrb[0].mxu0 %v732
      %v1849 = vpop.f32.mrb[0].mxu0
      %v1850 = vadd.f32 %v302, %v1849
      %v1851 = vpop.f32.mrb[0].mxu0
      %1852 = vmatprep.mubr.f32.mxu0 0.0
      %1853 = vmatmul.mubr.f32.gmra.mrb[0].mxu0 %v735
      %v1854 = vpop.f32.mrb[0].mxu0
      %v1855 = vadd.f32 %v302, %v1854
      %v1856 = vpop.f32.mrb[0].mxu0
      %1857 = vmatprep.mubr.f32.mxu0 0.0
      %1858 = vmatmul.mubr.f32.gmra.mrb[0].mxu0 %v738
      %v1859 = vpop.f32.mrb[0].mxu0
      %v1860 = vadd.f32 %v302, %v1859
      %v1861 = vpop.f32.mrb[0].mxu0
      %1862 = vmatprep.mubr.f32.mxu0 0.0
      %1863 = vmatmul.mubr.f32.gmra.mrb[0].mxu0 %v741
      %v1864 = vpop.f32.mrb[0].mxu0
      %v1865 = vadd.f32 %v302, %v1864
      %v1866 = vpop.f32.mrb[0].mxu0
      %1867 = vmatprep.mubr.f32.mxu0 0.0
      %1868 = vmatmul.mubr.f32.gmra.mrb[0].mxu0 %v744
      %v1869 = vpop.f32.mrb[0].mxu0
      %v1870 = vadd.f32 %v302, %v1869
      %v1871 = vpop.f32.mrb[0].mxu0
      %1872 = vmatprep.mubr.f32.mxu0 0.0
      %1873 = vmatmul.mubr.f32.gmra.mrb[0].mxu0 %v747
      %v1874 = vpop.f32.mrb[0].mxu0
      %v1875 = vadd.f32 %v302, %v1874
      %v1876 = vpop.f32.mrb[0].mxu0
      %1877 = vmatprep.mubr.f32.mxu0 0.0
      %1878 = vmatmul.mubr.f32.gmra.mrb[0].mxu0 %v750
      %v1879 = vpop.f32.mrb[0].mxu0
      %v1880 = vadd.f32 %v302, %v1879
      %v1881 = vpop.f32.mrb[0].mxu0
      %1882 = vmatprep.mubr.f32.mxu0 0.0
      %1883 = vmatmul.mubr.f32.gmra.mrb[0].mxu0 %v753
      %v1884 = vpop.f32.mrb[0].mxu0
      %v1885 = vadd.f32 %v302, %v1884
      %v1886 = vpop.f32.mrb[0].mxu0
      %1887 = vmatprep.mubr.f32.mxu0 0.0
      %1888 = vmatmul.mubr.f32.gmra.mrb[0].mxu0 %v756
      %v1889 = vpop.f32.mrb[0].mxu0
      %v1890 = vadd.f32 %v302, %v1889
      %v1891 = vpop.f32.mrb[0].mxu0
      %1892 = vmatprep.mubr.f32.mxu0 0.0
      %1893 = vmatmul.mubr.f32.gmra.mrb[0].mxu0 %v759
      %v1894 = vpop.f32.mrb[0].mxu0
      %v1895 = vadd.f32 %v302, %v1894
      %v1896 = vpop.f32.mrb[0].mxu0
      %1897 = vmatprep.mubr.f32.mxu0 0.0
      %1898 = vmatmul.mubr.f32.gmra.mrb[0].mxu0 %v762
      %v1899 = vpop.f32.mrb[0].mxu0
      %v1900 = vadd.f32 %v302, %v1899
      %v1901 = vpop.f32.mrb[0].mxu0
      %1902 = vmatprep.mubr.f32.mxu0 0.0
      %1903 = vmatmul.mubr.f32.gmra.mrb[0].mxu0 %v765
      %v1904 = vpop.f32.mrb[0].mxu0
      %v1905 = vadd.f32 %v302, %v1904
      %v1906 = vpop.f32.mrb[0].mxu0
      %1907 = vmatprep.mubr.f32.mxu0 0.0
      %1908 = vmatmul.mubr.f32.gmra.mrb[0].mxu0 %v768
      %v1909 = vpop.f32.mrb[0].mxu0
      %v1910 = vadd.f32 %v302, %v1909
      %v1911 = vpop.f32.mrb[0].mxu0
      %1912 = vmatprep.mubr.f32.mxu0 0.0
      %1913 = vmatmul.mubr.f32.gmra.mrb[0].mxu0 %v771
      %v1914 = vpop.f32.mrb[0].mxu0
      %v1915 = vadd.f32 %v302, %v1914
      %v1916 = vpop.f32.mrb[0].mxu0
      %1917 = vmatprep.mubr.f32.mxu0 0.0
      %1918 = vmatmul.mubr.f32.gmra.mrb[0].mxu0 %v774
      %v1919 = vpop.f32.mrb[0].mxu0
      %v1920 = vadd.f32 %v302, %v1919
      %v1921 = vpop.f32.mrb[0].mxu0
      %1922 = vmatprep.mubr.f32.mxu0 0.0
      %1923 = vmatmul.mubr.f32.gmra.mrb[0].mxu0 %v777
      %v1924 = vpop.f32.mrb[0].mxu0
      %v1925 = vadd.f32 %v302, %v1924
      %v1926 = vpop.f32.mrb[0].mxu0
      %1927 = vmatprep.mubr.f32.mxu0 0.0
      %1928 = vmatmul.mubr.f32.gmra.mrb[0].mxu0 %v780
      %v1929 = vpop.f32.mrb[0].mxu0
      %v1930 = vadd.f32 %v302, %v1929
      %v1931 = vpop.f32.mrb[0].mxu0
      %1932 = vmatprep.mubr.f32.mxu0 0.0
      %1933 = vmatmul.mubr.f32.gmra.mrb[0].mxu0 %v783
      %v1934 = vpop.f32.mrb[0].mxu0
      %v1935 = vadd.f32 %v302, %v1934
      %v1936 = vpop.f32.mrb[0].mxu0
      %1937 = vmatprep.mubr.f32.mxu0 0.0
      %1938 = vmatmul.mubr.f32.gmra.mrb[0].mxu0 %v786
      %v1939 = vpop.f32.mrb[0].mxu0
      %v1940 = vadd.f32 %v302, %v1939
      %v1941 = vpop.f32.mrb[0].mxu0
      %1942 = vmatprep.mubr.f32.mxu0 0.0
      %1943 = vmatmul.mubr.f32.gmra.mrb[0].mxu0 %v789
      %v1944 = vpop.f32.mrb[0].mxu0
      %v1945 = vadd.f32 %v302, %v1944
      %v1946 = vpop.f32.mrb[0].mxu0
      %1947 = vmatprep.mubr.f32.mxu0 0.0
      %1948 = vmatmul.mubr.f32.gmra.mrb[0].mxu0 %v792
      %v1949 = vpop.f32.mrb[0].mxu0
      %v1950 = vadd.f32 %v302, %v1949
      %v1951 = vpop.f32.mrb[0].mxu0
      %1952 = vmatprep.mubr.f32.mxu0 0.0
      %1953 = vmatmul.mubr.f32.gmra.mrb[0].mxu0 %v795
      %v1954 = vpop.f32.mrb[0].mxu0
      %v1955 = vadd.f32 %v302, %v1954
      %v1956 = vpop.f32.mrb[0].mxu0
      %1957 = vmatprep.mubr.f32.mxu0 0.0
      %1958 = vmatmul.mubr.f32.gmra.mrb[0].mxu0 %v798
      %v1959 = vpop.f32.mrb[0].mxu0
      %v1960 = vadd.f32 %v302, %v1959
      %v1961 = vpop.f32.mrb[0].mxu0
      %1962 = vmatprep.mubr.f32.mxu0 0.0
      %1963 = vmatmul.mubr.f32.gmra.mrb[0].mxu0 %v801
      %v1964 = vpop.f32.mrb[0].mxu0
      %v1965 = vadd.f32 %v302, %v1964
      %v1966 = vpop.f32.mrb[0].mxu0
      %1967 = vmatprep.mubr.f32.mxu0 0.0
      %1968 = vmatmul.mubr.f32.gmra.mrb[0].mxu0 %v804
      %v1969 = vpop.f32.mrb[0].mxu0
      %v1970 = vadd.f32 %v302, %v1969
      %v1971 = vpop.f32.mrb[0].mxu0
      %1972 = vmatprep.mubr.f32.mxu0 0.0
      %1973 = vmatmul.mubr.f32.gmra.mrb[0].mxu0 %v807
      %v1974 = vpop.f32.mrb[0].mxu0
      %v1975 = vadd.f32 %v302, %v1974
      %v1976 = vpop.f32.mrb[0].mxu0
      %1977 = vmatprep.mubr.f32.mxu0 0.0
      %1978 = vmatmul.mubr.f32.gmra.mrb[0].mxu0 %v810
      %v1979 = vpop.f32.mrb[0].mxu0
      %v1980 = vadd.f32 %v302, %v1979
      %v1981 = vpop.f32.mrb[0].mxu0
      %1982 = vmatprep.mubr.f32.mxu0 0.0
      %1983 = vmatmul.mubr.f32.gmra.mrb[0].mxu0 %v813
      %v1984 = vpop.f32.mrb[0].mxu0
      %v1985 = vadd.f32 %v302, %v1984
      %v1986 = vpop.f32.mrb[0].mxu0
      %1987 = vmatprep.mubr.f32.mxu0 0.0
      %1988 = vmatmul.mubr.f32.gmra.mrb[0].mxu0 %v816
      %v1989 = vpop.f32.mrb[0].mxu0
      %v1990 = vadd.f32 %v302, %v1989
      %v1991 = vpop.f32.mrb[0].mxu0
      %1992 = vmatprep.mubr.f32.mxu0 0.0
      %1993 = vmatmul.mubr.f32.gmra.mrb[0].mxu0 %v819
      %v1994 = vpop.f32.mrb[0].mxu0
      %v1995 = vadd.f32 %v302, %v1994
      %v1996 = vpop.f32.mrb[0].mxu0
      %1997 = vmatprep.mubr.f32.mxu0 0.0
      %1998 = vmatmul.mubr.f32.gmra.mrb[0].mxu0 %v822
      %v1999 = vpop.f32.mrb[0].mxu0
      %v2000 = vadd.f32 %v302, %v1999
      %v2001 = vpop.f32.mrb[0].mxu0
      %2002 = vmatprep.mubr.f32.mxu0 0.0
      %2003 = vmatmul.mubr.f32.gmra.mrb[0].mxu0 %v825
      %v2004 = vpop.f32.mrb[0].mxu0
      %v2005 = vadd.f32 %v302, %v2004
      %v2006 = vpop.f32.mrb[0].mxu0
      %2007 = vmatprep.mubr.f32.mxu0 0.0
      %2008 = vmatmul.mubr.f32.gmra.mrb[0].mxu0 %v828
      %v2009 = vpop.f32.mrb[0].mxu0
      %v2010 = vadd.f32 %v302, %v2009
      %v2011 = vpop.f32.mrb[0].mxu0
      %2012 = vmatprep.mubr.f32.mxu0 0.0
      %2013 = vmatmul.mubr.f32.gmra.mrb[0].mxu0 %v831
      %v2014 = vpop.f32.mrb[0].mxu0
      %v2015 = vadd.f32 %v302, %v2014
      %v2016 = vpop.f32.mrb[0].mxu0
      %2017 = vmatprep.mubr.f32.mxu0 0.0
      %2018 = vmatmul.mubr.f32.gmra.mrb[0].mxu0 %v834
      %v2019 = vpop.f32.mrb[0].mxu0
      %v2020 = vadd.f32 %v302, %v2019
      %v2021 = vpop.f32.mrb[0].mxu0
      %2022 = vmatprep.mubr.f32.mxu0 0.0
      %2023 = vmatmul.mubr.f32.gmra.mrb[0].mxu0 %v837
      %v2024 = vpop.f32.mrb[0].mxu0
      %v2025 = vadd.f32 %v302, %v2024
      %v2026 = vpop.f32.mrb[0].mxu0
      %2027 = vmatprep.mubr.f32.mxu0 0.0
      %2028 = vmatmul.mubr.f32.gmra.mrb[0].mxu0 %v840
      %v2029 = vpop.f32.mrb[0].mxu0
      %v2030 = vadd.f32 %v302, %v2029
      %v2031 = vpop.f32.mrb[0].mxu0
      %2032 = vmatprep.mubr.f32.mxu0 0.0
      %2033 = vmatmul.mubr.f32.gmra.mrb[0].mxu0 %v843
      %v2034 = vpop.f32.mrb[0].mxu0
      %v2035 = vadd.f32 %v302, %v2034
      %v2036 = vpop.f32.mrb[0].mxu0
      %2037 = vmatprep.mubr.f32.mxu0 0.0
      %2038 = vmatmul.mubr.f32.gmra.mrb[0].mxu0 %v846
      %v2039 = vpop.f32.mrb[0].mxu0
      %v2040 = vadd.f32 %v302, %v2039
      %v2041 = vpop.f32.mrb[0].mxu0
      %2042 = vmatprep.mubr.f32.mxu0 0.0
      %2043 = vmatmul.mubr.f32.gmra.mrb[0].mxu0 %v849
      %v2044 = vpop.f32.mrb[0].mxu0
      %v2045 = vadd.f32 %v302, %v2044
      %v2046 = vpop.f32.mrb[0].mxu0
      %2047 = vmatprep.mubr.f32.mxu0 0.0
      %2048 = vmatmul.mubr.f32.gmra.mrb[0].mxu0 %v852
      %v2049 = vpop.f32.mrb[0].mxu0
      %v2050 = vadd.f32 %v302, %v2049
      %v2051 = vpop.f32.mrb[0].mxu0
      %2052 = vmatprep.mubr.f32.mxu0 0.0
      %2053 = vmatmul.mubr.f32.gmra.mrb[0].mxu0 %v855
      %v2054 = vpop.f32.mrb[0].mxu0
      %v2055 = vadd.f32 %v302, %v2054
      %v2056 = vpop.f32.mrb[0].mxu0
      %2057 = vmatprep.mubr.f32.mxu0 0.0
      %2058 = vmatmul.mubr.f32.gmra.mrb[0].mxu0 %v858
      %v2059 = vpop.f32.mrb[0].mxu0
      %v2060 = vadd.f32 %v302, %v2059
      %v2061 = vpop.f32.mrb[0].mxu0
      %2062 = vmatprep.mubr.f32.mxu0 0.0
      %2063 = vmatmul.mubr.f32.gmra.mrb[0].mxu0 %v861
      %v2064 = vpop.f32.mrb[0].mxu0
      %v2065 = vadd.f32 %v302, %v2064
      %v2066 = vpop.f32.mrb[0].mxu0
      %2067 = vmatprep.mubr.f32.mxu0 0.0
      %2068 = vmatmul.mubr.f32.gmra.mrb[0].mxu0 %v864
      %v2069 = vpop.f32.mrb[0].mxu0
      %v2070 = vadd.f32 %v302, %v2069
      %v2071 = vpop.f32.mrb[0].mxu0
      %2072 = vmatprep.mubr.f32.mxu0 0.0
      %2073 = vmatmul.mubr.f32.gmra.mrb[0].mxu0 %v867
      %v2074 = vpop.f32.mrb[0].mxu0
      %v2075 = vadd.f32 %v302, %v2074
      %v2076 = vpop.f32.mrb[0].mxu0
      %2077 = vmatprep.mubr.f32.mxu0 0.0
      %2078 = vmatmul.mubr.f32.gmra.mrb[0].mxu0 %v870
      %v2079 = vpop.f32.mrb[0].mxu0
      %v2080 = vadd.f32 %v302, %v2079
      %v2081 = vpop.f32.mrb[0].mxu0
      %2082 = vmatprep.mubr.f32.mxu0 0.0
      %2083 = vmatmul.mubr.f32.gmra.mrb[0].mxu0 %v873
      %v2084 = vpop.f32.mrb[0].mxu0
      %v2085 = vadd.f32 %v302, %v2084
      %v2086 = vpop.f32.mrb[0].mxu0
      %2087 = vmatprep.mubr.f32.mxu0 0.0
      %2088 = vmatmul.mubr.f32.gmra.mrb[0].mxu0 %v876
      %v2089 = vpop.f32.mrb[0].mxu0
      %v2090 = vadd.f32 %v302, %v2089
      %v2091 = vpop.f32.mrb[0].mxu0
      %2092 = vmatprep.mubr.f32.mxu0 0.0
      %2093 = vmatmul.mubr.f32.gmra.mrb[0].mxu0 %v879
      %v2094 = vpop.f32.mrb[0].mxu0
      %v2095 = vadd.f32 %v302, %v2094
      %v2096 = vpop.f32.mrb[0].mxu0
      %2097 = vmatprep.mubr.f32.mxu0 0.0
      %2098 = vmatmul.mubr.f32.gmra.mrb[0].mxu0 %v882
      %v2099 = vpop.f32.mrb[0].mxu0
      %v2100 = vadd.f32 %v302, %v2099
      %v2101 = vpop.f32.mrb[0].mxu0
      %2102 = vmatprep.mubr.f32.mxu0 0.0
      %2103 = vmatmul.mubr.f32.gmra.mrb[0].mxu0 %v885
      %v2104 = vpop.f32.mrb[0].mxu0
      %v2105 = vadd.f32 %v302, %v2104
      %v2106 = vpop.f32.mrb[0].mxu0
      %2107 = vmatprep.mubr.f32.mxu0 0.0
      %2108 = vmatmul.mubr.f32.gmra.mrb[0].mxu0 %v888
      %v2109 = vpop.f32.mrb[0].mxu0
      %v2110 = vadd.f32 %v302, %v2109
      %v2111 = vpop.f32.mrb[0].mxu0
      %2112 = vmatprep.mubr.f32.mxu0 0.0
      %2113 = vmatmul.mubr.f32.gmra.mrb[0].mxu0 %v891
      %v2114 = vpop.f32.mrb[0].mxu0
      %v2115 = vadd.f32 %v302, %v2114
      %v2116 = vpop.f32.mrb[0].mxu0
      %2117 = vmatprep.mubr.f32.mxu0 0.0
      %2118 = vmatmul.mubr.f32.gmra.mrb[0].mxu0 %v894
      %v2119 = vpop.f32.mrb[0].mxu0
      %v2120 = vadd.f32 %v302, %v2119
      %v2121 = vpop.f32.mrb[0].mxu0
      %2122 = vmatprep.mubr.f32.mxu0 0.0
      %2123 = vmatmul.mubr.f32.gmra.mrb[0].mxu0 %v897
      %v2124 = vpop.f32.mrb[0].mxu0
      %v2125 = vadd.f32 %v302, %v2124
      %v2126 = vpop.f32.mrb[0].mxu0
      %2127 = vmatprep.mubr.f32.mxu0 0.0
      %2128 = vmatmul.mubr.f32.gmra.mrb[0].mxu0 %v900
      %v2129 = vpop.f32.mrb[0].mxu0
      %v2130 = vadd.f32 %v302, %v2129
      %v2131 = vpop.f32.mrb[0].mxu0
      %2132 = vmatprep.mubr.f32.mxu0 0.0
      %2133 = vmatmul.mubr.f32.gmra.mrb[0].mxu0 %v903
      %v2134 = vpop.f32.mrb[0].mxu0
      %v2135 = vadd.f32 %v302, %v2134
      %v2136 = vpop.f32.mrb[0].mxu0
      %2137 = vmatprep.mubr.f32.mxu0 0.0
      %2138 = vmatmul.mubr.f32.gmra.mrb[0].mxu0 %v906
      %v2139 = vpop.f32.mrb[0].mxu0
      %v2140 = vadd.f32 %v302, %v2139
      %v2141 = vpop.f32.mrb[0].mxu0
      %2142 = vmatprep.mubr.f32.mxu0 0.0
      %2143 = vmatmul.mubr.f32.gmra.mrb[0].mxu0 %v909
      %v2144 = vpop.f32.mrb[0].mxu0
      %v2145 = vadd.f32 %v302, %v2144
      %v2146 = vpop.f32.mrb[0].mxu0
      %2147 = vmatprep.mubr.f32.mxu0 0.0
      %2148 = vmatmul.mubr.f32.gmra.mrb[0].mxu0 %v912
      %v2149 = vpop.f32.mrb[0].mxu0
      %v2150 = vadd.f32 %v302, %v2149
      %v2151 = vpop.f32.mrb[0].mxu0
      %2152 = vmatprep.mubr.f32.mxu0 0.0
      %2153 = vmatmul.mubr.f32.gmra.mrb[0].mxu0 %v915
      %v2154 = vpop.f32.mrb[0].mxu0
      %v2155 = vadd.f32 %v302, %v2154
      %v2156 = vpop.f32.mrb[0].mxu0
      %2157 = vmatprep.mubr.f32.mxu0 0.0
      %2158 = vmatmul.mubr.f32.gmra.mrb[0].mxu0 %v918
      %v2159 = vpop.f32.mrb[0].mxu0
      %v2160 = vadd.f32 %v302, %v2159
      %v2161 = vpop.f32.mrb[0].mxu0
      %2162 = vmatprep.mubr.f32.mxu0 0.0
      %2163 = vmatmul.mubr.f32.gmra.mrb[0].mxu0 %v921
      %v2164 = vpop.f32.mrb[0].mxu0
      %v2165 = vadd.f32 %v302, %v2164
      %v2166 = vpop.f32.mrb[0].mxu0
      %2167 = vmatprep.mubr.f32.mxu0 0.0
      %2168 = vmatmul.mubr.f32.gmra.mrb[0].mxu0 %v924
      %v2169 = vpop.f32.mrb[0].mxu0
      %v2170 = vadd.f32 %v302, %v2169
      %v2171 = vpop.f32.mrb[0].mxu0
      %2172 = vmatprep.mubr.f32.mxu0 0.0
      %2173 = vmatmul.mubr.f32.gmra.mrb[0].mxu0 %v927
      %v2174 = vpop.f32.mrb[0].mxu0
      %v2175 = vadd.f32 %v302, %v2174
      %v2176 = vpop.f32.mrb[0].mxu0
      %2177 = vmatprep.mubr.f32.mxu0 0.0
      %2178 = vmatmul.mubr.f32.gmra.mrb[0].mxu0 %v930
      %v2179 = vpop.f32.mrb[0].mxu0
      %v2180 = vadd.f32 %v302, %v2179
      %v2181 = vpop.f32.mrb[0].mxu0
      %2182 = vmatprep.mubr.f32.mxu0 0.0
      %2183 = vmatmul.mubr.f32.gmra.mrb[0].mxu0 %v933
      %v2184 = vpop.f32.mrb[0].mxu0
      %v2185 = vadd.f32 %v302, %v2184
      %v2186 = vpop.f32.mrb[0].mxu0
      %2187 = vmatprep.mubr.f32.mxu0 0.0
      %2188 = vmatmul.mubr.f32.gmra.mrb[0].mxu0 %v936
      %v2189 = vpop.f32.mrb[0].mxu0
      %v2190 = vadd.f32 %v302, %v2189
      %v2191 = vpop.f32.mrb[0].mxu0
      %2192 = vmatprep.mubr.f32.mxu0 0.0
      %2193 = vmatmul.mubr.f32.gmra.mrb[0].mxu0 %v939
      %v2194 = vpop.f32.mrb[0].mxu0
      %v2195 = vadd.f32 %v302, %v2194
      %v2196 = vpop.f32.mrb[0].mxu0
      %2197 = vmatprep.mubr.f32.mxu0 0.0
      %2198 = vmatmul.mubr.f32.gmra.mrb[0].mxu0 %v942
      %v2199 = vpop.f32.mrb[0].mxu0
      %v2200 = vadd.f32 %v302, %v2199
      %v2201 = vpop.f32.mrb[0].mxu0
      %2202 = vmatprep.mubr.f32.mxu0 0.0
      %2203 = vmatmul.mubr.f32.gmra.mrb[0].mxu0 %v945
      %v2204 = vpop.f32.mrb[0].mxu0
      %v2205 = vadd.f32 %v302, %v2204
      %v2206 = vpop.f32.mrb[0].mxu0
      %2207 = vmatprep.mubr.f32.mxu0 0.0
      %2208 = vmatmul.mubr.f32.gmra.mrb[0].mxu0 %v948
      %v2209 = vpop.f32.mrb[0].mxu0
      %v2210 = vadd.f32 %v302, %v2209
      %v2211 = vpop.f32.mrb[0].mxu0
      %2212 = vmatprep.mubr.f32.mxu0 0.0
      %2213 = vmatmul.mubr.f32.gmra.mrb[0].mxu0 %v951
      %v2214 = vpop.f32.mrb[0].mxu0
      %v2215 = vadd.f32 %v302, %v2214
      %v2216 = vpop.f32.mrb[0].mxu0
      %2217 = vmatprep.mubr.f32.mxu0 0.0
      %2218 = vmatmul.mubr.f32.gmra.mrb[0].mxu0 %v954
      %v2219 = vpop.f32.mrb[0].mxu0
      %v2220 = vadd.f32 %v302, %v2219
      %v2221 = vpop.f32.mrb[0].mxu0
      %2222 = vmatprep.mubr.f32.mxu0 0.0
      %2223 = vmatmul.mubr.f32.gmra.mrb[0].mxu0 %v957
      %v2224 = vpop.f32.mrb[0].mxu0
      %v2225 = vadd.f32 %v302, %v2224
      %v2226 = vpop.f32.mrb[0].mxu0
      %2227 = vmatprep.mubr.f32.mxu0 0.0
      %2228 = vmatmul.mubr.f32.gmra.mrb[0].mxu0 %v960
      %v2229 = vpop.f32.mrb[0].mxu0
      %v2230 = vadd.f32 %v302, %v2229
      %v2231 = vpop.f32.mrb[0].mxu0
      %2232 = vmatprep.mubr.f32.mxu0 0.0
      %2233 = vmatmul.mubr.f32.gmra.mrb[0].mxu0 %v963
      %v2234 = vpop.f32.mrb[0].mxu0
      %v2235 = vadd.f32 %v302, %v2234
      %v2236 = vpop.f32.mrb[0].mxu0
      %2237 = vmatprep.mubr.f32.mxu0 0.0
      %2238 = vmatmul.mubr.f32.gmra.mrb[0].mxu0 %v966
      %v2239 = vpop.f32.mrb[0].mxu0
      %v2240 = vadd.f32 %v302, %v2239
      %v2241 = vpop.f32.mrb[0].mxu0
      %2242 = vmatprep.mubr.f32.mxu0 0.0
      %2243 = vmatmul.mubr.f32.gmra.mrb[0].mxu0 %v969
      %v2244 = vpop.f32.mrb[0].mxu0
      %v2245 = vadd.f32 %v302, %v2244
      %v2246 = vpop.f32.mrb[0].mxu0
      %2247 = vmatprep.mubr.f32.mxu0 0.0
      %2248 = vmatmul.mubr.f32.gmra.mrb[0].mxu0 %v972
      %v2249 = vpop.f32.mrb[0].mxu0
      %v2250 = vadd.f32 %v302, %v2249
      %v2251 = vpop.f32.mrb[0].mxu0
      %2252 = vmatprep.mubr.f32.mxu0 0.0
      %2253 = vmatmul.mubr.f32.gmra.mrb[0].mxu0 %v975
      %v2254 = vpop.f32.mrb[0].mxu0
      %v2255 = vadd.f32 %v302, %v2254
      %v2256 = vpop.f32.mrb[0].mxu0
      %2257 = vmatprep.mubr.f32.mxu0 0.0
      %2258 = vmatmul.mubr.f32.gmra.mrb[0].mxu0 %v978
      %v2259 = vpop.f32.mrb[0].mxu0
      %v2260 = vadd.f32 %v302, %v2259
      %v2261 = vpop.f32.mrb[0].mxu0
      %2262 = vmatprep.mubr.f32.mxu0 0.0
      %2263 = vmatmul.mubr.f32.gmra.mrb[0].mxu0 %v981
      %v2264 = vpop.f32.mrb[0].mxu0
      %v2265 = vadd.f32 %v302, %v2264
      %v2266 = vpop.f32.mrb[0].mxu0
      %2267 = vmatprep.mubr.f32.mxu0 0.0
      %2268 = vmatmul.mubr.f32.gmra.mrb[0].mxu0 %v984
      %v2269 = vpop.f32.mrb[0].mxu0
      %v2270 = vadd.f32 %v302, %v2269
      %v2271 = vpop.f32.mrb[0].mxu0
      %2272 = vmatprep.mubr.f32.mxu0 0.0
      %2273 = vmatmul.mubr.f32.gmra.mrb[0].mxu0 %v987
      %v2274 = vpop.f32.mrb[0].mxu0
      %v2275 = vadd.f32 %v302, %v2274
      %v2276 = vpop.f32.mrb[0].mxu0
      %2277 = vmatprep.mubr.f32.mxu0 0.0
      %2278 = vmatmul.mubr.f32.gmra.mrb[0].mxu0 %v990
      %v2279 = vpop.f32.mrb[0].mxu0
      %v2280 = vadd.f32 %v302, %v2279
      %v2281 = vpop.f32.mrb[0].mxu0
      %2282 = vmatprep.mubr.f32.mxu0 0.0
      %2283 = vmatmul.mubr.f32.gmra.mrb[0].mxu0 %v993
      %v2284 = vpop.f32.mrb[0].mxu0
      %v2285 = vadd.f32 %v302, %v2284
      %v2286 = vpop.f32.mrb[0].mxu0
      %2287 = vmatprep.mubr.f32.mxu0 0.0
      %2288 = vmatmul.mubr.f32.gmra.mrb[0].mxu0 %v996
      %v2289 = vpop.f32.mrb[0].mxu0
      %v2290 = vadd.f32 %v302, %v2289
      %v2291 = vpop.f32.mrb[0].mxu0
      %2292 = vmatprep.mubr.f32.mxu0 0.0
      %2293 = vmatmul.mubr.f32.gmra.mrb[0].mxu0 %v999
      %v2294 = vpop.f32.mrb[0].mxu0
      %v2295 = vadd.f32 %v302, %v2294
      %v2296 = vpop.f32.mrb[0].mxu0
      %2297 = vmatprep.mubr.f32.mxu0 0.0
      %2298 = vmatmul.mubr.f32.gmra.mrb[0].mxu0 %v1002
      %v2299 = vpop.f32.mrb[0].mxu0
      %v2300 = vadd.f32 %v302, %v2299
      %v2301 = vpop.f32.mrb[0].mxu0
      %2302 = vmatprep.mubr.f32.mxu0 0.0
      %2303 = vmatmul.mubr.f32.gmra.mrb[0].mxu0 %v1005
      %v2304 = vpop.f32.mrb[0].mxu0
      %v2305 = vadd.f32 %v302, %v2304
      %v2306 = vpop.f32.mrb[0].mxu0
      %2307 = vmatprep.mubr.f32.mxu0 0.0
      %2308 = vmatmul.mubr.f32.gmra.mrb[0].mxu0 %v1008
      %v2309 = vpop.f32.mrb[0].mxu0
      %v2310 = vadd.f32 %v302, %v2309
      %v2311 = vpop.f32.mrb[0].mxu0
      %2312 = vmatprep.mubr.f32.mxu0 0.0
      %2313 = vmatmul.mubr.f32.gmra.mrb[0].mxu0 %v1011
      %v2314 = vpop.f32.mrb[0].mxu0
      %v2315 = vadd.f32 %v302, %v2314
      %v2316 = vpop.f32.mrb[0].mxu0
      %2317 = vmatprep.mubr.f32.mxu0 0.0
      %2318 = vmatmul.mubr.f32.gmra.mrb[0].mxu0 %v1014
      %v2319 = vpop.f32.mrb[0].mxu0
      %v2320 = vadd.f32 %v302, %v2319
      %v2321 = vpop.f32.mrb[0].mxu0
      %2322 = vmatprep.mubr.f32.mxu0 0.0
      %2323 = vmatmul.mubr.f32.gmra.mrb[0].mxu0 %v1017
      %v2324 = vpop.f32.mrb[0].mxu0
      %v2325 = vadd.f32 %v302, %v2324
      %v2326 = vpop.f32.mrb[0].mxu0
      %2327 = vmatprep.mubr.f32.mxu0 0.0
      %2328 = vmatmul.mubr.f32.gmra.mrb[0].mxu0 %v1020
      %v2329 = vpop.f32.mrb[0].mxu0
      %v2330 = vadd.f32 %v302, %v2329
      %v2331 = vpop.f32.mrb[0].mxu0
      %2332 = vmatprep.mubr.f32.mxu0 0.0
      %2333 = vmatmul.mubr.f32.gmra.mrb[0].mxu0 %v1023
      %v2334 = vpop.f32.mrb[0].mxu0
      %v2335 = vadd.f32 %v302, %v2334
      %v2336 = vpop.f32.mrb[0].mxu0
      %2337 = vmatprep.mubr.f32.mxu0 0.0
      %2338 = vmatmul.mubr.f32.gmra.mrb[0].mxu0 %v1026
      %v2339 = vpop.f32.mrb[0].mxu0
      %v2340 = vadd.f32 %v302, %v2339
      %v2341 = vpop.f32.mrb[0].mxu0
      %2342 = vmatprep.mubr.f32.mxu0 0.0
      %2343 = vmatmul.mubr.f32.gmra.mrb[0].mxu0 %v1029
      %v2344 = vpop.f32.mrb[0].mxu0
      %v2345 = vadd.f32 %v302, %v2344
      %v2346 = vpop.f32.mrb[0].mxu0
      %2347 = vmatprep.mubr.f32.mxu0 0.0
      %2348 = vmatmul.mubr.f32.gmra.mrb[0].mxu0 %v1032
      %v2349 = vpop.f32.mrb[0].mxu0
      %v2350 = vadd.f32 %v302, %v2349
      %v2351 = vpop.f32.mrb[0].mxu0
      %2352 = vmatprep.mubr.f32.mxu0 0.0
      %2353 = vmatmul.mubr.f32.gmra.mrb[0].mxu0 %v1035
      %v2354 = vpop.f32.mrb[0].mxu0
      %v2355 = vadd.f32 %v302, %v2354
      %v2356 = vpop.f32.mrb[0].mxu0
      %2357 = vmatprep.mubr.f32.mxu0 0.0
      %2358 = vmatmul.mubr.f32.gmra.mrb[0].mxu0 %v1038
      %v2359 = vpop.f32.mrb[0].mxu0
      %v2360 = vadd.f32 %v302, %v2359
      %v2361 = vpop.f32.mrb[0].mxu0
      %2362 = vmatprep.mubr.f32.mxu0 0.0
      %2363 = vmatmul.mubr.f32.gmra.mrb[0].mxu0 %v1041
      %v2364 = vpop.f32.mrb[0].mxu0
      %v2365 = vadd.f32 %v302, %v2364
      %v2366 = vpop.f32.mrb[0].mxu0
      %2367 = vmatprep.mubr.f32.mxu0 0.0
      %2368 = vmatmul.mubr.f32.gmra.mrb[0].mxu0 %v1044
      %v2369 = vpop.f32.mrb[0].mxu0
      %v2370 = vadd.f32 %v302, %v2369
      %v2371 = vpop.f32.mrb[0].mxu0
      %2372 = vmatprep.mubr.f32.mxu0 0.0
      %2373 = vmatmul.mubr.f32.gmra.mrb[0].mxu0 %v1047
      %v2374 = vpop.f32.mrb[0].mxu0
      %v2375 = vadd.f32 %v302, %v2374
      %v2376 = vpop.f32.mrb[0].mxu0
      %2377 = vmatprep.mubr.f32.mxu0 0.0
      %2378 = vmatmul.mubr.f32.gmra.mrb[0].mxu0 %v1050
      %v2379 = vpop.f32.mrb[0].mxu0
      %v2380 = vadd.f32 %v302, %v2379
      %v2381 = vpop.f32.mrb[0].mxu0
      %2382 = vmatprep.mubr.f32.mxu0 0.0
      %2383 = vmatmul.mubr.f32.gmra.mrb[0].mxu0 %v1053
      %v2384 = vpop.f32.mrb[0].mxu0
      %v2385 = vadd.f32 %v302, %v2384
      %v2386 = vpop.f32.mrb[0].mxu0
      %2387 = vmatprep.mubr.f32.mxu0 0.0
      %2388 = vmatmul.mubr.f32.gmra.mrb[0].mxu0 %v1056
      %v2389 = vpop.f32.mrb[0].mxu0
      %v2390 = vadd.f32 %v302, %v2389
      %v2391 = vpop.f32.mrb[0].mxu0
      %2392 = vmatprep.mubr.f32.mxu0 0.0
      %2393 = vmatmul.mubr.f32.gmra.mrb[0].mxu0 %v1059
      %v2394 = vpop.f32.mrb[0].mxu0
      %v2395 = vadd.f32 %v302, %v2394
      %v2396 = vpop.f32.mrb[0].mxu0
      %2397 = vmatprep.mubr.f32.mxu0 0.0
      %2398 = vmatmul.mubr.f32.gmra.mrb[0].mxu0 %v1062
      %v2399 = vpop.f32.mrb[0].mxu0
      %v2400 = vadd.f32 %v302, %v2399
      %v2401 = vpop.f32.mrb[0].mxu0
      %2402 = vmatprep.mubr.f32.mxu0 0.0
      %2403 = vmatmul.mubr.f32.gmra.mrb[0].mxu0 %v1065
      %v2404 = vpop.f32.mrb[0].mxu0
      %v2405 = vadd.f32 %v302, %v2404
      %v2406 = vpop.f32.mrb[0].mxu0
      %2407 = vmatprep.mubr.f32.mxu0 0.0
      %2408 = vmatmul.mubr.f32.gmra.mrb[0].mxu0 %v1068
      %v2409 = vpop.f32.mrb[0].mxu0
      %v2410 = vadd.f32 %v302, %v2409
      %v2411 = vpop.f32.mrb[0].mxu0
      %2412 = vmatprep.mubr.f32.mxu0 0.0
      %2413 = vmatmul.mubr.f32.gmra.mrb[0].mxu0 %v1071
      %v2414 = vpop.f32.mrb[0].mxu0
      %v2415 = vadd.f32 %v302, %v2414
      %v2416 = vpop.f32.mrb[0].mxu0
      %2417 = vdwg.mxu0
      %v2418 = vxor.u32 %v1140, 2147483648
      %v2419 = vxor.u32 %v1145, 2147483648
      %v2420 = vxor.u32 %v1150, 2147483648
      %v2421 = vxor.u32 %v1155, 2147483648
      %v2422 = vxor.u32 %v1160, 2147483648
      %v2423 = vxor.u32 %v1165, 2147483648
      %v2424 = vxor.u32 %v1170, 2147483648
      %v2425 = vxor.u32 %v1175, 2147483648
      %v2426 = vxor.u32 %v1180, 2147483648
      %v2427 = vxor.u32 %v1185, 2147483648
      %v2428 = vxor.u32 %v1190, 2147483648
      %v2429 = vxor.u32 %v1195, 2147483648
      %v2430 = vxor.u32 %v1200, 2147483648
      %v2431 = vxor.u32 %v1205, 2147483648
      %v2432 = vxor.u32 %v1210, 2147483648
      %v2433 = vxor.u32 %v1215, 2147483648
      %v2434 = vxor.u32 %v1220, 2147483648
      %v2435 = vxor.u32 %v1225, 2147483648
      %v2436 = vxor.u32 %v1230, 2147483648
      %v2437 = vxor.u32 %v1235, 2147483648
      %v2438 = vxor.u32 %v1240, 2147483648
      %v2439 = vxor.u32 %v1245, 2147483648
      %v2440 = vxor.u32 %v1250, 2147483648
      %v2441 = vxor.u32 %v1255, 2147483648
      %v2442 = vxor.u32 %v1260, 2147483648
      %v2443 = vxor.u32 %v1265, 2147483648
      %v2444 = vxor.u32 %v1270, 2147483648
      %v2445 = vxor.u32 %v1275, 2147483648
      %v2446 = vxor.u32 %v1280, 2147483648
      %v2447 = vxor.u32 %v1285, 2147483648
      %v2448 = vxor.u32 %v1290, 2147483648
      %v2449 = vxor.u32 %v1295, 2147483648
      %v2450 = vxor.u32 %v1300, 2147483648
      %v2451 = vxor.u32 %v1305, 2147483648
      %v2452 = vxor.u32 %v1310, 2147483648
      %v2453 = vxor.u32 %v1315, 2147483648
      %v2454 = vxor.u32 %v1320, 2147483648
      %v2455 = vxor.u32 %v1325, 2147483648
      %v2456 = vxor.u32 %v1330, 2147483648
      %v2457 = vxor.u32 %v1335, 2147483648
      %v2458 = vxor.u32 %v1340, 2147483648
      %v2459 = vxor.u32 %v1345, 2147483648
      %v2460 = vxor.u32 %v1350, 2147483648
      %v2461 = vxor.u32 %v1355, 2147483648
      %v2462 = vxor.u32 %v1360, 2147483648
      %v2463 = vxor.u32 %v1365, 2147483648
      %v2464 = vxor.u32 %v1370, 2147483648
      %v2465 = vxor.u32 %v1375, 2147483648
      %v2466 = vxor.u32 %v1380, 2147483648
      %v2467 = vxor.u32 %v1385, 2147483648
      %v2468 = vxor.u32 %v1390, 2147483648
      %v2469 = vxor.u32 %v1395, 2147483648
      %v2470 = vxor.u32 %v1400, 2147483648
      %v2471 = vxor.u32 %v1405, 2147483648
      %v2472 = vxor.u32 %v1410, 2147483648
      %v2473 = vxor.u32 %v1415, 2147483648
      %v2474 = vxor.u32 %v1420, 2147483648
      %v2475 = vxor.u32 %v1425, 2147483648
      %v2476 = vxor.u32 %v1430, 2147483648
      %v2477 = vxor.u32 %v1435, 2147483648
      %v2478 = vxor.u32 %v1440, 2147483648
      %v2479 = vxor.u32 %v1445, 2147483648
      %v2480 = vxor.u32 %v1450, 2147483648
      %v2481 = vxor.u32 %v1455, 2147483648
      %v2482 = vxor.u32 %v1460, 2147483648
      %v2483 = vxor.u32 %v1465, 2147483648
      %v2484 = vxor.u32 %v1470, 2147483648
      %v2485 = vxor.u32 %v1475, 2147483648
      %v2486 = vxor.u32 %v1480, 2147483648
      %v2487 = vxor.u32 %v1485, 2147483648
      %v2488 = vxor.u32 %v1490, 2147483648
      %v2489 = vxor.u32 %v1495, 2147483648
      %v2490 = vxor.u32 %v1500, 2147483648
      %v2491 = vxor.u32 %v1505, 2147483648
      %v2492 = vxor.u32 %v1510, 2147483648
      %v2493 = vxor.u32 %v1515, 2147483648
      %v2494 = vxor.u32 %v1520, 2147483648
      %v2495 = vxor.u32 %v1525, 2147483648
      %v2496 = vxor.u32 %v1530, 2147483648
      %v2497 = vxor.u32 %v1535, 2147483648
      %v2498 = vxor.u32 %v1540, 2147483648
      %v2499 = vxor.u32 %v1545, 2147483648
      %v2500 = vxor.u32 %v1550, 2147483648
      %v2501 = vxor.u32 %v1555, 2147483648
      %v2502 = vxor.u32 %v1560, 2147483648
      %v2503 = vxor.u32 %v1565, 2147483648
      %v2504 = vxor.u32 %v1570, 2147483648
      %v2505 = vxor.u32 %v1575, 2147483648
      %v2506 = vxor.u32 %v1580, 2147483648
      %v2507 = vxor.u32 %v1585, 2147483648
      %v2508 = vxor.u32 %v1590, 2147483648
      %v2509 = vxor.u32 %v1595, 2147483648
      %v2510 = vxor.u32 %v1600, 2147483648
      %v2511 = vxor.u32 %v1605, 2147483648
      %v2512 = vxor.u32 %v1610, 2147483648
      %v2513 = vxor.u32 %v1615, 2147483648
      %v2514 = vxor.u32 %v1620, 2147483648
      %v2515 = vxor.u32 %v1625, 2147483648
      %v2516 = vxor.u32 %v1630, 2147483648
      %v2517 = vxor.u32 %v1635, 2147483648
      %v2518 = vxor.u32 %v1640, 2147483648
      %v2519 = vxor.u32 %v1645, 2147483648
      %v2520 = vxor.u32 %v1650, 2147483648
      %v2521 = vxor.u32 %v1655, 2147483648
      %v2522 = vxor.u32 %v1660, 2147483648
      %v2523 = vxor.u32 %v1665, 2147483648
      %v2524 = vxor.u32 %v1670, 2147483648
      %v2525 = vxor.u32 %v1675, 2147483648
      %v2526 = vxor.u32 %v1680, 2147483648
      %v2527 = vxor.u32 %v1685, 2147483648
      %v2528 = vxor.u32 %v1690, 2147483648
      %v2529 = vxor.u32 %v1695, 2147483648
      %v2530 = vxor.u32 %v1700, 2147483648
      %v2531 = vxor.u32 %v1705, 2147483648
      %v2532 = vxor.u32 %v1710, 2147483648
      %v2533 = vxor.u32 %v1715, 2147483648
      %v2534 = vxor.u32 %v1720, 2147483648
      %v2535 = vxor.u32 %v1725, 2147483648
      %v2536 = vxor.u32 %v1730, 2147483648
      %v2537 = vxor.u32 %v1735, 2147483648
      %v2538 = vxor.u32 %v1740, 2147483648
      %v2539 = vxor.u32 %v1745, 2147483648
      %v2540 = vxor.u32 %v1750, 2147483648
      %v2541 = vxor.u32 %v1755, 2147483648
      %v2542 = vxor.u32 %v1760, 2147483648
      %v2543 = vxor.u32 %v1765, 2147483648
      %v2544 = vxor.u32 %v1770, 2147483648
      %v2545 = vxor.u32 %v1775, 2147483648
      %v2546 = vxor.u32 %v1780, 2147483648
      %v2547 = vxor.u32 %v1785, 2147483648
      %v2548 = vxor.u32 %v1790, 2147483648
      %v2549 = vxor.u32 %v1795, 2147483648
      %v2550 = vxor.u32 %v1800, 2147483648
      %v2551 = vxor.u32 %v1805, 2147483648
      %v2552 = vxor.u32 %v1810, 2147483648
      %v2553 = vxor.u32 %v1815, 2147483648
      %v2554 = vxor.u32 %v1820, 2147483648
      %v2555 = vxor.u32 %v1825, 2147483648
      %v2556 = vxor.u32 %v1830, 2147483648
      %v2557 = vxor.u32 %v1835, 2147483648
      %v2558 = vxor.u32 %v1840, 2147483648
      %v2559 = vxor.u32 %v1845, 2147483648
      %v2560 = vxor.u32 %v1850, 2147483648
      %v2561 = vxor.u32 %v1855, 2147483648
      %v2562 = vxor.u32 %v1860, 2147483648
      %v2563 = vxor.u32 %v1865, 2147483648
      %v2564 = vxor.u32 %v1870, 2147483648
      %v2565 = vxor.u32 %v1875, 2147483648
      %v2566 = vxor.u32 %v1880, 2147483648
      %v2567 = vxor.u32 %v1885, 2147483648
      %v2568 = vxor.u32 %v1890, 2147483648
      %v2569 = vxor.u32 %v1895, 2147483648
      %v2570 = vxor.u32 %v1900, 2147483648
      %v2571 = vxor.u32 %v1905, 2147483648
      %v2572 = vxor.u32 %v1910, 2147483648
      %v2573 = vxor.u32 %v1915, 2147483648
      %v2574 = vxor.u32 %v1920, 2147483648
      %v2575 = vxor.u32 %v1925, 2147483648
      %v2576 = vxor.u32 %v1930, 2147483648
      %v2577 = vxor.u32 %v1935, 2147483648
      %v2578 = vxor.u32 %v1940, 2147483648
      %v2579 = vxor.u32 %v1945, 2147483648
      %v2580 = vxor.u32 %v1950, 2147483648
      %v2581 = vxor.u32 %v1955, 2147483648
      %v2582 = vxor.u32 %v1960, 2147483648
      %v2583 = vxor.u32 %v1965, 2147483648
      %v2584 = vxor.u32 %v1970, 2147483648
      %v2585 = vxor.u32 %v1975, 2147483648
      %v2586 = vxor.u32 %v1980, 2147483648
      %v2587 = vxor.u32 %v1985, 2147483648
      %v2588 = vxor.u32 %v1990, 2147483648
      %v2589 = vxor.u32 %v1995, 2147483648
      %v2590 = vxor.u32 %v2000, 2147483648
      %v2591 = vxor.u32 %v2005, 2147483648
      %v2592 = vxor.u32 %v2010, 2147483648
      %v2593 = vxor.u32 %v2015, 2147483648
      %v2594 = vxor.u32 %v2020, 2147483648
      %v2595 = vxor.u32 %v2025, 2147483648
      %v2596 = vxor.u32 %v2030, 2147483648
      %v2597 = vxor.u32 %v2035, 2147483648
      %v2598 = vxor.u32 %v2040, 2147483648
      %v2599 = vxor.u32 %v2045, 2147483648
      %v2600 = vxor.u32 %v2050, 2147483648
      %v2601 = vxor.u32 %v2055, 2147483648
      %v2602 = vxor.u32 %v2060, 2147483648
      %v2603 = vxor.u32 %v2065, 2147483648
      %v2604 = vxor.u32 %v2070, 2147483648
      %v2605 = vxor.u32 %v2075, 2147483648
      %v2606 = vxor.u32 %v2080, 2147483648
      %v2607 = vxor.u32 %v2085, 2147483648
      %v2608 = vxor.u32 %v2090, 2147483648
      %v2609 = vxor.u32 %v2095, 2147483648
      %v2610 = vxor.u32 %v2100, 2147483648
      %v2611 = vxor.u32 %v2105, 2147483648
      %v2612 = vxor.u32 %v2110, 2147483648
      %v2613 = vxor.u32 %v2115, 2147483648
      %v2614 = vxor.u32 %v2120, 2147483648
      %v2615 = vxor.u32 %v2125, 2147483648
      %v2616 = vxor.u32 %v2130, 2147483648
      %v2617 = vxor.u32 %v2135, 2147483648
      %v2618 = vxor.u32 %v2140, 2147483648
      %v2619 = vxor.u32 %v2145, 2147483648
      %v2620 = vxor.u32 %v2150, 2147483648
      %v2621 = vxor.u32 %v2155, 2147483648
      %v2622 = vxor.u32 %v2160, 2147483648
      %v2623 = vxor.u32 %v2165, 2147483648
      %v2624 = vxor.u32 %v2170, 2147483648
      %v2625 = vxor.u32 %v2175, 2147483648
      %v2626 = vxor.u32 %v2180, 2147483648
      %v2627 = vxor.u32 %v2185, 2147483648
      %v2628 = vxor.u32 %v2190, 2147483648
      %v2629 = vxor.u32 %v2195, 2147483648
      %v2630 = vxor.u32 %v2200, 2147483648
      %v2631 = vxor.u32 %v2205, 2147483648
      %v2632 = vxor.u32 %v2210, 2147483648
      %v2633 = vxor.u32 %v2215, 2147483648
      %v2634 = vxor.u32 %v2220, 2147483648
      %v2635 = vxor.u32 %v2225, 2147483648
      %v2636 = vxor.u32 %v2230, 2147483648
      %v2637 = vxor.u32 %v2235, 2147483648
      %v2638 = vxor.u32 %v2240, 2147483648
      %v2639 = vxor.u32 %v2245, 2147483648
      %v2640 = vxor.u32 %v2250, 2147483648
      %v2641 = vxor.u32 %v2255, 2147483648
      %v2642 = vxor.u32 %v2260, 2147483648
      %v2643 = vxor.u32 %v2265, 2147483648
      %v2644 = vxor.u32 %v2270, 2147483648
      %v2645 = vxor.u32 %v2275, 2147483648
      %v2646 = vxor.u32 %v2280, 2147483648
      %v2647 = vxor.u32 %v2285, 2147483648
      %v2648 = vxor.u32 %v2290, 2147483648
      %v2649 = vxor.u32 %v2295, 2147483648
      %v2650 = vxor.u32 %v2300, 2147483648
      %v2651 = vxor.u32 %v2305, 2147483648
      %v2652 = vxor.u32 %v2310, 2147483648
      %v2653 = vxor.u32 %v2315, 2147483648
      %v2654 = vxor.u32 %v2320, 2147483648
      %v2655 = vxor.u32 %v2325, 2147483648
      %v2656 = vxor.u32 %v2330, 2147483648
      %v2657 = vxor.u32 %v2335, 2147483648
      %v2658 = vxor.u32 %v2340, 2147483648
      %v2659 = vxor.u32 %v2345, 2147483648
      %v2660 = vxor.u32 %v2350, 2147483648
      %v2661 = vxor.u32 %v2355, 2147483648
      %v2662 = vxor.u32 %v2360, 2147483648
      %v2663 = vxor.u32 %v2365, 2147483648
      %v2664 = vxor.u32 %v2370, 2147483648
      %v2665 = vxor.u32 %v2375, 2147483648
      %v2666 = vxor.u32 %v2380, 2147483648
      %v2667 = vxor.u32 %v2385, 2147483648
      %v2668 = vxor.u32 %v2390, 2147483648
      %v2669 = vxor.u32 %v2395, 2147483648
      %v2670 = vxor.u32 %v2400, 2147483648
      %v2671 = vxor.u32 %v2405, 2147483648
      %v2672 = vxor.u32 %v2410, 2147483648
      %v2673 = vxor.u32 %v2415, 2147483648
      %v2674 = vmul.f32 %v2418, 1.442695
      %v2675 = vpow.pop %v2674
      %v2676 = vmul.f32 %v2419, 1.442695
      %v2677 = vpow.pop %v2676
      %v2678 = vmul.f32 %v2420, 1.442695
      %v2679 = vpow.pop %v2678
      %v2680 = vmul.f32 %v2421, 1.442695
      %v2681 = vpow.pop %v2680
      %v2682 = vmul.f32 %v2422, 1.442695
      %v2683 = vpow.pop %v2682
      %v2684 = vmul.f32 %v2423, 1.442695
      %v2685 = vpow.pop %v2684
      %v2686 = vmul.f32 %v2424, 1.442695
      %v2687 = vpow.pop %v2686
      %v2688 = vmul.f32 %v2425, 1.442695
      %v2689 = vpow.pop %v2688
      %v2690 = vmul.f32 %v2426, 1.442695
      %v2691 = vpow.pop %v2690
      %v2692 = vmul.f32 %v2427, 1.442695
      %v2693 = vpow.pop %v2692
      %v2694 = vmul.f32 %v2428, 1.442695
      %v2695 = vpow.pop %v2694
      %v2696 = vmul.f32 %v2429, 1.442695
      %v2697 = vpow.pop %v2696
      %v2698 = vmul.f32 %v2430, 1.442695
      %v2699 = vpow.pop %v2698
      %v2700 = vmul.f32 %v2431, 1.442695
      %v2701 = vpow.pop %v2700
      %v2702 = vmul.f32 %v2432, 1.442695
      %v2703 = vpow.pop %v2702
      %v2704 = vmul.f32 %v2433, 1.442695
      %v2705 = vpow.pop %v2704
      %v2706 = vmul.f32 %v2434, 1.442695
      %v2707 = vpow.pop %v2706
      %v2708 = vmul.f32 %v2435, 1.442695
      %v2709 = vpow.pop %v2708
      %v2710 = vmul.f32 %v2436, 1.442695
      %v2711 = vpow.pop %v2710
      %v2712 = vmul.f32 %v2437, 1.442695
      %v2713 = vpow.pop %v2712
      %v2714 = vmul.f32 %v2438, 1.442695
      %v2715 = vpow.pop %v2714
      %v2716 = vmul.f32 %v2439, 1.442695
      %v2717 = vpow.pop %v2716
      %v2718 = vmul.f32 %v2440, 1.442695
      %v2719 = vpow.pop %v2718
      %v2720 = vmul.f32 %v2441, 1.442695
      %v2721 = vpow.pop %v2720
      %v2722 = vmul.f32 %v2442, 1.442695
      %v2723 = vpow.pop %v2722
      %v2724 = vmul.f32 %v2443, 1.442695
      %v2725 = vpow.pop %v2724
      %v2726 = vmul.f32 %v2444, 1.442695
      %v2727 = vpow.pop %v2726
      %v2728 = vmul.f32 %v2445, 1.442695
      %v2729 = vpow.pop %v2728
      %v2730 = vmul.f32 %v2446, 1.442695
      %v2731 = vpow.pop %v2730
      %v2732 = vmul.f32 %v2447, 1.442695
      %v2733 = vpow.pop %v2732
      %v2734 = vmul.f32 %v2448, 1.442695
      %v2735 = vpow.pop %v2734
      %v2736 = vmul.f32 %v2449, 1.442695
      %v2737 = vpow.pop %v2736
      %v2738 = vmul.f32 %v2450, 1.442695
      %v2739 = vpow.pop %v2738
      %v2740 = vmul.f32 %v2451, 1.442695
      %v2741 = vpow.pop %v2740
      %v2742 = vmul.f32 %v2452, 1.442695
      %v2743 = vpow.pop %v2742
      %v2744 = vmul.f32 %v2453, 1.442695
      %v2745 = vpow.pop %v2744
      %v2746 = vmul.f32 %v2454, 1.442695
      %v2747 = vpow.pop %v2746
      %v2748 = vmul.f32 %v2455, 1.442695
      %v2749 = vpow.pop %v2748
      %v2750 = vmul.f32 %v2456, 1.442695
      %v2751 = vpow.pop %v2750
      %v2752 = vmul.f32 %v2457, 1.442695
      %v2753 = vpow.pop %v2752
      %v2754 = vmul.f32 %v2458, 1.442695
      %v2755 = vpow.pop %v2754
      %v2756 = vmul.f32 %v2459, 1.442695
      %v2757 = vpow.pop %v2756
      %v2758 = vmul.f32 %v2460, 1.442695
      %v2759 = vpow.pop %v2758
      %v2760 = vmul.f32 %v2461, 1.442695
      %v2761 = vpow.pop %v2760
      %v2762 = vmul.f32 %v2462, 1.442695
      %v2763 = vpow.pop %v2762
      %v2764 = vmul.f32 %v2463, 1.442695
      %v2765 = vpow.pop %v2764
      %v2766 = vmul.f32 %v2464, 1.442695
      %v2767 = vpow.pop %v2766
      %v2768 = vmul.f32 %v2465, 1.442695
      %v2769 = vpow.pop %v2768
      %v2770 = vmul.f32 %v2466, 1.442695
      %v2771 = vpow.pop %v2770
      %v2772 = vmul.f32 %v2467, 1.442695
      %v2773 = vpow.pop %v2772
      %v2774 = vmul.f32 %v2468, 1.442695
      %v2775 = vpow.pop %v2774
      %v2776 = vmul.f32 %v2469, 1.442695
      %v2777 = vpow.pop %v2776
      %v2778 = vmul.f32 %v2470, 1.442695
      %v2779 = vpow.pop %v2778
      %v2780 = vmul.f32 %v2471, 1.442695
      %v2781 = vpow.pop %v2780
      %v2782 = vmul.f32 %v2472, 1.442695
      %v2783 = vpow.pop %v2782
      %v2784 = vmul.f32 %v2473, 1.442695
      %v2785 = vpow.pop %v2784
      %v2786 = vmul.f32 %v2474, 1.442695
      %v2787 = vpow.pop %v2786
      %v2788 = vmul.f32 %v2475, 1.442695
      %v2789 = vpow.pop %v2788
      %v2790 = vmul.f32 %v2476, 1.442695
      %v2791 = vpow.pop %v2790
      %v2792 = vmul.f32 %v2477, 1.442695
      %v2793 = vpow.pop %v2792
      %v2794 = vmul.f32 %v2478, 1.442695
      %v2795 = vpow.pop %v2794
      %v2796 = vmul.f32 %v2479, 1.442695
      %v2797 = vpow.pop %v2796
      %v2798 = vmul.f32 %v2480, 1.442695
      %v2799 = vpow.pop %v2798
      %v2800 = vmul.f32 %v2481, 1.442695
      %v2801 = vpow.pop %v2800
      %v2802 = vmul.f32 %v2482, 1.442695
      %v2803 = vpow.pop %v2802
      %v2804 = vmul.f32 %v2483, 1.442695
      %v2805 = vpow.pop %v2804
      %v2806 = vmul.f32 %v2484, 1.442695
      %v2807 = vpow.pop %v2806
      %v2808 = vmul.f32 %v2485, 1.442695
      %v2809 = vpow.pop %v2808
      %v2810 = vmul.f32 %v2486, 1.442695
      %v2811 = vpow.pop %v2810
      %v2812 = vmul.f32 %v2487, 1.442695
      %v2813 = vpow.pop %v2812
      %v2814 = vmul.f32 %v2488, 1.442695
      %v2815 = vpow.pop %v2814
      %v2816 = vmul.f32 %v2489, 1.442695
      %v2817 = vpow.pop %v2816
      %v2818 = vmul.f32 %v2490, 1.442695
      %v2819 = vpow.pop %v2818
      %v2820 = vmul.f32 %v2491, 1.442695
      %v2821 = vpow.pop %v2820
      %v2822 = vmul.f32 %v2492, 1.442695
      %v2823 = vpow.pop %v2822
      %v2824 = vmul.f32 %v2493, 1.442695
      %v2825 = vpow.pop %v2824
      %v2826 = vmul.f32 %v2494, 1.442695
      %v2827 = vpow.pop %v2826
      %v2828 = vmul.f32 %v2495, 1.442695
      %v2829 = vpow.pop %v2828
      %v2830 = vmul.f32 %v2496, 1.442695
      %v2831 = vpow.pop %v2830
      %v2832 = vmul.f32 %v2497, 1.442695
      %v2833 = vpow.pop %v2832
      %v2834 = vmul.f32 %v2498, 1.442695
      %v2835 = vpow.pop %v2834
      %v2836 = vmul.f32 %v2499, 1.442695
      %v2837 = vpow.pop %v2836
      %v2838 = vmul.f32 %v2500, 1.442695
      %v2839 = vpow.pop %v2838
      %v2840 = vmul.f32 %v2501, 1.442695
      %v2841 = vpow.pop %v2840
      %v2842 = vmul.f32 %v2502, 1.442695
      %v2843 = vpow.pop %v2842
      %v2844 = vmul.f32 %v2503, 1.442695
      %v2845 = vpow.pop %v2844
      %v2846 = vmul.f32 %v2504, 1.442695
      %v2847 = vpow.pop %v2846
      %v2848 = vmul.f32 %v2505, 1.442695
      %v2849 = vpow.pop %v2848
      %v2850 = vmul.f32 %v2506, 1.442695
      %v2851 = vpow.pop %v2850
      %v2852 = vmul.f32 %v2507, 1.442695
      %v2853 = vpow.pop %v2852
      %v2854 = vmul.f32 %v2508, 1.442695
      %v2855 = vpow.pop %v2854
      %v2856 = vmul.f32 %v2509, 1.442695
      %v2857 = vpow.pop %v2856
      %v2858 = vmul.f32 %v2510, 1.442695
      %v2859 = vpow.pop %v2858
      %v2860 = vmul.f32 %v2511, 1.442695
      %v2861 = vpow.pop %v2860
      %v2862 = vmul.f32 %v2512, 1.442695
      %v2863 = vpow.pop %v2862
      %v2864 = vmul.f32 %v2513, 1.442695
      %v2865 = vpow.pop %v2864
      %v2866 = vmul.f32 %v2514, 1.442695
      %v2867 = vpow.pop %v2866
      %v2868 = vmul.f32 %v2515, 1.442695
      %v2869 = vpow.pop %v2868
      %v2870 = vmul.f32 %v2516, 1.442695
      %v2871 = vpow.pop %v2870
      %v2872 = vmul.f32 %v2517, 1.442695
      %v2873 = vpow.pop %v2872
      %v2874 = vmul.f32 %v2518, 1.442695
      %v2875 = vpow.pop %v2874
      %v2876 = vmul.f32 %v2519, 1.442695
      %v2877 = vpow.pop %v2876
      %v2878 = vmul.f32 %v2520, 1.442695
      %v2879 = vpow.pop %v2878
      %v2880 = vmul.f32 %v2521, 1.442695
      %v2881 = vpow.pop %v2880
      %v2882 = vmul.f32 %v2522, 1.442695
      %v2883 = vpow.pop %v2882
      %v2884 = vmul.f32 %v2523, 1.442695
      %v2885 = vpow.pop %v2884
      %v2886 = vmul.f32 %v2524, 1.442695
      %v2887 = vpow.pop %v2886
      %v2888 = vmul.f32 %v2525, 1.442695
      %v2889 = vpow.pop %v2888
      %v2890 = vmul.f32 %v2526, 1.442695
      %v2891 = vpow.pop %v2890
      %v2892 = vmul.f32 %v2527, 1.442695
      %v2893 = vpow.pop %v2892
      %v2894 = vmul.f32 %v2528, 1.442695
      %v2895 = vpow.pop %v2894
      %v2896 = vmul.f32 %v2529, 1.442695
      %v2897 = vpow.pop %v2896
      %v2898 = vmul.f32 %v2530, 1.442695
      %v2899 = vpow.pop %v2898
      %v2900 = vmul.f32 %v2531, 1.442695
      %v2901 = vpow.pop %v2900
      %v2902 = vmul.f32 %v2532, 1.442695
      %v2903 = vpow.pop %v2902
      %v2904 = vmul.f32 %v2533, 1.442695
      %v2905 = vpow.pop %v2904
      %v2906 = vmul.f32 %v2534, 1.442695
      %v2907 = vpow.pop %v2906
      %v2908 = vmul.f32 %v2535, 1.442695
      %v2909 = vpow.pop %v2908
      %v2910 = vmul.f32 %v2536, 1.442695
      %v2911 = vpow.pop %v2910
      %v2912 = vmul.f32 %v2537, 1.442695
      %v2913 = vpow.pop %v2912
      %v2914 = vmul.f32 %v2538, 1.442695
      %v2915 = vpow.pop %v2914
      %v2916 = vmul.f32 %v2539, 1.442695
      %v2917 = vpow.pop %v2916
      %v2918 = vmul.f32 %v2540, 1.442695
      %v2919 = vpow.pop %v2918
      %v2920 = vmul.f32 %v2541, 1.442695
      %v2921 = vpow.pop %v2920
      %v2922 = vmul.f32 %v2542, 1.442695
      %v2923 = vpow.pop %v2922
      %v2924 = vmul.f32 %v2543, 1.442695
      %v2925 = vpow.pop %v2924
      %v2926 = vmul.f32 %v2544, 1.442695
      %v2927 = vpow.pop %v2926
      %v2928 = vmul.f32 %v2545, 1.442695
      %v2929 = vpow.pop %v2928
      %v2930 = vmul.f32 %v2546, 1.442695
      %v2931 = vpow.pop %v2930
      %v2932 = vmul.f32 %v2547, 1.442695
      %v2933 = vpow.pop %v2932
      %v2934 = vmul.f32 %v2548, 1.442695
      %v2935 = vpow.pop %v2934
      %v2936 = vmul.f32 %v2549, 1.442695
      %v2937 = vpow.pop %v2936
      %v2938 = vmul.f32 %v2550, 1.442695
      %v2939 = vpow.pop %v2938
      %v2940 = vmul.f32 %v2551, 1.442695
      %v2941 = vpow.pop %v2940
      %v2942 = vmul.f32 %v2552, 1.442695
      %v2943 = vpow.pop %v2942
      %v2944 = vmul.f32 %v2553, 1.442695
      %v2945 = vpow.pop %v2944
      %v2946 = vmul.f32 %v2554, 1.442695
      %v2947 = vpow.pop %v2946
      %v2948 = vmul.f32 %v2555, 1.442695
      %v2949 = vpow.pop %v2948
      %v2950 = vmul.f32 %v2556, 1.442695
      %v2951 = vpow.pop %v2950
      %v2952 = vmul.f32 %v2557, 1.442695
      %v2953 = vpow.pop %v2952
      %v2954 = vmul.f32 %v2558, 1.442695
      %v2955 = vpow.pop %v2954
      %v2956 = vmul.f32 %v2559, 1.442695
      %v2957 = vpow.pop %v2956
      %v2958 = vmul.f32 %v2560, 1.442695
      %v2959 = vpow.pop %v2958
      %v2960 = vmul.f32 %v2561, 1.442695
      %v2961 = vpow.pop %v2960
      %v2962 = vmul.f32 %v2562, 1.442695
      %v2963 = vpow.pop %v2962
      %v2964 = vmul.f32 %v2563, 1.442695
      %v2965 = vpow.pop %v2964
      %v2966 = vmul.f32 %v2564, 1.442695
      %v2967 = vpow.pop %v2966
      %v2968 = vmul.f32 %v2565, 1.442695
      %v2969 = vpow.pop %v2968
      %v2970 = vmul.f32 %v2566, 1.442695
      %v2971 = vpow.pop %v2970
      %v2972 = vmul.f32 %v2567, 1.442695
      %v2973 = vpow.pop %v2972
      %v2974 = vmul.f32 %v2568, 1.442695
      %v2975 = vpow.pop %v2974
      %v2976 = vmul.f32 %v2569, 1.442695
      %v2977 = vpow.pop %v2976
      %v2978 = vmul.f32 %v2570, 1.442695
      %v2979 = vpow.pop %v2978
      %v2980 = vmul.f32 %v2571, 1.442695
      %v2981 = vpow.pop %v2980
      %v2982 = vmul.f32 %v2572, 1.442695
      %v2983 = vpow.pop %v2982
      %v2984 = vmul.f32 %v2573, 1.442695
      %v2985 = vpow.pop %v2984
      %v2986 = vmul.f32 %v2574, 1.442695
      %v2987 = vpow.pop %v2986
      %v2988 = vmul.f32 %v2575, 1.442695
      %v2989 = vpow.pop %v2988
      %v2990 = vmul.f32 %v2576, 1.442695
      %v2991 = vpow.pop %v2990
      %v2992 = vmul.f32 %v2577, 1.442695
      %v2993 = vpow.pop %v2992
      %v2994 = vmul.f32 %v2578, 1.442695
      %v2995 = vpow.pop %v2994
      %v2996 = vmul.f32 %v2579, 1.442695
      %v2997 = vpow.pop %v2996
      %v2998 = vmul.f32 %v2580, 1.442695
      %v2999 = vpow.pop %v2998
      %v3000 = vmul.f32 %v2581, 1.442695
      %v3001 = vpow.pop %v3000
      %v3002 = vmul.f32 %v2582, 1.442695
      %v3003 = vpow.pop %v3002
      %v3004 = vmul.f32 %v2583, 1.442695
      %v3005 = vpow.pop %v3004
      %v3006 = vmul.f32 %v2584, 1.442695
      %v3007 = vpow.pop %v3006
      %v3008 = vmul.f32 %v2585, 1.442695
      %v3009 = vpow.pop %v3008
      %v3010 = vmul.f32 %v2586, 1.442695
      %v3011 = vpow.pop %v3010
      %v3012 = vmul.f32 %v2587, 1.442695
      %v3013 = vpow.pop %v3012
      %v3014 = vmul.f32 %v2588, 1.442695
      %v3015 = vpow.pop %v3014
      %v3016 = vmul.f32 %v2589, 1.442695
      %v3017 = vpow.pop %v3016
      %v3018 = vmul.f32 %v2590, 1.442695
      %v3019 = vpow.pop %v3018
      %v3020 = vmul.f32 %v2591, 1.442695
      %v3021 = vpow.pop %v3020
      %v3022 = vmul.f32 %v2592, 1.442695
      %v3023 = vpow.pop %v3022
      %v3024 = vmul.f32 %v2593, 1.442695
      %v3025 = vpow.pop %v3024
      %v3026 = vmul.f32 %v2594, 1.442695
      %v3027 = vpow.pop %v3026
      %v3028 = vmul.f32 %v2595, 1.442695
      %v3029 = vpow.pop %v3028
      %v3030 = vmul.f32 %v2596, 1.442695
      %v3031 = vpow.pop %v3030
      %v3032 = vmul.f32 %v2597, 1.442695
      %v3033 = vpow.pop %v3032
      %v3034 = vmul.f32 %v2598, 1.442695
      %v3035 = vpow.pop %v3034
      %v3036 = vmul.f32 %v2599, 1.442695
      %v3037 = vpow.pop %v3036
      %v3038 = vmul.f32 %v2600, 1.442695
      %v3039 = vpow.pop %v3038
      %v3040 = vmul.f32 %v2601, 1.442695
      %v3041 = vpow.pop %v3040
      %v3042 = vmul.f32 %v2602, 1.442695
      %v3043 = vpow.pop %v3042
      %v3044 = vmul.f32 %v2603, 1.442695
      %v3045 = vpow.pop %v3044
      %v3046 = vmul.f32 %v2604, 1.442695
      %v3047 = vpow.pop %v3046
      %v3048 = vmul.f32 %v2605, 1.442695
      %v3049 = vpow.pop %v3048
      %v3050 = vmul.f32 %v2606, 1.442695
      %v3051 = vpow.pop %v3050
      %v3052 = vmul.f32 %v2607, 1.442695
      %v3053 = vpow.pop %v3052
      %v3054 = vmul.f32 %v2608, 1.442695
      %v3055 = vpow.pop %v3054
      %v3056 = vmul.f32 %v2609, 1.442695
      %v3057 = vpow.pop %v3056
      %v3058 = vmul.f32 %v2610, 1.442695
      %v3059 = vpow.pop %v3058
      %v3060 = vmul.f32 %v2611, 1.442695
      %v3061 = vpow.pop %v3060
      %v3062 = vmul.f32 %v2612, 1.442695
      %v3063 = vpow.pop %v3062
      %v3064 = vmul.f32 %v2613, 1.442695
      %v3065 = vpow.pop %v3064
      %v3066 = vmul.f32 %v2614, 1.442695
      %v3067 = vpow.pop %v3066
      %v3068 = vmul.f32 %v2615, 1.442695
      %v3069 = vpow.pop %v3068
      %v3070 = vmul.f32 %v2616, 1.442695
      %v3071 = vpow.pop %v3070
      %v3072 = vmul.f32 %v2617, 1.442695
      %v3073 = vpow.pop %v3072
      %v3074 = vmul.f32 %v2618, 1.442695
      %v3075 = vpow.pop %v3074
      %v3076 = vmul.f32 %v2619, 1.442695
      %v3077 = vpow.pop %v3076
      %v3078 = vmul.f32 %v2620, 1.442695
      %v3079 = vpow.pop %v3078
      %v3080 = vmul.f32 %v2621, 1.442695
      %v3081 = vpow.pop %v3080
      %v3082 = vmul.f32 %v2622, 1.442695
      %v3083 = vpow.pop %v3082
      %v3084 = vmul.f32 %v2623, 1.442695
      %v3085 = vpow.pop %v3084
      %v3086 = vmul.f32 %v2624, 1.442695
      %v3087 = vpow.pop %v3086
      %v3088 = vmul.f32 %v2625, 1.442695
      %v3089 = vpow.pop %v3088
      %v3090 = vmul.f32 %v2626, 1.442695
      %v3091 = vpow.pop %v3090
      %v3092 = vmul.f32 %v2627, 1.442695
      %v3093 = vpow.pop %v3092
      %v3094 = vmul.f32 %v2628, 1.442695
      %v3095 = vpow.pop %v3094
      %v3096 = vmul.f32 %v2629, 1.442695
      %v3097 = vpow.pop %v3096
      %v3098 = vmul.f32 %v2630, 1.442695
      %v3099 = vpow.pop %v3098
      %v3100 = vmul.f32 %v2631, 1.442695
      %v3101 = vpow.pop %v3100
      %v3102 = vmul.f32 %v2632, 1.442695
      %v3103 = vpow.pop %v3102
      %v3104 = vmul.f32 %v2633, 1.442695
      %v3105 = vpow.pop %v3104
      %v3106 = vmul.f32 %v2634, 1.442695
      %v3107 = vpow.pop %v3106
      %v3108 = vmul.f32 %v2635, 1.442695
      %v3109 = vpow.pop %v3108
      %v3110 = vmul.f32 %v2636, 1.442695
      %v3111 = vpow.pop %v3110
      %v3112 = vmul.f32 %v2637, 1.442695
      %v3113 = vpow.pop %v3112
      %v3114 = vmul.f32 %v2638, 1.442695
      %v3115 = vpow.pop %v3114
      %v3116 = vmul.f32 %v2639, 1.442695
      %v3117 = vpow.pop %v3116
      %v3118 = vmul.f32 %v2640, 1.442695
      %v3119 = vpow.pop %v3118
      %v3120 = vmul.f32 %v2641, 1.442695
      %v3121 = vpow.pop %v3120
      %v3122 = vmul.f32 %v2642, 1.442695
      %v3123 = vpow.pop %v3122
      %v3124 = vmul.f32 %v2643, 1.442695
      %v3125 = vpow.pop %v3124
      %v3126 = vmul.f32 %v2644, 1.442695
      %v3127 = vpow.pop %v3126
      %v3128 = vmul.f32 %v2645, 1.442695
      %v3129 = vpow.pop %v3128
      %v3130 = vmul.f32 %v2646, 1.442695
      %v3131 = vpow.pop %v3130
      %v3132 = vmul.f32 %v2647, 1.442695
      %v3133 = vpow.pop %v3132
      %v3134 = vmul.f32 %v2648, 1.442695
      %v3135 = vpow.pop %v3134
      %v3136 = vmul.f32 %v2649, 1.442695
      %v3137 = vpow.pop %v3136
      %v3138 = vmul.f32 %v2650, 1.442695
      %v3139 = vpow.pop %v3138
      %v3140 = vmul.f32 %v2651, 1.442695
      %v3141 = vpow.pop %v3140
      %v3142 = vmul.f32 %v2652, 1.442695
      %v3143 = vpow.pop %v3142
      %v3144 = vmul.f32 %v2653, 1.442695
      %v3145 = vpow.pop %v3144
      %v3146 = vmul.f32 %v2654, 1.442695
      %v3147 = vpow.pop %v3146
      %v3148 = vmul.f32 %v2655, 1.442695
      %v3149 = vpow.pop %v3148
      %v3150 = vmul.f32 %v2656, 1.442695
      %v3151 = vpow.pop %v3150
      %v3152 = vmul.f32 %v2657, 1.442695
      %v3153 = vpow.pop %v3152
      %v3154 = vmul.f32 %v2658, 1.442695
      %v3155 = vpow.pop %v3154
      %v3156 = vmul.f32 %v2659, 1.442695
      %v3157 = vpow.pop %v3156
      %v3158 = vmul.f32 %v2660, 1.442695
      %v3159 = vpow.pop %v3158
      %v3160 = vmul.f32 %v2661, 1.442695
      %v3161 = vpow.pop %v3160
      %v3162 = vmul.f32 %v2662, 1.442695
      %v3163 = vpow.pop %v3162
      %v3164 = vmul.f32 %v2663, 1.442695
      %v3165 = vpow.pop %v3164
      %v3166 = vmul.f32 %v2664, 1.442695
      %v3167 = vpow.pop %v3166
      %v3168 = vmul.f32 %v2665, 1.442695
      %v3169 = vpow.pop %v3168
      %v3170 = vmul.f32 %v2666, 1.442695
      %v3171 = vpow.pop %v3170
      %v3172 = vmul.f32 %v2667, 1.442695
      %v3173 = vpow.pop %v3172
      %v3174 = vmul.f32 %v2668, 1.442695
      %v3175 = vpow.pop %v3174
      %v3176 = vmul.f32 %v2669, 1.442695
      %v3177 = vpow.pop %v3176
      %v3178 = vmul.f32 %v2670, 1.442695
      %v3179 = vpow.pop %v3178
      %v3180 = vmul.f32 %v2671, 1.442695
      %v3181 = vpow.pop %v3180
      %v3182 = vmul.f32 %v2672, 1.442695
      %v3183 = vpow.pop %v3182
      %v3184 = vmul.f32 %v2673, 1.442695
      %v3185 = vpow.pop %v3184
      %v3186 = vadd.f32 %v2675, 1.0
      %v3187 = vadd.f32 %v2677, 1.0
      %v3188 = vadd.f32 %v2679, 1.0
      %v3189 = vadd.f32 %v2681, 1.0
      %v3190 = vadd.f32 %v2683, 1.0
      %v3191 = vadd.f32 %v2685, 1.0
      %v3192 = vadd.f32 %v2687, 1.0
      %v3193 = vadd.f32 %v2689, 1.0
      %v3194 = vadd.f32 %v2691, 1.0
      %v3195 = vadd.f32 %v2693, 1.0
      %v3196 = vadd.f32 %v2695, 1.0
      %v3197 = vadd.f32 %v2697, 1.0
      %v3198 = vadd.f32 %v2699, 1.0
      %v3199 = vadd.f32 %v2701, 1.0
      %v3200 = vadd.f32 %v2703, 1.0
      %v3201 = vadd.f32 %v2705, 1.0
      %v3202 = vadd.f32 %v2707, 1.0
      %v3203 = vadd.f32 %v2709, 1.0
      %v3204 = vadd.f32 %v2711, 1.0
      %v3205 = vadd.f32 %v2713, 1.0
      %v3206 = vadd.f32 %v2715, 1.0
      %v3207 = vadd.f32 %v2717, 1.0
      %v3208 = vadd.f32 %v2719, 1.0
      %v3209 = vadd.f32 %v2721, 1.0
      %v3210 = vadd.f32 %v2723, 1.0
      %v3211 = vadd.f32 %v2725, 1.0
      %v3212 = vadd.f32 %v2727, 1.0
      %v3213 = vadd.f32 %v2729, 1.0
      %v3214 = vadd.f32 %v2731, 1.0
      %v3215 = vadd.f32 %v2733, 1.0
      %v3216 = vadd.f32 %v2735, 1.0
      %v3217 = vadd.f32 %v2737, 1.0
      %v3218 = vadd.f32 %v2739, 1.0
      %v3219 = vadd.f32 %v2741, 1.0
      %v3220 = vadd.f32 %v2743, 1.0
      %v3221 = vadd.f32 %v2745, 1.0
      %v3222 = vadd.f32 %v2747, 1.0
      %v3223 = vadd.f32 %v2749, 1.0
      %v3224 = vadd.f32 %v2751, 1.0
      %v3225 = vadd.f32 %v2753, 1.0
      %v3226 = vadd.f32 %v2755, 1.0
      %v3227 = vadd.f32 %v2757, 1.0
      %v3228 = vadd.f32 %v2759, 1.0
      %v3229 = vadd.f32 %v2761, 1.0
      %v3230 = vadd.f32 %v2763, 1.0
      %v3231 = vadd.f32 %v2765, 1.0
      %v3232 = vadd.f32 %v2767, 1.0
      %v3233 = vadd.f32 %v2769, 1.0
      %v3234 = vadd.f32 %v2771, 1.0
      %v3235 = vadd.f32 %v2773, 1.0
      %v3236 = vadd.f32 %v2775, 1.0
      %v3237 = vadd.f32 %v2777, 1.0
      %v3238 = vadd.f32 %v2779, 1.0
      %v3239 = vadd.f32 %v2781, 1.0
      %v3240 = vadd.f32 %v2783, 1.0
      %v3241 = vadd.f32 %v2785, 1.0
      %v3242 = vadd.f32 %v2787, 1.0
      %v3243 = vadd.f32 %v2789, 1.0
      %v3244 = vadd.f32 %v2791, 1.0
      %v3245 = vadd.f32 %v2793, 1.0
      %v3246 = vadd.f32 %v2795, 1.0
      %v3247 = vadd.f32 %v2797, 1.0
      %v3248 = vadd.f32 %v2799, 1.0
      %v3249 = vadd.f32 %v2801, 1.0
      %v3250 = vadd.f32 %v2803, 1.0
      %v3251 = vadd.f32 %v2805, 1.0
      %v3252 = vadd.f32 %v2807, 1.0
      %v3253 = vadd.f32 %v2809, 1.0
      %v3254 = vadd.f32 %v2811, 1.0
      %v3255 = vadd.f32 %v2813, 1.0
      %v3256 = vadd.f32 %v2815, 1.0
      %v3257 = vadd.f32 %v2817, 1.0
      %v3258 = vadd.f32 %v2819, 1.0
      %v3259 = vadd.f32 %v2821, 1.0
      %v3260 = vadd.f32 %v2823, 1.0
      %v3261 = vadd.f32 %v2825, 1.0
      %v3262 = vadd.f32 %v2827, 1.0
      %v3263 = vadd.f32 %v2829, 1.0
      %v3264 = vadd.f32 %v2831, 1.0
      %v3265 = vadd.f32 %v2833, 1.0
      %v3266 = vadd.f32 %v2835, 1.0
      %v3267 = vadd.f32 %v2837, 1.0
      %v3268 = vadd.f32 %v2839, 1.0
      %v3269 = vadd.f32 %v2841, 1.0
      %v3270 = vadd.f32 %v2843, 1.0
      %v3271 = vadd.f32 %v2845, 1.0
      %v3272 = vadd.f32 %v2847, 1.0
      %v3273 = vadd.f32 %v2849, 1.0
      %v3274 = vadd.f32 %v2851, 1.0
      %v3275 = vadd.f32 %v2853, 1.0
      %v3276 = vadd.f32 %v2855, 1.0
      %v3277 = vadd.f32 %v2857, 1.0
      %v3278 = vadd.f32 %v2859, 1.0
      %v3279 = vadd.f32 %v2861, 1.0
      %v3280 = vadd.f32 %v2863, 1.0
      %v3281 = vadd.f32 %v2865, 1.0
      %v3282 = vadd.f32 %v2867, 1.0
      %v3283 = vadd.f32 %v2869, 1.0
      %v3284 = vadd.f32 %v2871, 1.0
      %v3285 = vadd.f32 %v2873, 1.0
      %v3286 = vadd.f32 %v2875, 1.0
      %v3287 = vadd.f32 %v2877, 1.0
      %v3288 = vadd.f32 %v2879, 1.0
      %v3289 = vadd.f32 %v2881, 1.0
      %v3290 = vadd.f32 %v2883, 1.0
      %v3291 = vadd.f32 %v2885, 1.0
      %v3292 = vadd.f32 %v2887, 1.0
      %v3293 = vadd.f32 %v2889, 1.0
      %v3294 = vadd.f32 %v2891, 1.0
      %v3295 = vadd.f32 %v2893, 1.0
      %v3296 = vadd.f32 %v2895, 1.0
      %v3297 = vadd.f32 %v2897, 1.0
      %v3298 = vadd.f32 %v2899, 1.0
      %v3299 = vadd.f32 %v2901, 1.0
      %v3300 = vadd.f32 %v2903, 1.0
      %v3301 = vadd.f32 %v2905, 1.0
      %v3302 = vadd.f32 %v2907, 1.0
      %v3303 = vadd.f32 %v2909, 1.0
      %v3304 = vadd.f32 %v2911, 1.0
      %v3305 = vadd.f32 %v2913, 1.0
      %v3306 = vadd.f32 %v2915, 1.0
      %v3307 = vadd.f32 %v2917, 1.0
      %v3308 = vadd.f32 %v2919, 1.0
      %v3309 = vadd.f32 %v2921, 1.0
      %v3310 = vadd.f32 %v2923, 1.0
      %v3311 = vadd.f32 %v2925, 1.0
      %v3312 = vadd.f32 %v2927, 1.0
      %v3313 = vadd.f32 %v2929, 1.0
      %v3314 = vadd.f32 %v2931, 1.0
      %v3315 = vadd.f32 %v2933, 1.0
      %v3316 = vadd.f32 %v2935, 1.0
      %v3317 = vadd.f32 %v2937, 1.0
      %v3318 = vadd.f32 %v2939, 1.0
      %v3319 = vadd.f32 %v2941, 1.0
      %v3320 = vadd.f32 %v2943, 1.0
      %v3321 = vadd.f32 %v2945, 1.0
      %v3322 = vadd.f32 %v2947, 1.0
      %v3323 = vadd.f32 %v2949, 1.0
      %v3324 = vadd.f32 %v2951, 1.0
      %v3325 = vadd.f32 %v2953, 1.0
      %v3326 = vadd.f32 %v2955, 1.0
      %v3327 = vadd.f32 %v2957, 1.0
      %v3328 = vadd.f32 %v2959, 1.0
      %v3329 = vadd.f32 %v2961, 1.0
      %v3330 = vadd.f32 %v2963, 1.0
      %v3331 = vadd.f32 %v2965, 1.0
      %v3332 = vadd.f32 %v2967, 1.0
      %v3333 = vadd.f32 %v2969, 1.0
      %v3334 = vadd.f32 %v2971, 1.0
      %v3335 = vadd.f32 %v2973, 1.0
      %v3336 = vadd.f32 %v2975, 1.0
      %v3337 = vadd.f32 %v2977, 1.0
      %v3338 = vadd.f32 %v2979, 1.0
      %v3339 = vadd.f32 %v2981, 1.0
      %v3340 = vadd.f32 %v2983, 1.0
      %v3341 = vadd.f32 %v2985, 1.0
      %v3342 = vadd.f32 %v2987, 1.0
      %v3343 = vadd.f32 %v2989, 1.0
      %v3344 = vadd.f32 %v2991, 1.0
      %v3345 = vadd.f32 %v2993, 1.0
      %v3346 = vadd.f32 %v2995, 1.0
      %v3347 = vadd.f32 %v2997, 1.0
      %v3348 = vadd.f32 %v2999, 1.0
      %v3349 = vadd.f32 %v3001, 1.0
      %v3350 = vadd.f32 %v3003, 1.0
      %v3351 = vadd.f32 %v3005, 1.0
      %v3352 = vadd.f32 %v3007, 1.0
      %v3353 = vadd.f32 %v3009, 1.0
      %v3354 = vadd.f32 %v3011, 1.0
      %v3355 = vadd.f32 %v3013, 1.0
      %v3356 = vadd.f32 %v3015, 1.0
      %v3357 = vadd.f32 %v3017, 1.0
      %v3358 = vadd.f32 %v3019, 1.0
      %v3359 = vadd.f32 %v3021, 1.0
      %v3360 = vadd.f32 %v3023, 1.0
      %v3361 = vadd.f32 %v3025, 1.0
      %v3362 = vadd.f32 %v3027, 1.0
      %v3363 = vadd.f32 %v3029, 1.0
      %v3364 = vadd.f32 %v3031, 1.0
      %v3365 = vadd.f32 %v3033, 1.0
      %v3366 = vadd.f32 %v3035, 1.0
      %v3367 = vadd.f32 %v3037, 1.0
      %v3368 = vadd.f32 %v3039, 1.0
      %v3369 = vadd.f32 %v3041, 1.0
      %v3370 = vadd.f32 %v3043, 1.0
      %v3371 = vadd.f32 %v3045, 1.0
      %v3372 = vadd.f32 %v3047, 1.0
      %v3373 = vadd.f32 %v3049, 1.0
      %v3374 = vadd.f32 %v3051, 1.0
      %v3375 = vadd.f32 %v3053, 1.0
      %v3376 = vadd.f32 %v3055, 1.0
      %v3377 = vadd.f32 %v3057, 1.0
      %v3378 = vadd.f32 %v3059, 1.0
      %v3379 = vadd.f32 %v3061, 1.0
      %v3380 = vadd.f32 %v3063, 1.0
      %v3381 = vadd.f32 %v3065, 1.0
      %v3382 = vadd.f32 %v3067, 1.0
      %v3383 = vadd.f32 %v3069, 1.0
      %v3384 = vadd.f32 %v3071, 1.0
      %v3385 = vadd.f32 %v3073, 1.0
      %v3386 = vadd.f32 %v3075, 1.0
      %v3387 = vadd.f32 %v3077, 1.0
      %v3388 = vadd.f32 %v3079, 1.0
      %v3389 = vadd.f32 %v3081, 1.0
      %v3390 = vadd.f32 %v3083, 1.0
      %v3391 = vadd.f32 %v3085, 1.0
      %v3392 = vadd.f32 %v3087, 1.0
      %v3393 = vadd.f32 %v3089, 1.0
      %v3394 = vadd.f32 %v3091, 1.0
      %v3395 = vadd.f32 %v3093, 1.0
      %v3396 = vadd.f32 %v3095, 1.0
      %v3397 = vadd.f32 %v3097, 1.0
      %v3398 = vadd.f32 %v3099, 1.0
      %v3399 = vadd.f32 %v3101, 1.0
      %v3400 = vadd.f32 %v3103, 1.0
      %v3401 = vadd.f32 %v3105, 1.0
      %v3402 = vadd.f32 %v3107, 1.0
      %v3403 = vadd.f32 %v3109, 1.0
      %v3404 = vadd.f32 %v3111, 1.0
      %v3405 = vadd.f32 %v3113, 1.0
      %v3406 = vadd.f32 %v3115, 1.0
      %v3407 = vadd.f32 %v3117, 1.0
      %v3408 = vadd.f32 %v3119, 1.0
      %v3409 = vadd.f32 %v3121, 1.0
      %v3410 = vadd.f32 %v3123, 1.0
      %v3411 = vadd.f32 %v3125, 1.0
      %v3412 = vadd.f32 %v3127, 1.0
      %v3413 = vadd.f32 %v3129, 1.0
      %v3414 = vadd.f32 %v3131, 1.0
      %v3415 = vadd.f32 %v3133, 1.0
      %v3416 = vadd.f32 %v3135, 1.0
      %v3417 = vadd.f32 %v3137, 1.0
      %v3418 = vadd.f32 %v3139, 1.0
      %v3419 = vadd.f32 %v3141, 1.0
      %v3420 = vadd.f32 %v3143, 1.0
      %v3421 = vadd.f32 %v3145, 1.0
      %v3422 = vadd.f32 %v3147, 1.0
      %v3423 = vadd.f32 %v3149, 1.0
      %v3424 = vadd.f32 %v3151, 1.0
      %v3425 = vadd.f32 %v3153, 1.0
      %v3426 = vadd.f32 %v3155, 1.0
      %v3427 = vadd.f32 %v3157, 1.0
      %v3428 = vadd.f32 %v3159, 1.0
      %v3429 = vadd.f32 %v3161, 1.0
      %v3430 = vadd.f32 %v3163, 1.0
      %v3431 = vadd.f32 %v3165, 1.0
      %v3432 = vadd.f32 %v3167, 1.0
      %v3433 = vadd.f32 %v3169, 1.0
      %v3434 = vadd.f32 %v3171, 1.0
      %v3435 = vadd.f32 %v3173, 1.0
      %v3436 = vadd.f32 %v3175, 1.0
      %v3437 = vadd.f32 %v3177, 1.0
      %v3438 = vadd.f32 %v3179, 1.0
      %v3439 = vadd.f32 %v3181, 1.0
      %v3440 = vadd.f32 %v3183, 1.0
      %v3441 = vadd.f32 %v3185, 1.0
      %v3442 = vrcp.pop %v3186
      %v3443 = vmul.f32 1.0, %v3442
      %v3444 = vrcp.pop %v3187
      %v3445 = vmul.f32 1.0, %v3444
      %v3446 = vrcp.pop %v3188
      %v3447 = vmul.f32 1.0, %v3446
      %v3448 = vrcp.pop %v3189
      %v3449 = vmul.f32 1.0, %v3448
      %v3450 = vrcp.pop %v3190
      %v3451 = vmul.f32 1.0, %v3450
      %v3452 = vrcp.pop %v3191
      %v3453 = vmul.f32 1.0, %v3452
      %v3454 = vrcp.pop %v3192
      %v3455 = vmul.f32 1.0, %v3454
      %v3456 = vrcp.pop %v3193
      %v3457 = vmul.f32 1.0, %v3456
      %v3458 = vrcp.pop %v3194
      %v3459 = vmul.f32 1.0, %v3458
      %v3460 = vrcp.pop %v3195
      %v3461 = vmul.f32 1.0, %v3460
      %v3462 = vrcp.pop %v3196
      %v3463 = vmul.f32 1.0, %v3462
      %v3464 = vrcp.pop %v3197
      %v3465 = vmul.f32 1.0, %v3464
      %v3466 = vrcp.pop %v3198
      %v3467 = vmul.f32 1.0, %v3466
      %v3468 = vrcp.pop %v3199
      %v3469 = vmul.f32 1.0, %v3468
      %v3470 = vrcp.pop %v3200
      %v3471 = vmul.f32 1.0, %v3470
      %v3472 = vrcp.pop %v3201
      %v3473 = vmul.f32 1.0, %v3472
      %v3474 = vrcp.pop %v3202
      %v3475 = vmul.f32 1.0, %v3474
      %v3476 = vrcp.pop %v3203
      %v3477 = vmul.f32 1.0, %v3476
      %v3478 = vrcp.pop %v3204
      %v3479 = vmul.f32 1.0, %v3478
      %v3480 = vrcp.pop %v3205
      %v3481 = vmul.f32 1.0, %v3480
      %v3482 = vrcp.pop %v3206
      %v3483 = vmul.f32 1.0, %v3482
      %v3484 = vrcp.pop %v3207
      %v3485 = vmul.f32 1.0, %v3484
      %v3486 = vrcp.pop %v3208
      %v3487 = vmul.f32 1.0, %v3486
      %v3488 = vrcp.pop %v3209
      %v3489 = vmul.f32 1.0, %v3488
      %v3490 = vrcp.pop %v3210
      %v3491 = vmul.f32 1.0, %v3490
      %v3492 = vrcp.pop %v3211
      %v3493 = vmul.f32 1.0, %v3492
      %v3494 = vrcp.pop %v3212
      %v3495 = vmul.f32 1.0, %v3494
      %v3496 = vrcp.pop %v3213
      %v3497 = vmul.f32 1.0, %v3496
      %v3498 = vrcp.pop %v3214
      %v3499 = vmul.f32 1.0, %v3498
      %v3500 = vrcp.pop %v3215
      %v3501 = vmul.f32 1.0, %v3500
      %v3502 = vrcp.pop %v3216
      %v3503 = vmul.f32 1.0, %v3502
      %v3504 = vrcp.pop %v3217
      %v3505 = vmul.f32 1.0, %v3504
      %v3506 = vrcp.pop %v3218
      %v3507 = vmul.f32 1.0, %v3506
      %v3508 = vrcp.pop %v3219
      %v3509 = vmul.f32 1.0, %v3508
      %v3510 = vrcp.pop %v3220
      %v3511 = vmul.f32 1.0, %v3510
      %v3512 = vrcp.pop %v3221
      %v3513 = vmul.f32 1.0, %v3512
      %v3514 = vrcp.pop %v3222
      %v3515 = vmul.f32 1.0, %v3514
      %v3516 = vrcp.pop %v3223
      %v3517 = vmul.f32 1.0, %v3516
      %v3518 = vrcp.pop %v3224
      %v3519 = vmul.f32 1.0, %v3518
      %v3520 = vrcp.pop %v3225
      %v3521 = vmul.f32 1.0, %v3520
      %v3522 = vrcp.pop %v3226
      %v3523 = vmul.f32 1.0, %v3522
      %v3524 = vrcp.pop %v3227
      %v3525 = vmul.f32 1.0, %v3524
      %v3526 = vrcp.pop %v3228
      %v3527 = vmul.f32 1.0, %v3526
      %v3528 = vrcp.pop %v3229
      %v3529 = vmul.f32 1.0, %v3528
      %v3530 = vrcp.pop %v3230
      %v3531 = vmul.f32 1.0, %v3530
      %v3532 = vrcp.pop %v3231
      %v3533 = vmul.f32 1.0, %v3532
      %v3534 = vrcp.pop %v3232
      %v3535 = vmul.f32 1.0, %v3534
      %v3536 = vrcp.pop %v3233
      %v3537 = vmul.f32 1.0, %v3536
      %v3538 = vrcp.pop %v3234
      %v3539 = vmul.f32 1.0, %v3538
      %v3540 = vrcp.pop %v3235
      %v3541 = vmul.f32 1.0, %v3540
      %v3542 = vrcp.pop %v3236
      %v3543 = vmul.f32 1.0, %v3542
      %v3544 = vrcp.pop %v3237
      %v3545 = vmul.f32 1.0, %v3544
      %v3546 = vrcp.pop %v3238
      %v3547 = vmul.f32 1.0, %v3546
      %v3548 = vrcp.pop %v3239
      %v3549 = vmul.f32 1.0, %v3548
      %v3550 = vrcp.pop %v3240
      %v3551 = vmul.f32 1.0, %v3550
      %v3552 = vrcp.pop %v3241
      %v3553 = vmul.f32 1.0, %v3552
      %v3554 = vrcp.pop %v3242
      %v3555 = vmul.f32 1.0, %v3554
      %v3556 = vrcp.pop %v3243
      %v3557 = vmul.f32 1.0, %v3556
      %v3558 = vrcp.pop %v3244
      %v3559 = vmul.f32 1.0, %v3558
      %v3560 = vrcp.pop %v3245
      %v3561 = vmul.f32 1.0, %v3560
      %v3562 = vrcp.pop %v3246
      %v3563 = vmul.f32 1.0, %v3562
      %v3564 = vrcp.pop %v3247
      %v3565 = vmul.f32 1.0, %v3564
      %v3566 = vrcp.pop %v3248
      %v3567 = vmul.f32 1.0, %v3566
      %v3568 = vrcp.pop %v3249
      %v3569 = vmul.f32 1.0, %v3568
      %v3570 = vrcp.pop %v3250
      %v3571 = vmul.f32 1.0, %v3570
      %v3572 = vrcp.pop %v3251
      %v3573 = vmul.f32 1.0, %v3572
      %v3574 = vrcp.pop %v3252
      %v3575 = vmul.f32 1.0, %v3574
      %v3576 = vrcp.pop %v3253
      %v3577 = vmul.f32 1.0, %v3576
      %v3578 = vrcp.pop %v3254
      %v3579 = vmul.f32 1.0, %v3578
      %v3580 = vrcp.pop %v3255
      %v3581 = vmul.f32 1.0, %v3580
      %v3582 = vrcp.pop %v3256
      %v3583 = vmul.f32 1.0, %v3582
      %v3584 = vrcp.pop %v3257
      %v3585 = vmul.f32 1.0, %v3584
      %v3586 = vrcp.pop %v3258
      %v3587 = vmul.f32 1.0, %v3586
      %v3588 = vrcp.pop %v3259
      %v3589 = vmul.f32 1.0, %v3588
      %v3590 = vrcp.pop %v3260
      %v3591 = vmul.f32 1.0, %v3590
      %v3592 = vrcp.pop %v3261
      %v3593 = vmul.f32 1.0, %v3592
      %v3594 = vrcp.pop %v3262
      %v3595 = vmul.f32 1.0, %v3594
      %v3596 = vrcp.pop %v3263
      %v3597 = vmul.f32 1.0, %v3596
      %v3598 = vrcp.pop %v3264
      %v3599 = vmul.f32 1.0, %v3598
      %v3600 = vrcp.pop %v3265
      %v3601 = vmul.f32 1.0, %v3600
      %v3602 = vrcp.pop %v3266
      %v3603 = vmul.f32 1.0, %v3602
      %v3604 = vrcp.pop %v3267
      %v3605 = vmul.f32 1.0, %v3604
      %v3606 = vrcp.pop %v3268
      %v3607 = vmul.f32 1.0, %v3606
      %v3608 = vrcp.pop %v3269
      %v3609 = vmul.f32 1.0, %v3608
      %v3610 = vrcp.pop %v3270
      %v3611 = vmul.f32 1.0, %v3610
      %v3612 = vrcp.pop %v3271
      %v3613 = vmul.f32 1.0, %v3612
      %v3614 = vrcp.pop %v3272
      %v3615 = vmul.f32 1.0, %v3614
      %v3616 = vrcp.pop %v3273
      %v3617 = vmul.f32 1.0, %v3616
      %v3618 = vrcp.pop %v3274
      %v3619 = vmul.f32 1.0, %v3618
      %v3620 = vrcp.pop %v3275
      %v3621 = vmul.f32 1.0, %v3620
      %v3622 = vrcp.pop %v3276
      %v3623 = vmul.f32 1.0, %v3622
      %v3624 = vrcp.pop %v3277
      %v3625 = vmul.f32 1.0, %v3624
      %v3626 = vrcp.pop %v3278
      %v3627 = vmul.f32 1.0, %v3626
      %v3628 = vrcp.pop %v3279
      %v3629 = vmul.f32 1.0, %v3628
      %v3630 = vrcp.pop %v3280
      %v3631 = vmul.f32 1.0, %v3630
      %v3632 = vrcp.pop %v3281
      %v3633 = vmul.f32 1.0, %v3632
      %v3634 = vrcp.pop %v3282
      %v3635 = vmul.f32 1.0, %v3634
      %v3636 = vrcp.pop %v3283
      %v3637 = vmul.f32 1.0, %v3636
      %v3638 = vrcp.pop %v3284
      %v3639 = vmul.f32 1.0, %v3638
      %v3640 = vrcp.pop %v3285
      %v3641 = vmul.f32 1.0, %v3640
      %v3642 = vrcp.pop %v3286
      %v3643 = vmul.f32 1.0, %v3642
      %v3644 = vrcp.pop %v3287
      %v3645 = vmul.f32 1.0, %v3644
      %v3646 = vrcp.pop %v3288
      %v3647 = vmul.f32 1.0, %v3646
      %v3648 = vrcp.pop %v3289
      %v3649 = vmul.f32 1.0, %v3648
      %v3650 = vrcp.pop %v3290
      %v3651 = vmul.f32 1.0, %v3650
      %v3652 = vrcp.pop %v3291
      %v3653 = vmul.f32 1.0, %v3652
      %v3654 = vrcp.pop %v3292
      %v3655 = vmul.f32 1.0, %v3654
      %v3656 = vrcp.pop %v3293
      %v3657 = vmul.f32 1.0, %v3656
      %v3658 = vrcp.pop %v3294
      %v3659 = vmul.f32 1.0, %v3658
      %v3660 = vrcp.pop %v3295
      %v3661 = vmul.f32 1.0, %v3660
      %v3662 = vrcp.pop %v3296
      %v3663 = vmul.f32 1.0, %v3662
      %v3664 = vrcp.pop %v3297
      %v3665 = vmul.f32 1.0, %v3664
      %v3666 = vrcp.pop %v3298
      %v3667 = vmul.f32 1.0, %v3666
      %v3668 = vrcp.pop %v3299
      %v3669 = vmul.f32 1.0, %v3668
      %v3670 = vrcp.pop %v3300
      %v3671 = vmul.f32 1.0, %v3670
      %v3672 = vrcp.pop %v3301
      %v3673 = vmul.f32 1.0, %v3672
      %v3674 = vrcp.pop %v3302
      %v3675 = vmul.f32 1.0, %v3674
      %v3676 = vrcp.pop %v3303
      %v3677 = vmul.f32 1.0, %v3676
      %v3678 = vrcp.pop %v3304
      %v3679 = vmul.f32 1.0, %v3678
      %v3680 = vrcp.pop %v3305
      %v3681 = vmul.f32 1.0, %v3680
      %v3682 = vrcp.pop %v3306
      %v3683 = vmul.f32 1.0, %v3682
      %v3684 = vrcp.pop %v3307
      %v3685 = vmul.f32 1.0, %v3684
      %v3686 = vrcp.pop %v3308
      %v3687 = vmul.f32 1.0, %v3686
      %v3688 = vrcp.pop %v3309
      %v3689 = vmul.f32 1.0, %v3688
      %v3690 = vrcp.pop %v3310
      %v3691 = vmul.f32 1.0, %v3690
      %v3692 = vrcp.pop %v3311
      %v3693 = vmul.f32 1.0, %v3692
      %v3694 = vrcp.pop %v3312
      %v3695 = vmul.f32 1.0, %v3694
      %v3696 = vrcp.pop %v3313
      %v3697 = vmul.f32 1.0, %v3696
      %v3698 = vrcp.pop %v3314
      %v3699 = vmul.f32 1.0, %v3698
      %v3700 = vrcp.pop %v3315
      %v3701 = vmul.f32 1.0, %v3700
      %v3702 = vrcp.pop %v3316
      %v3703 = vmul.f32 1.0, %v3702
      %v3704 = vrcp.pop %v3317
      %v3705 = vmul.f32 1.0, %v3704
      %v3706 = vrcp.pop %v3318
      %v3707 = vmul.f32 1.0, %v3706
      %v3708 = vrcp.pop %v3319
      %v3709 = vmul.f32 1.0, %v3708
      %v3710 = vrcp.pop %v3320
      %v3711 = vmul.f32 1.0, %v3710
      %v3712 = vrcp.pop %v3321
      %v3713 = vmul.f32 1.0, %v3712
      %v3714 = vrcp.pop %v3322
      %v3715 = vmul.f32 1.0, %v3714
      %v3716 = vrcp.pop %v3323
      %v3717 = vmul.f32 1.0, %v3716
      %v3718 = vrcp.pop %v3324
      %v3719 = vmul.f32 1.0, %v3718
      %v3720 = vrcp.pop %v3325
      %v3721 = vmul.f32 1.0, %v3720
      %v3722 = vrcp.pop %v3326
      %v3723 = vmul.f32 1.0, %v3722
      %v3724 = vrcp.pop %v3327
      %v3725 = vmul.f32 1.0, %v3724
      %v3726 = vrcp.pop %v3328
      %v3727 = vmul.f32 1.0, %v3726
      %v3728 = vrcp.pop %v3329
      %v3729 = vmul.f32 1.0, %v3728
      %v3730 = vrcp.pop %v3330
      %v3731 = vmul.f32 1.0, %v3730
      %v3732 = vrcp.pop %v3331
      %v3733 = vmul.f32 1.0, %v3732
      %v3734 = vrcp.pop %v3332
      %v3735 = vmul.f32 1.0, %v3734
      %v3736 = vrcp.pop %v3333
      %v3737 = vmul.f32 1.0, %v3736
      %v3738 = vrcp.pop %v3334
      %v3739 = vmul.f32 1.0, %v3738
      %v3740 = vrcp.pop %v3335
      %v3741 = vmul.f32 1.0, %v3740
      %v3742 = vrcp.pop %v3336
      %v3743 = vmul.f32 1.0, %v3742
      %v3744 = vrcp.pop %v3337
      %v3745 = vmul.f32 1.0, %v3744
      %v3746 = vrcp.pop %v3338
      %v3747 = vmul.f32 1.0, %v3746
      %v3748 = vrcp.pop %v3339
      %v3749 = vmul.f32 1.0, %v3748
      %v3750 = vrcp.pop %v3340
      %v3751 = vmul.f32 1.0, %v3750
      %v3752 = vrcp.pop %v3341
      %v3753 = vmul.f32 1.0, %v3752
      %v3754 = vrcp.pop %v3342
      %v3755 = vmul.f32 1.0, %v3754
      %v3756 = vrcp.pop %v3343
      %v3757 = vmul.f32 1.0, %v3756
      %v3758 = vrcp.pop %v3344
      %v3759 = vmul.f32 1.0, %v3758
      %v3760 = vrcp.pop %v3345
      %v3761 = vmul.f32 1.0, %v3760
      %v3762 = vrcp.pop %v3346
      %v3763 = vmul.f32 1.0, %v3762
      %v3764 = vrcp.pop %v3347
      %v3765 = vmul.f32 1.0, %v3764
      %v3766 = vrcp.pop %v3348
      %v3767 = vmul.f32 1.0, %v3766
      %v3768 = vrcp.pop %v3349
      %v3769 = vmul.f32 1.0, %v3768
      %v3770 = vrcp.pop %v3350
      %v3771 = vmul.f32 1.0, %v3770
      %v3772 = vrcp.pop %v3351
      %v3773 = vmul.f32 1.0, %v3772
      %v3774 = vrcp.pop %v3352
      %v3775 = vmul.f32 1.0, %v3774
      %v3776 = vrcp.pop %v3353
      %v3777 = vmul.f32 1.0, %v3776
      %v3778 = vrcp.pop %v3354
      %v3779 = vmul.f32 1.0, %v3778
      %v3780 = vrcp.pop %v3355
      %v3781 = vmul.f32 1.0, %v3780
      %v3782 = vrcp.pop %v3356
      %v3783 = vmul.f32 1.0, %v3782
      %v3784 = vrcp.pop %v3357
      %v3785 = vmul.f32 1.0, %v3784
      %v3786 = vrcp.pop %v3358
      %v3787 = vmul.f32 1.0, %v3786
      %v3788 = vrcp.pop %v3359
      %v3789 = vmul.f32 1.0, %v3788
      %v3790 = vrcp.pop %v3360
      %v3791 = vmul.f32 1.0, %v3790
      %v3792 = vrcp.pop %v3361
      %v3793 = vmul.f32 1.0, %v3792
      %v3794 = vrcp.pop %v3362
      %v3795 = vmul.f32 1.0, %v3794
      %v3796 = vrcp.pop %v3363
      %v3797 = vmul.f32 1.0, %v3796
      %v3798 = vrcp.pop %v3364
      %v3799 = vmul.f32 1.0, %v3798
      %v3800 = vrcp.pop %v3365
      %v3801 = vmul.f32 1.0, %v3800
      %v3802 = vrcp.pop %v3366
      %v3803 = vmul.f32 1.0, %v3802
      %v3804 = vrcp.pop %v3367
      %v3805 = vmul.f32 1.0, %v3804
      %v3806 = vrcp.pop %v3368
      %v3807 = vmul.f32 1.0, %v3806
      %v3808 = vrcp.pop %v3369
      %v3809 = vmul.f32 1.0, %v3808
      %v3810 = vrcp.pop %v3370
      %v3811 = vmul.f32 1.0, %v3810
      %v3812 = vrcp.pop %v3371
      %v3813 = vmul.f32 1.0, %v3812
      %v3814 = vrcp.pop %v3372
      %v3815 = vmul.f32 1.0, %v3814
      %v3816 = vrcp.pop %v3373
      %v3817 = vmul.f32 1.0, %v3816
      %v3818 = vrcp.pop %v3374
      %v3819 = vmul.f32 1.0, %v3818
      %v3820 = vrcp.pop %v3375
      %v3821 = vmul.f32 1.0, %v3820
      %v3822 = vrcp.pop %v3376
      %v3823 = vmul.f32 1.0, %v3822
      %v3824 = vrcp.pop %v3377
      %v3825 = vmul.f32 1.0, %v3824
      %v3826 = vrcp.pop %v3378
      %v3827 = vmul.f32 1.0, %v3826
      %v3828 = vrcp.pop %v3379
      %v3829 = vmul.f32 1.0, %v3828
      %v3830 = vrcp.pop %v3380
      %v3831 = vmul.f32 1.0, %v3830
      %v3832 = vrcp.pop %v3381
      %v3833 = vmul.f32 1.0, %v3832
      %v3834 = vrcp.pop %v3382
      %v3835 = vmul.f32 1.0, %v3834
      %v3836 = vrcp.pop %v3383
      %v3837 = vmul.f32 1.0, %v3836
      %v3838 = vrcp.pop %v3384
      %v3839 = vmul.f32 1.0, %v3838
      %v3840 = vrcp.pop %v3385
      %v3841 = vmul.f32 1.0, %v3840
      %v3842 = vrcp.pop %v3386
      %v3843 = vmul.f32 1.0, %v3842
      %v3844 = vrcp.pop %v3387
      %v3845 = vmul.f32 1.0, %v3844
      %v3846 = vrcp.pop %v3388
      %v3847 = vmul.f32 1.0, %v3846
      %v3848 = vrcp.pop %v3389
      %v3849 = vmul.f32 1.0, %v3848
      %v3850 = vrcp.pop %v3390
      %v3851 = vmul.f32 1.0, %v3850
      %v3852 = vrcp.pop %v3391
      %v3853 = vmul.f32 1.0, %v3852
      %v3854 = vrcp.pop %v3392
      %v3855 = vmul.f32 1.0, %v3854
      %v3856 = vrcp.pop %v3393
      %v3857 = vmul.f32 1.0, %v3856
      %v3858 = vrcp.pop %v3394
      %v3859 = vmul.f32 1.0, %v3858
      %v3860 = vrcp.pop %v3395
      %v3861 = vmul.f32 1.0, %v3860
      %v3862 = vrcp.pop %v3396
      %v3863 = vmul.f32 1.0, %v3862
      %v3864 = vrcp.pop %v3397
      %v3865 = vmul.f32 1.0, %v3864
      %v3866 = vrcp.pop %v3398
      %v3867 = vmul.f32 1.0, %v3866
      %v3868 = vrcp.pop %v3399
      %v3869 = vmul.f32 1.0, %v3868
      %v3870 = vrcp.pop %v3400
      %v3871 = vmul.f32 1.0, %v3870
      %v3872 = vrcp.pop %v3401
      %v3873 = vmul.f32 1.0, %v3872
      %v3874 = vrcp.pop %v3402
      %v3875 = vmul.f32 1.0, %v3874
      %v3876 = vrcp.pop %v3403
      %v3877 = vmul.f32 1.0, %v3876
      %v3878 = vrcp.pop %v3404
      %v3879 = vmul.f32 1.0, %v3878
      %v3880 = vrcp.pop %v3405
      %v3881 = vmul.f32 1.0, %v3880
      %v3882 = vrcp.pop %v3406
      %v3883 = vmul.f32 1.0, %v3882
      %v3884 = vrcp.pop %v3407
      %v3885 = vmul.f32 1.0, %v3884
      %v3886 = vrcp.pop %v3408
      %v3887 = vmul.f32 1.0, %v3886
      %v3888 = vrcp.pop %v3409
      %v3889 = vmul.f32 1.0, %v3888
      %v3890 = vrcp.pop %v3410
      %v3891 = vmul.f32 1.0, %v3890
      %v3892 = vrcp.pop %v3411
      %v3893 = vmul.f32 1.0, %v3892
      %v3894 = vrcp.pop %v3412
      %v3895 = vmul.f32 1.0, %v3894
      %v3896 = vrcp.pop %v3413
      %v3897 = vmul.f32 1.0, %v3896
      %v3898 = vrcp.pop %v3414
      %v3899 = vmul.f32 1.0, %v3898
      %v3900 = vrcp.pop %v3415
      %v3901 = vmul.f32 1.0, %v3900
      %v3902 = vrcp.pop %v3416
      %v3903 = vmul.f32 1.0, %v3902
      %v3904 = vrcp.pop %v3417
      %v3905 = vmul.f32 1.0, %v3904
      %v3906 = vrcp.pop %v3418
      %v3907 = vmul.f32 1.0, %v3906
      %v3908 = vrcp.pop %v3419
      %v3909 = vmul.f32 1.0, %v3908
      %v3910 = vrcp.pop %v3420
      %v3911 = vmul.f32 1.0, %v3910
      %v3912 = vrcp.pop %v3421
      %v3913 = vmul.f32 1.0, %v3912
      %v3914 = vrcp.pop %v3422
      %v3915 = vmul.f32 1.0, %v3914
      %v3916 = vrcp.pop %v3423
      %v3917 = vmul.f32 1.0, %v3916
      %v3918 = vrcp.pop %v3424
      %v3919 = vmul.f32 1.0, %v3918
      %v3920 = vrcp.pop %v3425
      %v3921 = vmul.f32 1.0, %v3920
      %v3922 = vrcp.pop %v3426
      %v3923 = vmul.f32 1.0, %v3922
      %v3924 = vrcp.pop %v3427
      %v3925 = vmul.f32 1.0, %v3924
      %v3926 = vrcp.pop %v3428
      %v3927 = vmul.f32 1.0, %v3926
      %v3928 = vrcp.pop %v3429
      %v3929 = vmul.f32 1.0, %v3928
      %v3930 = vrcp.pop %v3430
      %v3931 = vmul.f32 1.0, %v3930
      %v3932 = vrcp.pop %v3431
      %v3933 = vmul.f32 1.0, %v3932
      %v3934 = vrcp.pop %v3432
      %v3935 = vmul.f32 1.0, %v3934
      %v3936 = vrcp.pop %v3433
      %v3937 = vmul.f32 1.0, %v3936
      %v3938 = vrcp.pop %v3434
      %v3939 = vmul.f32 1.0, %v3938
      %v3940 = vrcp.pop %v3435
      %v3941 = vmul.f32 1.0, %v3940
      %v3942 = vrcp.pop %v3436
      %v3943 = vmul.f32 1.0, %v3942
      %v3944 = vrcp.pop %v3437
      %v3945 = vmul.f32 1.0, %v3944
      %v3946 = vrcp.pop %v3438
      %v3947 = vmul.f32 1.0, %v3946
      %v3948 = vrcp.pop %v3439
      %v3949 = vmul.f32 1.0, %v3948
      %v3950 = vrcp.pop %v3440
      %v3951 = vmul.f32 1.0, %v3950
      %v3952 = vrcp.pop %v3441
      %v3953 = vmul.f32 1.0, %v3952
      %v3954 = vmul.f32 %v1140, %v3443
      %v3955 = vmul.f32 %v1145, %v3445
      %v3956 = vmul.f32 %v1150, %v3447
      %v3957 = vmul.f32 %v1155, %v3449
      %v3958 = vmul.f32 %v1160, %v3451
      %v3959 = vmul.f32 %v1165, %v3453
      %v3960 = vmul.f32 %v1170, %v3455
      %v3961 = vmul.f32 %v1175, %v3457
      %v3962 = vmul.f32 %v1180, %v3459
      %v3963 = vmul.f32 %v1185, %v3461
      %v3964 = vmul.f32 %v1190, %v3463
      %v3965 = vmul.f32 %v1195, %v3465
      %v3966 = vmul.f32 %v1200, %v3467
      %v3967 = vmul.f32 %v1205, %v3469
      %v3968 = vmul.f32 %v1210, %v3471
      %v3969 = vmul.f32 %v1215, %v3473
      %v3970 = vmul.f32 %v1220, %v3475
      %v3971 = vmul.f32 %v1225, %v3477
      %v3972 = vmul.f32 %v1230, %v3479
      %v3973 = vmul.f32 %v1235, %v3481
      %v3974 = vmul.f32 %v1240, %v3483
      %v3975 = vmul.f32 %v1245, %v3485
      %v3976 = vmul.f32 %v1250, %v3487
      %v3977 = vmul.f32 %v1255, %v3489
      %v3978 = vmul.f32 %v1260, %v3491
      %v3979 = vmul.f32 %v1265, %v3493
      %v3980 = vmul.f32 %v1270, %v3495
      %v3981 = vmul.f32 %v1275, %v3497
      %v3982 = vmul.f32 %v1280, %v3499
      %v3983 = vmul.f32 %v1285, %v3501
      %v3984 = vmul.f32 %v1290, %v3503
      %v3985 = vmul.f32 %v1295, %v3505
      %v3986 = vmul.f32 %v1300, %v3507
      %v3987 = vmul.f32 %v1305, %v3509
      %v3988 = vmul.f32 %v1310, %v3511
      %v3989 = vmul.f32 %v1315, %v3513
      %v3990 = vmul.f32 %v1320, %v3515
      %v3991 = vmul.f32 %v1325, %v3517
      %v3992 = vmul.f32 %v1330, %v3519
      %v3993 = vmul.f32 %v1335, %v3521
      %v3994 = vmul.f32 %v1340, %v3523
      %v3995 = vmul.f32 %v1345, %v3525
      %v3996 = vmul.f32 %v1350, %v3527
      %v3997 = vmul.f32 %v1355, %v3529
      %v3998 = vmul.f32 %v1360, %v3531
      %v3999 = vmul.f32 %v1365, %v3533
      %v4000 = vmul.f32 %v1370, %v3535
      %v4001 = vmul.f32 %v1375, %v3537
      %v4002 = vmul.f32 %v1380, %v3539
      %v4003 = vmul.f32 %v1385, %v3541
      %v4004 = vmul.f32 %v1390, %v3543
      %v4005 = vmul.f32 %v1395, %v3545
      %v4006 = vmul.f32 %v1400, %v3547
      %v4007 = vmul.f32 %v1405, %v3549
      %v4008 = vmul.f32 %v1410, %v3551
      %v4009 = vmul.f32 %v1415, %v3553
      %v4010 = vmul.f32 %v1420, %v3555
      %v4011 = vmul.f32 %v1425, %v3557
      %v4012 = vmul.f32 %v1430, %v3559
      %v4013 = vmul.f32 %v1435, %v3561
      %v4014 = vmul.f32 %v1440, %v3563
      %v4015 = vmul.f32 %v1445, %v3565
      %v4016 = vmul.f32 %v1450, %v3567
      %v4017 = vmul.f32 %v1455, %v3569
      %v4018 = vmul.f32 %v1460, %v3571
      %v4019 = vmul.f32 %v1465, %v3573
      %v4020 = vmul.f32 %v1470, %v3575
      %v4021 = vmul.f32 %v1475, %v3577
      %v4022 = vmul.f32 %v1480, %v3579
      %v4023 = vmul.f32 %v1485, %v3581
      %v4024 = vmul.f32 %v1490, %v3583
      %v4025 = vmul.f32 %v1495, %v3585
      %v4026 = vmul.f32 %v1500, %v3587
      %v4027 = vmul.f32 %v1505, %v3589
      %v4028 = vmul.f32 %v1510, %v3591
      %v4029 = vmul.f32 %v1515, %v3593
      %v4030 = vmul.f32 %v1520, %v3595
      %v4031 = vmul.f32 %v1525, %v3597
      %v4032 = vmul.f32 %v1530, %v3599
      %v4033 = vmul.f32 %v1535, %v3601
      %v4034 = vmul.f32 %v1540, %v3603
      %v4035 = vmul.f32 %v1545, %v3605
      %v4036 = vmul.f32 %v1550, %v3607
      %v4037 = vmul.f32 %v1555, %v3609
      %v4038 = vmul.f32 %v1560, %v3611
      %v4039 = vmul.f32 %v1565, %v3613
      %v4040 = vmul.f32 %v1570, %v3615
      %v4041 = vmul.f32 %v1575, %v3617
      %v4042 = vmul.f32 %v1580, %v3619
      %v4043 = vmul.f32 %v1585, %v3621
      %v4044 = vmul.f32 %v1590, %v3623
      %v4045 = vmul.f32 %v1595, %v3625
      %v4046 = vmul.f32 %v1600, %v3627
      %v4047 = vmul.f32 %v1605, %v3629
      %v4048 = vmul.f32 %v1610, %v3631
      %v4049 = vmul.f32 %v1615, %v3633
      %v4050 = vmul.f32 %v1620, %v3635
      %v4051 = vmul.f32 %v1625, %v3637
      %v4052 = vmul.f32 %v1630, %v3639
      %v4053 = vmul.f32 %v1635, %v3641
      %v4054 = vmul.f32 %v1640, %v3643
      %v4055 = vmul.f32 %v1645, %v3645
      %v4056 = vmul.f32 %v1650, %v3647
      %v4057 = vmul.f32 %v1655, %v3649
      %v4058 = vmul.f32 %v1660, %v3651
      %v4059 = vmul.f32 %v1665, %v3653
      %v4060 = vmul.f32 %v1670, %v3655
      %v4061 = vmul.f32 %v1675, %v3657
      %v4062 = vmul.f32 %v1680, %v3659
      %v4063 = vmul.f32 %v1685, %v3661
      %v4064 = vmul.f32 %v1690, %v3663
      %v4065 = vmul.f32 %v1695, %v3665
      %v4066 = vmul.f32 %v1700, %v3667
      %v4067 = vmul.f32 %v1705, %v3669
      %v4068 = vmul.f32 %v1710, %v3671
      %v4069 = vmul.f32 %v1715, %v3673
      %v4070 = vmul.f32 %v1720, %v3675
      %v4071 = vmul.f32 %v1725, %v3677
      %v4072 = vmul.f32 %v1730, %v3679
      %v4073 = vmul.f32 %v1735, %v3681
      %v4074 = vmul.f32 %v1740, %v3683
      %v4075 = vmul.f32 %v1745, %v3685
      %v4076 = vmul.f32 %v1750, %v3687
      %v4077 = vmul.f32 %v1755, %v3689
      %v4078 = vmul.f32 %v1760, %v3691
      %v4079 = vmul.f32 %v1765, %v3693
      %v4080 = vmul.f32 %v1770, %v3695
      %v4081 = vmul.f32 %v1775, %v3697
      %v4082 = vmul.f32 %v1780, %v3699
      %v4083 = vmul.f32 %v1785, %v3701
      %v4084 = vmul.f32 %v1790, %v3703
      %v4085 = vmul.f32 %v1795, %v3705
      %v4086 = vmul.f32 %v1800, %v3707
      %v4087 = vmul.f32 %v1805, %v3709
      %v4088 = vmul.f32 %v1810, %v3711
      %v4089 = vmul.f32 %v1815, %v3713
      %v4090 = vmul.f32 %v1820, %v3715
      %v4091 = vmul.f32 %v1825, %v3717
      %v4092 = vmul.f32 %v1830, %v3719
      %v4093 = vmul.f32 %v1835, %v3721
      %v4094 = vmul.f32 %v1840, %v3723
      %v4095 = vmul.f32 %v1845, %v3725
      %v4096 = vmul.f32 %v1850, %v3727
      %v4097 = vmul.f32 %v1855, %v3729
      %v4098 = vmul.f32 %v1860, %v3731
      %v4099 = vmul.f32 %v1865, %v3733
      %v4100 = vmul.f32 %v1870, %v3735
      %v4101 = vmul.f32 %v1875, %v3737
      %v4102 = vmul.f32 %v1880, %v3739
      %v4103 = vmul.f32 %v1885, %v3741
      %v4104 = vmul.f32 %v1890, %v3743
      %v4105 = vmul.f32 %v1895, %v3745
      %v4106 = vmul.f32 %v1900, %v3747
      %v4107 = vmul.f32 %v1905, %v3749
      %v4108 = vmul.f32 %v1910, %v3751
      %v4109 = vmul.f32 %v1915, %v3753
      %v4110 = vmul.f32 %v1920, %v3755
      %v4111 = vmul.f32 %v1925, %v3757
      %v4112 = vmul.f32 %v1930, %v3759
      %v4113 = vmul.f32 %v1935, %v3761
      %v4114 = vmul.f32 %v1940, %v3763
      %v4115 = vmul.f32 %v1945, %v3765
      %v4116 = vmul.f32 %v1950, %v3767
      %v4117 = vmul.f32 %v1955, %v3769
      %v4118 = vmul.f32 %v1960, %v3771
      %v4119 = vmul.f32 %v1965, %v3773
      %v4120 = vmul.f32 %v1970, %v3775
      %v4121 = vmul.f32 %v1975, %v3777
      %v4122 = vmul.f32 %v1980, %v3779
      %v4123 = vmul.f32 %v1985, %v3781
      %v4124 = vmul.f32 %v1990, %v3783
      %v4125 = vmul.f32 %v1995, %v3785
      %v4126 = vmul.f32 %v2000, %v3787
      %v4127 = vmul.f32 %v2005, %v3789
      %v4128 = vmul.f32 %v2010, %v3791
      %v4129 = vmul.f32 %v2015, %v3793
      %v4130 = vmul.f32 %v2020, %v3795
      %v4131 = vmul.f32 %v2025, %v3797
      %v4132 = vmul.f32 %v2030, %v3799
      %v4133 = vmul.f32 %v2035, %v3801
      %v4134 = vmul.f32 %v2040, %v3803
      %v4135 = vmul.f32 %v2045, %v3805
      %v4136 = vmul.f32 %v2050, %v3807
      %v4137 = vmul.f32 %v2055, %v3809
      %v4138 = vmul.f32 %v2060, %v3811
      %v4139 = vmul.f32 %v2065, %v3813
      %v4140 = vmul.f32 %v2070, %v3815
      %v4141 = vmul.f32 %v2075, %v3817
      %v4142 = vmul.f32 %v2080, %v3819
      %v4143 = vmul.f32 %v2085, %v3821
      %v4144 = vmul.f32 %v2090, %v3823
      %v4145 = vmul.f32 %v2095, %v3825
      %v4146 = vmul.f32 %v2100, %v3827
      %v4147 = vmul.f32 %v2105, %v3829
      %v4148 = vmul.f32 %v2110, %v3831
      %v4149 = vmul.f32 %v2115, %v3833
      %v4150 = vmul.f32 %v2120, %v3835
      %v4151 = vmul.f32 %v2125, %v3837
      %v4152 = vmul.f32 %v2130, %v3839
      %v4153 = vmul.f32 %v2135, %v3841
      %v4154 = vmul.f32 %v2140, %v3843
      %v4155 = vmul.f32 %v2145, %v3845
      %v4156 = vmul.f32 %v2150, %v3847
      %v4157 = vmul.f32 %v2155, %v3849
      %v4158 = vmul.f32 %v2160, %v3851
      %v4159 = vmul.f32 %v2165, %v3853
      %v4160 = vmul.f32 %v2170, %v3855
      %v4161 = vmul.f32 %v2175, %v3857
      %v4162 = vmul.f32 %v2180, %v3859
      %v4163 = vmul.f32 %v2185, %v3861
      %v4164 = vmul.f32 %v2190, %v3863
      %v4165 = vmul.f32 %v2195, %v3865
      %v4166 = vmul.f32 %v2200, %v3867
      %v4167 = vmul.f32 %v2205, %v3869
      %v4168 = vmul.f32 %v2210, %v3871
      %v4169 = vmul.f32 %v2215, %v3873
      %v4170 = vmul.f32 %v2220, %v3875
      %v4171 = vmul.f32 %v2225, %v3877
      %v4172 = vmul.f32 %v2230, %v3879
      %v4173 = vmul.f32 %v2235, %v3881
      %v4174 = vmul.f32 %v2240, %v3883
      %v4175 = vmul.f32 %v2245, %v3885
      %v4176 = vmul.f32 %v2250, %v3887
      %v4177 = vmul.f32 %v2255, %v3889
      %v4178 = vmul.f32 %v2260, %v3891
      %v4179 = vmul.f32 %v2265, %v3893
      %v4180 = vmul.f32 %v2270, %v3895
      %v4181 = vmul.f32 %v2275, %v3897
      %v4182 = vmul.f32 %v2280, %v3899
      %v4183 = vmul.f32 %v2285, %v3901
      %v4184 = vmul.f32 %v2290, %v3903
      %v4185 = vmul.f32 %v2295, %v3905
      %v4186 = vmul.f32 %v2300, %v3907
      %v4187 = vmul.f32 %v2305, %v3909
      %v4188 = vmul.f32 %v2310, %v3911
      %v4189 = vmul.f32 %v2315, %v3913
      %v4190 = vmul.f32 %v2320, %v3915
      %v4191 = vmul.f32 %v2325, %v3917
      %v4192 = vmul.f32 %v2330, %v3919
      %v4193 = vmul.f32 %v2335, %v3921
      %v4194 = vmul.f32 %v2340, %v3923
      %v4195 = vmul.f32 %v2345, %v3925
      %v4196 = vmul.f32 %v2350, %v3927
      %v4197 = vmul.f32 %v2355, %v3929
      %v4198 = vmul.f32 %v2360, %v3931
      %v4199 = vmul.f32 %v2365, %v3933
      %v4200 = vmul.f32 %v2370, %v3935
      %v4201 = vmul.f32 %v2375, %v3937
      %v4202 = vmul.f32 %v2380, %v3939
      %v4203 = vmul.f32 %v2385, %v3941
      %v4204 = vmul.f32 %v2390, %v3943
      %v4205 = vmul.f32 %v2395, %v3945
      %v4206 = vmul.f32 %v2400, %v3947
      %v4207 = vmul.f32 %v2405, %v3949
      %v4208 = vmul.f32 %v2410, %v3951
      %v4209 = vmul.f32 %v2415, %v3953
      %v4210 = vld [vmem:[%s3] sm:$0xff]
      %v4211 = vld [vmem:[%s3 + $0x8] sm:$0xff]
      %v4212 = vld [vmem:[%s3 + $0x10] sm:$0xff]
      %v4213 = vld [vmem:[%s3 + $0x18] sm:$0xff]
      %v4214 = vld [vmem:[%s3 + $0x20] sm:$0xff]
      %v4215 = vld [vmem:[%s3 + $0x28] sm:$0xff]
      %v4216 = vld [vmem:[%s3 + $0x30] sm:$0xff]
      %v4217 = vld [vmem:[%s3 + $0x38] sm:$0xff]
      %v4218 = vld [vmem:[%s3 + $0x40] sm:$0xff]
      %v4219 = vld [vmem:[%s3 + $0x48] sm:$0xff]
      %v4220 = vld [vmem:[%s3 + $0x50] sm:$0xff]
      %v4221 = vld [vmem:[%s3 + $0x58] sm:$0xff]
      %v4222 = vld [vmem:[%s3 + $0x60] sm:$0xff]
      %v4223 = vld [vmem:[%s3 + $0x68] sm:$0xff]
      %v4224 = vld [vmem:[%s3 + $0x70] sm:$0xff]
      %v4225 = vld [vmem:[%s3 + $0x78] sm:$0xff]
      %v4226 = vld [vmem:[%s4] sm:$0x1]
      %v4228 = vlaneseq
      %v4229 = vshrl.u32 %v4228, 7
      %v4230 = vsub.s32 0, %v4229
      %v4231 = vrot.slane %v4226, %v4230
      %4233 = vmatprep.subr.mxu0 0.0
      %4234 = vmatpush1.msra.mxu0 %v4210
      %4235 = vmatprep.subr.mxu0 0.0
      %4236 = vmatpush1.msra.mxu0 %v4211
      %4237 = vmatprep.subr.mxu0 0.0
      %4238 = vmatpush1.msra.mxu0 %v4212
      %4239 = vmatprep.subr.mxu0 0.0
      %4240 = vmatpush1.msra.mxu0 %v4213
      %4241 = vmatprep.subr.mxu0 0.0
      %4242 = vmatpush1.msra.mxu0 %v4214
      %4243 = vmatprep.subr.mxu0 0.0
      %4244 = vmatpush1.msra.mxu0 %v4215
      %4245 = vmatprep.subr.mxu0 0.0
      %4246 = vmatpush1.msra.mxu0 %v4216
      %4247 = vmatprep.subr.mxu0 0.0
      %4248 = vmatpush1.msra.mxu0 %v4217
      %4249 = vmatprep.subr.mxu0 0.0
      %4250 = vmatpush1.msra.mxu0 %v4218
      %4251 = vmatprep.subr.mxu0 0.0
      %4252 = vmatpush1.msra.mxu0 %v4219
      %4253 = vmatprep.subr.mxu0 0.0
      %4254 = vmatpush1.msra.mxu0 %v4220
      %4255 = vmatprep.subr.mxu0 0.0
      %4256 = vmatpush1.msra.mxu0 %v4221
      %4257 = vmatprep.subr.mxu0 0.0
      %4258 = vmatpush1.msra.mxu0 %v4222
      %4259 = vmatprep.subr.mxu0 0.0
      %4260 = vmatpush1.msra.mxu0 %v4223
      %4261 = vmatprep.subr.mxu0 0.0
      %4262 = vmatpush1.msra.mxu0 %v4224
      %4263 = vmatprep.subr.mxu0 0.0
      %4264 = vmatpush1.msra.mxu0 %v4225
      %4265 = vmatprep.subr.mxu0 0.0
      %4266 = vmatpush1.msra.mxu0 0.0
      %4267 = vmatprep.subr.mxu0 0.0
      %4268 = vmatpush1.msra.mxu0 0.0
      %4269 = vmatprep.subr.mxu0 0.0
      %4270 = vmatpush1.msra.mxu0 0.0
      %4271 = vmatprep.subr.mxu0 0.0
      %4272 = vmatpush1.msra.mxu0 0.0
      %4273 = vmatprep.subr.mxu0 0.0
      %4274 = vmatpush1.msra.mxu0 0.0
      %4275 = vmatprep.subr.mxu0 0.0
      %4276 = vmatpush1.msra.mxu0 0.0
      %4277 = vmatprep.subr.mxu0 0.0
      %4278 = vmatpush1.msra.mxu0 0.0
      %4279 = vmatprep.subr.mxu0 0.0
      %4280 = vmatpush1.msra.mxu0 0.0
      %4281 = vmatprep.subr.mxu0 0.0
      %4282 = vmatpush1.msra.mxu0 0.0
      %4283 = vmatprep.subr.mxu0 0.0
      %4284 = vmatpush1.msra.mxu0 0.0
      %4285 = vmatprep.subr.mxu0 0.0
      %4286 = vmatpush1.msra.mxu0 0.0
      %4287 = vmatprep.subr.mxu0 0.0
      %4288 = vmatpush1.msra.mxu0 0.0
      %4289 = vmatprep.subr.mxu0 0.0
      %4290 = vmatpush1.msra.mxu0 0.0
      %4291 = vmatprep.subr.mxu0 0.0
      %4292 = vmatpush1.msra.mxu0 0.0
      %4293 = vmatprep.subr.mxu0 0.0
      %4294 = vmatpush1.msra.mxu0 0.0
      %4295 = vmatprep.subr.mxu0 0.0
      %4296 = vmatpush1.msra.mxu0 0.0
      %4297 = vmatprep.mubr.f32.mxu0 0.0
      %4298 = vmatmul.mubr.f32.gmra.mrb[0].mxu0 %v3954
      %v4299 = vpop.f32.mrb[0].mxu0
      %v4300 = vadd.f32 %v4231, %v4299
      %v4301 = vpop.f32.mrb[0].mxu0
      %4302 = vmatprep.mubr.f32.mxu0 0.0
      %4303 = vmatmul.mubr.f32.gmra.mrb[0].mxu0 %v3955
      %v4304 = vpop.f32.mrb[0].mxu0
      %v4305 = vadd.f32 %v4231, %v4304
      %v4306 = vpop.f32.mrb[0].mxu0
      %4307 = vmatprep.mubr.f32.mxu0 0.0
      %4308 = vmatmul.mubr.f32.gmra.mrb[0].mxu0 %v3956
      %v4309 = vpop.f32.mrb[0].mxu0
      %v4310 = vadd.f32 %v4231, %v4309
      %v4311 = vpop.f32.mrb[0].mxu0
      %4312 = vmatprep.mubr.f32.mxu0 0.0
      %4313 = vmatmul.mubr.f32.gmra.mrb[0].mxu0 %v3957
      %v4314 = vpop.f32.mrb[0].mxu0
      %v4315 = vadd.f32 %v4231, %v4314
      %v4316 = vpop.f32.mrb[0].mxu0
      %4317 = vmatprep.mubr.f32.mxu0 0.0
      %4318 = vmatmul.mubr.f32.gmra.mrb[0].mxu0 %v3958
      %v4319 = vpop.f32.mrb[0].mxu0
      %v4320 = vadd.f32 %v4231, %v4319
      %v4321 = vpop.f32.mrb[0].mxu0
      %4322 = vmatprep.mubr.f32.mxu0 0.0
      %4323 = vmatmul.mubr.f32.gmra.mrb[0].mxu0 %v3959
      %v4324 = vpop.f32.mrb[0].mxu0
      %v4325 = vadd.f32 %v4231, %v4324
      %v4326 = vpop.f32.mrb[0].mxu0
      %4327 = vmatprep.mubr.f32.mxu0 0.0
      %4328 = vmatmul.mubr.f32.gmra.mrb[0].mxu0 %v3960
      %v4329 = vpop.f32.mrb[0].mxu0
      %v4330 = vadd.f32 %v4231, %v4329
      %v4331 = vpop.f32.mrb[0].mxu0
      %4332 = vmatprep.mubr.f32.mxu0 0.0
      %4333 = vmatmul.mubr.f32.gmra.mrb[0].mxu0 %v3961
      %v4334 = vpop.f32.mrb[0].mxu0
      %v4335 = vadd.f32 %v4231, %v4334
      %v4336 = vpop.f32.mrb[0].mxu0
      %4337 = vmatprep.mubr.f32.mxu0 0.0
      %4338 = vmatmul.mubr.f32.gmra.mrb[0].mxu0 %v3962
      %v4339 = vpop.f32.mrb[0].mxu0
      %v4340 = vadd.f32 %v4231, %v4339
      %v4341 = vpop.f32.mrb[0].mxu0
      %4342 = vmatprep.mubr.f32.mxu0 0.0
      %4343 = vmatmul.mubr.f32.gmra.mrb[0].mxu0 %v3963
      %v4344 = vpop.f32.mrb[0].mxu0
      %v4345 = vadd.f32 %v4231, %v4344
      %v4346 = vpop.f32.mrb[0].mxu0
      %4347 = vmatprep.mubr.f32.mxu0 0.0
      %4348 = vmatmul.mubr.f32.gmra.mrb[0].mxu0 %v3964
      %v4349 = vpop.f32.mrb[0].mxu0
      %v4350 = vadd.f32 %v4231, %v4349
      %v4351 = vpop.f32.mrb[0].mxu0
      %4352 = vmatprep.mubr.f32.mxu0 0.0
      %4353 = vmatmul.mubr.f32.gmra.mrb[0].mxu0 %v3965
      %v4354 = vpop.f32.mrb[0].mxu0
      %v4355 = vadd.f32 %v4231, %v4354
      %v4356 = vpop.f32.mrb[0].mxu0
      %4357 = vmatprep.mubr.f32.mxu0 0.0
      %4358 = vmatmul.mubr.f32.gmra.mrb[0].mxu0 %v3966
      %v4359 = vpop.f32.mrb[0].mxu0
      %v4360 = vadd.f32 %v4231, %v4359
      %v4361 = vpop.f32.mrb[0].mxu0
      %4362 = vmatprep.mubr.f32.mxu0 0.0
      %4363 = vmatmul.mubr.f32.gmra.mrb[0].mxu0 %v3967
      %v4364 = vpop.f32.mrb[0].mxu0
      %v4365 = vadd.f32 %v4231, %v4364
      %v4366 = vpop.f32.mrb[0].mxu0
      %4367 = vmatprep.mubr.f32.mxu0 0.0
      %4368 = vmatmul.mubr.f32.gmra.mrb[0].mxu0 %v3968
      %v4369 = vpop.f32.mrb[0].mxu0
      %v4370 = vadd.f32 %v4231, %v4369
      %v4371 = vpop.f32.mrb[0].mxu0
      %4372 = vmatprep.mubr.f32.mxu0 0.0
      %4373 = vmatmul.mubr.f32.gmra.mrb[0].mxu0 %v3969
      %v4374 = vpop.f32.mrb[0].mxu0
      %v4375 = vadd.f32 %v4231, %v4374
      %v4376 = vpop.f32.mrb[0].mxu0
      %4377 = vmatprep.mubr.f32.mxu0 0.0
      %4378 = vmatmul.mubr.f32.gmra.mrb[0].mxu0 %v3970
      %v4379 = vpop.f32.mrb[0].mxu0
      %v4380 = vadd.f32 %v4231, %v4379
      %v4381 = vpop.f32.mrb[0].mxu0
      %4382 = vmatprep.mubr.f32.mxu0 0.0
      %4383 = vmatmul.mubr.f32.gmra.mrb[0].mxu0 %v3971
      %v4384 = vpop.f32.mrb[0].mxu0
      %v4385 = vadd.f32 %v4231, %v4384
      %v4386 = vpop.f32.mrb[0].mxu0
      %4387 = vmatprep.mubr.f32.mxu0 0.0
      %4388 = vmatmul.mubr.f32.gmra.mrb[0].mxu0 %v3972
      %v4389 = vpop.f32.mrb[0].mxu0
      %v4390 = vadd.f32 %v4231, %v4389
      %v4391 = vpop.f32.mrb[0].mxu0
      %4392 = vmatprep.mubr.f32.mxu0 0.0
      %4393 = vmatmul.mubr.f32.gmra.mrb[0].mxu0 %v3973
      %v4394 = vpop.f32.mrb[0].mxu0
      %v4395 = vadd.f32 %v4231, %v4394
      %v4396 = vpop.f32.mrb[0].mxu0
      %4397 = vmatprep.mubr.f32.mxu0 0.0
      %4398 = vmatmul.mubr.f32.gmra.mrb[0].mxu0 %v3974
      %v4399 = vpop.f32.mrb[0].mxu0
      %v4400 = vadd.f32 %v4231, %v4399
      %v4401 = vpop.f32.mrb[0].mxu0
      %4402 = vmatprep.mubr.f32.mxu0 0.0
      %4403 = vmatmul.mubr.f32.gmra.mrb[0].mxu0 %v3975
      %v4404 = vpop.f32.mrb[0].mxu0
      %v4405 = vadd.f32 %v4231, %v4404
      %v4406 = vpop.f32.mrb[0].mxu0
      %4407 = vmatprep.mubr.f32.mxu0 0.0
      %4408 = vmatmul.mubr.f32.gmra.mrb[0].mxu0 %v3976
      %v4409 = vpop.f32.mrb[0].mxu0
      %v4410 = vadd.f32 %v4231, %v4409
      %v4411 = vpop.f32.mrb[0].mxu0
      %4412 = vmatprep.mubr.f32.mxu0 0.0
      %4413 = vmatmul.mubr.f32.gmra.mrb[0].mxu0 %v3977
      %v4414 = vpop.f32.mrb[0].mxu0
      %v4415 = vadd.f32 %v4231, %v4414
      %v4416 = vpop.f32.mrb[0].mxu0
      %4417 = vmatprep.mubr.f32.mxu0 0.0
      %4418 = vmatmul.mubr.f32.gmra.mrb[0].mxu0 %v3978
      %v4419 = vpop.f32.mrb[0].mxu0
      %v4420 = vadd.f32 %v4231, %v4419
      %v4421 = vpop.f32.mrb[0].mxu0
      %4422 = vmatprep.mubr.f32.mxu0 0.0
      %4423 = vmatmul.mubr.f32.gmra.mrb[0].mxu0 %v3979
      %v4424 = vpop.f32.mrb[0].mxu0
      %v4425 = vadd.f32 %v4231, %v4424
      %v4426 = vpop.f32.mrb[0].mxu0
      %4427 = vmatprep.mubr.f32.mxu0 0.0
      %4428 = vmatmul.mubr.f32.gmra.mrb[0].mxu0 %v3980
      %v4429 = vpop.f32.mrb[0].mxu0
      %v4430 = vadd.f32 %v4231, %v4429
      %v4431 = vpop.f32.mrb[0].mxu0
      %4432 = vmatprep.mubr.f32.mxu0 0.0
      %4433 = vmatmul.mubr.f32.gmra.mrb[0].mxu0 %v3981
      %v4434 = vpop.f32.mrb[0].mxu0
      %v4435 = vadd.f32 %v4231, %v4434
      %v4436 = vpop.f32.mrb[0].mxu0
      %4437 = vmatprep.mubr.f32.mxu0 0.0
      %4438 = vmatmul.mubr.f32.gmra.mrb[0].mxu0 %v3982
      %v4439 = vpop.f32.mrb[0].mxu0
      %v4440 = vadd.f32 %v4231, %v4439
      %v4441 = vpop.f32.mrb[0].mxu0
      %4442 = vmatprep.mubr.f32.mxu0 0.0
      %4443 = vmatmul.mubr.f32.gmra.mrb[0].mxu0 %v3983
      %v4444 = vpop.f32.mrb[0].mxu0
      %v4445 = vadd.f32 %v4231, %v4444
      %v4446 = vpop.f32.mrb[0].mxu0
      %4447 = vmatprep.mubr.f32.mxu0 0.0
      %4448 = vmatmul.mubr.f32.gmra.mrb[0].mxu0 %v3984
      %v4449 = vpop.f32.mrb[0].mxu0
      %v4450 = vadd.f32 %v4231, %v4449
      %v4451 = vpop.f32.mrb[0].mxu0
      %4452 = vmatprep.mubr.f32.mxu0 0.0
      %4453 = vmatmul.mubr.f32.gmra.mrb[0].mxu0 %v3985
      %v4454 = vpop.f32.mrb[0].mxu0
      %v4455 = vadd.f32 %v4231, %v4454
      %v4456 = vpop.f32.mrb[0].mxu0
      %4457 = vmatprep.mubr.f32.mxu0 0.0
      %4458 = vmatmul.mubr.f32.gmra.mrb[0].mxu0 %v3986
      %v4459 = vpop.f32.mrb[0].mxu0
      %v4460 = vadd.f32 %v4231, %v4459
      %v4461 = vpop.f32.mrb[0].mxu0
      %4462 = vmatprep.mubr.f32.mxu0 0.0
      %4463 = vmatmul.mubr.f32.gmra.mrb[0].mxu0 %v3987
      %v4464 = vpop.f32.mrb[0].mxu0
      %v4465 = vadd.f32 %v4231, %v4464
      %v4466 = vpop.f32.mrb[0].mxu0
      %4467 = vmatprep.mubr.f32.mxu0 0.0
      %4468 = vmatmul.mubr.f32.gmra.mrb[0].mxu0 %v3988
      %v4469 = vpop.f32.mrb[0].mxu0
      %v4470 = vadd.f32 %v4231, %v4469
      %v4471 = vpop.f32.mrb[0].mxu0
      %4472 = vmatprep.mubr.f32.mxu0 0.0
      %4473 = vmatmul.mubr.f32.gmra.mrb[0].mxu0 %v3989
      %v4474 = vpop.f32.mrb[0].mxu0
      %v4475 = vadd.f32 %v4231, %v4474
      %v4476 = vpop.f32.mrb[0].mxu0
      %4477 = vmatprep.mubr.f32.mxu0 0.0
      %4478 = vmatmul.mubr.f32.gmra.mrb[0].mxu0 %v3990
      %v4479 = vpop.f32.mrb[0].mxu0
      %v4480 = vadd.f32 %v4231, %v4479
      %v4481 = vpop.f32.mrb[0].mxu0
      %4482 = vmatprep.mubr.f32.mxu0 0.0
      %4483 = vmatmul.mubr.f32.gmra.mrb[0].mxu0 %v3991
      %v4484 = vpop.f32.mrb[0].mxu0
      %v4485 = vadd.f32 %v4231, %v4484
      %v4486 = vpop.f32.mrb[0].mxu0
      %4487 = vmatprep.mubr.f32.mxu0 0.0
      %4488 = vmatmul.mubr.f32.gmra.mrb[0].mxu0 %v3992
      %v4489 = vpop.f32.mrb[0].mxu0
      %v4490 = vadd.f32 %v4231, %v4489
      %v4491 = vpop.f32.mrb[0].mxu0
      %4492 = vmatprep.mubr.f32.mxu0 0.0
      %4493 = vmatmul.mubr.f32.gmra.mrb[0].mxu0 %v3993
      %v4494 = vpop.f32.mrb[0].mxu0
      %v4495 = vadd.f32 %v4231, %v4494
      %v4496 = vpop.f32.mrb[0].mxu0
      %4497 = vmatprep.mubr.f32.mxu0 0.0
      %4498 = vmatmul.mubr.f32.gmra.mrb[0].mxu0 %v3994
      %v4499 = vpop.f32.mrb[0].mxu0
      %v4500 = vadd.f32 %v4231, %v4499
      %v4501 = vpop.f32.mrb[0].mxu0
      %4502 = vmatprep.mubr.f32.mxu0 0.0
      %4503 = vmatmul.mubr.f32.gmra.mrb[0].mxu0 %v3995
      %v4504 = vpop.f32.mrb[0].mxu0
      %v4505 = vadd.f32 %v4231, %v4504
      %v4506 = vpop.f32.mrb[0].mxu0
      %4507 = vmatprep.mubr.f32.mxu0 0.0
      %4508 = vmatmul.mubr.f32.gmra.mrb[0].mxu0 %v3996
      %v4509 = vpop.f32.mrb[0].mxu0
      %v4510 = vadd.f32 %v4231, %v4509
      %v4511 = vpop.f32.mrb[0].mxu0
      %4512 = vmatprep.mubr.f32.mxu0 0.0
      %4513 = vmatmul.mubr.f32.gmra.mrb[0].mxu0 %v3997
      %v4514 = vpop.f32.mrb[0].mxu0
      %v4515 = vadd.f32 %v4231, %v4514
      %v4516 = vpop.f32.mrb[0].mxu0
      %4517 = vmatprep.mubr.f32.mxu0 0.0
      %4518 = vmatmul.mubr.f32.gmra.mrb[0].mxu0 %v3998
      %v4519 = vpop.f32.mrb[0].mxu0
      %v4520 = vadd.f32 %v4231, %v4519
      %v4521 = vpop.f32.mrb[0].mxu0
      %4522 = vmatprep.mubr.f32.mxu0 0.0
      %4523 = vmatmul.mubr.f32.gmra.mrb[0].mxu0 %v3999
      %v4524 = vpop.f32.mrb[0].mxu0
      %v4525 = vadd.f32 %v4231, %v4524
      %v4526 = vpop.f32.mrb[0].mxu0
      %4527 = vmatprep.mubr.f32.mxu0 0.0
      %4528 = vmatmul.mubr.f32.gmra.mrb[0].mxu0 %v4000
      %v4529 = vpop.f32.mrb[0].mxu0
      %v4530 = vadd.f32 %v4231, %v4529
      %v4531 = vpop.f32.mrb[0].mxu0
      %4532 = vmatprep.mubr.f32.mxu0 0.0
      %4533 = vmatmul.mubr.f32.gmra.mrb[0].mxu0 %v4001
      %v4534 = vpop.f32.mrb[0].mxu0
      %v4535 = vadd.f32 %v4231, %v4534
      %v4536 = vpop.f32.mrb[0].mxu0
      %4537 = vmatprep.mubr.f32.mxu0 0.0
      %4538 = vmatmul.mubr.f32.gmra.mrb[0].mxu0 %v4002
      %v4539 = vpop.f32.mrb[0].mxu0
      %v4540 = vadd.f32 %v4231, %v4539
      %v4541 = vpop.f32.mrb[0].mxu0
      %4542 = vmatprep.mubr.f32.mxu0 0.0
      %4543 = vmatmul.mubr.f32.gmra.mrb[0].mxu0 %v4003
      %v4544 = vpop.f32.mrb[0].mxu0
      %v4545 = vadd.f32 %v4231, %v4544
      %v4546 = vpop.f32.mrb[0].mxu0
      %4547 = vmatprep.mubr.f32.mxu0 0.0
      %4548 = vmatmul.mubr.f32.gmra.mrb[0].mxu0 %v4004
      %v4549 = vpop.f32.mrb[0].mxu0
      %v4550 = vadd.f32 %v4231, %v4549
      %v4551 = vpop.f32.mrb[0].mxu0
      %4552 = vmatprep.mubr.f32.mxu0 0.0
      %4553 = vmatmul.mubr.f32.gmra.mrb[0].mxu0 %v4005
      %v4554 = vpop.f32.mrb[0].mxu0
      %v4555 = vadd.f32 %v4231, %v4554
      %v4556 = vpop.f32.mrb[0].mxu0
      %4557 = vmatprep.mubr.f32.mxu0 0.0
      %4558 = vmatmul.mubr.f32.gmra.mrb[0].mxu0 %v4006
      %v4559 = vpop.f32.mrb[0].mxu0
      %v4560 = vadd.f32 %v4231, %v4559
      %v4561 = vpop.f32.mrb[0].mxu0
      %4562 = vmatprep.mubr.f32.mxu0 0.0
      %4563 = vmatmul.mubr.f32.gmra.mrb[0].mxu0 %v4007
      %v4564 = vpop.f32.mrb[0].mxu0
      %v4565 = vadd.f32 %v4231, %v4564
      %v4566 = vpop.f32.mrb[0].mxu0
      %4567 = vmatprep.mubr.f32.mxu0 0.0
      %4568 = vmatmul.mubr.f32.gmra.mrb[0].mxu0 %v4008
      %v4569 = vpop.f32.mrb[0].mxu0
      %v4570 = vadd.f32 %v4231, %v4569
      %v4571 = vpop.f32.mrb[0].mxu0
      %4572 = vmatprep.mubr.f32.mxu0 0.0
      %4573 = vmatmul.mubr.f32.gmra.mrb[0].mxu0 %v4009
      %v4574 = vpop.f32.mrb[0].mxu0
      %v4575 = vadd.f32 %v4231, %v4574
      %v4576 = vpop.f32.mrb[0].mxu0
      %4577 = vmatprep.mubr.f32.mxu0 0.0
      %4578 = vmatmul.mubr.f32.gmra.mrb[0].mxu0 %v4010
      %v4579 = vpop.f32.mrb[0].mxu0
      %v4580 = vadd.f32 %v4231, %v4579
      %v4581 = vpop.f32.mrb[0].mxu0
      %4582 = vmatprep.mubr.f32.mxu0 0.0
      %4583 = vmatmul.mubr.f32.gmra.mrb[0].mxu0 %v4011
      %v4584 = vpop.f32.mrb[0].mxu0
      %v4585 = vadd.f32 %v4231, %v4584
      %v4586 = vpop.f32.mrb[0].mxu0
      %4587 = vmatprep.mubr.f32.mxu0 0.0
      %4588 = vmatmul.mubr.f32.gmra.mrb[0].mxu0 %v4012
      %v4589 = vpop.f32.mrb[0].mxu0
      %v4590 = vadd.f32 %v4231, %v4589
      %v4591 = vpop.f32.mrb[0].mxu0
      %4592 = vmatprep.mubr.f32.mxu0 0.0
      %4593 = vmatmul.mubr.f32.gmra.mrb[0].mxu0 %v4013
      %v4594 = vpop.f32.mrb[0].mxu0
      %v4595 = vadd.f32 %v4231, %v4594
      %v4596 = vpop.f32.mrb[0].mxu0
      %4597 = vmatprep.mubr.f32.mxu0 0.0
      %4598 = vmatmul.mubr.f32.gmra.mrb[0].mxu0 %v4014
      %v4599 = vpop.f32.mrb[0].mxu0
      %v4600 = vadd.f32 %v4231, %v4599
      %v4601 = vpop.f32.mrb[0].mxu0
      %4602 = vmatprep.mubr.f32.mxu0 0.0
      %4603 = vmatmul.mubr.f32.gmra.mrb[0].mxu0 %v4015
      %v4604 = vpop.f32.mrb[0].mxu0
      %v4605 = vadd.f32 %v4231, %v4604
      %v4606 = vpop.f32.mrb[0].mxu0
      %4607 = vmatprep.mubr.f32.mxu0 0.0
      %4608 = vmatmul.mubr.f32.gmra.mrb[0].mxu0 %v4016
      %v4609 = vpop.f32.mrb[0].mxu0
      %v4610 = vadd.f32 %v4231, %v4609
      %v4611 = vpop.f32.mrb[0].mxu0
      %4612 = vmatprep.mubr.f32.mxu0 0.0
      %4613 = vmatmul.mubr.f32.gmra.mrb[0].mxu0 %v4017
      %v4614 = vpop.f32.mrb[0].mxu0
      %v4615 = vadd.f32 %v4231, %v4614
      %v4616 = vpop.f32.mrb[0].mxu0
      %4617 = vmatprep.mubr.f32.mxu0 0.0
      %4618 = vmatmul.mubr.f32.gmra.mrb[0].mxu0 %v4018
      %v4619 = vpop.f32.mrb[0].mxu0
      %v4620 = vadd.f32 %v4231, %v4619
      %v4621 = vpop.f32.mrb[0].mxu0
      %4622 = vmatprep.mubr.f32.mxu0 0.0
      %4623 = vmatmul.mubr.f32.gmra.mrb[0].mxu0 %v4019
      %v4624 = vpop.f32.mrb[0].mxu0
      %v4625 = vadd.f32 %v4231, %v4624
      %v4626 = vpop.f32.mrb[0].mxu0
      %4627 = vmatprep.mubr.f32.mxu0 0.0
      %4628 = vmatmul.mubr.f32.gmra.mrb[0].mxu0 %v4020
      %v4629 = vpop.f32.mrb[0].mxu0
      %v4630 = vadd.f32 %v4231, %v4629
      %v4631 = vpop.f32.mrb[0].mxu0
      %4632 = vmatprep.mubr.f32.mxu0 0.0
      %4633 = vmatmul.mubr.f32.gmra.mrb[0].mxu0 %v4021
      %v4634 = vpop.f32.mrb[0].mxu0
      %v4635 = vadd.f32 %v4231, %v4634
      %v4636 = vpop.f32.mrb[0].mxu0
      %4637 = vmatprep.mubr.f32.mxu0 0.0
      %4638 = vmatmul.mubr.f32.gmra.mrb[0].mxu0 %v4022
      %v4639 = vpop.f32.mrb[0].mxu0
      %v4640 = vadd.f32 %v4231, %v4639
      %v4641 = vpop.f32.mrb[0].mxu0
      %4642 = vmatprep.mubr.f32.mxu0 0.0
      %4643 = vmatmul.mubr.f32.gmra.mrb[0].mxu0 %v4023
      %v4644 = vpop.f32.mrb[0].mxu0
      %v4645 = vadd.f32 %v4231, %v4644
      %v4646 = vpop.f32.mrb[0].mxu0
      %4647 = vmatprep.mubr.f32.mxu0 0.0
      %4648 = vmatmul.mubr.f32.gmra.mrb[0].mxu0 %v4024
      %v4649 = vpop.f32.mrb[0].mxu0
      %v4650 = vadd.f32 %v4231, %v4649
      %v4651 = vpop.f32.mrb[0].mxu0
      %4652 = vmatprep.mubr.f32.mxu0 0.0
      %4653 = vmatmul.mubr.f32.gmra.mrb[0].mxu0 %v4025
      %v4654 = vpop.f32.mrb[0].mxu0
      %v4655 = vadd.f32 %v4231, %v4654
      %v4656 = vpop.f32.mrb[0].mxu0
      %4657 = vmatprep.mubr.f32.mxu0 0.0
      %4658 = vmatmul.mubr.f32.gmra.mrb[0].mxu0 %v4026
      %v4659 = vpop.f32.mrb[0].mxu0
      %v4660 = vadd.f32 %v4231, %v4659
      %v4661 = vpop.f32.mrb[0].mxu0
      %4662 = vmatprep.mubr.f32.mxu0 0.0
      %4663 = vmatmul.mubr.f32.gmra.mrb[0].mxu0 %v4027
      %v4664 = vpop.f32.mrb[0].mxu0
      %v4665 = vadd.f32 %v4231, %v4664
      %v4666 = vpop.f32.mrb[0].mxu0
      %4667 = vmatprep.mubr.f32.mxu0 0.0
      %4668 = vmatmul.mubr.f32.gmra.mrb[0].mxu0 %v4028
      %v4669 = vpop.f32.mrb[0].mxu0
      %v4670 = vadd.f32 %v4231, %v4669
      %v4671 = vpop.f32.mrb[0].mxu0
      %4672 = vmatprep.mubr.f32.mxu0 0.0
      %4673 = vmatmul.mubr.f32.gmra.mrb[0].mxu0 %v4029
      %v4674 = vpop.f32.mrb[0].mxu0
      %v4675 = vadd.f32 %v4231, %v4674
      %v4676 = vpop.f32.mrb[0].mxu0
      %4677 = vmatprep.mubr.f32.mxu0 0.0
      %4678 = vmatmul.mubr.f32.gmra.mrb[0].mxu0 %v4030
      %v4679 = vpop.f32.mrb[0].mxu0
      %v4680 = vadd.f32 %v4231, %v4679
      %v4681 = vpop.f32.mrb[0].mxu0
      %4682 = vmatprep.mubr.f32.mxu0 0.0
      %4683 = vmatmul.mubr.f32.gmra.mrb[0].mxu0 %v4031
      %v4684 = vpop.f32.mrb[0].mxu0
      %v4685 = vadd.f32 %v4231, %v4684
      %v4686 = vpop.f32.mrb[0].mxu0
      %4687 = vmatprep.mubr.f32.mxu0 0.0
      %4688 = vmatmul.mubr.f32.gmra.mrb[0].mxu0 %v4032
      %v4689 = vpop.f32.mrb[0].mxu0
      %v4690 = vadd.f32 %v4231, %v4689
      %v4691 = vpop.f32.mrb[0].mxu0
      %4692 = vmatprep.mubr.f32.mxu0 0.0
      %4693 = vmatmul.mubr.f32.gmra.mrb[0].mxu0 %v4033
      %v4694 = vpop.f32.mrb[0].mxu0
      %v4695 = vadd.f32 %v4231, %v4694
      %v4696 = vpop.f32.mrb[0].mxu0
      %4697 = vmatprep.mubr.f32.mxu0 0.0
      %4698 = vmatmul.mubr.f32.gmra.mrb[0].mxu0 %v4034
      %v4699 = vpop.f32.mrb[0].mxu0
      %v4700 = vadd.f32 %v4231, %v4699
      %v4701 = vpop.f32.mrb[0].mxu0
      %4702 = vmatprep.mubr.f32.mxu0 0.0
      %4703 = vmatmul.mubr.f32.gmra.mrb[0].mxu0 %v4035
      %v4704 = vpop.f32.mrb[0].mxu0
      %v4705 = vadd.f32 %v4231, %v4704
      %v4706 = vpop.f32.mrb[0].mxu0
      %4707 = vmatprep.mubr.f32.mxu0 0.0
      %4708 = vmatmul.mubr.f32.gmra.mrb[0].mxu0 %v4036
      %v4709 = vpop.f32.mrb[0].mxu0
      %v4710 = vadd.f32 %v4231, %v4709
      %v4711 = vpop.f32.mrb[0].mxu0
      %4712 = vmatprep.mubr.f32.mxu0 0.0
      %4713 = vmatmul.mubr.f32.gmra.mrb[0].mxu0 %v4037
      %v4714 = vpop.f32.mrb[0].mxu0
      %v4715 = vadd.f32 %v4231, %v4714
      %v4716 = vpop.f32.mrb[0].mxu0
      %4717 = vmatprep.mubr.f32.mxu0 0.0
      %4718 = vmatmul.mubr.f32.gmra.mrb[0].mxu0 %v4038
      %v4719 = vpop.f32.mrb[0].mxu0
      %v4720 = vadd.f32 %v4231, %v4719
      %v4721 = vpop.f32.mrb[0].mxu0
      %4722 = vmatprep.mubr.f32.mxu0 0.0
      %4723 = vmatmul.mubr.f32.gmra.mrb[0].mxu0 %v4039
      %v4724 = vpop.f32.mrb[0].mxu0
      %v4725 = vadd.f32 %v4231, %v4724
      %v4726 = vpop.f32.mrb[0].mxu0
      %4727 = vmatprep.mubr.f32.mxu0 0.0
      %4728 = vmatmul.mubr.f32.gmra.mrb[0].mxu0 %v4040
      %v4729 = vpop.f32.mrb[0].mxu0
      %v4730 = vadd.f32 %v4231, %v4729
      %v4731 = vpop.f32.mrb[0].mxu0
      %4732 = vmatprep.mubr.f32.mxu0 0.0
      %4733 = vmatmul.mubr.f32.gmra.mrb[0].mxu0 %v4041
      %v4734 = vpop.f32.mrb[0].mxu0
      %v4735 = vadd.f32 %v4231, %v4734
      %v4736 = vpop.f32.mrb[0].mxu0
      %4737 = vmatprep.mubr.f32.mxu0 0.0
      %4738 = vmatmul.mubr.f32.gmra.mrb[0].mxu0 %v4042
      %v4739 = vpop.f32.mrb[0].mxu0
      %v4740 = vadd.f32 %v4231, %v4739
      %v4741 = vpop.f32.mrb[0].mxu0
      %4742 = vmatprep.mubr.f32.mxu0 0.0
      %4743 = vmatmul.mubr.f32.gmra.mrb[0].mxu0 %v4043
      %v4744 = vpop.f32.mrb[0].mxu0
      %v4745 = vadd.f32 %v4231, %v4744
      %v4746 = vpop.f32.mrb[0].mxu0
      %4747 = vmatprep.mubr.f32.mxu0 0.0
      %4748 = vmatmul.mubr.f32.gmra.mrb[0].mxu0 %v4044
      %v4749 = vpop.f32.mrb[0].mxu0
      %v4750 = vadd.f32 %v4231, %v4749
      %v4751 = vpop.f32.mrb[0].mxu0
      %4752 = vmatprep.mubr.f32.mxu0 0.0
      %4753 = vmatmul.mubr.f32.gmra.mrb[0].mxu0 %v4045
      %v4754 = vpop.f32.mrb[0].mxu0
      %v4755 = vadd.f32 %v4231, %v4754
      %v4756 = vpop.f32.mrb[0].mxu0
      %4757 = vmatprep.mubr.f32.mxu0 0.0
      %4758 = vmatmul.mubr.f32.gmra.mrb[0].mxu0 %v4046
      %v4759 = vpop.f32.mrb[0].mxu0
      %v4760 = vadd.f32 %v4231, %v4759
      %v4761 = vpop.f32.mrb[0].mxu0
      %4762 = vmatprep.mubr.f32.mxu0 0.0
      %4763 = vmatmul.mubr.f32.gmra.mrb[0].mxu0 %v4047
      %v4764 = vpop.f32.mrb[0].mxu0
      %v4765 = vadd.f32 %v4231, %v4764
      %v4766 = vpop.f32.mrb[0].mxu0
      %4767 = vmatprep.mubr.f32.mxu0 0.0
      %4768 = vmatmul.mubr.f32.gmra.mrb[0].mxu0 %v4048
      %v4769 = vpop.f32.mrb[0].mxu0
      %v4770 = vadd.f32 %v4231, %v4769
      %v4771 = vpop.f32.mrb[0].mxu0
      %4772 = vmatprep.mubr.f32.mxu0 0.0
      %4773 = vmatmul.mubr.f32.gmra.mrb[0].mxu0 %v4049
      %v4774 = vpop.f32.mrb[0].mxu0
      %v4775 = vadd.f32 %v4231, %v4774
      %v4776 = vpop.f32.mrb[0].mxu0
      %4777 = vmatprep.mubr.f32.mxu0 0.0
      %4778 = vmatmul.mubr.f32.gmra.mrb[0].mxu0 %v4050
      %v4779 = vpop.f32.mrb[0].mxu0
      %v4780 = vadd.f32 %v4231, %v4779
      %v4781 = vpop.f32.mrb[0].mxu0
      %4782 = vmatprep.mubr.f32.mxu0 0.0
      %4783 = vmatmul.mubr.f32.gmra.mrb[0].mxu0 %v4051
      %v4784 = vpop.f32.mrb[0].mxu0
      %v4785 = vadd.f32 %v4231, %v4784
      %v4786 = vpop.f32.mrb[0].mxu0
      %4787 = vmatprep.mubr.f32.mxu0 0.0
      %4788 = vmatmul.mubr.f32.gmra.mrb[0].mxu0 %v4052
      %v4789 = vpop.f32.mrb[0].mxu0
      %v4790 = vadd.f32 %v4231, %v4789
      %v4791 = vpop.f32.mrb[0].mxu0
      %4792 = vmatprep.mubr.f32.mxu0 0.0
      %4793 = vmatmul.mubr.f32.gmra.mrb[0].mxu0 %v4053
      %v4794 = vpop.f32.mrb[0].mxu0
      %v4795 = vadd.f32 %v4231, %v4794
      %v4796 = vpop.f32.mrb[0].mxu0
      %4797 = vmatprep.mubr.f32.mxu0 0.0
      %4798 = vmatmul.mubr.f32.gmra.mrb[0].mxu0 %v4054
      %v4799 = vpop.f32.mrb[0].mxu0
      %v4800 = vadd.f32 %v4231, %v4799
      %v4801 = vpop.f32.mrb[0].mxu0
      %4802 = vmatprep.mubr.f32.mxu0 0.0
      %4803 = vmatmul.mubr.f32.gmra.mrb[0].mxu0 %v4055
      %v4804 = vpop.f32.mrb[0].mxu0
      %v4805 = vadd.f32 %v4231, %v4804
      %v4806 = vpop.f32.mrb[0].mxu0
      %4807 = vmatprep.mubr.f32.mxu0 0.0
      %4808 = vmatmul.mubr.f32.gmra.mrb[0].mxu0 %v4056
      %v4809 = vpop.f32.mrb[0].mxu0
      %v4810 = vadd.f32 %v4231, %v4809
      %v4811 = vpop.f32.mrb[0].mxu0
      %4812 = vmatprep.mubr.f32.mxu0 0.0
      %4813 = vmatmul.mubr.f32.gmra.mrb[0].mxu0 %v4057
      %v4814 = vpop.f32.mrb[0].mxu0
      %v4815 = vadd.f32 %v4231, %v4814
      %v4816 = vpop.f32.mrb[0].mxu0
      %4817 = vmatprep.mubr.f32.mxu0 0.0
      %4818 = vmatmul.mubr.f32.gmra.mrb[0].mxu0 %v4058
      %v4819 = vpop.f32.mrb[0].mxu0
      %v4820 = vadd.f32 %v4231, %v4819
      %v4821 = vpop.f32.mrb[0].mxu0
      %4822 = vmatprep.mubr.f32.mxu0 0.0
      %4823 = vmatmul.mubr.f32.gmra.mrb[0].mxu0 %v4059
      %v4824 = vpop.f32.mrb[0].mxu0
      %v4825 = vadd.f32 %v4231, %v4824
      %v4826 = vpop.f32.mrb[0].mxu0
      %4827 = vmatprep.mubr.f32.mxu0 0.0
      %4828 = vmatmul.mubr.f32.gmra.mrb[0].mxu0 %v4060
      %v4829 = vpop.f32.mrb[0].mxu0
      %v4830 = vadd.f32 %v4231, %v4829
      %v4831 = vpop.f32.mrb[0].mxu0
      %4832 = vmatprep.mubr.f32.mxu0 0.0
      %4833 = vmatmul.mubr.f32.gmra.mrb[0].mxu0 %v4061
      %v4834 = vpop.f32.mrb[0].mxu0
      %v4835 = vadd.f32 %v4231, %v4834
      %v4836 = vpop.f32.mrb[0].mxu0
      %4837 = vmatprep.mubr.f32.mxu0 0.0
      %4838 = vmatmul.mubr.f32.gmra.mrb[0].mxu0 %v4062
      %v4839 = vpop.f32.mrb[0].mxu0
      %v4840 = vadd.f32 %v4231, %v4839
      %v4841 = vpop.f32.mrb[0].mxu0
      %4842 = vmatprep.mubr.f32.mxu0 0.0
      %4843 = vmatmul.mubr.f32.gmra.mrb[0].mxu0 %v4063
      %v4844 = vpop.f32.mrb[0].mxu0
      %v4845 = vadd.f32 %v4231, %v4844
      %v4846 = vpop.f32.mrb[0].mxu0
      %4847 = vmatprep.mubr.f32.mxu0 0.0
      %4848 = vmatmul.mubr.f32.gmra.mrb[0].mxu0 %v4064
      %v4849 = vpop.f32.mrb[0].mxu0
      %v4850 = vadd.f32 %v4231, %v4849
      %v4851 = vpop.f32.mrb[0].mxu0
      %4852 = vmatprep.mubr.f32.mxu0 0.0
      %4853 = vmatmul.mubr.f32.gmra.mrb[0].mxu0 %v4065
      %v4854 = vpop.f32.mrb[0].mxu0
      %v4855 = vadd.f32 %v4231, %v4854
      %v4856 = vpop.f32.mrb[0].mxu0
      %4857 = vmatprep.mubr.f32.mxu0 0.0
      %4858 = vmatmul.mubr.f32.gmra.mrb[0].mxu0 %v4066
      %v4859 = vpop.f32.mrb[0].mxu0
      %v4860 = vadd.f32 %v4231, %v4859
      %v4861 = vpop.f32.mrb[0].mxu0
      %4862 = vmatprep.mubr.f32.mxu0 0.0
      %4863 = vmatmul.mubr.f32.gmra.mrb[0].mxu0 %v4067
      %v4864 = vpop.f32.mrb[0].mxu0
      %v4865 = vadd.f32 %v4231, %v4864
      %v4866 = vpop.f32.mrb[0].mxu0
      %4867 = vmatprep.mubr.f32.mxu0 0.0
      %4868 = vmatmul.mubr.f32.gmra.mrb[0].mxu0 %v4068
      %v4869 = vpop.f32.mrb[0].mxu0
      %v4870 = vadd.f32 %v4231, %v4869
      %v4871 = vpop.f32.mrb[0].mxu0
      %4872 = vmatprep.mubr.f32.mxu0 0.0
      %4873 = vmatmul.mubr.f32.gmra.mrb[0].mxu0 %v4069
      %v4874 = vpop.f32.mrb[0].mxu0
      %v4875 = vadd.f32 %v4231, %v4874
      %v4876 = vpop.f32.mrb[0].mxu0
      %4877 = vmatprep.mubr.f32.mxu0 0.0
      %4878 = vmatmul.mubr.f32.gmra.mrb[0].mxu0 %v4070
      %v4879 = vpop.f32.mrb[0].mxu0
      %v4880 = vadd.f32 %v4231, %v4879
      %v4881 = vpop.f32.mrb[0].mxu0
      %4882 = vmatprep.mubr.f32.mxu0 0.0
      %4883 = vmatmul.mubr.f32.gmra.mrb[0].mxu0 %v4071
      %v4884 = vpop.f32.mrb[0].mxu0
      %v4885 = vadd.f32 %v4231, %v4884
      %v4886 = vpop.f32.mrb[0].mxu0
      %4887 = vmatprep.mubr.f32.mxu0 0.0
      %4888 = vmatmul.mubr.f32.gmra.mrb[0].mxu0 %v4072
      %v4889 = vpop.f32.mrb[0].mxu0
      %v4890 = vadd.f32 %v4231, %v4889
      %v4891 = vpop.f32.mrb[0].mxu0
      %4892 = vmatprep.mubr.f32.mxu0 0.0
      %4893 = vmatmul.mubr.f32.gmra.mrb[0].mxu0 %v4073
      %v4894 = vpop.f32.mrb[0].mxu0
      %v4895 = vadd.f32 %v4231, %v4894
      %v4896 = vpop.f32.mrb[0].mxu0
      %4897 = vmatprep.mubr.f32.mxu0 0.0
      %4898 = vmatmul.mubr.f32.gmra.mrb[0].mxu0 %v4074
      %v4899 = vpop.f32.mrb[0].mxu0
      %v4900 = vadd.f32 %v4231, %v4899
      %v4901 = vpop.f32.mrb[0].mxu0
      %4902 = vmatprep.mubr.f32.mxu0 0.0
      %4903 = vmatmul.mubr.f32.gmra.mrb[0].mxu0 %v4075
      %v4904 = vpop.f32.mrb[0].mxu0
      %v4905 = vadd.f32 %v4231, %v4904
      %v4906 = vpop.f32.mrb[0].mxu0
      %4907 = vmatprep.mubr.f32.mxu0 0.0
      %4908 = vmatmul.mubr.f32.gmra.mrb[0].mxu0 %v4076
      %v4909 = vpop.f32.mrb[0].mxu0
      %v4910 = vadd.f32 %v4231, %v4909
      %v4911 = vpop.f32.mrb[0].mxu0
      %4912 = vmatprep.mubr.f32.mxu0 0.0
      %4913 = vmatmul.mubr.f32.gmra.mrb[0].mxu0 %v4077
      %v4914 = vpop.f32.mrb[0].mxu0
      %v4915 = vadd.f32 %v4231, %v4914
      %v4916 = vpop.f32.mrb[0].mxu0
      %4917 = vmatprep.mubr.f32.mxu0 0.0
      %4918 = vmatmul.mubr.f32.gmra.mrb[0].mxu0 %v4078
      %v4919 = vpop.f32.mrb[0].mxu0
      %v4920 = vadd.f32 %v4231, %v4919
      %v4921 = vpop.f32.mrb[0].mxu0
      %4922 = vmatprep.mubr.f32.mxu0 0.0
      %4923 = vmatmul.mubr.f32.gmra.mrb[0].mxu0 %v4079
      %v4924 = vpop.f32.mrb[0].mxu0
      %v4925 = vadd.f32 %v4231, %v4924
      %v4926 = vpop.f32.mrb[0].mxu0
      %4927 = vmatprep.mubr.f32.mxu0 0.0
      %4928 = vmatmul.mubr.f32.gmra.mrb[0].mxu0 %v4080
      %v4929 = vpop.f32.mrb[0].mxu0
      %v4930 = vadd.f32 %v4231, %v4929
      %v4931 = vpop.f32.mrb[0].mxu0
      %4932 = vmatprep.mubr.f32.mxu0 0.0
      %4933 = vmatmul.mubr.f32.gmra.mrb[0].mxu0 %v4081
      %v4934 = vpop.f32.mrb[0].mxu0
      %v4935 = vadd.f32 %v4231, %v4934
      %v4936 = vpop.f32.mrb[0].mxu0
      %4937 = vmatprep.mubr.f32.mxu0 0.0
      %4938 = vmatmul.mubr.f32.gmra.mrb[0].mxu0 %v4082
      %v4939 = vpop.f32.mrb[0].mxu0
      %v4940 = vadd.f32 %v4231, %v4939
      %v4941 = vpop.f32.mrb[0].mxu0
      %4942 = vmatprep.mubr.f32.mxu0 0.0
      %4943 = vmatmul.mubr.f32.gmra.mrb[0].mxu0 %v4083
      %v4944 = vpop.f32.mrb[0].mxu0
      %v4945 = vadd.f32 %v4231, %v4944
      %v4946 = vpop.f32.mrb[0].mxu0
      %4947 = vmatprep.mubr.f32.mxu0 0.0
      %4948 = vmatmul.mubr.f32.gmra.mrb[0].mxu0 %v4084
      %v4949 = vpop.f32.mrb[0].mxu0
      %v4950 = vadd.f32 %v4231, %v4949
      %v4951 = vpop.f32.mrb[0].mxu0
      %4952 = vmatprep.mubr.f32.mxu0 0.0
      %4953 = vmatmul.mubr.f32.gmra.mrb[0].mxu0 %v4085
      %v4954 = vpop.f32.mrb[0].mxu0
      %v4955 = vadd.f32 %v4231, %v4954
      %v4956 = vpop.f32.mrb[0].mxu0
      %4957 = vmatprep.mubr.f32.mxu0 0.0
      %4958 = vmatmul.mubr.f32.gmra.mrb[0].mxu0 %v4086
      %v4959 = vpop.f32.mrb[0].mxu0
      %v4960 = vadd.f32 %v4231, %v4959
      %v4961 = vpop.f32.mrb[0].mxu0
      %4962 = vmatprep.mubr.f32.mxu0 0.0
      %4963 = vmatmul.mubr.f32.gmra.mrb[0].mxu0 %v4087
      %v4964 = vpop.f32.mrb[0].mxu0
      %v4965 = vadd.f32 %v4231, %v4964
      %v4966 = vpop.f32.mrb[0].mxu0
      %4967 = vmatprep.mubr.f32.mxu0 0.0
      %4968 = vmatmul.mubr.f32.gmra.mrb[0].mxu0 %v4088
      %v4969 = vpop.f32.mrb[0].mxu0
      %v4970 = vadd.f32 %v4231, %v4969
      %v4971 = vpop.f32.mrb[0].mxu0
      %4972 = vmatprep.mubr.f32.mxu0 0.0
      %4973 = vmatmul.mubr.f32.gmra.mrb[0].mxu0 %v4089
      %v4974 = vpop.f32.mrb[0].mxu0
      %v4975 = vadd.f32 %v4231, %v4974
      %v4976 = vpop.f32.mrb[0].mxu0
      %4977 = vmatprep.mubr.f32.mxu0 0.0
      %4978 = vmatmul.mubr.f32.gmra.mrb[0].mxu0 %v4090
      %v4979 = vpop.f32.mrb[0].mxu0
      %v4980 = vadd.f32 %v4231, %v4979
      %v4981 = vpop.f32.mrb[0].mxu0
      %4982 = vmatprep.mubr.f32.mxu0 0.0
      %4983 = vmatmul.mubr.f32.gmra.mrb[0].mxu0 %v4091
      %v4984 = vpop.f32.mrb[0].mxu0
      %v4985 = vadd.f32 %v4231, %v4984
      %v4986 = vpop.f32.mrb[0].mxu0
      %4987 = vmatprep.mubr.f32.mxu0 0.0
      %4988 = vmatmul.mubr.f32.gmra.mrb[0].mxu0 %v4092
      %v4989 = vpop.f32.mrb[0].mxu0
      %v4990 = vadd.f32 %v4231, %v4989
      %v4991 = vpop.f32.mrb[0].mxu0
      %4992 = vmatprep.mubr.f32.mxu0 0.0
      %4993 = vmatmul.mubr.f32.gmra.mrb[0].mxu0 %v4093
      %v4994 = vpop.f32.mrb[0].mxu0
      %v4995 = vadd.f32 %v4231, %v4994
      %v4996 = vpop.f32.mrb[0].mxu0
      %4997 = vmatprep.mubr.f32.mxu0 0.0
      %4998 = vmatmul.mubr.f32.gmra.mrb[0].mxu0 %v4094
      %v4999 = vpop.f32.mrb[0].mxu0
      %v5000 = vadd.f32 %v4231, %v4999
      %v5001 = vpop.f32.mrb[0].mxu0
      %5002 = vmatprep.mubr.f32.mxu0 0.0
      %5003 = vmatmul.mubr.f32.gmra.mrb[0].mxu0 %v4095
      %v5004 = vpop.f32.mrb[0].mxu0
      %v5005 = vadd.f32 %v4231, %v5004
      %v5006 = vpop.f32.mrb[0].mxu0
      %5007 = vmatprep.mubr.f32.mxu0 0.0
      %5008 = vmatmul.mubr.f32.gmra.mrb[0].mxu0 %v4096
      %v5009 = vpop.f32.mrb[0].mxu0
      %v5010 = vadd.f32 %v4231, %v5009
      %v5011 = vpop.f32.mrb[0].mxu0
      %5012 = vmatprep.mubr.f32.mxu0 0.0
      %5013 = vmatmul.mubr.f32.gmra.mrb[0].mxu0 %v4097
      %v5014 = vpop.f32.mrb[0].mxu0
      %v5015 = vadd.f32 %v4231, %v5014
      %v5016 = vpop.f32.mrb[0].mxu0
      %5017 = vmatprep.mubr.f32.mxu0 0.0
      %5018 = vmatmul.mubr.f32.gmra.mrb[0].mxu0 %v4098
      %v5019 = vpop.f32.mrb[0].mxu0
      %v5020 = vadd.f32 %v4231, %v5019
      %v5021 = vpop.f32.mrb[0].mxu0
      %5022 = vmatprep.mubr.f32.mxu0 0.0
      %5023 = vmatmul.mubr.f32.gmra.mrb[0].mxu0 %v4099
      %v5024 = vpop.f32.mrb[0].mxu0
      %v5025 = vadd.f32 %v4231, %v5024
      %v5026 = vpop.f32.mrb[0].mxu0
      %5027 = vmatprep.mubr.f32.mxu0 0.0
      %5028 = vmatmul.mubr.f32.gmra.mrb[0].mxu0 %v4100
      %v5029 = vpop.f32.mrb[0].mxu0
      %v5030 = vadd.f32 %v4231, %v5029
      %v5031 = vpop.f32.mrb[0].mxu0
      %5032 = vmatprep.mubr.f32.mxu0 0.0
      %5033 = vmatmul.mubr.f32.gmra.mrb[0].mxu0 %v4101
      %v5034 = vpop.f32.mrb[0].mxu0
      %v5035 = vadd.f32 %v4231, %v5034
      %v5036 = vpop.f32.mrb[0].mxu0
      %5037 = vmatprep.mubr.f32.mxu0 0.0
      %5038 = vmatmul.mubr.f32.gmra.mrb[0].mxu0 %v4102
      %v5039 = vpop.f32.mrb[0].mxu0
      %v5040 = vadd.f32 %v4231, %v5039
      %v5041 = vpop.f32.mrb[0].mxu0
      %5042 = vmatprep.mubr.f32.mxu0 0.0
      %5043 = vmatmul.mubr.f32.gmra.mrb[0].mxu0 %v4103
      %v5044 = vpop.f32.mrb[0].mxu0
      %v5045 = vadd.f32 %v4231, %v5044
      %v5046 = vpop.f32.mrb[0].mxu0
      %5047 = vmatprep.mubr.f32.mxu0 0.0
      %5048 = vmatmul.mubr.f32.gmra.mrb[0].mxu0 %v4104
      %v5049 = vpop.f32.mrb[0].mxu0
      %v5050 = vadd.f32 %v4231, %v5049
      %v5051 = vpop.f32.mrb[0].mxu0
      %5052 = vmatprep.mubr.f32.mxu0 0.0
      %5053 = vmatmul.mubr.f32.gmra.mrb[0].mxu0 %v4105
      %v5054 = vpop.f32.mrb[0].mxu0
      %v5055 = vadd.f32 %v4231, %v5054
      %v5056 = vpop.f32.mrb[0].mxu0
      %5057 = vmatprep.mubr.f32.mxu0 0.0
      %5058 = vmatmul.mubr.f32.gmra.mrb[0].mxu0 %v4106
      %v5059 = vpop.f32.mrb[0].mxu0
      %v5060 = vadd.f32 %v4231, %v5059
      %v5061 = vpop.f32.mrb[0].mxu0
      %5062 = vmatprep.mubr.f32.mxu0 0.0
      %5063 = vmatmul.mubr.f32.gmra.mrb[0].mxu0 %v4107
      %v5064 = vpop.f32.mrb[0].mxu0
      %v5065 = vadd.f32 %v4231, %v5064
      %v5066 = vpop.f32.mrb[0].mxu0
      %5067 = vmatprep.mubr.f32.mxu0 0.0
      %5068 = vmatmul.mubr.f32.gmra.mrb[0].mxu0 %v4108
      %v5069 = vpop.f32.mrb[0].mxu0
      %v5070 = vadd.f32 %v4231, %v5069
      %v5071 = vpop.f32.mrb[0].mxu0
      %5072 = vmatprep.mubr.f32.mxu0 0.0
      %5073 = vmatmul.mubr.f32.gmra.mrb[0].mxu0 %v4109
      %v5074 = vpop.f32.mrb[0].mxu0
      %v5075 = vadd.f32 %v4231, %v5074
      %v5076 = vpop.f32.mrb[0].mxu0
      %5077 = vmatprep.mubr.f32.mxu0 0.0
      %5078 = vmatmul.mubr.f32.gmra.mrb[0].mxu0 %v4110
      %v5079 = vpop.f32.mrb[0].mxu0
      %v5080 = vadd.f32 %v4231, %v5079
      %v5081 = vpop.f32.mrb[0].mxu0
      %5082 = vmatprep.mubr.f32.mxu0 0.0
      %5083 = vmatmul.mubr.f32.gmra.mrb[0].mxu0 %v4111
      %v5084 = vpop.f32.mrb[0].mxu0
      %v5085 = vadd.f32 %v4231, %v5084
      %v5086 = vpop.f32.mrb[0].mxu0
      %5087 = vmatprep.mubr.f32.mxu0 0.0
      %5088 = vmatmul.mubr.f32.gmra.mrb[0].mxu0 %v4112
      %v5089 = vpop.f32.mrb[0].mxu0
      %v5090 = vadd.f32 %v4231, %v5089
      %v5091 = vpop.f32.mrb[0].mxu0
      %5092 = vmatprep.mubr.f32.mxu0 0.0
      %5093 = vmatmul.mubr.f32.gmra.mrb[0].mxu0 %v4113
      %v5094 = vpop.f32.mrb[0].mxu0
      %v5095 = vadd.f32 %v4231, %v5094
      %v5096 = vpop.f32.mrb[0].mxu0
      %5097 = vmatprep.mubr.f32.mxu0 0.0
      %5098 = vmatmul.mubr.f32.gmra.mrb[0].mxu0 %v4114
      %v5099 = vpop.f32.mrb[0].mxu0
      %v5100 = vadd.f32 %v4231, %v5099
      %v5101 = vpop.f32.mrb[0].mxu0
      %5102 = vmatprep.mubr.f32.mxu0 0.0
      %5103 = vmatmul.mubr.f32.gmra.mrb[0].mxu0 %v4115
      %v5104 = vpop.f32.mrb[0].mxu0
      %v5105 = vadd.f32 %v4231, %v5104
      %v5106 = vpop.f32.mrb[0].mxu0
      %5107 = vmatprep.mubr.f32.mxu0 0.0
      %5108 = vmatmul.mubr.f32.gmra.mrb[0].mxu0 %v4116
      %v5109 = vpop.f32.mrb[0].mxu0
      %v5110 = vadd.f32 %v4231, %v5109
      %v5111 = vpop.f32.mrb[0].mxu0
      %5112 = vmatprep.mubr.f32.mxu0 0.0
      %5113 = vmatmul.mubr.f32.gmra.mrb[0].mxu0 %v4117
      %v5114 = vpop.f32.mrb[0].mxu0
      %v5115 = vadd.f32 %v4231, %v5114
      %v5116 = vpop.f32.mrb[0].mxu0
      %5117 = vmatprep.mubr.f32.mxu0 0.0
      %5118 = vmatmul.mubr.f32.gmra.mrb[0].mxu0 %v4118
      %v5119 = vpop.f32.mrb[0].mxu0
      %v5120 = vadd.f32 %v4231, %v5119
      %v5121 = vpop.f32.mrb[0].mxu0
      %5122 = vmatprep.mubr.f32.mxu0 0.0
      %5123 = vmatmul.mubr.f32.gmra.mrb[0].mxu0 %v4119
      %v5124 = vpop.f32.mrb[0].mxu0
      %v5125 = vadd.f32 %v4231, %v5124
      %v5126 = vpop.f32.mrb[0].mxu0
      %5127 = vmatprep.mubr.f32.mxu0 0.0
      %5128 = vmatmul.mubr.f32.gmra.mrb[0].mxu0 %v4120
      %v5129 = vpop.f32.mrb[0].mxu0
      %v5130 = vadd.f32 %v4231, %v5129
      %v5131 = vpop.f32.mrb[0].mxu0
      %5132 = vmatprep.mubr.f32.mxu0 0.0
      %5133 = vmatmul.mubr.f32.gmra.mrb[0].mxu0 %v4121
      %v5134 = vpop.f32.mrb[0].mxu0
      %v5135 = vadd.f32 %v4231, %v5134
      %v5136 = vpop.f32.mrb[0].mxu0
      %5137 = vmatprep.mubr.f32.mxu0 0.0
      %5138 = vmatmul.mubr.f32.gmra.mrb[0].mxu0 %v4122
      %v5139 = vpop.f32.mrb[0].mxu0
      %v5140 = vadd.f32 %v4231, %v5139
      %v5141 = vpop.f32.mrb[0].mxu0
      %5142 = vmatprep.mubr.f32.mxu0 0.0
      %5143 = vmatmul.mubr.f32.gmra.mrb[0].mxu0 %v4123
      %v5144 = vpop.f32.mrb[0].mxu0
      %v5145 = vadd.f32 %v4231, %v5144
      %v5146 = vpop.f32.mrb[0].mxu0
      %5147 = vmatprep.mubr.f32.mxu0 0.0
      %5148 = vmatmul.mubr.f32.gmra.mrb[0].mxu0 %v4124
      %v5149 = vpop.f32.mrb[0].mxu0
      %v5150 = vadd.f32 %v4231, %v5149
      %v5151 = vpop.f32.mrb[0].mxu0
      %5152 = vmatprep.mubr.f32.mxu0 0.0
      %5153 = vmatmul.mubr.f32.gmra.mrb[0].mxu0 %v4125
      %v5154 = vpop.f32.mrb[0].mxu0
      %v5155 = vadd.f32 %v4231, %v5154
      %v5156 = vpop.f32.mrb[0].mxu0
      %5157 = vmatprep.mubr.f32.mxu0 0.0
      %5158 = vmatmul.mubr.f32.gmra.mrb[0].mxu0 %v4126
      %v5159 = vpop.f32.mrb[0].mxu0
      %v5160 = vadd.f32 %v4231, %v5159
      %v5161 = vpop.f32.mrb[0].mxu0
      %5162 = vmatprep.mubr.f32.mxu0 0.0
      %5163 = vmatmul.mubr.f32.gmra.mrb[0].mxu0 %v4127
      %v5164 = vpop.f32.mrb[0].mxu0
      %v5165 = vadd.f32 %v4231, %v5164
      %v5166 = vpop.f32.mrb[0].mxu0
      %5167 = vmatprep.mubr.f32.mxu0 0.0
      %5168 = vmatmul.mubr.f32.gmra.mrb[0].mxu0 %v4128
      %v5169 = vpop.f32.mrb[0].mxu0
      %v5170 = vadd.f32 %v4231, %v5169
      %v5171 = vpop.f32.mrb[0].mxu0
      %5172 = vmatprep.mubr.f32.mxu0 0.0
      %5173 = vmatmul.mubr.f32.gmra.mrb[0].mxu0 %v4129
      %v5174 = vpop.f32.mrb[0].mxu0
      %v5175 = vadd.f32 %v4231, %v5174
      %v5176 = vpop.f32.mrb[0].mxu0
      %5177 = vmatprep.mubr.f32.mxu0 0.0
      %5178 = vmatmul.mubr.f32.gmra.mrb[0].mxu0 %v4130
      %v5179 = vpop.f32.mrb[0].mxu0
      %v5180 = vadd.f32 %v4231, %v5179
      %v5181 = vpop.f32.mrb[0].mxu0
      %5182 = vmatprep.mubr.f32.mxu0 0.0
      %5183 = vmatmul.mubr.f32.gmra.mrb[0].mxu0 %v4131
      %v5184 = vpop.f32.mrb[0].mxu0
      %v5185 = vadd.f32 %v4231, %v5184
      %v5186 = vpop.f32.mrb[0].mxu0
      %5187 = vmatprep.mubr.f32.mxu0 0.0
      %5188 = vmatmul.mubr.f32.gmra.mrb[0].mxu0 %v4132
      %v5189 = vpop.f32.mrb[0].mxu0
      %v5190 = vadd.f32 %v4231, %v5189
      %v5191 = vpop.f32.mrb[0].mxu0
      %5192 = vmatprep.mubr.f32.mxu0 0.0
      %5193 = vmatmul.mubr.f32.gmra.mrb[0].mxu0 %v4133
      %v5194 = vpop.f32.mrb[0].mxu0
      %v5195 = vadd.f32 %v4231, %v5194
      %v5196 = vpop.f32.mrb[0].mxu0
      %5197 = vmatprep.mubr.f32.mxu0 0.0
      %5198 = vmatmul.mubr.f32.gmra.mrb[0].mxu0 %v4134
      %v5199 = vpop.f32.mrb[0].mxu0
      %v5200 = vadd.f32 %v4231, %v5199
      %v5201 = vpop.f32.mrb[0].mxu0
      %5202 = vmatprep.mubr.f32.mxu0 0.0
      %5203 = vmatmul.mubr.f32.gmra.mrb[0].mxu0 %v4135
      %v5204 = vpop.f32.mrb[0].mxu0
      %v5205 = vadd.f32 %v4231, %v5204
      %v5206 = vpop.f32.mrb[0].mxu0
      %5207 = vmatprep.mubr.f32.mxu0 0.0
      %5208 = vmatmul.mubr.f32.gmra.mrb[0].mxu0 %v4136
      %v5209 = vpop.f32.mrb[0].mxu0
      %v5210 = vadd.f32 %v4231, %v5209
      %v5211 = vpop.f32.mrb[0].mxu0
      %5212 = vmatprep.mubr.f32.mxu0 0.0
      %5213 = vmatmul.mubr.f32.gmra.mrb[0].mxu0 %v4137
      %v5214 = vpop.f32.mrb[0].mxu0
      %v5215 = vadd.f32 %v4231, %v5214
      %v5216 = vpop.f32.mrb[0].mxu0
      %5217 = vmatprep.mubr.f32.mxu0 0.0
      %5218 = vmatmul.mubr.f32.gmra.mrb[0].mxu0 %v4138
      %v5219 = vpop.f32.mrb[0].mxu0
      %v5220 = vadd.f32 %v4231, %v5219
      %v5221 = vpop.f32.mrb[0].mxu0
      %5222 = vmatprep.mubr.f32.mxu0 0.0
      %5223 = vmatmul.mubr.f32.gmra.mrb[0].mxu0 %v4139
      %v5224 = vpop.f32.mrb[0].mxu0
      %v5225 = vadd.f32 %v4231, %v5224
      %v5226 = vpop.f32.mrb[0].mxu0
      %5227 = vmatprep.mubr.f32.mxu0 0.0
      %5228 = vmatmul.mubr.f32.gmra.mrb[0].mxu0 %v4140
      %v5229 = vpop.f32.mrb[0].mxu0
      %v5230 = vadd.f32 %v4231, %v5229
      %v5231 = vpop.f32.mrb[0].mxu0
      %5232 = vmatprep.mubr.f32.mxu0 0.0
      %5233 = vmatmul.mubr.f32.gmra.mrb[0].mxu0 %v4141
      %v5234 = vpop.f32.mrb[0].mxu0
      %v5235 = vadd.f32 %v4231, %v5234
      %v5236 = vpop.f32.mrb[0].mxu0
      %5237 = vmatprep.mubr.f32.mxu0 0.0
      %5238 = vmatmul.mubr.f32.gmra.mrb[0].mxu0 %v4142
      %v5239 = vpop.f32.mrb[0].mxu0
      %v5240 = vadd.f32 %v4231, %v5239
      %v5241 = vpop.f32.mrb[0].mxu0
      %5242 = vmatprep.mubr.f32.mxu0 0.0
      %5243 = vmatmul.mubr.f32.gmra.mrb[0].mxu0 %v4143
      %v5244 = vpop.f32.mrb[0].mxu0
      %v5245 = vadd.f32 %v4231, %v5244
      %v5246 = vpop.f32.mrb[0].mxu0
      %5247 = vmatprep.mubr.f32.mxu0 0.0
      %5248 = vmatmul.mubr.f32.gmra.mrb[0].mxu0 %v4144
      %v5249 = vpop.f32.mrb[0].mxu0
      %v5250 = vadd.f32 %v4231, %v5249
      %v5251 = vpop.f32.mrb[0].mxu0
      %5252 = vmatprep.mubr.f32.mxu0 0.0
      %5253 = vmatmul.mubr.f32.gmra.mrb[0].mxu0 %v4145
      %v5254 = vpop.f32.mrb[0].mxu0
      %v5255 = vadd.f32 %v4231, %v5254
      %v5256 = vpop.f32.mrb[0].mxu0
      %5257 = vmatprep.mubr.f32.mxu0 0.0
      %5258 = vmatmul.mubr.f32.gmra.mrb[0].mxu0 %v4146
      %v5259 = vpop.f32.mrb[0].mxu0
      %v5260 = vadd.f32 %v4231, %v5259
      %v5261 = vpop.f32.mrb[0].mxu0
      %5262 = vmatprep.mubr.f32.mxu0 0.0
      %5263 = vmatmul.mubr.f32.gmra.mrb[0].mxu0 %v4147
      %v5264 = vpop.f32.mrb[0].mxu0
      %v5265 = vadd.f32 %v4231, %v5264
      %v5266 = vpop.f32.mrb[0].mxu0
      %5267 = vmatprep.mubr.f32.mxu0 0.0
      %5268 = vmatmul.mubr.f32.gmra.mrb[0].mxu0 %v4148
      %v5269 = vpop.f32.mrb[0].mxu0
      %v5270 = vadd.f32 %v4231, %v5269
      %v5271 = vpop.f32.mrb[0].mxu0
      %5272 = vmatprep.mubr.f32.mxu0 0.0
      %5273 = vmatmul.mubr.f32.gmra.mrb[0].mxu0 %v4149
      %v5274 = vpop.f32.mrb[0].mxu0
      %v5275 = vadd.f32 %v4231, %v5274
      %v5276 = vpop.f32.mrb[0].mxu0
      %5277 = vmatprep.mubr.f32.mxu0 0.0
      %5278 = vmatmul.mubr.f32.gmra.mrb[0].mxu0 %v4150
      %v5279 = vpop.f32.mrb[0].mxu0
      %v5280 = vadd.f32 %v4231, %v5279
      %v5281 = vpop.f32.mrb[0].mxu0
      %5282 = vmatprep.mubr.f32.mxu0 0.0
      %5283 = vmatmul.mubr.f32.gmra.mrb[0].mxu0 %v4151
      %v5284 = vpop.f32.mrb[0].mxu0
      %v5285 = vadd.f32 %v4231, %v5284
      %v5286 = vpop.f32.mrb[0].mxu0
      %5287 = vmatprep.mubr.f32.mxu0 0.0
      %5288 = vmatmul.mubr.f32.gmra.mrb[0].mxu0 %v4152
      %v5289 = vpop.f32.mrb[0].mxu0
      %v5290 = vadd.f32 %v4231, %v5289
      %v5291 = vpop.f32.mrb[0].mxu0
      %5292 = vmatprep.mubr.f32.mxu0 0.0
      %5293 = vmatmul.mubr.f32.gmra.mrb[0].mxu0 %v4153
      %v5294 = vpop.f32.mrb[0].mxu0
      %v5295 = vadd.f32 %v4231, %v5294
      %v5296 = vpop.f32.mrb[0].mxu0
      %5297 = vmatprep.mubr.f32.mxu0 0.0
      %5298 = vmatmul.mubr.f32.gmra.mrb[0].mxu0 %v4154
      %v5299 = vpop.f32.mrb[0].mxu0
      %v5300 = vadd.f32 %v4231, %v5299
      %v5301 = vpop.f32.mrb[0].mxu0
      %5302 = vmatprep.mubr.f32.mxu0 0.0
      %5303 = vmatmul.mubr.f32.gmra.mrb[0].mxu0 %v4155
      %v5304 = vpop.f32.mrb[0].mxu0
      %v5305 = vadd.f32 %v4231, %v5304
      %v5306 = vpop.f32.mrb[0].mxu0
      %5307 = vmatprep.mubr.f32.mxu0 0.0
      %5308 = vmatmul.mubr.f32.gmra.mrb[0].mxu0 %v4156
      %v5309 = vpop.f32.mrb[0].mxu0
      %v5310 = vadd.f32 %v4231, %v5309
      %v5311 = vpop.f32.mrb[0].mxu0
      %5312 = vmatprep.mubr.f32.mxu0 0.0
      %5313 = vmatmul.mubr.f32.gmra.mrb[0].mxu0 %v4157
      %v5314 = vpop.f32.mrb[0].mxu0
      %v5315 = vadd.f32 %v4231, %v5314
      %v5316 = vpop.f32.mrb[0].mxu0
      %5317 = vmatprep.mubr.f32.mxu0 0.0
      %5318 = vmatmul.mubr.f32.gmra.mrb[0].mxu0 %v4158
      %v5319 = vpop.f32.mrb[0].mxu0
      %v5320 = vadd.f32 %v4231, %v5319
      %v5321 = vpop.f32.mrb[0].mxu0
      %5322 = vmatprep.mubr.f32.mxu0 0.0
      %5323 = vmatmul.mubr.f32.gmra.mrb[0].mxu0 %v4159
      %v5324 = vpop.f32.mrb[0].mxu0
      %v5325 = vadd.f32 %v4231, %v5324
      %v5326 = vpop.f32.mrb[0].mxu0
      %5327 = vmatprep.mubr.f32.mxu0 0.0
      %5328 = vmatmul.mubr.f32.gmra.mrb[0].mxu0 %v4160
      %v5329 = vpop.f32.mrb[0].mxu0
      %v5330 = vadd.f32 %v4231, %v5329
      %v5331 = vpop.f32.mrb[0].mxu0
      %5332 = vmatprep.mubr.f32.mxu0 0.0
      %5333 = vmatmul.mubr.f32.gmra.mrb[0].mxu0 %v4161
      %v5334 = vpop.f32.mrb[0].mxu0
      %v5335 = vadd.f32 %v4231, %v5334
      %v5336 = vpop.f32.mrb[0].mxu0
      %5337 = vmatprep.mubr.f32.mxu0 0.0
      %5338 = vmatmul.mubr.f32.gmra.mrb[0].mxu0 %v4162
      %v5339 = vpop.f32.mrb[0].mxu0
      %v5340 = vadd.f32 %v4231, %v5339
      %v5341 = vpop.f32.mrb[0].mxu0
      %5342 = vmatprep.mubr.f32.mxu0 0.0
      %5343 = vmatmul.mubr.f32.gmra.mrb[0].mxu0 %v4163
      %v5344 = vpop.f32.mrb[0].mxu0
      %v5345 = vadd.f32 %v4231, %v5344
      %v5346 = vpop.f32.mrb[0].mxu0
      %5347 = vmatprep.mubr.f32.mxu0 0.0
      %5348 = vmatmul.mubr.f32.gmra.mrb[0].mxu0 %v4164
      %v5349 = vpop.f32.mrb[0].mxu0
      %v5350 = vadd.f32 %v4231, %v5349
      %v5351 = vpop.f32.mrb[0].mxu0
      %5352 = vmatprep.mubr.f32.mxu0 0.0
      %5353 = vmatmul.mubr.f32.gmra.mrb[0].mxu0 %v4165
      %v5354 = vpop.f32.mrb[0].mxu0
      %v5355 = vadd.f32 %v4231, %v5354
      %v5356 = vpop.f32.mrb[0].mxu0
      %5357 = vmatprep.mubr.f32.mxu0 0.0
      %5358 = vmatmul.mubr.f32.gmra.mrb[0].mxu0 %v4166
      %v5359 = vpop.f32.mrb[0].mxu0
      %v5360 = vadd.f32 %v4231, %v5359
      %v5361 = vpop.f32.mrb[0].mxu0
      %5362 = vmatprep.mubr.f32.mxu0 0.0
      %5363 = vmatmul.mubr.f32.gmra.mrb[0].mxu0 %v4167
      %v5364 = vpop.f32.mrb[0].mxu0
      %v5365 = vadd.f32 %v4231, %v5364
      %v5366 = vpop.f32.mrb[0].mxu0
      %5367 = vmatprep.mubr.f32.mxu0 0.0
      %5368 = vmatmul.mubr.f32.gmra.mrb[0].mxu0 %v4168
      %v5369 = vpop.f32.mrb[0].mxu0
      %v5370 = vadd.f32 %v4231, %v5369
      %v5371 = vpop.f32.mrb[0].mxu0
      %5372 = vmatprep.mubr.f32.mxu0 0.0
      %5373 = vmatmul.mubr.f32.gmra.mrb[0].mxu0 %v4169
      %v5374 = vpop.f32.mrb[0].mxu0
      %v5375 = vadd.f32 %v4231, %v5374
      %v5376 = vpop.f32.mrb[0].mxu0
      %5377 = vmatprep.mubr.f32.mxu0 0.0
      %5378 = vmatmul.mubr.f32.gmra.mrb[0].mxu0 %v4170
      %v5379 = vpop.f32.mrb[0].mxu0
      %v5380 = vadd.f32 %v4231, %v5379
      %v5381 = vpop.f32.mrb[0].mxu0
      %5382 = vmatprep.mubr.f32.mxu0 0.0
      %5383 = vmatmul.mubr.f32.gmra.mrb[0].mxu0 %v4171
      %v5384 = vpop.f32.mrb[0].mxu0
      %v5385 = vadd.f32 %v4231, %v5384
      %v5386 = vpop.f32.mrb[0].mxu0
      %5387 = vmatprep.mubr.f32.mxu0 0.0
      %5388 = vmatmul.mubr.f32.gmra.mrb[0].mxu0 %v4172
      %v5389 = vpop.f32.mrb[0].mxu0
      %v5390 = vadd.f32 %v4231, %v5389
      %v5391 = vpop.f32.mrb[0].mxu0
      %5392 = vmatprep.mubr.f32.mxu0 0.0
      %5393 = vmatmul.mubr.f32.gmra.mrb[0].mxu0 %v4173
      %v5394 = vpop.f32.mrb[0].mxu0
      %v5395 = vadd.f32 %v4231, %v5394
      %v5396 = vpop.f32.mrb[0].mxu0
      %5397 = vmatprep.mubr.f32.mxu0 0.0
      %5398 = vmatmul.mubr.f32.gmra.mrb[0].mxu0 %v4174
      %v5399 = vpop.f32.mrb[0].mxu0
      %v5400 = vadd.f32 %v4231, %v5399
      %v5401 = vpop.f32.mrb[0].mxu0
      %5402 = vmatprep.mubr.f32.mxu0 0.0
      %5403 = vmatmul.mubr.f32.gmra.mrb[0].mxu0 %v4175
      %v5404 = vpop.f32.mrb[0].mxu0
      %v5405 = vadd.f32 %v4231, %v5404
      %v5406 = vpop.f32.mrb[0].mxu0
      %5407 = vmatprep.mubr.f32.mxu0 0.0
      %5408 = vmatmul.mubr.f32.gmra.mrb[0].mxu0 %v4176
      %v5409 = vpop.f32.mrb[0].mxu0
      %v5410 = vadd.f32 %v4231, %v5409
      %v5411 = vpop.f32.mrb[0].mxu0
      %5412 = vmatprep.mubr.f32.mxu0 0.0
      %5413 = vmatmul.mubr.f32.gmra.mrb[0].mxu0 %v4177
      %v5414 = vpop.f32.mrb[0].mxu0
      %v5415 = vadd.f32 %v4231, %v5414
      %v5416 = vpop.f32.mrb[0].mxu0
      %5417 = vmatprep.mubr.f32.mxu0 0.0
      %5418 = vmatmul.mubr.f32.gmra.mrb[0].mxu0 %v4178
      %v5419 = vpop.f32.mrb[0].mxu0
      %v5420 = vadd.f32 %v4231, %v5419
      %v5421 = vpop.f32.mrb[0].mxu0
      %5422 = vmatprep.mubr.f32.mxu0 0.0
      %5423 = vmatmul.mubr.f32.gmra.mrb[0].mxu0 %v4179
      %v5424 = vpop.f32.mrb[0].mxu0
      %v5425 = vadd.f32 %v4231, %v5424
      %v5426 = vpop.f32.mrb[0].mxu0
      %5427 = vmatprep.mubr.f32.mxu0 0.0
      %5428 = vmatmul.mubr.f32.gmra.mrb[0].mxu0 %v4180
      %v5429 = vpop.f32.mrb[0].mxu0
      %v5430 = vadd.f32 %v4231, %v5429
      %v5431 = vpop.f32.mrb[0].mxu0
      %5432 = vmatprep.mubr.f32.mxu0 0.0
      %5433 = vmatmul.mubr.f32.gmra.mrb[0].mxu0 %v4181
      %v5434 = vpop.f32.mrb[0].mxu0
      %v5435 = vadd.f32 %v4231, %v5434
      %v5436 = vpop.f32.mrb[0].mxu0
      %5437 = vmatprep.mubr.f32.mxu0 0.0
      %5438 = vmatmul.mubr.f32.gmra.mrb[0].mxu0 %v4182
      %v5439 = vpop.f32.mrb[0].mxu0
      %v5440 = vadd.f32 %v4231, %v5439
      %v5441 = vpop.f32.mrb[0].mxu0
      %5442 = vmatprep.mubr.f32.mxu0 0.0
      %5443 = vmatmul.mubr.f32.gmra.mrb[0].mxu0 %v4183
      %v5444 = vpop.f32.mrb[0].mxu0
      %v5445 = vadd.f32 %v4231, %v5444
      %v5446 = vpop.f32.mrb[0].mxu0
      %5447 = vmatprep.mubr.f32.mxu0 0.0
      %5448 = vmatmul.mubr.f32.gmra.mrb[0].mxu0 %v4184
      %v5449 = vpop.f32.mrb[0].mxu0
      %v5450 = vadd.f32 %v4231, %v5449
      %v5451 = vpop.f32.mrb[0].mxu0
      %5452 = vmatprep.mubr.f32.mxu0 0.0
      %5453 = vmatmul.mubr.f32.gmra.mrb[0].mxu0 %v4185
      %v5454 = vpop.f32.mrb[0].mxu0
      %v5455 = vadd.f32 %v4231, %v5454
      %v5456 = vpop.f32.mrb[0].mxu0
      %5457 = vmatprep.mubr.f32.mxu0 0.0
      %5458 = vmatmul.mubr.f32.gmra.mrb[0].mxu0 %v4186
      %v5459 = vpop.f32.mrb[0].mxu0
      %v5460 = vadd.f32 %v4231, %v5459
      %v5461 = vpop.f32.mrb[0].mxu0
      %5462 = vmatprep.mubr.f32.mxu0 0.0
      %5463 = vmatmul.mubr.f32.gmra.mrb[0].mxu0 %v4187
      %v5464 = vpop.f32.mrb[0].mxu0
      %v5465 = vadd.f32 %v4231, %v5464
      %v5466 = vpop.f32.mrb[0].mxu0
      %5467 = vmatprep.mubr.f32.mxu0 0.0
      %5468 = vmatmul.mubr.f32.gmra.mrb[0].mxu0 %v4188
      %v5469 = vpop.f32.mrb[0].mxu0
      %v5470 = vadd.f32 %v4231, %v5469
      %v5471 = vpop.f32.mrb[0].mxu0
      %5472 = vmatprep.mubr.f32.mxu0 0.0
      %5473 = vmatmul.mubr.f32.gmra.mrb[0].mxu0 %v4189
      %v5474 = vpop.f32.mrb[0].mxu0
      %v5475 = vadd.f32 %v4231, %v5474
      %v5476 = vpop.f32.mrb[0].mxu0
      %5477 = vmatprep.mubr.f32.mxu0 0.0
      %5478 = vmatmul.mubr.f32.gmra.mrb[0].mxu0 %v4190
      %v5479 = vpop.f32.mrb[0].mxu0
      %v5480 = vadd.f32 %v4231, %v5479
      %v5481 = vpop.f32.mrb[0].mxu0
      %5482 = vmatprep.mubr.f32.mxu0 0.0
      %5483 = vmatmul.mubr.f32.gmra.mrb[0].mxu0 %v4191
      %v5484 = vpop.f32.mrb[0].mxu0
      %v5485 = vadd.f32 %v4231, %v5484
      %v5486 = vpop.f32.mrb[0].mxu0
      %5487 = vmatprep.mubr.f32.mxu0 0.0
      %5488 = vmatmul.mubr.f32.gmra.mrb[0].mxu0 %v4192
      %v5489 = vpop.f32.mrb[0].mxu0
      %v5490 = vadd.f32 %v4231, %v5489
      %v5491 = vpop.f32.mrb[0].mxu0
      %5492 = vmatprep.mubr.f32.mxu0 0.0
      %5493 = vmatmul.mubr.f32.gmra.mrb[0].mxu0 %v4193
      %v5494 = vpop.f32.mrb[0].mxu0
      %v5495 = vadd.f32 %v4231, %v5494
      %v5496 = vpop.f32.mrb[0].mxu0
      %5497 = vmatprep.mubr.f32.mxu0 0.0
      %5498 = vmatmul.mubr.f32.gmra.mrb[0].mxu0 %v4194
      %v5499 = vpop.f32.mrb[0].mxu0
      %v5500 = vadd.f32 %v4231, %v5499
      %v5501 = vpop.f32.mrb[0].mxu0
      %5502 = vmatprep.mubr.f32.mxu0 0.0
      %5503 = vmatmul.mubr.f32.gmra.mrb[0].mxu0 %v4195
      %v5504 = vpop.f32.mrb[0].mxu0
      %v5505 = vadd.f32 %v4231, %v5504
      %v5506 = vpop.f32.mrb[0].mxu0
      %5507 = vmatprep.mubr.f32.mxu0 0.0
      %5508 = vmatmul.mubr.f32.gmra.mrb[0].mxu0 %v4196
      %v5509 = vpop.f32.mrb[0].mxu0
      %v5510 = vadd.f32 %v4231, %v5509
      %v5511 = vpop.f32.mrb[0].mxu0
      %5512 = vmatprep.mubr.f32.mxu0 0.0
      %5513 = vmatmul.mubr.f32.gmra.mrb[0].mxu0 %v4197
      %v5514 = vpop.f32.mrb[0].mxu0
      %v5515 = vadd.f32 %v4231, %v5514
      %v5516 = vpop.f32.mrb[0].mxu0
      %5517 = vmatprep.mubr.f32.mxu0 0.0
      %5518 = vmatmul.mubr.f32.gmra.mrb[0].mxu0 %v4198
      %v5519 = vpop.f32.mrb[0].mxu0
      %v5520 = vadd.f32 %v4231, %v5519
      %v5521 = vpop.f32.mrb[0].mxu0
      %5522 = vmatprep.mubr.f32.mxu0 0.0
      %5523 = vmatmul.mubr.f32.gmra.mrb[0].mxu0 %v4199
      %v5524 = vpop.f32.mrb[0].mxu0
      %v5525 = vadd.f32 %v4231, %v5524
      %v5526 = vpop.f32.mrb[0].mxu0
      %5527 = vmatprep.mubr.f32.mxu0 0.0
      %5528 = vmatmul.mubr.f32.gmra.mrb[0].mxu0 %v4200
      %v5529 = vpop.f32.mrb[0].mxu0
      %v5530 = vadd.f32 %v4231, %v5529
      %v5531 = vpop.f32.mrb[0].mxu0
      %5532 = vmatprep.mubr.f32.mxu0 0.0
      %5533 = vmatmul.mubr.f32.gmra.mrb[0].mxu0 %v4201
      %v5534 = vpop.f32.mrb[0].mxu0
      %v5535 = vadd.f32 %v4231, %v5534
      %v5536 = vpop.f32.mrb[0].mxu0
      %5537 = vmatprep.mubr.f32.mxu0 0.0
      %5538 = vmatmul.mubr.f32.gmra.mrb[0].mxu0 %v4202
      %v5539 = vpop.f32.mrb[0].mxu0
      %v5540 = vadd.f32 %v4231, %v5539
      %v5541 = vpop.f32.mrb[0].mxu0
      %5542 = vmatprep.mubr.f32.mxu0 0.0
      %5543 = vmatmul.mubr.f32.gmra.mrb[0].mxu0 %v4203
      %v5544 = vpop.f32.mrb[0].mxu0
      %v5545 = vadd.f32 %v4231, %v5544
      %v5546 = vpop.f32.mrb[0].mxu0
      %5547 = vmatprep.mubr.f32.mxu0 0.0
      %5548 = vmatmul.mubr.f32.gmra.mrb[0].mxu0 %v4204
      %v5549 = vpop.f32.mrb[0].mxu0
      %v5550 = vadd.f32 %v4231, %v5549
      %v5551 = vpop.f32.mrb[0].mxu0
      %5552 = vmatprep.mubr.f32.mxu0 0.0
      %5553 = vmatmul.mubr.f32.gmra.mrb[0].mxu0 %v4205
      %v5554 = vpop.f32.mrb[0].mxu0
      %v5555 = vadd.f32 %v4231, %v5554
      %v5556 = vpop.f32.mrb[0].mxu0
      %5557 = vmatprep.mubr.f32.mxu0 0.0
      %5558 = vmatmul.mubr.f32.gmra.mrb[0].mxu0 %v4206
      %v5559 = vpop.f32.mrb[0].mxu0
      %v5560 = vadd.f32 %v4231, %v5559
      %v5561 = vpop.f32.mrb[0].mxu0
      %5562 = vmatprep.mubr.f32.mxu0 0.0
      %5563 = vmatmul.mubr.f32.gmra.mrb[0].mxu0 %v4207
      %v5564 = vpop.f32.mrb[0].mxu0
      %v5565 = vadd.f32 %v4231, %v5564
      %v5566 = vpop.f32.mrb[0].mxu0
      %5567 = vmatprep.mubr.f32.mxu0 0.0
      %5568 = vmatmul.mubr.f32.gmra.mrb[0].mxu0 %v4208
      %v5569 = vpop.f32.mrb[0].mxu0
      %v5570 = vadd.f32 %v4231, %v5569
      %v5571 = vpop.f32.mrb[0].mxu0
      %5572 = vmatprep.mubr.f32.mxu0 0.0
      %5573 = vmatmul.mubr.f32.gmra.mrb[0].mxu0 %v4209
      %v5574 = vpop.f32.mrb[0].mxu0
      %v5575 = vadd.f32 %v4231, %v5574
      %v5576 = vpop.f32.mrb[0].mxu0
      %5577 = vdwg.mxu0
      %v5578 = vxor.u32 %v4300, 2147483648
      %v5579 = vxor.u32 %v4305, 2147483648
      %v5580 = vxor.u32 %v4310, 2147483648
      %v5581 = vxor.u32 %v4315, 2147483648
      %v5582 = vxor.u32 %v4320, 2147483648
      %v5583 = vxor.u32 %v4325, 2147483648
      %v5584 = vxor.u32 %v4330, 2147483648
      %v5585 = vxor.u32 %v4335, 2147483648
      %v5586 = vxor.u32 %v4340, 2147483648
      %v5587 = vxor.u32 %v4345, 2147483648
      %v5588 = vxor.u32 %v4350, 2147483648
      %v5589 = vxor.u32 %v4355, 2147483648
      %v5590 = vxor.u32 %v4360, 2147483648
      %v5591 = vxor.u32 %v4365, 2147483648
      %v5592 = vxor.u32 %v4370, 2147483648
      %v5593 = vxor.u32 %v4375, 2147483648
      %v5594 = vxor.u32 %v4380, 2147483648
      %v5595 = vxor.u32 %v4385, 2147483648
      %v5596 = vxor.u32 %v4390, 2147483648
      %v5597 = vxor.u32 %v4395, 2147483648
      %v5598 = vxor.u32 %v4400, 2147483648
      %v5599 = vxor.u32 %v4405, 2147483648
      %v5600 = vxor.u32 %v4410, 2147483648
      %v5601 = vxor.u32 %v4415, 2147483648
      %v5602 = vxor.u32 %v4420, 2147483648
      %v5603 = vxor.u32 %v4425, 2147483648
      %v5604 = vxor.u32 %v4430, 2147483648
      %v5605 = vxor.u32 %v4435, 2147483648
      %v5606 = vxor.u32 %v4440, 2147483648
      %v5607 = vxor.u32 %v4445, 2147483648
      %v5608 = vxor.u32 %v4450, 2147483648
      %v5609 = vxor.u32 %v4455, 2147483648
      %v5610 = vxor.u32 %v4460, 2147483648
      %v5611 = vxor.u32 %v4465, 2147483648
      %v5612 = vxor.u32 %v4470, 2147483648
      %v5613 = vxor.u32 %v4475, 2147483648
      %v5614 = vxor.u32 %v4480, 2147483648
      %v5615 = vxor.u32 %v4485, 2147483648
      %v5616 = vxor.u32 %v4490, 2147483648
      %v5617 = vxor.u32 %v4495, 2147483648
      %v5618 = vxor.u32 %v4500, 2147483648
      %v5619 = vxor.u32 %v4505, 2147483648
      %v5620 = vxor.u32 %v4510, 2147483648
      %v5621 = vxor.u32 %v4515, 2147483648
      %v5622 = vxor.u32 %v4520, 2147483648
      %v5623 = vxor.u32 %v4525, 2147483648
      %v5624 = vxor.u32 %v4530, 2147483648
      %v5625 = vxor.u32 %v4535, 2147483648
      %v5626 = vxor.u32 %v4540, 2147483648
      %v5627 = vxor.u32 %v4545, 2147483648
      %v5628 = vxor.u32 %v4550, 2147483648
      %v5629 = vxor.u32 %v4555, 2147483648
      %v5630 = vxor.u32 %v4560, 2147483648
      %v5631 = vxor.u32 %v4565, 2147483648
      %v5632 = vxor.u32 %v4570, 2147483648
      %v5633 = vxor.u32 %v4575, 2147483648
      %v5634 = vxor.u32 %v4580, 2147483648
      %v5635 = vxor.u32 %v4585, 2147483648
      %v5636 = vxor.u32 %v4590, 2147483648
      %v5637 = vxor.u32 %v4595, 2147483648
      %v5638 = vxor.u32 %v4600, 2147483648
      %v5639 = vxor.u32 %v4605, 2147483648
      %v5640 = vxor.u32 %v4610, 2147483648
      %v5641 = vxor.u32 %v4615, 2147483648
      %v5642 = vxor.u32 %v4620, 2147483648
      %v5643 = vxor.u32 %v4625, 2147483648
      %v5644 = vxor.u32 %v4630, 2147483648
      %v5645 = vxor.u32 %v4635, 2147483648
      %v5646 = vxor.u32 %v4640, 2147483648
      %v5647 = vxor.u32 %v4645, 2147483648
      %v5648 = vxor.u32 %v4650, 2147483648
      %v5649 = vxor.u32 %v4655, 2147483648
      %v5650 = vxor.u32 %v4660, 2147483648
      %v5651 = vxor.u32 %v4665, 2147483648
      %v5652 = vxor.u32 %v4670, 2147483648
      %v5653 = vxor.u32 %v4675, 2147483648
      %v5654 = vxor.u32 %v4680, 2147483648
      %v5655 = vxor.u32 %v4685, 2147483648
      %v5656 = vxor.u32 %v4690, 2147483648
      %v5657 = vxor.u32 %v4695, 2147483648
      %v5658 = vxor.u32 %v4700, 2147483648
      %v5659 = vxor.u32 %v4705, 2147483648
      %v5660 = vxor.u32 %v4710, 2147483648
      %v5661 = vxor.u32 %v4715, 2147483648
      %v5662 = vxor.u32 %v4720, 2147483648
      %v5663 = vxor.u32 %v4725, 2147483648
      %v5664 = vxor.u32 %v4730, 2147483648
      %v5665 = vxor.u32 %v4735, 2147483648
      %v5666 = vxor.u32 %v4740, 2147483648
      %v5667 = vxor.u32 %v4745, 2147483648
      %v5668 = vxor.u32 %v4750, 2147483648
      %v5669 = vxor.u32 %v4755, 2147483648
      %v5670 = vxor.u32 %v4760, 2147483648
      %v5671 = vxor.u32 %v4765, 2147483648
      %v5672 = vxor.u32 %v4770, 2147483648
      %v5673 = vxor.u32 %v4775, 2147483648
      %v5674 = vxor.u32 %v4780, 2147483648
      %v5675 = vxor.u32 %v4785, 2147483648
      %v5676 = vxor.u32 %v4790, 2147483648
      %v5677 = vxor.u32 %v4795, 2147483648
      %v5678 = vxor.u32 %v4800, 2147483648
      %v5679 = vxor.u32 %v4805, 2147483648
      %v5680 = vxor.u32 %v4810, 2147483648
      %v5681 = vxor.u32 %v4815, 2147483648
      %v5682 = vxor.u32 %v4820, 2147483648
      %v5683 = vxor.u32 %v4825, 2147483648
      %v5684 = vxor.u32 %v4830, 2147483648
      %v5685 = vxor.u32 %v4835, 2147483648
      %v5686 = vxor.u32 %v4840, 2147483648
      %v5687 = vxor.u32 %v4845, 2147483648
      %v5688 = vxor.u32 %v4850, 2147483648
      %v5689 = vxor.u32 %v4855, 2147483648
      %v5690 = vxor.u32 %v4860, 2147483648
      %v5691 = vxor.u32 %v4865, 2147483648
      %v5692 = vxor.u32 %v4870, 2147483648
      %v5693 = vxor.u32 %v4875, 2147483648
      %v5694 = vxor.u32 %v4880, 2147483648
      %v5695 = vxor.u32 %v4885, 2147483648
      %v5696 = vxor.u32 %v4890, 2147483648
      %v5697 = vxor.u32 %v4895, 2147483648
      %v5698 = vxor.u32 %v4900, 2147483648
      %v5699 = vxor.u32 %v4905, 2147483648
      %v5700 = vxor.u32 %v4910, 2147483648
      %v5701 = vxor.u32 %v4915, 2147483648
      %v5702 = vxor.u32 %v4920, 2147483648
      %v5703 = vxor.u32 %v4925, 2147483648
      %v5704 = vxor.u32 %v4930, 2147483648
      %v5705 = vxor.u32 %v4935, 2147483648
      %v5706 = vxor.u32 %v4940, 2147483648
      %v5707 = vxor.u32 %v4945, 2147483648
      %v5708 = vxor.u32 %v4950, 2147483648
      %v5709 = vxor.u32 %v4955, 2147483648
      %v5710 = vxor.u32 %v4960, 2147483648
      %v5711 = vxor.u32 %v4965, 2147483648
      %v5712 = vxor.u32 %v4970, 2147483648
      %v5713 = vxor.u32 %v4975, 2147483648
      %v5714 = vxor.u32 %v4980, 2147483648
      %v5715 = vxor.u32 %v4985, 2147483648
      %v5716 = vxor.u32 %v4990, 2147483648
      %v5717 = vxor.u32 %v4995, 2147483648
      %v5718 = vxor.u32 %v5000, 2147483648
      %v5719 = vxor.u32 %v5005, 2147483648
      %v5720 = vxor.u32 %v5010, 2147483648
      %v5721 = vxor.u32 %v5015, 2147483648
      %v5722 = vxor.u32 %v5020, 2147483648
      %v5723 = vxor.u32 %v5025, 2147483648
      %v5724 = vxor.u32 %v5030, 2147483648
      %v5725 = vxor.u32 %v5035, 2147483648
      %v5726 = vxor.u32 %v5040, 2147483648
      %v5727 = vxor.u32 %v5045, 2147483648
      %v5728 = vxor.u32 %v5050, 2147483648
      %v5729 = vxor.u32 %v5055, 2147483648
      %v5730 = vxor.u32 %v5060, 2147483648
      %v5731 = vxor.u32 %v5065, 2147483648
      %v5732 = vxor.u32 %v5070, 2147483648
      %v5733 = vxor.u32 %v5075, 2147483648
      %v5734 = vxor.u32 %v5080, 2147483648
      %v5735 = vxor.u32 %v5085, 2147483648
      %v5736 = vxor.u32 %v5090, 2147483648
      %v5737 = vxor.u32 %v5095, 2147483648
      %v5738 = vxor.u32 %v5100, 2147483648
      %v5739 = vxor.u32 %v5105, 2147483648
      %v5740 = vxor.u32 %v5110, 2147483648
      %v5741 = vxor.u32 %v5115, 2147483648
      %v5742 = vxor.u32 %v5120, 2147483648
      %v5743 = vxor.u32 %v5125, 2147483648
      %v5744 = vxor.u32 %v5130, 2147483648
      %v5745 = vxor.u32 %v5135, 2147483648
      %v5746 = vxor.u32 %v5140, 2147483648
      %v5747 = vxor.u32 %v5145, 2147483648
      %v5748 = vxor.u32 %v5150, 2147483648
      %v5749 = vxor.u32 %v5155, 2147483648
      %v5750 = vxor.u32 %v5160, 2147483648
      %v5751 = vxor.u32 %v5165, 2147483648
      %v5752 = vxor.u32 %v5170, 2147483648
      %v5753 = vxor.u32 %v5175, 2147483648
      %v5754 = vxor.u32 %v5180, 2147483648
      %v5755 = vxor.u32 %v5185, 2147483648
      %v5756 = vxor.u32 %v5190, 2147483648
      %v5757 = vxor.u32 %v5195, 2147483648
      %v5758 = vxor.u32 %v5200, 2147483648
      %v5759 = vxor.u32 %v5205, 2147483648
      %v5760 = vxor.u32 %v5210, 2147483648
      %v5761 = vxor.u32 %v5215, 2147483648
      %v5762 = vxor.u32 %v5220, 2147483648
      %v5763 = vxor.u32 %v5225, 2147483648
      %v5764 = vxor.u32 %v5230, 2147483648
      %v5765 = vxor.u32 %v5235, 2147483648
      %v5766 = vxor.u32 %v5240, 2147483648
      %v5767 = vxor.u32 %v5245, 2147483648
      %v5768 = vxor.u32 %v5250, 2147483648
      %v5769 = vxor.u32 %v5255, 2147483648
      %v5770 = vxor.u32 %v5260, 2147483648
      %v5771 = vxor.u32 %v5265, 2147483648
      %v5772 = vxor.u32 %v5270, 2147483648
      %v5773 = vxor.u32 %v5275, 2147483648
      %v5774 = vxor.u32 %v5280, 2147483648
      %v5775 = vxor.u32 %v5285, 2147483648
      %v5776 = vxor.u32 %v5290, 2147483648
      %v5777 = vxor.u32 %v5295, 2147483648
      %v5778 = vxor.u32 %v5300, 2147483648
      %v5779 = vxor.u32 %v5305, 2147483648
      %v5780 = vxor.u32 %v5310, 2147483648
      %v5781 = vxor.u32 %v5315, 2147483648
      %v5782 = vxor.u32 %v5320, 2147483648
      %v5783 = vxor.u32 %v5325, 2147483648
      %v5784 = vxor.u32 %v5330, 2147483648
      %v5785 = vxor.u32 %v5335, 2147483648
      %v5786 = vxor.u32 %v5340, 2147483648
      %v5787 = vxor.u32 %v5345, 2147483648
      %v5788 = vxor.u32 %v5350, 2147483648
      %v5789 = vxor.u32 %v5355, 2147483648
      %v5790 = vxor.u32 %v5360, 2147483648
      %v5791 = vxor.u32 %v5365, 2147483648
      %v5792 = vxor.u32 %v5370, 2147483648
      %v5793 = vxor.u32 %v5375, 2147483648
      %v5794 = vxor.u32 %v5380, 2147483648
      %v5795 = vxor.u32 %v5385, 2147483648
      %v5796 = vxor.u32 %v5390, 2147483648
      %v5797 = vxor.u32 %v5395, 2147483648
      %v5798 = vxor.u32 %v5400, 2147483648
      %v5799 = vxor.u32 %v5405, 2147483648
      %v5800 = vxor.u32 %v5410, 2147483648
      %v5801 = vxor.u32 %v5415, 2147483648
      %v5802 = vxor.u32 %v5420, 2147483648
      %v5803 = vxor.u32 %v5425, 2147483648
      %v5804 = vxor.u32 %v5430, 2147483648
      %v5805 = vxor.u32 %v5435, 2147483648
      %v5806 = vxor.u32 %v5440, 2147483648
      %v5807 = vxor.u32 %v5445, 2147483648
      %v5808 = vxor.u32 %v5450, 2147483648
      %v5809 = vxor.u32 %v5455, 2147483648
      %v5810 = vxor.u32 %v5460, 2147483648
      %v5811 = vxor.u32 %v5465, 2147483648
      %v5812 = vxor.u32 %v5470, 2147483648
      %v5813 = vxor.u32 %v5475, 2147483648
      %v5814 = vxor.u32 %v5480, 2147483648
      %v5815 = vxor.u32 %v5485, 2147483648
      %v5816 = vxor.u32 %v5490, 2147483648
      %v5817 = vxor.u32 %v5495, 2147483648
      %v5818 = vxor.u32 %v5500, 2147483648
      %v5819 = vxor.u32 %v5505, 2147483648
      %v5820 = vxor.u32 %v5510, 2147483648
      %v5821 = vxor.u32 %v5515, 2147483648
      %v5822 = vxor.u32 %v5520, 2147483648
      %v5823 = vxor.u32 %v5525, 2147483648
      %v5824 = vxor.u32 %v5530, 2147483648
      %v5825 = vxor.u32 %v5535, 2147483648
      %v5826 = vxor.u32 %v5540, 2147483648
      %v5827 = vxor.u32 %v5545, 2147483648
      %v5828 = vxor.u32 %v5550, 2147483648
      %v5829 = vxor.u32 %v5555, 2147483648
      %v5830 = vxor.u32 %v5560, 2147483648
      %v5831 = vxor.u32 %v5565, 2147483648
      %v5832 = vxor.u32 %v5570, 2147483648
      %v5833 = vxor.u32 %v5575, 2147483648
      %v5834 = vmul.f32 %v5578, 1.442695
      %v5835 = vpow.pop %v5834
      %v5836 = vmul.f32 %v5579, 1.442695
      %v5837 = vpow.pop %v5836
      %v5838 = vmul.f32 %v5580, 1.442695
      %v5839 = vpow.pop %v5838
      %v5840 = vmul.f32 %v5581, 1.442695
      %v5841 = vpow.pop %v5840
      %v5842 = vmul.f32 %v5582, 1.442695
      %v5843 = vpow.pop %v5842
      %v5844 = vmul.f32 %v5583, 1.442695
      %v5845 = vpow.pop %v5844
      %v5846 = vmul.f32 %v5584, 1.442695
      %v5847 = vpow.pop %v5846
      %v5848 = vmul.f32 %v5585, 1.442695
      %v5849 = vpow.pop %v5848
      %v5850 = vmul.f32 %v5586, 1.442695
      %v5851 = vpow.pop %v5850
      %v5852 = vmul.f32 %v5587, 1.442695
      %v5853 = vpow.pop %v5852
      %v5854 = vmul.f32 %v5588, 1.442695
      %v5855 = vpow.pop %v5854
      %v5856 = vmul.f32 %v5589, 1.442695
      %v5857 = vpow.pop %v5856
      %v5858 = vmul.f32 %v5590, 1.442695
      %v5859 = vpow.pop %v5858
      %v5860 = vmul.f32 %v5591, 1.442695
      %v5861 = vpow.pop %v5860
      %v5862 = vmul.f32 %v5592, 1.442695
      %v5863 = vpow.pop %v5862
      %v5864 = vmul.f32 %v5593, 1.442695
      %v5865 = vpow.pop %v5864
      %v5866 = vmul.f32 %v5594, 1.442695
      %v5867 = vpow.pop %v5866
      %v5868 = vmul.f32 %v5595, 1.442695
      %v5869 = vpow.pop %v5868
      %v5870 = vmul.f32 %v5596, 1.442695
      %v5871 = vpow.pop %v5870
      %v5872 = vmul.f32 %v5597, 1.442695
      %v5873 = vpow.pop %v5872
      %v5874 = vmul.f32 %v5598, 1.442695
      %v5875 = vpow.pop %v5874
      %v5876 = vmul.f32 %v5599, 1.442695
      %v5877 = vpow.pop %v5876
      %v5878 = vmul.f32 %v5600, 1.442695
      %v5879 = vpow.pop %v5878
      %v5880 = vmul.f32 %v5601, 1.442695
      %v5881 = vpow.pop %v5880
      %v5882 = vmul.f32 %v5602, 1.442695
      %v5883 = vpow.pop %v5882
      %v5884 = vmul.f32 %v5603, 1.442695
      %v5885 = vpow.pop %v5884
      %v5886 = vmul.f32 %v5604, 1.442695
      %v5887 = vpow.pop %v5886
      %v5888 = vmul.f32 %v5605, 1.442695
      %v5889 = vpow.pop %v5888
      %v5890 = vmul.f32 %v5606, 1.442695
      %v5891 = vpow.pop %v5890
      %v5892 = vmul.f32 %v5607, 1.442695
      %v5893 = vpow.pop %v5892
      %v5894 = vmul.f32 %v5608, 1.442695
      %v5895 = vpow.pop %v5894
      %v5896 = vmul.f32 %v5609, 1.442695
      %v5897 = vpow.pop %v5896
      %v5898 = vmul.f32 %v5610, 1.442695
      %v5899 = vpow.pop %v5898
      %v5900 = vmul.f32 %v5611, 1.442695
      %v5901 = vpow.pop %v5900
      %v5902 = vmul.f32 %v5612, 1.442695
      %v5903 = vpow.pop %v5902
      %v5904 = vmul.f32 %v5613, 1.442695
      %v5905 = vpow.pop %v5904
      %v5906 = vmul.f32 %v5614, 1.442695
      %v5907 = vpow.pop %v5906
      %v5908 = vmul.f32 %v5615, 1.442695
      %v5909 = vpow.pop %v5908
      %v5910 = vmul.f32 %v5616, 1.442695
      %v5911 = vpow.pop %v5910
      %v5912 = vmul.f32 %v5617, 1.442695
      %v5913 = vpow.pop %v5912
      %v5914 = vmul.f32 %v5618, 1.442695
      %v5915 = vpow.pop %v5914
      %v5916 = vmul.f32 %v5619, 1.442695
      %v5917 = vpow.pop %v5916
      %v5918 = vmul.f32 %v5620, 1.442695
      %v5919 = vpow.pop %v5918
      %v5920 = vmul.f32 %v5621, 1.442695
      %v5921 = vpow.pop %v5920
      %v5922 = vmul.f32 %v5622, 1.442695
      %v5923 = vpow.pop %v5922
      %v5924 = vmul.f32 %v5623, 1.442695
      %v5925 = vpow.pop %v5924
      %v5926 = vmul.f32 %v5624, 1.442695
      %v5927 = vpow.pop %v5926
      %v5928 = vmul.f32 %v5625, 1.442695
      %v5929 = vpow.pop %v5928
      %v5930 = vmul.f32 %v5626, 1.442695
      %v5931 = vpow.pop %v5930
      %v5932 = vmul.f32 %v5627, 1.442695
      %v5933 = vpow.pop %v5932
      %v5934 = vmul.f32 %v5628, 1.442695
      %v5935 = vpow.pop %v5934
      %v5936 = vmul.f32 %v5629, 1.442695
      %v5937 = vpow.pop %v5936
      %v5938 = vmul.f32 %v5630, 1.442695
      %v5939 = vpow.pop %v5938
      %v5940 = vmul.f32 %v5631, 1.442695
      %v5941 = vpow.pop %v5940
      %v5942 = vmul.f32 %v5632, 1.442695
      %v5943 = vpow.pop %v5942
      %v5944 = vmul.f32 %v5633, 1.442695
      %v5945 = vpow.pop %v5944
      %v5946 = vmul.f32 %v5634, 1.442695
      %v5947 = vpow.pop %v5946
      %v5948 = vmul.f32 %v5635, 1.442695
      %v5949 = vpow.pop %v5948
      %v5950 = vmul.f32 %v5636, 1.442695
      %v5951 = vpow.pop %v5950
      %v5952 = vmul.f32 %v5637, 1.442695
      %v5953 = vpow.pop %v5952
      %v5954 = vmul.f32 %v5638, 1.442695
      %v5955 = vpow.pop %v5954
      %v5956 = vmul.f32 %v5639, 1.442695
      %v5957 = vpow.pop %v5956
      %v5958 = vmul.f32 %v5640, 1.442695
      %v5959 = vpow.pop %v5958
      %v5960 = vmul.f32 %v5641, 1.442695
      %v5961 = vpow.pop %v5960
      %v5962 = vmul.f32 %v5642, 1.442695
      %v5963 = vpow.pop %v5962
      %v5964 = vmul.f32 %v5643, 1.442695
      %v5965 = vpow.pop %v5964
      %v5966 = vmul.f32 %v5644, 1.442695
      %v5967 = vpow.pop %v5966
      %v5968 = vmul.f32 %v5645, 1.442695
      %v5969 = vpow.pop %v5968
      %v5970 = vmul.f32 %v5646, 1.442695
      %v5971 = vpow.pop %v5970
      %v5972 = vmul.f32 %v5647, 1.442695
      %v5973 = vpow.pop %v5972
      %v5974 = vmul.f32 %v5648, 1.442695
      %v5975 = vpow.pop %v5974
      %v5976 = vmul.f32 %v5649, 1.442695
      %v5977 = vpow.pop %v5976
      %v5978 = vmul.f32 %v5650, 1.442695
      %v5979 = vpow.pop %v5978
      %v5980 = vmul.f32 %v5651, 1.442695
      %v5981 = vpow.pop %v5980
      %v5982 = vmul.f32 %v5652, 1.442695
      %v5983 = vpow.pop %v5982
      %v5984 = vmul.f32 %v5653, 1.442695
      %v5985 = vpow.pop %v5984
      %v5986 = vmul.f32 %v5654, 1.442695
      %v5987 = vpow.pop %v5986
      %v5988 = vmul.f32 %v5655, 1.442695
      %v5989 = vpow.pop %v5988
      %v5990 = vmul.f32 %v5656, 1.442695
      %v5991 = vpow.pop %v5990
      %v5992 = vmul.f32 %v5657, 1.442695
      %v5993 = vpow.pop %v5992
      %v5994 = vmul.f32 %v5658, 1.442695
      %v5995 = vpow.pop %v5994
      %v5996 = vmul.f32 %v5659, 1.442695
      %v5997 = vpow.pop %v5996
      %v5998 = vmul.f32 %v5660, 1.442695
      %v5999 = vpow.pop %v5998
      %v6000 = vmul.f32 %v5661, 1.442695
      %v6001 = vpow.pop %v6000
      %v6002 = vmul.f32 %v5662, 1.442695
      %v6003 = vpow.pop %v6002
      %v6004 = vmul.f32 %v5663, 1.442695
      %v6005 = vpow.pop %v6004
      %v6006 = vmul.f32 %v5664, 1.442695
      %v6007 = vpow.pop %v6006
      %v6008 = vmul.f32 %v5665, 1.442695
      %v6009 = vpow.pop %v6008
      %v6010 = vmul.f32 %v5666, 1.442695
      %v6011 = vpow.pop %v6010
      %v6012 = vmul.f32 %v5667, 1.442695
      %v6013 = vpow.pop %v6012
      %v6014 = vmul.f32 %v5668, 1.442695
      %v6015 = vpow.pop %v6014
      %v6016 = vmul.f32 %v5669, 1.442695
      %v6017 = vpow.pop %v6016
      %v6018 = vmul.f32 %v5670, 1.442695
      %v6019 = vpow.pop %v6018
      %v6020 = vmul.f32 %v5671, 1.442695
      %v6021 = vpow.pop %v6020
      %v6022 = vmul.f32 %v5672, 1.442695
      %v6023 = vpow.pop %v6022
      %v6024 = vmul.f32 %v5673, 1.442695
      %v6025 = vpow.pop %v6024
      %v6026 = vmul.f32 %v5674, 1.442695
      %v6027 = vpow.pop %v6026
      %v6028 = vmul.f32 %v5675, 1.442695
      %v6029 = vpow.pop %v6028
      %v6030 = vmul.f32 %v5676, 1.442695
      %v6031 = vpow.pop %v6030
      %v6032 = vmul.f32 %v5677, 1.442695
      %v6033 = vpow.pop %v6032
      %v6034 = vmul.f32 %v5678, 1.442695
      %v6035 = vpow.pop %v6034
      %v6036 = vmul.f32 %v5679, 1.442695
      %v6037 = vpow.pop %v6036
      %v6038 = vmul.f32 %v5680, 1.442695
      %v6039 = vpow.pop %v6038
      %v6040 = vmul.f32 %v5681, 1.442695
      %v6041 = vpow.pop %v6040
      %v6042 = vmul.f32 %v5682, 1.442695
      %v6043 = vpow.pop %v6042
      %v6044 = vmul.f32 %v5683, 1.442695
      %v6045 = vpow.pop %v6044
      %v6046 = vmul.f32 %v5684, 1.442695
      %v6047 = vpow.pop %v6046
      %v6048 = vmul.f32 %v5685, 1.442695
      %v6049 = vpow.pop %v6048
      %v6050 = vmul.f32 %v5686, 1.442695
      %v6051 = vpow.pop %v6050
      %v6052 = vmul.f32 %v5687, 1.442695
      %v6053 = vpow.pop %v6052
      %v6054 = vmul.f32 %v5688, 1.442695
      %v6055 = vpow.pop %v6054
      %v6056 = vmul.f32 %v5689, 1.442695
      %v6057 = vpow.pop %v6056
      %v6058 = vmul.f32 %v5690, 1.442695
      %v6059 = vpow.pop %v6058
      %v6060 = vmul.f32 %v5691, 1.442695
      %v6061 = vpow.pop %v6060
      %v6062 = vmul.f32 %v5692, 1.442695
      %v6063 = vpow.pop %v6062
      %v6064 = vmul.f32 %v5693, 1.442695
      %v6065 = vpow.pop %v6064
      %v6066 = vmul.f32 %v5694, 1.442695
      %v6067 = vpow.pop %v6066
      %v6068 = vmul.f32 %v5695, 1.442695
      %v6069 = vpow.pop %v6068
      %v6070 = vmul.f32 %v5696, 1.442695
      %v6071 = vpow.pop %v6070
      %v6072 = vmul.f32 %v5697, 1.442695
      %v6073 = vpow.pop %v6072
      %v6074 = vmul.f32 %v5698, 1.442695
      %v6075 = vpow.pop %v6074
      %v6076 = vmul.f32 %v5699, 1.442695
      %v6077 = vpow.pop %v6076
      %v6078 = vmul.f32 %v5700, 1.442695
      %v6079 = vpow.pop %v6078
      %v6080 = vmul.f32 %v5701, 1.442695
      %v6081 = vpow.pop %v6080
      %v6082 = vmul.f32 %v5702, 1.442695
      %v6083 = vpow.pop %v6082
      %v6084 = vmul.f32 %v5703, 1.442695
      %v6085 = vpow.pop %v6084
      %v6086 = vmul.f32 %v5704, 1.442695
      %v6087 = vpow.pop %v6086
      %v6088 = vmul.f32 %v5705, 1.442695
      %v6089 = vpow.pop %v6088
      %v6090 = vmul.f32 %v5706, 1.442695
      %v6091 = vpow.pop %v6090
      %v6092 = vmul.f32 %v5707, 1.442695
      %v6093 = vpow.pop %v6092
      %v6094 = vmul.f32 %v5708, 1.442695
      %v6095 = vpow.pop %v6094
      %v6096 = vmul.f32 %v5709, 1.442695
      %v6097 = vpow.pop %v6096
      %v6098 = vmul.f32 %v5710, 1.442695
      %v6099 = vpow.pop %v6098
      %v6100 = vmul.f32 %v5711, 1.442695
      %v6101 = vpow.pop %v6100
      %v6102 = vmul.f32 %v5712, 1.442695
      %v6103 = vpow.pop %v6102
      %v6104 = vmul.f32 %v5713, 1.442695
      %v6105 = vpow.pop %v6104
      %v6106 = vmul.f32 %v5714, 1.442695
      %v6107 = vpow.pop %v6106
      %v6108 = vmul.f32 %v5715, 1.442695
      %v6109 = vpow.pop %v6108
      %v6110 = vmul.f32 %v5716, 1.442695
      %v6111 = vpow.pop %v6110
      %v6112 = vmul.f32 %v5717, 1.442695
      %v6113 = vpow.pop %v6112
      %v6114 = vmul.f32 %v5718, 1.442695
      %v6115 = vpow.pop %v6114
      %v6116 = vmul.f32 %v5719, 1.442695
      %v6117 = vpow.pop %v6116
      %v6118 = vmul.f32 %v5720, 1.442695
      %v6119 = vpow.pop %v6118
      %v6120 = vmul.f32 %v5721, 1.442695
      %v6121 = vpow.pop %v6120
      %v6122 = vmul.f32 %v5722, 1.442695
      %v6123 = vpow.pop %v6122
      %v6124 = vmul.f32 %v5723, 1.442695
      %v6125 = vpow.pop %v6124
      %v6126 = vmul.f32 %v5724, 1.442695
      %v6127 = vpow.pop %v6126
      %v6128 = vmul.f32 %v5725, 1.442695
      %v6129 = vpow.pop %v6128
      %v6130 = vmul.f32 %v5726, 1.442695
      %v6131 = vpow.pop %v6130
      %v6132 = vmul.f32 %v5727, 1.442695
      %v6133 = vpow.pop %v6132
      %v6134 = vmul.f32 %v5728, 1.442695
      %v6135 = vpow.pop %v6134
      %v6136 = vmul.f32 %v5729, 1.442695
      %v6137 = vpow.pop %v6136
      %v6138 = vmul.f32 %v5730, 1.442695
      %v6139 = vpow.pop %v6138
      %v6140 = vmul.f32 %v5731, 1.442695
      %v6141 = vpow.pop %v6140
      %v6142 = vmul.f32 %v5732, 1.442695
      %v6143 = vpow.pop %v6142
      %v6144 = vmul.f32 %v5733, 1.442695
      %v6145 = vpow.pop %v6144
      %v6146 = vmul.f32 %v5734, 1.442695
      %v6147 = vpow.pop %v6146
      %v6148 = vmul.f32 %v5735, 1.442695
      %v6149 = vpow.pop %v6148
      %v6150 = vmul.f32 %v5736, 1.442695
      %v6151 = vpow.pop %v6150
      %v6152 = vmul.f32 %v5737, 1.442695
      %v6153 = vpow.pop %v6152
      %v6154 = vmul.f32 %v5738, 1.442695
      %v6155 = vpow.pop %v6154
      %v6156 = vmul.f32 %v5739, 1.442695
      %v6157 = vpow.pop %v6156
      %v6158 = vmul.f32 %v5740, 1.442695
      %v6159 = vpow.pop %v6158
      %v6160 = vmul.f32 %v5741, 1.442695
      %v6161 = vpow.pop %v6160
      %v6162 = vmul.f32 %v5742, 1.442695
      %v6163 = vpow.pop %v6162
      %v6164 = vmul.f32 %v5743, 1.442695
      %v6165 = vpow.pop %v6164
      %v6166 = vmul.f32 %v5744, 1.442695
      %v6167 = vpow.pop %v6166
      %v6168 = vmul.f32 %v5745, 1.442695
      %v6169 = vpow.pop %v6168
      %v6170 = vmul.f32 %v5746, 1.442695
      %v6171 = vpow.pop %v6170
      %v6172 = vmul.f32 %v5747, 1.442695
      %v6173 = vpow.pop %v6172
      %v6174 = vmul.f32 %v5748, 1.442695
      %v6175 = vpow.pop %v6174
      %v6176 = vmul.f32 %v5749, 1.442695
      %v6177 = vpow.pop %v6176
      %v6178 = vmul.f32 %v5750, 1.442695
      %v6179 = vpow.pop %v6178
      %v6180 = vmul.f32 %v5751, 1.442695
      %v6181 = vpow.pop %v6180
      %v6182 = vmul.f32 %v5752, 1.442695
      %v6183 = vpow.pop %v6182
      %v6184 = vmul.f32 %v5753, 1.442695
      %v6185 = vpow.pop %v6184
      %v6186 = vmul.f32 %v5754, 1.442695
      %v6187 = vpow.pop %v6186
      %v6188 = vmul.f32 %v5755, 1.442695
      %v6189 = vpow.pop %v6188
      %v6190 = vmul.f32 %v5756, 1.442695
      %v6191 = vpow.pop %v6190
      %v6192 = vmul.f32 %v5757, 1.442695
      %v6193 = vpow.pop %v6192
      %v6194 = vmul.f32 %v5758, 1.442695
      %v6195 = vpow.pop %v6194
      %v6196 = vmul.f32 %v5759, 1.442695
      %v6197 = vpow.pop %v6196
      %v6198 = vmul.f32 %v5760, 1.442695
      %v6199 = vpow.pop %v6198
      %v6200 = vmul.f32 %v5761, 1.442695
      %v6201 = vpow.pop %v6200
      %v6202 = vmul.f32 %v5762, 1.442695
      %v6203 = vpow.pop %v6202
      %v6204 = vmul.f32 %v5763, 1.442695
      %v6205 = vpow.pop %v6204
      %v6206 = vmul.f32 %v5764, 1.442695
      %v6207 = vpow.pop %v6206
      %v6208 = vmul.f32 %v5765, 1.442695
      %v6209 = vpow.pop %v6208
      %v6210 = vmul.f32 %v5766, 1.442695
      %v6211 = vpow.pop %v6210
      %v6212 = vmul.f32 %v5767, 1.442695
      %v6213 = vpow.pop %v6212
      %v6214 = vmul.f32 %v5768, 1.442695
      %v6215 = vpow.pop %v6214
      %v6216 = vmul.f32 %v5769, 1.442695
      %v6217 = vpow.pop %v6216
      %v6218 = vmul.f32 %v5770, 1.442695
      %v6219 = vpow.pop %v6218
      %v6220 = vmul.f32 %v5771, 1.442695
      %v6221 = vpow.pop %v6220
      %v6222 = vmul.f32 %v5772, 1.442695
      %v6223 = vpow.pop %v6222
      %v6224 = vmul.f32 %v5773, 1.442695
      %v6225 = vpow.pop %v6224
      %v6226 = vmul.f32 %v5774, 1.442695
      %v6227 = vpow.pop %v6226
      %v6228 = vmul.f32 %v5775, 1.442695
      %v6229 = vpow.pop %v6228
      %v6230 = vmul.f32 %v5776, 1.442695
      %v6231 = vpow.pop %v6230
      %v6232 = vmul.f32 %v5777, 1.442695
      %v6233 = vpow.pop %v6232
      %v6234 = vmul.f32 %v5778, 1.442695
      %v6235 = vpow.pop %v6234
      %v6236 = vmul.f32 %v5779, 1.442695
      %v6237 = vpow.pop %v6236
      %v6238 = vmul.f32 %v5780, 1.442695
      %v6239 = vpow.pop %v6238
      %v6240 = vmul.f32 %v5781, 1.442695
      %v6241 = vpow.pop %v6240
      %v6242 = vmul.f32 %v5782, 1.442695
      %v6243 = vpow.pop %v6242
      %v6244 = vmul.f32 %v5783, 1.442695
      %v6245 = vpow.pop %v6244
      %v6246 = vmul.f32 %v5784, 1.442695
      %v6247 = vpow.pop %v6246
      %v6248 = vmul.f32 %v5785, 1.442695
      %v6249 = vpow.pop %v6248
      %v6250 = vmul.f32 %v5786, 1.442695
      %v6251 = vpow.pop %v6250
      %v6252 = vmul.f32 %v5787, 1.442695
      %v6253 = vpow.pop %v6252
      %v6254 = vmul.f32 %v5788, 1.442695
      %v6255 = vpow.pop %v6254
      %v6256 = vmul.f32 %v5789, 1.442695
      %v6257 = vpow.pop %v6256
      %v6258 = vmul.f32 %v5790, 1.442695
      %v6259 = vpow.pop %v6258
      %v6260 = vmul.f32 %v5791, 1.442695
      %v6261 = vpow.pop %v6260
      %v6262 = vmul.f32 %v5792, 1.442695
      %v6263 = vpow.pop %v6262
      %v6264 = vmul.f32 %v5793, 1.442695
      %v6265 = vpow.pop %v6264
      %v6266 = vmul.f32 %v5794, 1.442695
      %v6267 = vpow.pop %v6266
      %v6268 = vmul.f32 %v5795, 1.442695
      %v6269 = vpow.pop %v6268
      %v6270 = vmul.f32 %v5796, 1.442695
      %v6271 = vpow.pop %v6270
      %v6272 = vmul.f32 %v5797, 1.442695
      %v6273 = vpow.pop %v6272
      %v6274 = vmul.f32 %v5798, 1.442695
      %v6275 = vpow.pop %v6274
      %v6276 = vmul.f32 %v5799, 1.442695
      %v6277 = vpow.pop %v6276
      %v6278 = vmul.f32 %v5800, 1.442695
      %v6279 = vpow.pop %v6278
      %v6280 = vmul.f32 %v5801, 1.442695
      %v6281 = vpow.pop %v6280
      %v6282 = vmul.f32 %v5802, 1.442695
      %v6283 = vpow.pop %v6282
      %v6284 = vmul.f32 %v5803, 1.442695
      %v6285 = vpow.pop %v6284
      %v6286 = vmul.f32 %v5804, 1.442695
      %v6287 = vpow.pop %v6286
      %v6288 = vmul.f32 %v5805, 1.442695
      %v6289 = vpow.pop %v6288
      %v6290 = vmul.f32 %v5806, 1.442695
      %v6291 = vpow.pop %v6290
      %v6292 = vmul.f32 %v5807, 1.442695
      %v6293 = vpow.pop %v6292
      %v6294 = vmul.f32 %v5808, 1.442695
      %v6295 = vpow.pop %v6294
      %v6296 = vmul.f32 %v5809, 1.442695
      %v6297 = vpow.pop %v6296
      %v6298 = vmul.f32 %v5810, 1.442695
      %v6299 = vpow.pop %v6298
      %v6300 = vmul.f32 %v5811, 1.442695
      %v6301 = vpow.pop %v6300
      %v6302 = vmul.f32 %v5812, 1.442695
      %v6303 = vpow.pop %v6302
      %v6304 = vmul.f32 %v5813, 1.442695
      %v6305 = vpow.pop %v6304
      %v6306 = vmul.f32 %v5814, 1.442695
      %v6307 = vpow.pop %v6306
      %v6308 = vmul.f32 %v5815, 1.442695
      %v6309 = vpow.pop %v6308
      %v6310 = vmul.f32 %v5816, 1.442695
      %v6311 = vpow.pop %v6310
      %v6312 = vmul.f32 %v5817, 1.442695
      %v6313 = vpow.pop %v6312
      %v6314 = vmul.f32 %v5818, 1.442695
      %v6315 = vpow.pop %v6314
      %v6316 = vmul.f32 %v5819, 1.442695
      %v6317 = vpow.pop %v6316
      %v6318 = vmul.f32 %v5820, 1.442695
      %v6319 = vpow.pop %v6318
      %v6320 = vmul.f32 %v5821, 1.442695
      %v6321 = vpow.pop %v6320
      %v6322 = vmul.f32 %v5822, 1.442695
      %v6323 = vpow.pop %v6322
      %v6324 = vmul.f32 %v5823, 1.442695
      %v6325 = vpow.pop %v6324
      %v6326 = vmul.f32 %v5824, 1.442695
      %v6327 = vpow.pop %v6326
      %v6328 = vmul.f32 %v5825, 1.442695
      %v6329 = vpow.pop %v6328
      %v6330 = vmul.f32 %v5826, 1.442695
      %v6331 = vpow.pop %v6330
      %v6332 = vmul.f32 %v5827, 1.442695
      %v6333 = vpow.pop %v6332
      %v6334 = vmul.f32 %v5828, 1.442695
      %v6335 = vpow.pop %v6334
      %v6336 = vmul.f32 %v5829, 1.442695
      %v6337 = vpow.pop %v6336
      %v6338 = vmul.f32 %v5830, 1.442695
      %v6339 = vpow.pop %v6338
      %v6340 = vmul.f32 %v5831, 1.442695
      %v6341 = vpow.pop %v6340
      %v6342 = vmul.f32 %v5832, 1.442695
      %v6343 = vpow.pop %v6342
      %v6344 = vmul.f32 %v5833, 1.442695
      %v6345 = vpow.pop %v6344
      %v6346 = vadd.f32 %v5835, 1.0
      %v6347 = vadd.f32 %v5837, 1.0
      %v6348 = vadd.f32 %v5839, 1.0
      %v6349 = vadd.f32 %v5841, 1.0
      %v6350 = vadd.f32 %v5843, 1.0
      %v6351 = vadd.f32 %v5845, 1.0
      %v6352 = vadd.f32 %v5847, 1.0
      %v6353 = vadd.f32 %v5849, 1.0
      %v6354 = vadd.f32 %v5851, 1.0
      %v6355 = vadd.f32 %v5853, 1.0
      %v6356 = vadd.f32 %v5855, 1.0
      %v6357 = vadd.f32 %v5857, 1.0
      %v6358 = vadd.f32 %v5859, 1.0
      %v6359 = vadd.f32 %v5861, 1.0
      %v6360 = vadd.f32 %v5863, 1.0
      %v6361 = vadd.f32 %v5865, 1.0
      %v6362 = vadd.f32 %v5867, 1.0
      %v6363 = vadd.f32 %v5869, 1.0
      %v6364 = vadd.f32 %v5871, 1.0
      %v6365 = vadd.f32 %v5873, 1.0
      %v6366 = vadd.f32 %v5875, 1.0
      %v6367 = vadd.f32 %v5877, 1.0
      %v6368 = vadd.f32 %v5879, 1.0
      %v6369 = vadd.f32 %v5881, 1.0
      %v6370 = vadd.f32 %v5883, 1.0
      %v6371 = vadd.f32 %v5885, 1.0
      %v6372 = vadd.f32 %v5887, 1.0
      %v6373 = vadd.f32 %v5889, 1.0
      %v6374 = vadd.f32 %v5891, 1.0
      %v6375 = vadd.f32 %v5893, 1.0
      %v6376 = vadd.f32 %v5895, 1.0
      %v6377 = vadd.f32 %v5897, 1.0
      %v6378 = vadd.f32 %v5899, 1.0
      %v6379 = vadd.f32 %v5901, 1.0
      %v6380 = vadd.f32 %v5903, 1.0
      %v6381 = vadd.f32 %v5905, 1.0
      %v6382 = vadd.f32 %v5907, 1.0
      %v6383 = vadd.f32 %v5909, 1.0
      %v6384 = vadd.f32 %v5911, 1.0
      %v6385 = vadd.f32 %v5913, 1.0
      %v6386 = vadd.f32 %v5915, 1.0
      %v6387 = vadd.f32 %v5917, 1.0
      %v6388 = vadd.f32 %v5919, 1.0
      %v6389 = vadd.f32 %v5921, 1.0
      %v6390 = vadd.f32 %v5923, 1.0
      %v6391 = vadd.f32 %v5925, 1.0
      %v6392 = vadd.f32 %v5927, 1.0
      %v6393 = vadd.f32 %v5929, 1.0
      %v6394 = vadd.f32 %v5931, 1.0
      %v6395 = vadd.f32 %v5933, 1.0
      %v6396 = vadd.f32 %v5935, 1.0
      %v6397 = vadd.f32 %v5937, 1.0
      %v6398 = vadd.f32 %v5939, 1.0
      %v6399 = vadd.f32 %v5941, 1.0
      %v6400 = vadd.f32 %v5943, 1.0
      %v6401 = vadd.f32 %v5945, 1.0
      %v6402 = vadd.f32 %v5947, 1.0
      %v6403 = vadd.f32 %v5949, 1.0
      %v6404 = vadd.f32 %v5951, 1.0
      %v6405 = vadd.f32 %v5953, 1.0
      %v6406 = vadd.f32 %v5955, 1.0
      %v6407 = vadd.f32 %v5957, 1.0
      %v6408 = vadd.f32 %v5959, 1.0
      %v6409 = vadd.f32 %v5961, 1.0
      %v6410 = vadd.f32 %v5963, 1.0
      %v6411 = vadd.f32 %v5965, 1.0
      %v6412 = vadd.f32 %v5967, 1.0
      %v6413 = vadd.f32 %v5969, 1.0
      %v6414 = vadd.f32 %v5971, 1.0
      %v6415 = vadd.f32 %v5973, 1.0
      %v6416 = vadd.f32 %v5975, 1.0
      %v6417 = vadd.f32 %v5977, 1.0
      %v6418 = vadd.f32 %v5979, 1.0
      %v6419 = vadd.f32 %v5981, 1.0
      %v6420 = vadd.f32 %v5983, 1.0
      %v6421 = vadd.f32 %v5985, 1.0
      %v6422 = vadd.f32 %v5987, 1.0
      %v6423 = vadd.f32 %v5989, 1.0
      %v6424 = vadd.f32 %v5991, 1.0
      %v6425 = vadd.f32 %v5993, 1.0
      %v6426 = vadd.f32 %v5995, 1.0
      %v6427 = vadd.f32 %v5997, 1.0
      %v6428 = vadd.f32 %v5999, 1.0
      %v6429 = vadd.f32 %v6001, 1.0
      %v6430 = vadd.f32 %v6003, 1.0
      %v6431 = vadd.f32 %v6005, 1.0
      %v6432 = vadd.f32 %v6007, 1.0
      %v6433 = vadd.f32 %v6009, 1.0
      %v6434 = vadd.f32 %v6011, 1.0
      %v6435 = vadd.f32 %v6013, 1.0
      %v6436 = vadd.f32 %v6015, 1.0
      %v6437 = vadd.f32 %v6017, 1.0
      %v6438 = vadd.f32 %v6019, 1.0
      %v6439 = vadd.f32 %v6021, 1.0
      %v6440 = vadd.f32 %v6023, 1.0
      %v6441 = vadd.f32 %v6025, 1.0
      %v6442 = vadd.f32 %v6027, 1.0
      %v6443 = vadd.f32 %v6029, 1.0
      %v6444 = vadd.f32 %v6031, 1.0
      %v6445 = vadd.f32 %v6033, 1.0
      %v6446 = vadd.f32 %v6035, 1.0
      %v6447 = vadd.f32 %v6037, 1.0
      %v6448 = vadd.f32 %v6039, 1.0
      %v6449 = vadd.f32 %v6041, 1.0
      %v6450 = vadd.f32 %v6043, 1.0
      %v6451 = vadd.f32 %v6045, 1.0
      %v6452 = vadd.f32 %v6047, 1.0
      %v6453 = vadd.f32 %v6049, 1.0
      %v6454 = vadd.f32 %v6051, 1.0
      %v6455 = vadd.f32 %v6053, 1.0
      %v6456 = vadd.f32 %v6055, 1.0
      %v6457 = vadd.f32 %v6057, 1.0
      %v6458 = vadd.f32 %v6059, 1.0
      %v6459 = vadd.f32 %v6061, 1.0
      %v6460 = vadd.f32 %v6063, 1.0
      %v6461 = vadd.f32 %v6065, 1.0
      %v6462 = vadd.f32 %v6067, 1.0
      %v6463 = vadd.f32 %v6069, 1.0
      %v6464 = vadd.f32 %v6071, 1.0
      %v6465 = vadd.f32 %v6073, 1.0
      %v6466 = vadd.f32 %v6075, 1.0
      %v6467 = vadd.f32 %v6077, 1.0
      %v6468 = vadd.f32 %v6079, 1.0
      %v6469 = vadd.f32 %v6081, 1.0
      %v6470 = vadd.f32 %v6083, 1.0
      %v6471 = vadd.f32 %v6085, 1.0
      %v6472 = vadd.f32 %v6087, 1.0
      %v6473 = vadd.f32 %v6089, 1.0
      %v6474 = vadd.f32 %v6091, 1.0
      %v6475 = vadd.f32 %v6093, 1.0
      %v6476 = vadd.f32 %v6095, 1.0
      %v6477 = vadd.f32 %v6097, 1.0
      %v6478 = vadd.f32 %v6099, 1.0
      %v6479 = vadd.f32 %v6101, 1.0
      %v6480 = vadd.f32 %v6103, 1.0
      %v6481 = vadd.f32 %v6105, 1.0
      %v6482 = vadd.f32 %v6107, 1.0
      %v6483 = vadd.f32 %v6109, 1.0
      %v6484 = vadd.f32 %v6111, 1.0
      %v6485 = vadd.f32 %v6113, 1.0
      %v6486 = vadd.f32 %v6115, 1.0
      %v6487 = vadd.f32 %v6117, 1.0
      %v6488 = vadd.f32 %v6119, 1.0
      %v6489 = vadd.f32 %v6121, 1.0
      %v6490 = vadd.f32 %v6123, 1.0
      %v6491 = vadd.f32 %v6125, 1.0
      %v6492 = vadd.f32 %v6127, 1.0
      %v6493 = vadd.f32 %v6129, 1.0
      %v6494 = vadd.f32 %v6131, 1.0
      %v6495 = vadd.f32 %v6133, 1.0
      %v6496 = vadd.f32 %v6135, 1.0
      %v6497 = vadd.f32 %v6137, 1.0
      %v6498 = vadd.f32 %v6139, 1.0
      %v6499 = vadd.f32 %v6141, 1.0
      %v6500 = vadd.f32 %v6143, 1.0
      %v6501 = vadd.f32 %v6145, 1.0
      %v6502 = vadd.f32 %v6147, 1.0
      %v6503 = vadd.f32 %v6149, 1.0
      %v6504 = vadd.f32 %v6151, 1.0
      %v6505 = vadd.f32 %v6153, 1.0
      %v6506 = vadd.f32 %v6155, 1.0
      %v6507 = vadd.f32 %v6157, 1.0
      %v6508 = vadd.f32 %v6159, 1.0
      %v6509 = vadd.f32 %v6161, 1.0
      %v6510 = vadd.f32 %v6163, 1.0
      %v6511 = vadd.f32 %v6165, 1.0
      %v6512 = vadd.f32 %v6167, 1.0
      %v6513 = vadd.f32 %v6169, 1.0
      %v6514 = vadd.f32 %v6171, 1.0
      %v6515 = vadd.f32 %v6173, 1.0
      %v6516 = vadd.f32 %v6175, 1.0
      %v6517 = vadd.f32 %v6177, 1.0
      %v6518 = vadd.f32 %v6179, 1.0
      %v6519 = vadd.f32 %v6181, 1.0
      %v6520 = vadd.f32 %v6183, 1.0
      %v6521 = vadd.f32 %v6185, 1.0
      %v6522 = vadd.f32 %v6187, 1.0
      %v6523 = vadd.f32 %v6189, 1.0
      %v6524 = vadd.f32 %v6191, 1.0
      %v6525 = vadd.f32 %v6193, 1.0
      %v6526 = vadd.f32 %v6195, 1.0
      %v6527 = vadd.f32 %v6197, 1.0
      %v6528 = vadd.f32 %v6199, 1.0
      %v6529 = vadd.f32 %v6201, 1.0
      %v6530 = vadd.f32 %v6203, 1.0
      %v6531 = vadd.f32 %v6205, 1.0
      %v6532 = vadd.f32 %v6207, 1.0
      %v6533 = vadd.f32 %v6209, 1.0
      %v6534 = vadd.f32 %v6211, 1.0
      %v6535 = vadd.f32 %v6213, 1.0
      %v6536 = vadd.f32 %v6215, 1.0
      %v6537 = vadd.f32 %v6217, 1.0
      %v6538 = vadd.f32 %v6219, 1.0
      %v6539 = vadd.f32 %v6221, 1.0
      %v6540 = vadd.f32 %v6223, 1.0
      %v6541 = vadd.f32 %v6225, 1.0
      %v6542 = vadd.f32 %v6227, 1.0
      %v6543 = vadd.f32 %v6229, 1.0
      %v6544 = vadd.f32 %v6231, 1.0
      %v6545 = vadd.f32 %v6233, 1.0
      %v6546 = vadd.f32 %v6235, 1.0
      %v6547 = vadd.f32 %v6237, 1.0
      %v6548 = vadd.f32 %v6239, 1.0
      %v6549 = vadd.f32 %v6241, 1.0
      %v6550 = vadd.f32 %v6243, 1.0
      %v6551 = vadd.f32 %v6245, 1.0
      %v6552 = vadd.f32 %v6247, 1.0
      %v6553 = vadd.f32 %v6249, 1.0
      %v6554 = vadd.f32 %v6251, 1.0
      %v6555 = vadd.f32 %v6253, 1.0
      %v6556 = vadd.f32 %v6255, 1.0
      %v6557 = vadd.f32 %v6257, 1.0
      %v6558 = vadd.f32 %v6259, 1.0
      %v6559 = vadd.f32 %v6261, 1.0
      %v6560 = vadd.f32 %v6263, 1.0
      %v6561 = vadd.f32 %v6265, 1.0
      %v6562 = vadd.f32 %v6267, 1.0
      %v6563 = vadd.f32 %v6269, 1.0
      %v6564 = vadd.f32 %v6271, 1.0
      %v6565 = vadd.f32 %v6273, 1.0
      %v6566 = vadd.f32 %v6275, 1.0
      %v6567 = vadd.f32 %v6277, 1.0
      %v6568 = vadd.f32 %v6279, 1.0
      %v6569 = vadd.f32 %v6281, 1.0
      %v6570 = vadd.f32 %v6283, 1.0
      %v6571 = vadd.f32 %v6285, 1.0
      %v6572 = vadd.f32 %v6287, 1.0
      %v6573 = vadd.f32 %v6289, 1.0
      %v6574 = vadd.f32 %v6291, 1.0
      %v6575 = vadd.f32 %v6293, 1.0
      %v6576 = vadd.f32 %v6295, 1.0
      %v6577 = vadd.f32 %v6297, 1.0
      %v6578 = vadd.f32 %v6299, 1.0
      %v6579 = vadd.f32 %v6301, 1.0
      %v6580 = vadd.f32 %v6303, 1.0
      %v6581 = vadd.f32 %v6305, 1.0
      %v6582 = vadd.f32 %v6307, 1.0
      %v6583 = vadd.f32 %v6309, 1.0
      %v6584 = vadd.f32 %v6311, 1.0
      %v6585 = vadd.f32 %v6313, 1.0
      %v6586 = vadd.f32 %v6315, 1.0
      %v6587 = vadd.f32 %v6317, 1.0
      %v6588 = vadd.f32 %v6319, 1.0
      %v6589 = vadd.f32 %v6321, 1.0
      %v6590 = vadd.f32 %v6323, 1.0
      %v6591 = vadd.f32 %v6325, 1.0
      %v6592 = vadd.f32 %v6327, 1.0
      %v6593 = vadd.f32 %v6329, 1.0
      %v6594 = vadd.f32 %v6331, 1.0
      %v6595 = vadd.f32 %v6333, 1.0
      %v6596 = vadd.f32 %v6335, 1.0
      %v6597 = vadd.f32 %v6337, 1.0
      %v6598 = vadd.f32 %v6339, 1.0
      %v6599 = vadd.f32 %v6341, 1.0
      %v6600 = vadd.f32 %v6343, 1.0
      %v6601 = vadd.f32 %v6345, 1.0
      %v6602 = vrcp.pop %v6346
      %v6603 = vmul.f32 1.0, %v6602
      %v6604 = vrcp.pop %v6347
      %v6605 = vmul.f32 1.0, %v6604
      %v6606 = vrcp.pop %v6348
      %v6607 = vmul.f32 1.0, %v6606
      %v6608 = vrcp.pop %v6349
      %v6609 = vmul.f32 1.0, %v6608
      %v6610 = vrcp.pop %v6350
      %v6611 = vmul.f32 1.0, %v6610
      %v6612 = vrcp.pop %v6351
      %v6613 = vmul.f32 1.0, %v6612
      %v6614 = vrcp.pop %v6352
      %v6615 = vmul.f32 1.0, %v6614
      %v6616 = vrcp.pop %v6353
      %v6617 = vmul.f32 1.0, %v6616
      %v6618 = vrcp.pop %v6354
      %v6619 = vmul.f32 1.0, %v6618
      %v6620 = vrcp.pop %v6355
      %v6621 = vmul.f32 1.0, %v6620
      %v6622 = vrcp.pop %v6356
      %v6623 = vmul.f32 1.0, %v6622
      %v6624 = vrcp.pop %v6357
      %v6625 = vmul.f32 1.0, %v6624
      %v6626 = vrcp.pop %v6358
      %v6627 = vmul.f32 1.0, %v6626
      %v6628 = vrcp.pop %v6359
      %v6629 = vmul.f32 1.0, %v6628
      %v6630 = vrcp.pop %v6360
      %v6631 = vmul.f32 1.0, %v6630
      %v6632 = vrcp.pop %v6361
      %v6633 = vmul.f32 1.0, %v6632
      %v6634 = vrcp.pop %v6362
      %v6635 = vmul.f32 1.0, %v6634
      %v6636 = vrcp.pop %v6363
      %v6637 = vmul.f32 1.0, %v6636
      %v6638 = vrcp.pop %v6364
      %v6639 = vmul.f32 1.0, %v6638
      %v6640 = vrcp.pop %v6365
      %v6641 = vmul.f32 1.0, %v6640
      %v6642 = vrcp.pop %v6366
      %v6643 = vmul.f32 1.0, %v6642
      %v6644 = vrcp.pop %v6367
      %v6645 = vmul.f32 1.0, %v6644
      %v6646 = vrcp.pop %v6368
      %v6647 = vmul.f32 1.0, %v6646
      %v6648 = vrcp.pop %v6369
      %v6649 = vmul.f32 1.0, %v6648
      %v6650 = vrcp.pop %v6370
      %v6651 = vmul.f32 1.0, %v6650
      %v6652 = vrcp.pop %v6371
      %v6653 = vmul.f32 1.0, %v6652
      %v6654 = vrcp.pop %v6372
      %v6655 = vmul.f32 1.0, %v6654
      %v6656 = vrcp.pop %v6373
      %v6657 = vmul.f32 1.0, %v6656
      %v6658 = vrcp.pop %v6374
      %v6659 = vmul.f32 1.0, %v6658
      %v6660 = vrcp.pop %v6375
      %v6661 = vmul.f32 1.0, %v6660
      %v6662 = vrcp.pop %v6376
      %v6663 = vmul.f32 1.0, %v6662
      %v6664 = vrcp.pop %v6377
      %v6665 = vmul.f32 1.0, %v6664
      %v6666 = vrcp.pop %v6378
      %v6667 = vmul.f32 1.0, %v6666
      %v6668 = vrcp.pop %v6379
      %v6669 = vmul.f32 1.0, %v6668
      %v6670 = vrcp.pop %v6380
      %v6671 = vmul.f32 1.0, %v6670
      %v6672 = vrcp.pop %v6381
      %v6673 = vmul.f32 1.0, %v6672
      %v6674 = vrcp.pop %v6382
      %v6675 = vmul.f32 1.0, %v6674
      %v6676 = vrcp.pop %v6383
      %v6677 = vmul.f32 1.0, %v6676
      %v6678 = vrcp.pop %v6384
      %v6679 = vmul.f32 1.0, %v6678
      %v6680 = vrcp.pop %v6385
      %v6681 = vmul.f32 1.0, %v6680
      %v6682 = vrcp.pop %v6386
      %v6683 = vmul.f32 1.0, %v6682
      %v6684 = vrcp.pop %v6387
      %v6685 = vmul.f32 1.0, %v6684
      %v6686 = vrcp.pop %v6388
      %v6687 = vmul.f32 1.0, %v6686
      %v6688 = vrcp.pop %v6389
      %v6689 = vmul.f32 1.0, %v6688
      %v6690 = vrcp.pop %v6390
      %v6691 = vmul.f32 1.0, %v6690
      %v6692 = vrcp.pop %v6391
      %v6693 = vmul.f32 1.0, %v6692
      %v6694 = vrcp.pop %v6392
      %v6695 = vmul.f32 1.0, %v6694
      %v6696 = vrcp.pop %v6393
      %v6697 = vmul.f32 1.0, %v6696
      %v6698 = vrcp.pop %v6394
      %v6699 = vmul.f32 1.0, %v6698
      %v6700 = vrcp.pop %v6395
      %v6701 = vmul.f32 1.0, %v6700
      %v6702 = vrcp.pop %v6396
      %v6703 = vmul.f32 1.0, %v6702
      %v6704 = vrcp.pop %v6397
      %v6705 = vmul.f32 1.0, %v6704
      %v6706 = vrcp.pop %v6398
      %v6707 = vmul.f32 1.0, %v6706
      %v6708 = vrcp.pop %v6399
      %v6709 = vmul.f32 1.0, %v6708
      %v6710 = vrcp.pop %v6400
      %v6711 = vmul.f32 1.0, %v6710
      %v6712 = vrcp.pop %v6401
      %v6713 = vmul.f32 1.0, %v6712
      %v6714 = vrcp.pop %v6402
      %v6715 = vmul.f32 1.0, %v6714
      %v6716 = vrcp.pop %v6403
      %v6717 = vmul.f32 1.0, %v6716
      %v6718 = vrcp.pop %v6404
      %v6719 = vmul.f32 1.0, %v6718
      %v6720 = vrcp.pop %v6405
      %v6721 = vmul.f32 1.0, %v6720
      %v6722 = vrcp.pop %v6406
      %v6723 = vmul.f32 1.0, %v6722
      %v6724 = vrcp.pop %v6407
      %v6725 = vmul.f32 1.0, %v6724
      %v6726 = vrcp.pop %v6408
      %v6727 = vmul.f32 1.0, %v6726
      %v6728 = vrcp.pop %v6409
      %v6729 = vmul.f32 1.0, %v6728
      %v6730 = vrcp.pop %v6410
      %v6731 = vmul.f32 1.0, %v6730
      %v6732 = vrcp.pop %v6411
      %v6733 = vmul.f32 1.0, %v6732
      %v6734 = vrcp.pop %v6412
      %v6735 = vmul.f32 1.0, %v6734
      %v6736 = vrcp.pop %v6413
      %v6737 = vmul.f32 1.0, %v6736
      %v6738 = vrcp.pop %v6414
      %v6739 = vmul.f32 1.0, %v6738
      %v6740 = vrcp.pop %v6415
      %v6741 = vmul.f32 1.0, %v6740
      %v6742 = vrcp.pop %v6416
      %v6743 = vmul.f32 1.0, %v6742
      %v6744 = vrcp.pop %v6417
      %v6745 = vmul.f32 1.0, %v6744
      %v6746 = vrcp.pop %v6418
      %v6747 = vmul.f32 1.0, %v6746
      %v6748 = vrcp.pop %v6419
      %v6749 = vmul.f32 1.0, %v6748
      %v6750 = vrcp.pop %v6420
      %v6751 = vmul.f32 1.0, %v6750
      %v6752 = vrcp.pop %v6421
      %v6753 = vmul.f32 1.0, %v6752
      %v6754 = vrcp.pop %v6422
      %v6755 = vmul.f32 1.0, %v6754
      %v6756 = vrcp.pop %v6423
      %v6757 = vmul.f32 1.0, %v6756
      %v6758 = vrcp.pop %v6424
      %v6759 = vmul.f32 1.0, %v6758
      %v6760 = vrcp.pop %v6425
      %v6761 = vmul.f32 1.0, %v6760
      %v6762 = vrcp.pop %v6426
      %v6763 = vmul.f32 1.0, %v6762
      %v6764 = vrcp.pop %v6427
      %v6765 = vmul.f32 1.0, %v6764
      %v6766 = vrcp.pop %v6428
      %v6767 = vmul.f32 1.0, %v6766
      %v6768 = vrcp.pop %v6429
      %v6769 = vmul.f32 1.0, %v6768
      %v6770 = vrcp.pop %v6430
      %v6771 = vmul.f32 1.0, %v6770
      %v6772 = vrcp.pop %v6431
      %v6773 = vmul.f32 1.0, %v6772
      %v6774 = vrcp.pop %v6432
      %v6775 = vmul.f32 1.0, %v6774
      %v6776 = vrcp.pop %v6433
      %v6777 = vmul.f32 1.0, %v6776
      %v6778 = vrcp.pop %v6434
      %v6779 = vmul.f32 1.0, %v6778
      %v6780 = vrcp.pop %v6435
      %v6781 = vmul.f32 1.0, %v6780
      %v6782 = vrcp.pop %v6436
      %v6783 = vmul.f32 1.0, %v6782
      %v6784 = vrcp.pop %v6437
      %v6785 = vmul.f32 1.0, %v6784
      %v6786 = vrcp.pop %v6438
      %v6787 = vmul.f32 1.0, %v6786
      %v6788 = vrcp.pop %v6439
      %v6789 = vmul.f32 1.0, %v6788
      %v6790 = vrcp.pop %v6440
      %v6791 = vmul.f32 1.0, %v6790
      %v6792 = vrcp.pop %v6441
      %v6793 = vmul.f32 1.0, %v6792
      %v6794 = vrcp.pop %v6442
      %v6795 = vmul.f32 1.0, %v6794
      %v6796 = vrcp.pop %v6443
      %v6797 = vmul.f32 1.0, %v6796
      %v6798 = vrcp.pop %v6444
      %v6799 = vmul.f32 1.0, %v6798
      %v6800 = vrcp.pop %v6445
      %v6801 = vmul.f32 1.0, %v6800
      %v6802 = vrcp.pop %v6446
      %v6803 = vmul.f32 1.0, %v6802
      %v6804 = vrcp.pop %v6447
      %v6805 = vmul.f32 1.0, %v6804
      %v6806 = vrcp.pop %v6448
      %v6807 = vmul.f32 1.0, %v6806
      %v6808 = vrcp.pop %v6449
      %v6809 = vmul.f32 1.0, %v6808
      %v6810 = vrcp.pop %v6450
      %v6811 = vmul.f32 1.0, %v6810
      %v6812 = vrcp.pop %v6451
      %v6813 = vmul.f32 1.0, %v6812
      %v6814 = vrcp.pop %v6452
      %v6815 = vmul.f32 1.0, %v6814
      %v6816 = vrcp.pop %v6453
      %v6817 = vmul.f32 1.0, %v6816
      %v6818 = vrcp.pop %v6454
      %v6819 = vmul.f32 1.0, %v6818
      %v6820 = vrcp.pop %v6455
      %v6821 = vmul.f32 1.0, %v6820
      %v6822 = vrcp.pop %v6456
      %v6823 = vmul.f32 1.0, %v6822
      %v6824 = vrcp.pop %v6457
      %v6825 = vmul.f32 1.0, %v6824
      %v6826 = vrcp.pop %v6458
      %v6827 = vmul.f32 1.0, %v6826
      %v6828 = vrcp.pop %v6459
      %v6829 = vmul.f32 1.0, %v6828
      %v6830 = vrcp.pop %v6460
      %v6831 = vmul.f32 1.0, %v6830
      %v6832 = vrcp.pop %v6461
      %v6833 = vmul.f32 1.0, %v6832
      %v6834 = vrcp.pop %v6462
      %v6835 = vmul.f32 1.0, %v6834
      %v6836 = vrcp.pop %v6463
      %v6837 = vmul.f32 1.0, %v6836
      %v6838 = vrcp.pop %v6464
      %v6839 = vmul.f32 1.0, %v6838
      %v6840 = vrcp.pop %v6465
      %v6841 = vmul.f32 1.0, %v6840
      %v6842 = vrcp.pop %v6466
      %v6843 = vmul.f32 1.0, %v6842
      %v6844 = vrcp.pop %v6467
      %v6845 = vmul.f32 1.0, %v6844
      %v6846 = vrcp.pop %v6468
      %v6847 = vmul.f32 1.0, %v6846
      %v6848 = vrcp.pop %v6469
      %v6849 = vmul.f32 1.0, %v6848
      %v6850 = vrcp.pop %v6470
      %v6851 = vmul.f32 1.0, %v6850
      %v6852 = vrcp.pop %v6471
      %v6853 = vmul.f32 1.0, %v6852
      %v6854 = vrcp.pop %v6472
      %v6855 = vmul.f32 1.0, %v6854
      %v6856 = vrcp.pop %v6473
      %v6857 = vmul.f32 1.0, %v6856
      %v6858 = vrcp.pop %v6474
      %v6859 = vmul.f32 1.0, %v6858
      %v6860 = vrcp.pop %v6475
      %v6861 = vmul.f32 1.0, %v6860
      %v6862 = vrcp.pop %v6476
      %v6863 = vmul.f32 1.0, %v6862
      %v6864 = vrcp.pop %v6477
      %v6865 = vmul.f32 1.0, %v6864
      %v6866 = vrcp.pop %v6478
      %v6867 = vmul.f32 1.0, %v6866
      %v6868 = vrcp.pop %v6479
      %v6869 = vmul.f32 1.0, %v6868
      %v6870 = vrcp.pop %v6480
      %v6871 = vmul.f32 1.0, %v6870
      %v6872 = vrcp.pop %v6481
      %v6873 = vmul.f32 1.0, %v6872
      %v6874 = vrcp.pop %v6482
      %v6875 = vmul.f32 1.0, %v6874
      %v6876 = vrcp.pop %v6483
      %v6877 = vmul.f32 1.0, %v6876
      %v6878 = vrcp.pop %v6484
      %v6879 = vmul.f32 1.0, %v6878
      %v6880 = vrcp.pop %v6485
      %v6881 = vmul.f32 1.0, %v6880
      %v6882 = vrcp.pop %v6486
      %v6883 = vmul.f32 1.0, %v6882
      %v6884 = vrcp.pop %v6487
      %v6885 = vmul.f32 1.0, %v6884
      %v6886 = vrcp.pop %v6488
      %v6887 = vmul.f32 1.0, %v6886
      %v6888 = vrcp.pop %v6489
      %v6889 = vmul.f32 1.0, %v6888
      %v6890 = vrcp.pop %v6490
      %v6891 = vmul.f32 1.0, %v6890
      %v6892 = vrcp.pop %v6491
      %v6893 = vmul.f32 1.0, %v6892
      %v6894 = vrcp.pop %v6492
      %v6895 = vmul.f32 1.0, %v6894
      %v6896 = vrcp.pop %v6493
      %v6897 = vmul.f32 1.0, %v6896
      %v6898 = vrcp.pop %v6494
      %v6899 = vmul.f32 1.0, %v6898
      %v6900 = vrcp.pop %v6495
      %v6901 = vmul.f32 1.0, %v6900
      %v6902 = vrcp.pop %v6496
      %v6903 = vmul.f32 1.0, %v6902
      %v6904 = vrcp.pop %v6497
      %v6905 = vmul.f32 1.0, %v6904
      %v6906 = vrcp.pop %v6498
      %v6907 = vmul.f32 1.0, %v6906
      %v6908 = vrcp.pop %v6499
      %v6909 = vmul.f32 1.0, %v6908
      %v6910 = vrcp.pop %v6500
      %v6911 = vmul.f32 1.0, %v6910
      %v6912 = vrcp.pop %v6501
      %v6913 = vmul.f32 1.0, %v6912
      %v6914 = vrcp.pop %v6502
      %v6915 = vmul.f32 1.0, %v6914
      %v6916 = vrcp.pop %v6503
      %v6917 = vmul.f32 1.0, %v6916
      %v6918 = vrcp.pop %v6504
      %v6919 = vmul.f32 1.0, %v6918
      %v6920 = vrcp.pop %v6505
      %v6921 = vmul.f32 1.0, %v6920
      %v6922 = vrcp.pop %v6506
      %v6923 = vmul.f32 1.0, %v6922
      %v6924 = vrcp.pop %v6507
      %v6925 = vmul.f32 1.0, %v6924
      %v6926 = vrcp.pop %v6508
      %v6927 = vmul.f32 1.0, %v6926
      %v6928 = vrcp.pop %v6509
      %v6929 = vmul.f32 1.0, %v6928
      %v6930 = vrcp.pop %v6510
      %v6931 = vmul.f32 1.0, %v6930
      %v6932 = vrcp.pop %v6511
      %v6933 = vmul.f32 1.0, %v6932
      %v6934 = vrcp.pop %v6512
      %v6935 = vmul.f32 1.0, %v6934
      %v6936 = vrcp.pop %v6513
      %v6937 = vmul.f32 1.0, %v6936
      %v6938 = vrcp.pop %v6514
      %v6939 = vmul.f32 1.0, %v6938
      %v6940 = vrcp.pop %v6515
      %v6941 = vmul.f32 1.0, %v6940
      %v6942 = vrcp.pop %v6516
      %v6943 = vmul.f32 1.0, %v6942
      %v6944 = vrcp.pop %v6517
      %v6945 = vmul.f32 1.0, %v6944
      %v6946 = vrcp.pop %v6518
      %v6947 = vmul.f32 1.0, %v6946
      %v6948 = vrcp.pop %v6519
      %v6949 = vmul.f32 1.0, %v6948
      %v6950 = vrcp.pop %v6520
      %v6951 = vmul.f32 1.0, %v6950
      %v6952 = vrcp.pop %v6521
      %v6953 = vmul.f32 1.0, %v6952
      %v6954 = vrcp.pop %v6522
      %v6955 = vmul.f32 1.0, %v6954
      %v6956 = vrcp.pop %v6523
      %v6957 = vmul.f32 1.0, %v6956
      %v6958 = vrcp.pop %v6524
      %v6959 = vmul.f32 1.0, %v6958
      %v6960 = vrcp.pop %v6525
      %v6961 = vmul.f32 1.0, %v6960
      %v6962 = vrcp.pop %v6526
      %v6963 = vmul.f32 1.0, %v6962
      %v6964 = vrcp.pop %v6527
      %v6965 = vmul.f32 1.0, %v6964
      %v6966 = vrcp.pop %v6528
      %v6967 = vmul.f32 1.0, %v6966
      %v6968 = vrcp.pop %v6529
      %v6969 = vmul.f32 1.0, %v6968
      %v6970 = vrcp.pop %v6530
      %v6971 = vmul.f32 1.0, %v6970
      %v6972 = vrcp.pop %v6531
      %v6973 = vmul.f32 1.0, %v6972
      %v6974 = vrcp.pop %v6532
      %v6975 = vmul.f32 1.0, %v6974
      %v6976 = vrcp.pop %v6533
      %v6977 = vmul.f32 1.0, %v6976
      %v6978 = vrcp.pop %v6534
      %v6979 = vmul.f32 1.0, %v6978
      %v6980 = vrcp.pop %v6535
      %v6981 = vmul.f32 1.0, %v6980
      %v6982 = vrcp.pop %v6536
      %v6983 = vmul.f32 1.0, %v6982
      %v6984 = vrcp.pop %v6537
      %v6985 = vmul.f32 1.0, %v6984
      %v6986 = vrcp.pop %v6538
      %v6987 = vmul.f32 1.0, %v6986
      %v6988 = vrcp.pop %v6539
      %v6989 = vmul.f32 1.0, %v6988
      %v6990 = vrcp.pop %v6540
      %v6991 = vmul.f32 1.0, %v6990
      %v6992 = vrcp.pop %v6541
      %v6993 = vmul.f32 1.0, %v6992
      %v6994 = vrcp.pop %v6542
      %v6995 = vmul.f32 1.0, %v6994
      %v6996 = vrcp.pop %v6543
      %v6997 = vmul.f32 1.0, %v6996
      %v6998 = vrcp.pop %v6544
      %v6999 = vmul.f32 1.0, %v6998
      %v7000 = vrcp.pop %v6545
      %v7001 = vmul.f32 1.0, %v7000
      %v7002 = vrcp.pop %v6546
      %v7003 = vmul.f32 1.0, %v7002
      %v7004 = vrcp.pop %v6547
      %v7005 = vmul.f32 1.0, %v7004
      %v7006 = vrcp.pop %v6548
      %v7007 = vmul.f32 1.0, %v7006
      %v7008 = vrcp.pop %v6549
      %v7009 = vmul.f32 1.0, %v7008
      %v7010 = vrcp.pop %v6550
      %v7011 = vmul.f32 1.0, %v7010
      %v7012 = vrcp.pop %v6551
      %v7013 = vmul.f32 1.0, %v7012
      %v7014 = vrcp.pop %v6552
      %v7015 = vmul.f32 1.0, %v7014
      %v7016 = vrcp.pop %v6553
      %v7017 = vmul.f32 1.0, %v7016
      %v7018 = vrcp.pop %v6554
      %v7019 = vmul.f32 1.0, %v7018
      %v7020 = vrcp.pop %v6555
      %v7021 = vmul.f32 1.0, %v7020
      %v7022 = vrcp.pop %v6556
      %v7023 = vmul.f32 1.0, %v7022
      %v7024 = vrcp.pop %v6557
      %v7025 = vmul.f32 1.0, %v7024
      %v7026 = vrcp.pop %v6558
      %v7027 = vmul.f32 1.0, %v7026
      %v7028 = vrcp.pop %v6559
      %v7029 = vmul.f32 1.0, %v7028
      %v7030 = vrcp.pop %v6560
      %v7031 = vmul.f32 1.0, %v7030
      %v7032 = vrcp.pop %v6561
      %v7033 = vmul.f32 1.0, %v7032
      %v7034 = vrcp.pop %v6562
      %v7035 = vmul.f32 1.0, %v7034
      %v7036 = vrcp.pop %v6563
      %v7037 = vmul.f32 1.0, %v7036
      %v7038 = vrcp.pop %v6564
      %v7039 = vmul.f32 1.0, %v7038
      %v7040 = vrcp.pop %v6565
      %v7041 = vmul.f32 1.0, %v7040
      %v7042 = vrcp.pop %v6566
      %v7043 = vmul.f32 1.0, %v7042
      %v7044 = vrcp.pop %v6567
      %v7045 = vmul.f32 1.0, %v7044
      %v7046 = vrcp.pop %v6568
      %v7047 = vmul.f32 1.0, %v7046
      %v7048 = vrcp.pop %v6569
      %v7049 = vmul.f32 1.0, %v7048
      %v7050 = vrcp.pop %v6570
      %v7051 = vmul.f32 1.0, %v7050
      %v7052 = vrcp.pop %v6571
      %v7053 = vmul.f32 1.0, %v7052
      %v7054 = vrcp.pop %v6572
      %v7055 = vmul.f32 1.0, %v7054
      %v7056 = vrcp.pop %v6573
      %v7057 = vmul.f32 1.0, %v7056
      %v7058 = vrcp.pop %v6574
      %v7059 = vmul.f32 1.0, %v7058
      %v7060 = vrcp.pop %v6575
      %v7061 = vmul.f32 1.0, %v7060
      %v7062 = vrcp.pop %v6576
      %v7063 = vmul.f32 1.0, %v7062
      %v7064 = vrcp.pop %v6577
      %v7065 = vmul.f32 1.0, %v7064
      %v7066 = vrcp.pop %v6578
      %v7067 = vmul.f32 1.0, %v7066
      %v7068 = vrcp.pop %v6579
      %v7069 = vmul.f32 1.0, %v7068
      %v7070 = vrcp.pop %v6580
      %v7071 = vmul.f32 1.0, %v7070
      %v7072 = vrcp.pop %v6581
      %v7073 = vmul.f32 1.0, %v7072
      %v7074 = vrcp.pop %v6582
      %v7075 = vmul.f32 1.0, %v7074
      %v7076 = vrcp.pop %v6583
      %v7077 = vmul.f32 1.0, %v7076
      %v7078 = vrcp.pop %v6584
      %v7079 = vmul.f32 1.0, %v7078
      %v7080 = vrcp.pop %v6585
      %v7081 = vmul.f32 1.0, %v7080
      %v7082 = vrcp.pop %v6586
      %v7083 = vmul.f32 1.0, %v7082
      %v7084 = vrcp.pop %v6587
      %v7085 = vmul.f32 1.0, %v7084
      %v7086 = vrcp.pop %v6588
      %v7087 = vmul.f32 1.0, %v7086
      %v7088 = vrcp.pop %v6589
      %v7089 = vmul.f32 1.0, %v7088
      %v7090 = vrcp.pop %v6590
      %v7091 = vmul.f32 1.0, %v7090
      %v7092 = vrcp.pop %v6591
      %v7093 = vmul.f32 1.0, %v7092
      %v7094 = vrcp.pop %v6592
      %v7095 = vmul.f32 1.0, %v7094
      %v7096 = vrcp.pop %v6593
      %v7097 = vmul.f32 1.0, %v7096
      %v7098 = vrcp.pop %v6594
      %v7099 = vmul.f32 1.0, %v7098
      %v7100 = vrcp.pop %v6595
      %v7101 = vmul.f32 1.0, %v7100
      %v7102 = vrcp.pop %v6596
      %v7103 = vmul.f32 1.0, %v7102
      %v7104 = vrcp.pop %v6597
      %v7105 = vmul.f32 1.0, %v7104
      %v7106 = vrcp.pop %v6598
      %v7107 = vmul.f32 1.0, %v7106
      %v7108 = vrcp.pop %v6599
      %v7109 = vmul.f32 1.0, %v7108
      %v7110 = vrcp.pop %v6600
      %v7111 = vmul.f32 1.0, %v7110
      %v7112 = vrcp.pop %v6601
      %v7113 = vmul.f32 1.0, %v7112
      %v7114 = vmul.f32 %v4300, %v6603
      %v7115 = vmul.f32 %v4305, %v6605
      %v7116 = vmul.f32 %v4310, %v6607
      %v7117 = vmul.f32 %v4315, %v6609
      %v7118 = vmul.f32 %v4320, %v6611
      %v7119 = vmul.f32 %v4325, %v6613
      %v7120 = vmul.f32 %v4330, %v6615
      %v7121 = vmul.f32 %v4335, %v6617
      %v7122 = vmul.f32 %v4340, %v6619
      %v7123 = vmul.f32 %v4345, %v6621
      %v7124 = vmul.f32 %v4350, %v6623
      %v7125 = vmul.f32 %v4355, %v6625
      %v7126 = vmul.f32 %v4360, %v6627
      %v7127 = vmul.f32 %v4365, %v6629
      %v7128 = vmul.f32 %v4370, %v6631
      %v7129 = vmul.f32 %v4375, %v6633
      %v7130 = vmul.f32 %v4380, %v6635
      %v7131 = vmul.f32 %v4385, %v6637
      %v7132 = vmul.f32 %v4390, %v6639
      %v7133 = vmul.f32 %v4395, %v6641
      %v7134 = vmul.f32 %v4400, %v6643
      %v7135 = vmul.f32 %v4405, %v6645
      %v7136 = vmul.f32 %v4410, %v6647
      %v7137 = vmul.f32 %v4415, %v6649
      %v7138 = vmul.f32 %v4420, %v6651
      %v7139 = vmul.f32 %v4425, %v6653
      %v7140 = vmul.f32 %v4430, %v6655
      %v7141 = vmul.f32 %v4435, %v6657
      %v7142 = vmul.f32 %v4440, %v6659
      %v7143 = vmul.f32 %v4445, %v6661
      %v7144 = vmul.f32 %v4450, %v6663
      %v7145 = vmul.f32 %v4455, %v6665
      %v7146 = vmul.f32 %v4460, %v6667
      %v7147 = vmul.f32 %v4465, %v6669
      %v7148 = vmul.f32 %v4470, %v6671
      %v7149 = vmul.f32 %v4475, %v6673
      %v7150 = vmul.f32 %v4480, %v6675
      %v7151 = vmul.f32 %v4485, %v6677
      %v7152 = vmul.f32 %v4490, %v6679
      %v7153 = vmul.f32 %v4495, %v6681
      %v7154 = vmul.f32 %v4500, %v6683
      %v7155 = vmul.f32 %v4505, %v6685
      %v7156 = vmul.f32 %v4510, %v6687
      %v7157 = vmul.f32 %v4515, %v6689
      %v7158 = vmul.f32 %v4520, %v6691
      %v7159 = vmul.f32 %v4525, %v6693
      %v7160 = vmul.f32 %v4530, %v6695
      %v7161 = vmul.f32 %v4535, %v6697
      %v7162 = vmul.f32 %v4540, %v6699
      %v7163 = vmul.f32 %v4545, %v6701
      %v7164 = vmul.f32 %v4550, %v6703
      %v7165 = vmul.f32 %v4555, %v6705
      %v7166 = vmul.f32 %v4560, %v6707
      %v7167 = vmul.f32 %v4565, %v6709
      %v7168 = vmul.f32 %v4570, %v6711
      %v7169 = vmul.f32 %v4575, %v6713
      %v7170 = vmul.f32 %v4580, %v6715
      %v7171 = vmul.f32 %v4585, %v6717
      %v7172 = vmul.f32 %v4590, %v6719
      %v7173 = vmul.f32 %v4595, %v6721
      %v7174 = vmul.f32 %v4600, %v6723
      %v7175 = vmul.f32 %v4605, %v6725
      %v7176 = vmul.f32 %v4610, %v6727
      %v7177 = vmul.f32 %v4615, %v6729
      %v7178 = vmul.f32 %v4620, %v6731
      %v7179 = vmul.f32 %v4625, %v6733
      %v7180 = vmul.f32 %v4630, %v6735
      %v7181 = vmul.f32 %v4635, %v6737
      %v7182 = vmul.f32 %v4640, %v6739
      %v7183 = vmul.f32 %v4645, %v6741
      %v7184 = vmul.f32 %v4650, %v6743
      %v7185 = vmul.f32 %v4655, %v6745
      %v7186 = vmul.f32 %v4660, %v6747
      %v7187 = vmul.f32 %v4665, %v6749
      %v7188 = vmul.f32 %v4670, %v6751
      %v7189 = vmul.f32 %v4675, %v6753
      %v7190 = vmul.f32 %v4680, %v6755
      %v7191 = vmul.f32 %v4685, %v6757
      %v7192 = vmul.f32 %v4690, %v6759
      %v7193 = vmul.f32 %v4695, %v6761
      %v7194 = vmul.f32 %v4700, %v6763
      %v7195 = vmul.f32 %v4705, %v6765
      %v7196 = vmul.f32 %v4710, %v6767
      %v7197 = vmul.f32 %v4715, %v6769
      %v7198 = vmul.f32 %v4720, %v6771
      %v7199 = vmul.f32 %v4725, %v6773
      %v7200 = vmul.f32 %v4730, %v6775
      %v7201 = vmul.f32 %v4735, %v6777
      %v7202 = vmul.f32 %v4740, %v6779
      %v7203 = vmul.f32 %v4745, %v6781
      %v7204 = vmul.f32 %v4750, %v6783
      %v7205 = vmul.f32 %v4755, %v6785
      %v7206 = vmul.f32 %v4760, %v6787
      %v7207 = vmul.f32 %v4765, %v6789
      %v7208 = vmul.f32 %v4770, %v6791
      %v7209 = vmul.f32 %v4775, %v6793
      %v7210 = vmul.f32 %v4780, %v6795
      %v7211 = vmul.f32 %v4785, %v6797
      %v7212 = vmul.f32 %v4790, %v6799
      %v7213 = vmul.f32 %v4795, %v6801
      %v7214 = vmul.f32 %v4800, %v6803
      %v7215 = vmul.f32 %v4805, %v6805
      %v7216 = vmul.f32 %v4810, %v6807
      %v7217 = vmul.f32 %v4815, %v6809
      %v7218 = vmul.f32 %v4820, %v6811
      %v7219 = vmul.f32 %v4825, %v6813
      %v7220 = vmul.f32 %v4830, %v6815
      %v7221 = vmul.f32 %v4835, %v6817
      %v7222 = vmul.f32 %v4840, %v6819
      %v7223 = vmul.f32 %v4845, %v6821
      %v7224 = vmul.f32 %v4850, %v6823
      %v7225 = vmul.f32 %v4855, %v6825
      %v7226 = vmul.f32 %v4860, %v6827
      %v7227 = vmul.f32 %v4865, %v6829
      %v7228 = vmul.f32 %v4870, %v6831
      %v7229 = vmul.f32 %v4875, %v6833
      %v7230 = vmul.f32 %v4880, %v6835
      %v7231 = vmul.f32 %v4885, %v6837
      %v7232 = vmul.f32 %v4890, %v6839
      %v7233 = vmul.f32 %v4895, %v6841
      %v7234 = vmul.f32 %v4900, %v6843
      %v7235 = vmul.f32 %v4905, %v6845
      %v7236 = vmul.f32 %v4910, %v6847
      %v7237 = vmul.f32 %v4915, %v6849
      %v7238 = vmul.f32 %v4920, %v6851
      %v7239 = vmul.f32 %v4925, %v6853
      %v7240 = vmul.f32 %v4930, %v6855
      %v7241 = vmul.f32 %v4935, %v6857
      %v7242 = vmul.f32 %v4940, %v6859
      %v7243 = vmul.f32 %v4945, %v6861
      %v7244 = vmul.f32 %v4950, %v6863
      %v7245 = vmul.f32 %v4955, %v6865
      %v7246 = vmul.f32 %v4960, %v6867
      %v7247 = vmul.f32 %v4965, %v6869
      %v7248 = vmul.f32 %v4970, %v6871
      %v7249 = vmul.f32 %v4975, %v6873
      %v7250 = vmul.f32 %v4980, %v6875
      %v7251 = vmul.f32 %v4985, %v6877
      %v7252 = vmul.f32 %v4990, %v6879
      %v7253 = vmul.f32 %v4995, %v6881
      %v7254 = vmul.f32 %v5000, %v6883
      %v7255 = vmul.f32 %v5005, %v6885
      %v7256 = vmul.f32 %v5010, %v6887
      %v7257 = vmul.f32 %v5015, %v6889
      %v7258 = vmul.f32 %v5020, %v6891
      %v7259 = vmul.f32 %v5025, %v6893
      %v7260 = vmul.f32 %v5030, %v6895
      %v7261 = vmul.f32 %v5035, %v6897
      %v7262 = vmul.f32 %v5040, %v6899
      %v7263 = vmul.f32 %v5045, %v6901
      %v7264 = vmul.f32 %v5050, %v6903
      %v7265 = vmul.f32 %v5055, %v6905
      %v7266 = vmul.f32 %v5060, %v6907
      %v7267 = vmul.f32 %v5065, %v6909
      %v7268 = vmul.f32 %v5070, %v6911
      %v7269 = vmul.f32 %v5075, %v6913
      %v7270 = vmul.f32 %v5080, %v6915
      %v7271 = vmul.f32 %v5085, %v6917
      %v7272 = vmul.f32 %v5090, %v6919
      %v7273 = vmul.f32 %v5095, %v6921
      %v7274 = vmul.f32 %v5100, %v6923
      %v7275 = vmul.f32 %v5105, %v6925
      %v7276 = vmul.f32 %v5110, %v6927
      %v7277 = vmul.f32 %v5115, %v6929
      %v7278 = vmul.f32 %v5120, %v6931
      %v7279 = vmul.f32 %v5125, %v6933
      %v7280 = vmul.f32 %v5130, %v6935
      %v7281 = vmul.f32 %v5135, %v6937
      %v7282 = vmul.f32 %v5140, %v6939
      %v7283 = vmul.f32 %v5145, %v6941
      %v7284 = vmul.f32 %v5150, %v6943
      %v7285 = vmul.f32 %v5155, %v6945
      %v7286 = vmul.f32 %v5160, %v6947
      %v7287 = vmul.f32 %v5165, %v6949
      %v7288 = vmul.f32 %v5170, %v6951
      %v7289 = vmul.f32 %v5175, %v6953
      %v7290 = vmul.f32 %v5180, %v6955
      %v7291 = vmul.f32 %v5185, %v6957
      %v7292 = vmul.f32 %v5190, %v6959
      %v7293 = vmul.f32 %v5195, %v6961
      %v7294 = vmul.f32 %v5200, %v6963
      %v7295 = vmul.f32 %v5205, %v6965
      %v7296 = vmul.f32 %v5210, %v6967
      %v7297 = vmul.f32 %v5215, %v6969
      %v7298 = vmul.f32 %v5220, %v6971
      %v7299 = vmul.f32 %v5225, %v6973
      %v7300 = vmul.f32 %v5230, %v6975
      %v7301 = vmul.f32 %v5235, %v6977
      %v7302 = vmul.f32 %v5240, %v6979
      %v7303 = vmul.f32 %v5245, %v6981
      %v7304 = vmul.f32 %v5250, %v6983
      %v7305 = vmul.f32 %v5255, %v6985
      %v7306 = vmul.f32 %v5260, %v6987
      %v7307 = vmul.f32 %v5265, %v6989
      %v7308 = vmul.f32 %v5270, %v6991
      %v7309 = vmul.f32 %v5275, %v6993
      %v7310 = vmul.f32 %v5280, %v6995
      %v7311 = vmul.f32 %v5285, %v6997
      %v7312 = vmul.f32 %v5290, %v6999
      %v7313 = vmul.f32 %v5295, %v7001
      %v7314 = vmul.f32 %v5300, %v7003
      %v7315 = vmul.f32 %v5305, %v7005
      %v7316 = vmul.f32 %v5310, %v7007
      %v7317 = vmul.f32 %v5315, %v7009
      %v7318 = vmul.f32 %v5320, %v7011
      %v7319 = vmul.f32 %v5325, %v7013
      %v7320 = vmul.f32 %v5330, %v7015
      %v7321 = vmul.f32 %v5335, %v7017
      %v7322 = vmul.f32 %v5340, %v7019
      %v7323 = vmul.f32 %v5345, %v7021
      %v7324 = vmul.f32 %v5350, %v7023
      %v7325 = vmul.f32 %v5355, %v7025
      %v7326 = vmul.f32 %v5360, %v7027
      %v7327 = vmul.f32 %v5365, %v7029
      %v7328 = vmul.f32 %v5370, %v7031
      %v7329 = vmul.f32 %v5375, %v7033
      %v7330 = vmul.f32 %v5380, %v7035
      %v7331 = vmul.f32 %v5385, %v7037
      %v7332 = vmul.f32 %v5390, %v7039
      %v7333 = vmul.f32 %v5395, %v7041
      %v7334 = vmul.f32 %v5400, %v7043
      %v7335 = vmul.f32 %v5405, %v7045
      %v7336 = vmul.f32 %v5410, %v7047
      %v7337 = vmul.f32 %v5415, %v7049
      %v7338 = vmul.f32 %v5420, %v7051
      %v7339 = vmul.f32 %v5425, %v7053
      %v7340 = vmul.f32 %v5430, %v7055
      %v7341 = vmul.f32 %v5435, %v7057
      %v7342 = vmul.f32 %v5440, %v7059
      %v7343 = vmul.f32 %v5445, %v7061
      %v7344 = vmul.f32 %v5450, %v7063
      %v7345 = vmul.f32 %v5455, %v7065
      %v7346 = vmul.f32 %v5460, %v7067
      %v7347 = vmul.f32 %v5465, %v7069
      %v7348 = vmul.f32 %v5470, %v7071
      %v7349 = vmul.f32 %v5475, %v7073
      %v7350 = vmul.f32 %v5480, %v7075
      %v7351 = vmul.f32 %v5485, %v7077
      %v7352 = vmul.f32 %v5490, %v7079
      %v7353 = vmul.f32 %v5495, %v7081
      %v7354 = vmul.f32 %v5500, %v7083
      %v7355 = vmul.f32 %v5505, %v7085
      %v7356 = vmul.f32 %v5510, %v7087
      %v7357 = vmul.f32 %v5515, %v7089
      %v7358 = vmul.f32 %v5520, %v7091
      %v7359 = vmul.f32 %v5525, %v7093
      %v7360 = vmul.f32 %v5530, %v7095
      %v7361 = vmul.f32 %v5535, %v7097
      %v7362 = vmul.f32 %v5540, %v7099
      %v7363 = vmul.f32 %v5545, %v7101
      %v7364 = vmul.f32 %v5550, %v7103
      %v7365 = vmul.f32 %v5555, %v7105
      %v7366 = vmul.f32 %v5560, %v7107
      %v7367 = vmul.f32 %v5565, %v7109
      %v7368 = vmul.f32 %v5570, %v7111
      %v7369 = vmul.f32 %v5575, %v7113
      %v7370 = vld [vmem:[%s5] sm:$0xff]
      %v7371 = vld [vmem:[%s5 + $0x8] sm:$0xff]
      %v7372 = vld [vmem:[%s5 + $0x10] sm:$0xff]
      %v7373 = vld [vmem:[%s5 + $0x18] sm:$0xff]
      %v7374 = vld [vmem:[%s5 + $0x20] sm:$0xff]
      %v7375 = vld [vmem:[%s5 + $0x28] sm:$0xff]
      %v7376 = vld [vmem:[%s5 + $0x30] sm:$0xff]
      %v7377 = vld [vmem:[%s5 + $0x38] sm:$0xff]
      %v7378 = vld [vmem:[%s5 + $0x40] sm:$0xff]
      %v7379 = vld [vmem:[%s5 + $0x48] sm:$0xff]
      %v7380 = vld [vmem:[%s5 + $0x50] sm:$0xff]
      %v7381 = vld [vmem:[%s5 + $0x58] sm:$0xff]
      %v7382 = vld [vmem:[%s5 + $0x60] sm:$0xff]
      %v7383 = vld [vmem:[%s5 + $0x68] sm:$0xff]
      %v7384 = vld [vmem:[%s5 + $0x70] sm:$0xff]
      %v7385 = vld [vmem:[%s5 + $0x78] sm:$0xff]
      %v7386 = vld [vmem:[%s6] sm:$0x1]
      %v7388 = vlaneseq
      %v7389 = vshrl.u32 %v7388, 7
      %v7390 = vsub.s32 0, %v7389
      %v7391 = vrot.slane %v7386, %v7390
      %7393 = vmatprep.subr.mxu0 0.0
      %7394 = vmatpush1.msra.mxu0 %v7370
      %7395 = vmatprep.subr.mxu0 0.0
      %7396 = vmatpush1.msra.mxu0 %v7371
      %7397 = vmatprep.subr.mxu0 0.0
      %7398 = vmatpush1.msra.mxu0 %v7372
      %7399 = vmatprep.subr.mxu0 0.0
      %7400 = vmatpush1.msra.mxu0 %v7373
      %7401 = vmatprep.subr.mxu0 0.0
      %7402 = vmatpush1.msra.mxu0 %v7374
      %7403 = vmatprep.subr.mxu0 0.0
      %7404 = vmatpush1.msra.mxu0 %v7375
      %7405 = vmatprep.subr.mxu0 0.0
      %7406 = vmatpush1.msra.mxu0 %v7376
      %7407 = vmatprep.subr.mxu0 0.0
      %7408 = vmatpush1.msra.mxu0 %v7377
      %7409 = vmatprep.subr.mxu0 0.0
      %7410 = vmatpush1.msra.mxu0 %v7378
      %7411 = vmatprep.subr.mxu0 0.0
      %7412 = vmatpush1.msra.mxu0 %v7379
      %7413 = vmatprep.subr.mxu0 0.0
      %7414 = vmatpush1.msra.mxu0 %v7380
      %7415 = vmatprep.subr.mxu0 0.0
      %7416 = vmatpush1.msra.mxu0 %v7381
      %7417 = vmatprep.subr.mxu0 0.0
      %7418 = vmatpush1.msra.mxu0 %v7382
      %7419 = vmatprep.subr.mxu0 0.0
      %7420 = vmatpush1.msra.mxu0 %v7383
      %7421 = vmatprep.subr.mxu0 0.0
      %7422 = vmatpush1.msra.mxu0 %v7384
      %7423 = vmatprep.subr.mxu0 0.0
      %7424 = vmatpush1.msra.mxu0 %v7385
      %7425 = vmatprep.subr.mxu0 0.0
      %7426 = vmatpush1.msra.mxu0 0.0
      %7427 = vmatprep.subr.mxu0 0.0
      %7428 = vmatpush1.msra.mxu0 0.0
      %7429 = vmatprep.subr.mxu0 0.0
      %7430 = vmatpush1.msra.mxu0 0.0
      %7431 = vmatprep.subr.mxu0 0.0
      %7432 = vmatpush1.msra.mxu0 0.0
      %7433 = vmatprep.subr.mxu0 0.0
      %7434 = vmatpush1.msra.mxu0 0.0
      %7435 = vmatprep.subr.mxu0 0.0
      %7436 = vmatpush1.msra.mxu0 0.0
      %7437 = vmatprep.subr.mxu0 0.0
      %7438 = vmatpush1.msra.mxu0 0.0
      %7439 = vmatprep.subr.mxu0 0.0
      %7440 = vmatpush1.msra.mxu0 0.0
      %7441 = vmatprep.subr.mxu0 0.0
      %7442 = vmatpush1.msra.mxu0 0.0
      %7443 = vmatprep.subr.mxu0 0.0
      %7444 = vmatpush1.msra.mxu0 0.0
      %7445 = vmatprep.subr.mxu0 0.0
      %7446 = vmatpush1.msra.mxu0 0.0
      %7447 = vmatprep.subr.mxu0 0.0
      %7448 = vmatpush1.msra.mxu0 0.0
      %7449 = vmatprep.subr.mxu0 0.0
      %7450 = vmatpush1.msra.mxu0 0.0
      %7451 = vmatprep.subr.mxu0 0.0
      %7452 = vmatpush1.msra.mxu0 0.0
      %7453 = vmatprep.subr.mxu0 0.0
      %7454 = vmatpush1.msra.mxu0 0.0
      %7455 = vmatprep.subr.mxu0 0.0
      %7456 = vmatpush1.msra.mxu0 0.0
      %7457 = vmatprep.mubr.f32.mxu0 0.0
      %7458 = vmatmul.mubr.f32.gmra.mrb[0].mxu0 %v7114
      %v7459 = vpop.f32.mrb[0].mxu0
      %v7460 = vadd.f32 %v7391, %v7459
      %v7461 = vpop.f32.mrb[0].mxu0
      %7462 = vmatprep.mubr.f32.mxu0 0.0
      %7463 = vmatmul.mubr.f32.gmra.mrb[0].mxu0 %v7115
      %v7464 = vpop.f32.mrb[0].mxu0
      %v7465 = vadd.f32 %v7391, %v7464
      %v7466 = vpop.f32.mrb[0].mxu0
      %7467 = vmatprep.mubr.f32.mxu0 0.0
      %7468 = vmatmul.mubr.f32.gmra.mrb[0].mxu0 %v7116
      %v7469 = vpop.f32.mrb[0].mxu0
      %v7470 = vadd.f32 %v7391, %v7469
      %v7471 = vpop.f32.mrb[0].mxu0
      %7472 = vmatprep.mubr.f32.mxu0 0.0
      %7473 = vmatmul.mubr.f32.gmra.mrb[0].mxu0 %v7117
      %v7474 = vpop.f32.mrb[0].mxu0
      %v7475 = vadd.f32 %v7391, %v7474
      %v7476 = vpop.f32.mrb[0].mxu0
      %7477 = vmatprep.mubr.f32.mxu0 0.0
      %7478 = vmatmul.mubr.f32.gmra.mrb[0].mxu0 %v7118
      %v7479 = vpop.f32.mrb[0].mxu0
      %v7480 = vadd.f32 %v7391, %v7479
      %v7481 = vpop.f32.mrb[0].mxu0
      %7482 = vmatprep.mubr.f32.mxu0 0.0
      %7483 = vmatmul.mubr.f32.gmra.mrb[0].mxu0 %v7119
      %v7484 = vpop.f32.mrb[0].mxu0
      %v7485 = vadd.f32 %v7391, %v7484
      %v7486 = vpop.f32.mrb[0].mxu0
      %7487 = vmatprep.mubr.f32.mxu0 0.0
      %7488 = vmatmul.mubr.f32.gmra.mrb[0].mxu0 %v7120
      %v7489 = vpop.f32.mrb[0].mxu0
      %v7490 = vadd.f32 %v7391, %v7489
      %v7491 = vpop.f32.mrb[0].mxu0
      %7492 = vmatprep.mubr.f32.mxu0 0.0
      %7493 = vmatmul.mubr.f32.gmra.mrb[0].mxu0 %v7121
      %v7494 = vpop.f32.mrb[0].mxu0
      %v7495 = vadd.f32 %v7391, %v7494
      %v7496 = vpop.f32.mrb[0].mxu0
      %7497 = vmatprep.mubr.f32.mxu0 0.0
      %7498 = vmatmul.mubr.f32.gmra.mrb[0].mxu0 %v7122
      %v7499 = vpop.f32.mrb[0].mxu0
      %v7500 = vadd.f32 %v7391, %v7499
      %v7501 = vpop.f32.mrb[0].mxu0
      %7502 = vmatprep.mubr.f32.mxu0 0.0
      %7503 = vmatmul.mubr.f32.gmra.mrb[0].mxu0 %v7123
      %v7504 = vpop.f32.mrb[0].mxu0
      %v7505 = vadd.f32 %v7391, %v7504
      %v7506 = vpop.f32.mrb[0].mxu0
      %7507 = vmatprep.mubr.f32.mxu0 0.0
      %7508 = vmatmul.mubr.f32.gmra.mrb[0].mxu0 %v7124
      %v7509 = vpop.f32.mrb[0].mxu0
      %v7510 = vadd.f32 %v7391, %v7509
      %v7511 = vpop.f32.mrb[0].mxu0
      %7512 = vmatprep.mubr.f32.mxu0 0.0
      %7513 = vmatmul.mubr.f32.gmra.mrb[0].mxu0 %v7125
      %v7514 = vpop.f32.mrb[0].mxu0
      %v7515 = vadd.f32 %v7391, %v7514
      %v7516 = vpop.f32.mrb[0].mxu0
      %7517 = vmatprep.mubr.f32.mxu0 0.0
      %7518 = vmatmul.mubr.f32.gmra.mrb[0].mxu0 %v7126
      %v7519 = vpop.f32.mrb[0].mxu0
      %v7520 = vadd.f32 %v7391, %v7519
      %v7521 = vpop.f32.mrb[0].mxu0
      %7522 = vmatprep.mubr.f32.mxu0 0.0
      %7523 = vmatmul.mubr.f32.gmra.mrb[0].mxu0 %v7127
      %v7524 = vpop.f32.mrb[0].mxu0
      %v7525 = vadd.f32 %v7391, %v7524
      %v7526 = vpop.f32.mrb[0].mxu0
      %7527 = vmatprep.mubr.f32.mxu0 0.0
      %7528 = vmatmul.mubr.f32.gmra.mrb[0].mxu0 %v7128
      %v7529 = vpop.f32.mrb[0].mxu0
      %v7530 = vadd.f32 %v7391, %v7529
      %v7531 = vpop.f32.mrb[0].mxu0
      %7532 = vmatprep.mubr.f32.mxu0 0.0
      %7533 = vmatmul.mubr.f32.gmra.mrb[0].mxu0 %v7129
      %v7534 = vpop.f32.mrb[0].mxu0
      %v7535 = vadd.f32 %v7391, %v7534
      %v7536 = vpop.f32.mrb[0].mxu0
      %7537 = vmatprep.mubr.f32.mxu0 0.0
      %7538 = vmatmul.mubr.f32.gmra.mrb[0].mxu0 %v7130
      %v7539 = vpop.f32.mrb[0].mxu0
      %v7540 = vadd.f32 %v7391, %v7539
      %v7541 = vpop.f32.mrb[0].mxu0
      %7542 = vmatprep.mubr.f32.mxu0 0.0
      %7543 = vmatmul.mubr.f32.gmra.mrb[0].mxu0 %v7131
      %v7544 = vpop.f32.mrb[0].mxu0
      %v7545 = vadd.f32 %v7391, %v7544
      %v7546 = vpop.f32.mrb[0].mxu0
      %7547 = vmatprep.mubr.f32.mxu0 0.0
      %7548 = vmatmul.mubr.f32.gmra.mrb[0].mxu0 %v7132
      %v7549 = vpop.f32.mrb[0].mxu0
      %v7550 = vadd.f32 %v7391, %v7549
      %v7551 = vpop.f32.mrb[0].mxu0
      %7552 = vmatprep.mubr.f32.mxu0 0.0
      %7553 = vmatmul.mubr.f32.gmra.mrb[0].mxu0 %v7133
      %v7554 = vpop.f32.mrb[0].mxu0
      %v7555 = vadd.f32 %v7391, %v7554
      %v7556 = vpop.f32.mrb[0].mxu0
      %7557 = vmatprep.mubr.f32.mxu0 0.0
      %7558 = vmatmul.mubr.f32.gmra.mrb[0].mxu0 %v7134
      %v7559 = vpop.f32.mrb[0].mxu0
      %v7560 = vadd.f32 %v7391, %v7559
      %v7561 = vpop.f32.mrb[0].mxu0
      %7562 = vmatprep.mubr.f32.mxu0 0.0
      %7563 = vmatmul.mubr.f32.gmra.mrb[0].mxu0 %v7135
      %v7564 = vpop.f32.mrb[0].mxu0
      %v7565 = vadd.f32 %v7391, %v7564
      %v7566 = vpop.f32.mrb[0].mxu0
      %7567 = vmatprep.mubr.f32.mxu0 0.0
      %7568 = vmatmul.mubr.f32.gmra.mrb[0].mxu0 %v7136
      %v7569 = vpop.f32.mrb[0].mxu0
      %v7570 = vadd.f32 %v7391, %v7569
      %v7571 = vpop.f32.mrb[0].mxu0
      %7572 = vmatprep.mubr.f32.mxu0 0.0
      %7573 = vmatmul.mubr.f32.gmra.mrb[0].mxu0 %v7137
      %v7574 = vpop.f32.mrb[0].mxu0
      %v7575 = vadd.f32 %v7391, %v7574
      %v7576 = vpop.f32.mrb[0].mxu0
      %7577 = vmatprep.mubr.f32.mxu0 0.0
      %7578 = vmatmul.mubr.f32.gmra.mrb[0].mxu0 %v7138
      %v7579 = vpop.f32.mrb[0].mxu0
      %v7580 = vadd.f32 %v7391, %v7579
      %v7581 = vpop.f32.mrb[0].mxu0
      %7582 = vmatprep.mubr.f32.mxu0 0.0
      %7583 = vmatmul.mubr.f32.gmra.mrb[0].mxu0 %v7139
      %v7584 = vpop.f32.mrb[0].mxu0
      %v7585 = vadd.f32 %v7391, %v7584
      %v7586 = vpop.f32.mrb[0].mxu0
      %7587 = vmatprep.mubr.f32.mxu0 0.0
      %7588 = vmatmul.mubr.f32.gmra.mrb[0].mxu0 %v7140
      %v7589 = vpop.f32.mrb[0].mxu0
      %v7590 = vadd.f32 %v7391, %v7589
      %v7591 = vpop.f32.mrb[0].mxu0
      %7592 = vmatprep.mubr.f32.mxu0 0.0
      %7593 = vmatmul.mubr.f32.gmra.mrb[0].mxu0 %v7141
      %v7594 = vpop.f32.mrb[0].mxu0
      %v7595 = vadd.f32 %v7391, %v7594
      %v7596 = vpop.f32.mrb[0].mxu0
      %7597 = vmatprep.mubr.f32.mxu0 0.0
      %7598 = vmatmul.mubr.f32.gmra.mrb[0].mxu0 %v7142
      %v7599 = vpop.f32.mrb[0].mxu0
      %v7600 = vadd.f32 %v7391, %v7599
      %v7601 = vpop.f32.mrb[0].mxu0
      %7602 = vmatprep.mubr.f32.mxu0 0.0
      %7603 = vmatmul.mubr.f32.gmra.mrb[0].mxu0 %v7143
      %v7604 = vpop.f32.mrb[0].mxu0
      %v7605 = vadd.f32 %v7391, %v7604
      %v7606 = vpop.f32.mrb[0].mxu0
      %7607 = vmatprep.mubr.f32.mxu0 0.0
      %7608 = vmatmul.mubr.f32.gmra.mrb[0].mxu0 %v7144
      %v7609 = vpop.f32.mrb[0].mxu0
      %v7610 = vadd.f32 %v7391, %v7609
      %v7611 = vpop.f32.mrb[0].mxu0
      %7612 = vmatprep.mubr.f32.mxu0 0.0
      %7613 = vmatmul.mubr.f32.gmra.mrb[0].mxu0 %v7145
      %v7614 = vpop.f32.mrb[0].mxu0
      %v7615 = vadd.f32 %v7391, %v7614
      %v7616 = vpop.f32.mrb[0].mxu0
      %7617 = vmatprep.mubr.f32.mxu0 0.0
      %7618 = vmatmul.mubr.f32.gmra.mrb[0].mxu0 %v7146
      %v7619 = vpop.f32.mrb[0].mxu0
      %v7620 = vadd.f32 %v7391, %v7619
      %v7621 = vpop.f32.mrb[0].mxu0
      %7622 = vmatprep.mubr.f32.mxu0 0.0
      %7623 = vmatmul.mubr.f32.gmra.mrb[0].mxu0 %v7147
      %v7624 = vpop.f32.mrb[0].mxu0
      %v7625 = vadd.f32 %v7391, %v7624
      %v7626 = vpop.f32.mrb[0].mxu0
      %7627 = vmatprep.mubr.f32.mxu0 0.0
      %7628 = vmatmul.mubr.f32.gmra.mrb[0].mxu0 %v7148
      %v7629 = vpop.f32.mrb[0].mxu0
      %v7630 = vadd.f32 %v7391, %v7629
      %v7631 = vpop.f32.mrb[0].mxu0
      %7632 = vmatprep.mubr.f32.mxu0 0.0
      %7633 = vmatmul.mubr.f32.gmra.mrb[0].mxu0 %v7149
      %v7634 = vpop.f32.mrb[0].mxu0
      %v7635 = vadd.f32 %v7391, %v7634
      %v7636 = vpop.f32.mrb[0].mxu0
      %7637 = vmatprep.mubr.f32.mxu0 0.0
      %7638 = vmatmul.mubr.f32.gmra.mrb[0].mxu0 %v7150
      %v7639 = vpop.f32.mrb[0].mxu0
      %v7640 = vadd.f32 %v7391, %v7639
      %v7641 = vpop.f32.mrb[0].mxu0
      %7642 = vmatprep.mubr.f32.mxu0 0.0
      %7643 = vmatmul.mubr.f32.gmra.mrb[0].mxu0 %v7151
      %v7644 = vpop.f32.mrb[0].mxu0
      %v7645 = vadd.f32 %v7391, %v7644
      %v7646 = vpop.f32.mrb[0].mxu0
      %7647 = vmatprep.mubr.f32.mxu0 0.0
      %7648 = vmatmul.mubr.f32.gmra.mrb[0].mxu0 %v7152
      %v7649 = vpop.f32.mrb[0].mxu0
      %v7650 = vadd.f32 %v7391, %v7649
      %v7651 = vpop.f32.mrb[0].mxu0
      %7652 = vmatprep.mubr.f32.mxu0 0.0
      %7653 = vmatmul.mubr.f32.gmra.mrb[0].mxu0 %v7153
      %v7654 = vpop.f32.mrb[0].mxu0
      %v7655 = vadd.f32 %v7391, %v7654
      %v7656 = vpop.f32.mrb[0].mxu0
      %7657 = vmatprep.mubr.f32.mxu0 0.0
      %7658 = vmatmul.mubr.f32.gmra.mrb[0].mxu0 %v7154
      %v7659 = vpop.f32.mrb[0].mxu0
      %v7660 = vadd.f32 %v7391, %v7659
      %v7661 = vpop.f32.mrb[0].mxu0
      %7662 = vmatprep.mubr.f32.mxu0 0.0
      %7663 = vmatmul.mubr.f32.gmra.mrb[0].mxu0 %v7155
      %v7664 = vpop.f32.mrb[0].mxu0
      %v7665 = vadd.f32 %v7391, %v7664
      %v7666 = vpop.f32.mrb[0].mxu0
      %7667 = vmatprep.mubr.f32.mxu0 0.0
      %7668 = vmatmul.mubr.f32.gmra.mrb[0].mxu0 %v7156
      %v7669 = vpop.f32.mrb[0].mxu0
      %v7670 = vadd.f32 %v7391, %v7669
      %v7671 = vpop.f32.mrb[0].mxu0
      %7672 = vmatprep.mubr.f32.mxu0 0.0
      %7673 = vmatmul.mubr.f32.gmra.mrb[0].mxu0 %v7157
      %v7674 = vpop.f32.mrb[0].mxu0
      %v7675 = vadd.f32 %v7391, %v7674
      %v7676 = vpop.f32.mrb[0].mxu0
      %7677 = vmatprep.mubr.f32.mxu0 0.0
      %7678 = vmatmul.mubr.f32.gmra.mrb[0].mxu0 %v7158
      %v7679 = vpop.f32.mrb[0].mxu0
      %v7680 = vadd.f32 %v7391, %v7679
      %v7681 = vpop.f32.mrb[0].mxu0
      %7682 = vmatprep.mubr.f32.mxu0 0.0
      %7683 = vmatmul.mubr.f32.gmra.mrb[0].mxu0 %v7159
      %v7684 = vpop.f32.mrb[0].mxu0
      %v7685 = vadd.f32 %v7391, %v7684
      %v7686 = vpop.f32.mrb[0].mxu0
      %7687 = vmatprep.mubr.f32.mxu0 0.0
      %7688 = vmatmul.mubr.f32.gmra.mrb[0].mxu0 %v7160
      %v7689 = vpop.f32.mrb[0].mxu0
      %v7690 = vadd.f32 %v7391, %v7689
      %v7691 = vpop.f32.mrb[0].mxu0
      %7692 = vmatprep.mubr.f32.mxu0 0.0
      %7693 = vmatmul.mubr.f32.gmra.mrb[0].mxu0 %v7161
      %v7694 = vpop.f32.mrb[0].mxu0
      %v7695 = vadd.f32 %v7391, %v7694
      %v7696 = vpop.f32.mrb[0].mxu0
      %7697 = vmatprep.mubr.f32.mxu0 0.0
      %7698 = vmatmul.mubr.f32.gmra.mrb[0].mxu0 %v7162
      %v7699 = vpop.f32.mrb[0].mxu0
      %v7700 = vadd.f32 %v7391, %v7699
      %v7701 = vpop.f32.mrb[0].mxu0
      %7702 = vmatprep.mubr.f32.mxu0 0.0
      %7703 = vmatmul.mubr.f32.gmra.mrb[0].mxu0 %v7163
      %v7704 = vpop.f32.mrb[0].mxu0
      %v7705 = vadd.f32 %v7391, %v7704
      %v7706 = vpop.f32.mrb[0].mxu0
      %7707 = vmatprep.mubr.f32.mxu0 0.0
      %7708 = vmatmul.mubr.f32.gmra.mrb[0].mxu0 %v7164
      %v7709 = vpop.f32.mrb[0].mxu0
      %v7710 = vadd.f32 %v7391, %v7709
      %v7711 = vpop.f32.mrb[0].mxu0
      %7712 = vmatprep.mubr.f32.mxu0 0.0
      %7713 = vmatmul.mubr.f32.gmra.mrb[0].mxu0 %v7165
      %v7714 = vpop.f32.mrb[0].mxu0
      %v7715 = vadd.f32 %v7391, %v7714
      %v7716 = vpop.f32.mrb[0].mxu0
      %7717 = vmatprep.mubr.f32.mxu0 0.0
      %7718 = vmatmul.mubr.f32.gmra.mrb[0].mxu0 %v7166
      %v7719 = vpop.f32.mrb[0].mxu0
      %v7720 = vadd.f32 %v7391, %v7719
      %v7721 = vpop.f32.mrb[0].mxu0
      %7722 = vmatprep.mubr.f32.mxu0 0.0
      %7723 = vmatmul.mubr.f32.gmra.mrb[0].mxu0 %v7167
      %v7724 = vpop.f32.mrb[0].mxu0
      %v7725 = vadd.f32 %v7391, %v7724
      %v7726 = vpop.f32.mrb[0].mxu0
      %7727 = vmatprep.mubr.f32.mxu0 0.0
      %7728 = vmatmul.mubr.f32.gmra.mrb[0].mxu0 %v7168
      %v7729 = vpop.f32.mrb[0].mxu0
      %v7730 = vadd.f32 %v7391, %v7729
      %v7731 = vpop.f32.mrb[0].mxu0
      %7732 = vmatprep.mubr.f32.mxu0 0.0
      %7733 = vmatmul.mubr.f32.gmra.mrb[0].mxu0 %v7169
      %v7734 = vpop.f32.mrb[0].mxu0
      %v7735 = vadd.f32 %v7391, %v7734
      %v7736 = vpop.f32.mrb[0].mxu0
      %7737 = vmatprep.mubr.f32.mxu0 0.0
      %7738 = vmatmul.mubr.f32.gmra.mrb[0].mxu0 %v7170
      %v7739 = vpop.f32.mrb[0].mxu0
      %v7740 = vadd.f32 %v7391, %v7739
      %v7741 = vpop.f32.mrb[0].mxu0
      %7742 = vmatprep.mubr.f32.mxu0 0.0
      %7743 = vmatmul.mubr.f32.gmra.mrb[0].mxu0 %v7171
      %v7744 = vpop.f32.mrb[0].mxu0
      %v7745 = vadd.f32 %v7391, %v7744
      %v7746 = vpop.f32.mrb[0].mxu0
      %7747 = vmatprep.mubr.f32.mxu0 0.0
      %7748 = vmatmul.mubr.f32.gmra.mrb[0].mxu0 %v7172
      %v7749 = vpop.f32.mrb[0].mxu0
      %v7750 = vadd.f32 %v7391, %v7749
      %v7751 = vpop.f32.mrb[0].mxu0
      %7752 = vmatprep.mubr.f32.mxu0 0.0
      %7753 = vmatmul.mubr.f32.gmra.mrb[0].mxu0 %v7173
      %v7754 = vpop.f32.mrb[0].mxu0
      %v7755 = vadd.f32 %v7391, %v7754
      %v7756 = vpop.f32.mrb[0].mxu0
      %7757 = vmatprep.mubr.f32.mxu0 0.0
      %7758 = vmatmul.mubr.f32.gmra.mrb[0].mxu0 %v7174
      %v7759 = vpop.f32.mrb[0].mxu0
      %v7760 = vadd.f32 %v7391, %v7759
      %v7761 = vpop.f32.mrb[0].mxu0
      %7762 = vmatprep.mubr.f32.mxu0 0.0
      %7763 = vmatmul.mubr.f32.gmra.mrb[0].mxu0 %v7175
      %v7764 = vpop.f32.mrb[0].mxu0
      %v7765 = vadd.f32 %v7391, %v7764
      %v7766 = vpop.f32.mrb[0].mxu0
      %7767 = vmatprep.mubr.f32.mxu0 0.0
      %7768 = vmatmul.mubr.f32.gmra.mrb[0].mxu0 %v7176
      %v7769 = vpop.f32.mrb[0].mxu0
      %v7770 = vadd.f32 %v7391, %v7769
      %v7771 = vpop.f32.mrb[0].mxu0
      %7772 = vmatprep.mubr.f32.mxu0 0.0
      %7773 = vmatmul.mubr.f32.gmra.mrb[0].mxu0 %v7177
      %v7774 = vpop.f32.mrb[0].mxu0
      %v7775 = vadd.f32 %v7391, %v7774
      %v7776 = vpop.f32.mrb[0].mxu0
      %7777 = vmatprep.mubr.f32.mxu0 0.0
      %7778 = vmatmul.mubr.f32.gmra.mrb[0].mxu0 %v7178
      %v7779 = vpop.f32.mrb[0].mxu0
      %v7780 = vadd.f32 %v7391, %v7779
      %v7781 = vpop.f32.mrb[0].mxu0
      %7782 = vmatprep.mubr.f32.mxu0 0.0
      %7783 = vmatmul.mubr.f32.gmra.mrb[0].mxu0 %v7179
      %v7784 = vpop.f32.mrb[0].mxu0
      %v7785 = vadd.f32 %v7391, %v7784
      %v7786 = vpop.f32.mrb[0].mxu0
      %7787 = vmatprep.mubr.f32.mxu0 0.0
      %7788 = vmatmul.mubr.f32.gmra.mrb[0].mxu0 %v7180
      %v7789 = vpop.f32.mrb[0].mxu0
      %v7790 = vadd.f32 %v7391, %v7789
      %v7791 = vpop.f32.mrb[0].mxu0
      %7792 = vmatprep.mubr.f32.mxu0 0.0
      %7793 = vmatmul.mubr.f32.gmra.mrb[0].mxu0 %v7181
      %v7794 = vpop.f32.mrb[0].mxu0
      %v7795 = vadd.f32 %v7391, %v7794
      %v7796 = vpop.f32.mrb[0].mxu0
      %7797 = vmatprep.mubr.f32.mxu0 0.0
      %7798 = vmatmul.mubr.f32.gmra.mrb[0].mxu0 %v7182
      %v7799 = vpop.f32.mrb[0].mxu0
      %v7800 = vadd.f32 %v7391, %v7799
      %v7801 = vpop.f32.mrb[0].mxu0
      %7802 = vmatprep.mubr.f32.mxu0 0.0
      %7803 = vmatmul.mubr.f32.gmra.mrb[0].mxu0 %v7183
      %v7804 = vpop.f32.mrb[0].mxu0
      %v7805 = vadd.f32 %v7391, %v7804
      %v7806 = vpop.f32.mrb[0].mxu0
      %7807 = vmatprep.mubr.f32.mxu0 0.0
      %7808 = vmatmul.mubr.f32.gmra.mrb[0].mxu0 %v7184
      %v7809 = vpop.f32.mrb[0].mxu0
      %v7810 = vadd.f32 %v7391, %v7809
      %v7811 = vpop.f32.mrb[0].mxu0
      %7812 = vmatprep.mubr.f32.mxu0 0.0
      %7813 = vmatmul.mubr.f32.gmra.mrb[0].mxu0 %v7185
      %v7814 = vpop.f32.mrb[0].mxu0
      %v7815 = vadd.f32 %v7391, %v7814
      %v7816 = vpop.f32.mrb[0].mxu0
      %7817 = vmatprep.mubr.f32.mxu0 0.0
      %7818 = vmatmul.mubr.f32.gmra.mrb[0].mxu0 %v7186
      %v7819 = vpop.f32.mrb[0].mxu0
      %v7820 = vadd.f32 %v7391, %v7819
      %v7821 = vpop.f32.mrb[0].mxu0
      %7822 = vmatprep.mubr.f32.mxu0 0.0
      %7823 = vmatmul.mubr.f32.gmra.mrb[0].mxu0 %v7187
      %v7824 = vpop.f32.mrb[0].mxu0
      %v7825 = vadd.f32 %v7391, %v7824
      %v7826 = vpop.f32.mrb[0].mxu0
      %7827 = vmatprep.mubr.f32.mxu0 0.0
      %7828 = vmatmul.mubr.f32.gmra.mrb[0].mxu0 %v7188
      %v7829 = vpop.f32.mrb[0].mxu0
      %v7830 = vadd.f32 %v7391, %v7829
      %v7831 = vpop.f32.mrb[0].mxu0
      %7832 = vmatprep.mubr.f32.mxu0 0.0
      %7833 = vmatmul.mubr.f32.gmra.mrb[0].mxu0 %v7189
      %v7834 = vpop.f32.mrb[0].mxu0
      %v7835 = vadd.f32 %v7391, %v7834
      %v7836 = vpop.f32.mrb[0].mxu0
      %7837 = vmatprep.mubr.f32.mxu0 0.0
      %7838 = vmatmul.mubr.f32.gmra.mrb[0].mxu0 %v7190
      %v7839 = vpop.f32.mrb[0].mxu0
      %v7840 = vadd.f32 %v7391, %v7839
      %v7841 = vpop.f32.mrb[0].mxu0
      %7842 = vmatprep.mubr.f32.mxu0 0.0
      %7843 = vmatmul.mubr.f32.gmra.mrb[0].mxu0 %v7191
      %v7844 = vpop.f32.mrb[0].mxu0
      %v7845 = vadd.f32 %v7391, %v7844
      %v7846 = vpop.f32.mrb[0].mxu0
      %7847 = vmatprep.mubr.f32.mxu0 0.0
      %7848 = vmatmul.mubr.f32.gmra.mrb[0].mxu0 %v7192
      %v7849 = vpop.f32.mrb[0].mxu0
      %v7850 = vadd.f32 %v7391, %v7849
      %v7851 = vpop.f32.mrb[0].mxu0
      %7852 = vmatprep.mubr.f32.mxu0 0.0
      %7853 = vmatmul.mubr.f32.gmra.mrb[0].mxu0 %v7193
      %v7854 = vpop.f32.mrb[0].mxu0
      %v7855 = vadd.f32 %v7391, %v7854
      %v7856 = vpop.f32.mrb[0].mxu0
      %7857 = vmatprep.mubr.f32.mxu0 0.0
      %7858 = vmatmul.mubr.f32.gmra.mrb[0].mxu0 %v7194
      %v7859 = vpop.f32.mrb[0].mxu0
      %v7860 = vadd.f32 %v7391, %v7859
      %v7861 = vpop.f32.mrb[0].mxu0
      %7862 = vmatprep.mubr.f32.mxu0 0.0
      %7863 = vmatmul.mubr.f32.gmra.mrb[0].mxu0 %v7195
      %v7864 = vpop.f32.mrb[0].mxu0
      %v7865 = vadd.f32 %v7391, %v7864
      %v7866 = vpop.f32.mrb[0].mxu0
      %7867 = vmatprep.mubr.f32.mxu0 0.0
      %7868 = vmatmul.mubr.f32.gmra.mrb[0].mxu0 %v7196
      %v7869 = vpop.f32.mrb[0].mxu0
      %v7870 = vadd.f32 %v7391, %v7869
      %v7871 = vpop.f32.mrb[0].mxu0
      %7872 = vmatprep.mubr.f32.mxu0 0.0
      %7873 = vmatmul.mubr.f32.gmra.mrb[0].mxu0 %v7197
      %v7874 = vpop.f32.mrb[0].mxu0
      %v7875 = vadd.f32 %v7391, %v7874
      %v7876 = vpop.f32.mrb[0].mxu0
      %7877 = vmatprep.mubr.f32.mxu0 0.0
      %7878 = vmatmul.mubr.f32.gmra.mrb[0].mxu0 %v7198
      %v7879 = vpop.f32.mrb[0].mxu0
      %v7880 = vadd.f32 %v7391, %v7879
      %v7881 = vpop.f32.mrb[0].mxu0
      %7882 = vmatprep.mubr.f32.mxu0 0.0
      %7883 = vmatmul.mubr.f32.gmra.mrb[0].mxu0 %v7199
      %v7884 = vpop.f32.mrb[0].mxu0
      %v7885 = vadd.f32 %v7391, %v7884
      %v7886 = vpop.f32.mrb[0].mxu0
      %7887 = vmatprep.mubr.f32.mxu0 0.0
      %7888 = vmatmul.mubr.f32.gmra.mrb[0].mxu0 %v7200
      %v7889 = vpop.f32.mrb[0].mxu0
      %v7890 = vadd.f32 %v7391, %v7889
      %v7891 = vpop.f32.mrb[0].mxu0
      %7892 = vmatprep.mubr.f32.mxu0 0.0
      %7893 = vmatmul.mubr.f32.gmra.mrb[0].mxu0 %v7201
      %v7894 = vpop.f32.mrb[0].mxu0
      %v7895 = vadd.f32 %v7391, %v7894
      %v7896 = vpop.f32.mrb[0].mxu0
      %7897 = vmatprep.mubr.f32.mxu0 0.0
      %7898 = vmatmul.mubr.f32.gmra.mrb[0].mxu0 %v7202
      %v7899 = vpop.f32.mrb[0].mxu0
      %v7900 = vadd.f32 %v7391, %v7899
      %v7901 = vpop.f32.mrb[0].mxu0
      %7902 = vmatprep.mubr.f32.mxu0 0.0
      %7903 = vmatmul.mubr.f32.gmra.mrb[0].mxu0 %v7203
      %v7904 = vpop.f32.mrb[0].mxu0
      %v7905 = vadd.f32 %v7391, %v7904
      %v7906 = vpop.f32.mrb[0].mxu0
      %7907 = vmatprep.mubr.f32.mxu0 0.0
      %7908 = vmatmul.mubr.f32.gmra.mrb[0].mxu0 %v7204
      %v7909 = vpop.f32.mrb[0].mxu0
      %v7910 = vadd.f32 %v7391, %v7909
      %v7911 = vpop.f32.mrb[0].mxu0
      %7912 = vmatprep.mubr.f32.mxu0 0.0
      %7913 = vmatmul.mubr.f32.gmra.mrb[0].mxu0 %v7205
      %v7914 = vpop.f32.mrb[0].mxu0
      %v7915 = vadd.f32 %v7391, %v7914
      %v7916 = vpop.f32.mrb[0].mxu0
      %7917 = vmatprep.mubr.f32.mxu0 0.0
      %7918 = vmatmul.mubr.f32.gmra.mrb[0].mxu0 %v7206
      %v7919 = vpop.f32.mrb[0].mxu0
      %v7920 = vadd.f32 %v7391, %v7919
      %v7921 = vpop.f32.mrb[0].mxu0
      %7922 = vmatprep.mubr.f32.mxu0 0.0
      %7923 = vmatmul.mubr.f32.gmra.mrb[0].mxu0 %v7207
      %v7924 = vpop.f32.mrb[0].mxu0
      %v7925 = vadd.f32 %v7391, %v7924
      %v7926 = vpop.f32.mrb[0].mxu0
      %7927 = vmatprep.mubr.f32.mxu0 0.0
      %7928 = vmatmul.mubr.f32.gmra.mrb[0].mxu0 %v7208
      %v7929 = vpop.f32.mrb[0].mxu0
      %v7930 = vadd.f32 %v7391, %v7929
      %v7931 = vpop.f32.mrb[0].mxu0
      %7932 = vmatprep.mubr.f32.mxu0 0.0
      %7933 = vmatmul.mubr.f32.gmra.mrb[0].mxu0 %v7209
      %v7934 = vpop.f32.mrb[0].mxu0
      %v7935 = vadd.f32 %v7391, %v7934
      %v7936 = vpop.f32.mrb[0].mxu0
      %7937 = vmatprep.mubr.f32.mxu0 0.0
      %7938 = vmatmul.mubr.f32.gmra.mrb[0].mxu0 %v7210
      %v7939 = vpop.f32.mrb[0].mxu0
      %v7940 = vadd.f32 %v7391, %v7939
      %v7941 = vpop.f32.mrb[0].mxu0
      %7942 = vmatprep.mubr.f32.mxu0 0.0
      %7943 = vmatmul.mubr.f32.gmra.mrb[0].mxu0 %v7211
      %v7944 = vpop.f32.mrb[0].mxu0
      %v7945 = vadd.f32 %v7391, %v7944
      %v7946 = vpop.f32.mrb[0].mxu0
      %7947 = vmatprep.mubr.f32.mxu0 0.0
      %7948 = vmatmul.mubr.f32.gmra.mrb[0].mxu0 %v7212
      %v7949 = vpop.f32.mrb[0].mxu0
      %v7950 = vadd.f32 %v7391, %v7949
      %v7951 = vpop.f32.mrb[0].mxu0
      %7952 = vmatprep.mubr.f32.mxu0 0.0
      %7953 = vmatmul.mubr.f32.gmra.mrb[0].mxu0 %v7213
      %v7954 = vpop.f32.mrb[0].mxu0
      %v7955 = vadd.f32 %v7391, %v7954
      %v7956 = vpop.f32.mrb[0].mxu0
      %7957 = vmatprep.mubr.f32.mxu0 0.0
      %7958 = vmatmul.mubr.f32.gmra.mrb[0].mxu0 %v7214
      %v7959 = vpop.f32.mrb[0].mxu0
      %v7960 = vadd.f32 %v7391, %v7959
      %v7961 = vpop.f32.mrb[0].mxu0
      %7962 = vmatprep.mubr.f32.mxu0 0.0
      %7963 = vmatmul.mubr.f32.gmra.mrb[0].mxu0 %v7215
      %v7964 = vpop.f32.mrb[0].mxu0
      %v7965 = vadd.f32 %v7391, %v7964
      %v7966 = vpop.f32.mrb[0].mxu0
      %7967 = vmatprep.mubr.f32.mxu0 0.0
      %7968 = vmatmul.mubr.f32.gmra.mrb[0].mxu0 %v7216
      %v7969 = vpop.f32.mrb[0].mxu0
      %v7970 = vadd.f32 %v7391, %v7969
      %v7971 = vpop.f32.mrb[0].mxu0
      %7972 = vmatprep.mubr.f32.mxu0 0.0
      %7973 = vmatmul.mubr.f32.gmra.mrb[0].mxu0 %v7217
      %v7974 = vpop.f32.mrb[0].mxu0
      %v7975 = vadd.f32 %v7391, %v7974
      %v7976 = vpop.f32.mrb[0].mxu0
      %7977 = vmatprep.mubr.f32.mxu0 0.0
      %7978 = vmatmul.mubr.f32.gmra.mrb[0].mxu0 %v7218
      %v7979 = vpop.f32.mrb[0].mxu0
      %v7980 = vadd.f32 %v7391, %v7979
      %v7981 = vpop.f32.mrb[0].mxu0
      %7982 = vmatprep.mubr.f32.mxu0 0.0
      %7983 = vmatmul.mubr.f32.gmra.mrb[0].mxu0 %v7219
      %v7984 = vpop.f32.mrb[0].mxu0
      %v7985 = vadd.f32 %v7391, %v7984
      %v7986 = vpop.f32.mrb[0].mxu0
      %7987 = vmatprep.mubr.f32.mxu0 0.0
      %7988 = vmatmul.mubr.f32.gmra.mrb[0].mxu0 %v7220
      %v7989 = vpop.f32.mrb[0].mxu0
      %v7990 = vadd.f32 %v7391, %v7989
      %v7991 = vpop.f32.mrb[0].mxu0
      %7992 = vmatprep.mubr.f32.mxu0 0.0
      %7993 = vmatmul.mubr.f32.gmra.mrb[0].mxu0 %v7221
      %v7994 = vpop.f32.mrb[0].mxu0
      %v7995 = vadd.f32 %v7391, %v7994
      %v7996 = vpop.f32.mrb[0].mxu0
      %7997 = vmatprep.mubr.f32.mxu0 0.0
      %7998 = vmatmul.mubr.f32.gmra.mrb[0].mxu0 %v7222
      %v7999 = vpop.f32.mrb[0].mxu0
      %v8000 = vadd.f32 %v7391, %v7999
      %v8001 = vpop.f32.mrb[0].mxu0
      %8002 = vmatprep.mubr.f32.mxu0 0.0
      %8003 = vmatmul.mubr.f32.gmra.mrb[0].mxu0 %v7223
      %v8004 = vpop.f32.mrb[0].mxu0
      %v8005 = vadd.f32 %v7391, %v8004
      %v8006 = vpop.f32.mrb[0].mxu0
      %8007 = vmatprep.mubr.f32.mxu0 0.0
      %8008 = vmatmul.mubr.f32.gmra.mrb[0].mxu0 %v7224
      %v8009 = vpop.f32.mrb[0].mxu0
      %v8010 = vadd.f32 %v7391, %v8009
      %v8011 = vpop.f32.mrb[0].mxu0
      %8012 = vmatprep.mubr.f32.mxu0 0.0
      %8013 = vmatmul.mubr.f32.gmra.mrb[0].mxu0 %v7225
      %v8014 = vpop.f32.mrb[0].mxu0
      %v8015 = vadd.f32 %v7391, %v8014
      %v8016 = vpop.f32.mrb[0].mxu0
      %8017 = vmatprep.mubr.f32.mxu0 0.0
      %8018 = vmatmul.mubr.f32.gmra.mrb[0].mxu0 %v7226
      %v8019 = vpop.f32.mrb[0].mxu0
      %v8020 = vadd.f32 %v7391, %v8019
      %v8021 = vpop.f32.mrb[0].mxu0
      %8022 = vmatprep.mubr.f32.mxu0 0.0
      %8023 = vmatmul.mubr.f32.gmra.mrb[0].mxu0 %v7227
      %v8024 = vpop.f32.mrb[0].mxu0
      %v8025 = vadd.f32 %v7391, %v8024
      %v8026 = vpop.f32.mrb[0].mxu0
      %8027 = vmatprep.mubr.f32.mxu0 0.0
      %8028 = vmatmul.mubr.f32.gmra.mrb[0].mxu0 %v7228
      %v8029 = vpop.f32.mrb[0].mxu0
      %v8030 = vadd.f32 %v7391, %v8029
      %v8031 = vpop.f32.mrb[0].mxu0
      %8032 = vmatprep.mubr.f32.mxu0 0.0
      %8033 = vmatmul.mubr.f32.gmra.mrb[0].mxu0 %v7229
      %v8034 = vpop.f32.mrb[0].mxu0
      %v8035 = vadd.f32 %v7391, %v8034
      %v8036 = vpop.f32.mrb[0].mxu0
      %8037 = vmatprep.mubr.f32.mxu0 0.0
      %8038 = vmatmul.mubr.f32.gmra.mrb[0].mxu0 %v7230
      %v8039 = vpop.f32.mrb[0].mxu0
      %v8040 = vadd.f32 %v7391, %v8039
      %v8041 = vpop.f32.mrb[0].mxu0
      %8042 = vmatprep.mubr.f32.mxu0 0.0
      %8043 = vmatmul.mubr.f32.gmra.mrb[0].mxu0 %v7231
      %v8044 = vpop.f32.mrb[0].mxu0
      %v8045 = vadd.f32 %v7391, %v8044
      %v8046 = vpop.f32.mrb[0].mxu0
      %8047 = vmatprep.mubr.f32.mxu0 0.0
      %8048 = vmatmul.mubr.f32.gmra.mrb[0].mxu0 %v7232
      %v8049 = vpop.f32.mrb[0].mxu0
      %v8050 = vadd.f32 %v7391, %v8049
      %v8051 = vpop.f32.mrb[0].mxu0
      %8052 = vmatprep.mubr.f32.mxu0 0.0
      %8053 = vmatmul.mubr.f32.gmra.mrb[0].mxu0 %v7233
      %v8054 = vpop.f32.mrb[0].mxu0
      %v8055 = vadd.f32 %v7391, %v8054
      %v8056 = vpop.f32.mrb[0].mxu0
      %8057 = vmatprep.mubr.f32.mxu0 0.0
      %8058 = vmatmul.mubr.f32.gmra.mrb[0].mxu0 %v7234
      %v8059 = vpop.f32.mrb[0].mxu0
      %v8060 = vadd.f32 %v7391, %v8059
      %v8061 = vpop.f32.mrb[0].mxu0
      %8062 = vmatprep.mubr.f32.mxu0 0.0
      %8063 = vmatmul.mubr.f32.gmra.mrb[0].mxu0 %v7235
      %v8064 = vpop.f32.mrb[0].mxu0
      %v8065 = vadd.f32 %v7391, %v8064
      %v8066 = vpop.f32.mrb[0].mxu0
      %8067 = vmatprep.mubr.f32.mxu0 0.0
      %8068 = vmatmul.mubr.f32.gmra.mrb[0].mxu0 %v7236
      %v8069 = vpop.f32.mrb[0].mxu0
      %v8070 = vadd.f32 %v7391, %v8069
      %v8071 = vpop.f32.mrb[0].mxu0
      %8072 = vmatprep.mubr.f32.mxu0 0.0
      %8073 = vmatmul.mubr.f32.gmra.mrb[0].mxu0 %v7237
      %v8074 = vpop.f32.mrb[0].mxu0
      %v8075 = vadd.f32 %v7391, %v8074
      %v8076 = vpop.f32.mrb[0].mxu0
      %8077 = vmatprep.mubr.f32.mxu0 0.0
      %8078 = vmatmul.mubr.f32.gmra.mrb[0].mxu0 %v7238
      %v8079 = vpop.f32.mrb[0].mxu0
      %v8080 = vadd.f32 %v7391, %v8079
      %v8081 = vpop.f32.mrb[0].mxu0
      %8082 = vmatprep.mubr.f32.mxu0 0.0
      %8083 = vmatmul.mubr.f32.gmra.mrb[0].mxu0 %v7239
      %v8084 = vpop.f32.mrb[0].mxu0
      %v8085 = vadd.f32 %v7391, %v8084
      %v8086 = vpop.f32.mrb[0].mxu0
      %8087 = vmatprep.mubr.f32.mxu0 0.0
      %8088 = vmatmul.mubr.f32.gmra.mrb[0].mxu0 %v7240
      %v8089 = vpop.f32.mrb[0].mxu0
      %v8090 = vadd.f32 %v7391, %v8089
      %v8091 = vpop.f32.mrb[0].mxu0
      %8092 = vmatprep.mubr.f32.mxu0 0.0
      %8093 = vmatmul.mubr.f32.gmra.mrb[0].mxu0 %v7241
      %v8094 = vpop.f32.mrb[0].mxu0
      %v8095 = vadd.f32 %v7391, %v8094
      %v8096 = vpop.f32.mrb[0].mxu0
      %8097 = vmatprep.mubr.f32.mxu0 0.0
      %8098 = vmatmul.mubr.f32.gmra.mrb[0].mxu0 %v7242
      %v8099 = vpop.f32.mrb[0].mxu0
      %v8100 = vadd.f32 %v7391, %v8099
      %v8101 = vpop.f32.mrb[0].mxu0
      %8102 = vmatprep.mubr.f32.mxu0 0.0
      %8103 = vmatmul.mubr.f32.gmra.mrb[0].mxu0 %v7243
      %v8104 = vpop.f32.mrb[0].mxu0
      %v8105 = vadd.f32 %v7391, %v8104
      %v8106 = vpop.f32.mrb[0].mxu0
      %8107 = vmatprep.mubr.f32.mxu0 0.0
      %8108 = vmatmul.mubr.f32.gmra.mrb[0].mxu0 %v7244
      %v8109 = vpop.f32.mrb[0].mxu0
      %v8110 = vadd.f32 %v7391, %v8109
      %v8111 = vpop.f32.mrb[0].mxu0
      %8112 = vmatprep.mubr.f32.mxu0 0.0
      %8113 = vmatmul.mubr.f32.gmra.mrb[0].mxu0 %v7245
      %v8114 = vpop.f32.mrb[0].mxu0
      %v8115 = vadd.f32 %v7391, %v8114
      %v8116 = vpop.f32.mrb[0].mxu0
      %8117 = vmatprep.mubr.f32.mxu0 0.0
      %8118 = vmatmul.mubr.f32.gmra.mrb[0].mxu0 %v7246
      %v8119 = vpop.f32.mrb[0].mxu0
      %v8120 = vadd.f32 %v7391, %v8119
      %v8121 = vpop.f32.mrb[0].mxu0
      %8122 = vmatprep.mubr.f32.mxu0 0.0
      %8123 = vmatmul.mubr.f32.gmra.mrb[0].mxu0 %v7247
      %v8124 = vpop.f32.mrb[0].mxu0
      %v8125 = vadd.f32 %v7391, %v8124
      %v8126 = vpop.f32.mrb[0].mxu0
      %8127 = vmatprep.mubr.f32.mxu0 0.0
      %8128 = vmatmul.mubr.f32.gmra.mrb[0].mxu0 %v7248
      %v8129 = vpop.f32.mrb[0].mxu0
      %v8130 = vadd.f32 %v7391, %v8129
      %v8131 = vpop.f32.mrb[0].mxu0
      %8132 = vmatprep.mubr.f32.mxu0 0.0
      %8133 = vmatmul.mubr.f32.gmra.mrb[0].mxu0 %v7249
      %v8134 = vpop.f32.mrb[0].mxu0
      %v8135 = vadd.f32 %v7391, %v8134
      %v8136 = vpop.f32.mrb[0].mxu0
      %8137 = vmatprep.mubr.f32.mxu0 0.0
      %8138 = vmatmul.mubr.f32.gmra.mrb[0].mxu0 %v7250
      %v8139 = vpop.f32.mrb[0].mxu0
      %v8140 = vadd.f32 %v7391, %v8139
      %v8141 = vpop.f32.mrb[0].mxu0
      %8142 = vmatprep.mubr.f32.mxu0 0.0
      %8143 = vmatmul.mubr.f32.gmra.mrb[0].mxu0 %v7251
      %v8144 = vpop.f32.mrb[0].mxu0
      %v8145 = vadd.f32 %v7391, %v8144
      %v8146 = vpop.f32.mrb[0].mxu0
      %8147 = vmatprep.mubr.f32.mxu0 0.0
      %8148 = vmatmul.mubr.f32.gmra.mrb[0].mxu0 %v7252
      %v8149 = vpop.f32.mrb[0].mxu0
      %v8150 = vadd.f32 %v7391, %v8149
      %v8151 = vpop.f32.mrb[0].mxu0
      %8152 = vmatprep.mubr.f32.mxu0 0.0
      %8153 = vmatmul.mubr.f32.gmra.mrb[0].mxu0 %v7253
      %v8154 = vpop.f32.mrb[0].mxu0
      %v8155 = vadd.f32 %v7391, %v8154
      %v8156 = vpop.f32.mrb[0].mxu0
      %8157 = vmatprep.mubr.f32.mxu0 0.0
      %8158 = vmatmul.mubr.f32.gmra.mrb[0].mxu0 %v7254
      %v8159 = vpop.f32.mrb[0].mxu0
      %v8160 = vadd.f32 %v7391, %v8159
      %v8161 = vpop.f32.mrb[0].mxu0
      %8162 = vmatprep.mubr.f32.mxu0 0.0
      %8163 = vmatmul.mubr.f32.gmra.mrb[0].mxu0 %v7255
      %v8164 = vpop.f32.mrb[0].mxu0
      %v8165 = vadd.f32 %v7391, %v8164
      %v8166 = vpop.f32.mrb[0].mxu0
      %8167 = vmatprep.mubr.f32.mxu0 0.0
      %8168 = vmatmul.mubr.f32.gmra.mrb[0].mxu0 %v7256
      %v8169 = vpop.f32.mrb[0].mxu0
      %v8170 = vadd.f32 %v7391, %v8169
      %v8171 = vpop.f32.mrb[0].mxu0
      %8172 = vmatprep.mubr.f32.mxu0 0.0
      %8173 = vmatmul.mubr.f32.gmra.mrb[0].mxu0 %v7257
      %v8174 = vpop.f32.mrb[0].mxu0
      %v8175 = vadd.f32 %v7391, %v8174
      %v8176 = vpop.f32.mrb[0].mxu0
      %8177 = vmatprep.mubr.f32.mxu0 0.0
      %8178 = vmatmul.mubr.f32.gmra.mrb[0].mxu0 %v7258
      %v8179 = vpop.f32.mrb[0].mxu0
      %v8180 = vadd.f32 %v7391, %v8179
      %v8181 = vpop.f32.mrb[0].mxu0
      %8182 = vmatprep.mubr.f32.mxu0 0.0
      %8183 = vmatmul.mubr.f32.gmra.mrb[0].mxu0 %v7259
      %v8184 = vpop.f32.mrb[0].mxu0
      %v8185 = vadd.f32 %v7391, %v8184
      %v8186 = vpop.f32.mrb[0].mxu0
      %8187 = vmatprep.mubr.f32.mxu0 0.0
      %8188 = vmatmul.mubr.f32.gmra.mrb[0].mxu0 %v7260
      %v8189 = vpop.f32.mrb[0].mxu0
      %v8190 = vadd.f32 %v7391, %v8189
      %v8191 = vpop.f32.mrb[0].mxu0
      %8192 = vmatprep.mubr.f32.mxu0 0.0
      %8193 = vmatmul.mubr.f32.gmra.mrb[0].mxu0 %v7261
      %v8194 = vpop.f32.mrb[0].mxu0
      %v8195 = vadd.f32 %v7391, %v8194
      %v8196 = vpop.f32.mrb[0].mxu0
      %8197 = vmatprep.mubr.f32.mxu0 0.0
      %8198 = vmatmul.mubr.f32.gmra.mrb[0].mxu0 %v7262
      %v8199 = vpop.f32.mrb[0].mxu0
      %v8200 = vadd.f32 %v7391, %v8199
      %v8201 = vpop.f32.mrb[0].mxu0
      %8202 = vmatprep.mubr.f32.mxu0 0.0
      %8203 = vmatmul.mubr.f32.gmra.mrb[0].mxu0 %v7263
      %v8204 = vpop.f32.mrb[0].mxu0
      %v8205 = vadd.f32 %v7391, %v8204
      %v8206 = vpop.f32.mrb[0].mxu0
      %8207 = vmatprep.mubr.f32.mxu0 0.0
      %8208 = vmatmul.mubr.f32.gmra.mrb[0].mxu0 %v7264
      %v8209 = vpop.f32.mrb[0].mxu0
      %v8210 = vadd.f32 %v7391, %v8209
      %v8211 = vpop.f32.mrb[0].mxu0
      %8212 = vmatprep.mubr.f32.mxu0 0.0
      %8213 = vmatmul.mubr.f32.gmra.mrb[0].mxu0 %v7265
      %v8214 = vpop.f32.mrb[0].mxu0
      %v8215 = vadd.f32 %v7391, %v8214
      %v8216 = vpop.f32.mrb[0].mxu0
      %8217 = vmatprep.mubr.f32.mxu0 0.0
      %8218 = vmatmul.mubr.f32.gmra.mrb[0].mxu0 %v7266
      %v8219 = vpop.f32.mrb[0].mxu0
      %v8220 = vadd.f32 %v7391, %v8219
      %v8221 = vpop.f32.mrb[0].mxu0
      %8222 = vmatprep.mubr.f32.mxu0 0.0
      %8223 = vmatmul.mubr.f32.gmra.mrb[0].mxu0 %v7267
      %v8224 = vpop.f32.mrb[0].mxu0
      %v8225 = vadd.f32 %v7391, %v8224
      %v8226 = vpop.f32.mrb[0].mxu0
      %8227 = vmatprep.mubr.f32.mxu0 0.0
      %8228 = vmatmul.mubr.f32.gmra.mrb[0].mxu0 %v7268
      %v8229 = vpop.f32.mrb[0].mxu0
      %v8230 = vadd.f32 %v7391, %v8229
      %v8231 = vpop.f32.mrb[0].mxu0
      %8232 = vmatprep.mubr.f32.mxu0 0.0
      %8233 = vmatmul.mubr.f32.gmra.mrb[0].mxu0 %v7269
      %v8234 = vpop.f32.mrb[0].mxu0
      %v8235 = vadd.f32 %v7391, %v8234
      %v8236 = vpop.f32.mrb[0].mxu0
      %8237 = vmatprep.mubr.f32.mxu0 0.0
      %8238 = vmatmul.mubr.f32.gmra.mrb[0].mxu0 %v7270
      %v8239 = vpop.f32.mrb[0].mxu0
      %v8240 = vadd.f32 %v7391, %v8239
      %v8241 = vpop.f32.mrb[0].mxu0
      %8242 = vmatprep.mubr.f32.mxu0 0.0
      %8243 = vmatmul.mubr.f32.gmra.mrb[0].mxu0 %v7271
      %v8244 = vpop.f32.mrb[0].mxu0
      %v8245 = vadd.f32 %v7391, %v8244
      %v8246 = vpop.f32.mrb[0].mxu0
      %8247 = vmatprep.mubr.f32.mxu0 0.0
      %8248 = vmatmul.mubr.f32.gmra.mrb[0].mxu0 %v7272
      %v8249 = vpop.f32.mrb[0].mxu0
      %v8250 = vadd.f32 %v7391, %v8249
      %v8251 = vpop.f32.mrb[0].mxu0
      %8252 = vmatprep.mubr.f32.mxu0 0.0
      %8253 = vmatmul.mubr.f32.gmra.mrb[0].mxu0 %v7273
      %v8254 = vpop.f32.mrb[0].mxu0
      %v8255 = vadd.f32 %v7391, %v8254
      %v8256 = vpop.f32.mrb[0].mxu0
      %8257 = vmatprep.mubr.f32.mxu0 0.0
      %8258 = vmatmul.mubr.f32.gmra.mrb[0].mxu0 %v7274
      %v8259 = vpop.f32.mrb[0].mxu0
      %v8260 = vadd.f32 %v7391, %v8259
      %v8261 = vpop.f32.mrb[0].mxu0
      %8262 = vmatprep.mubr.f32.mxu0 0.0
      %8263 = vmatmul.mubr.f32.gmra.mrb[0].mxu0 %v7275
      %v8264 = vpop.f32.mrb[0].mxu0
      %v8265 = vadd.f32 %v7391, %v8264
      %v8266 = vpop.f32.mrb[0].mxu0
      %8267 = vmatprep.mubr.f32.mxu0 0.0
      %8268 = vmatmul.mubr.f32.gmra.mrb[0].mxu0 %v7276
      %v8269 = vpop.f32.mrb[0].mxu0
      %v8270 = vadd.f32 %v7391, %v8269
      %v8271 = vpop.f32.mrb[0].mxu0
      %8272 = vmatprep.mubr.f32.mxu0 0.0
      %8273 = vmatmul.mubr.f32.gmra.mrb[0].mxu0 %v7277
      %v8274 = vpop.f32.mrb[0].mxu0
      %v8275 = vadd.f32 %v7391, %v8274
      %v8276 = vpop.f32.mrb[0].mxu0
      %8277 = vmatprep.mubr.f32.mxu0 0.0
      %8278 = vmatmul.mubr.f32.gmra.mrb[0].mxu0 %v7278
      %v8279 = vpop.f32.mrb[0].mxu0
      %v8280 = vadd.f32 %v7391, %v8279
      %v8281 = vpop.f32.mrb[0].mxu0
      %8282 = vmatprep.mubr.f32.mxu0 0.0
      %8283 = vmatmul.mubr.f32.gmra.mrb[0].mxu0 %v7279
      %v8284 = vpop.f32.mrb[0].mxu0
      %v8285 = vadd.f32 %v7391, %v8284
      %v8286 = vpop.f32.mrb[0].mxu0
      %8287 = vmatprep.mubr.f32.mxu0 0.0
      %8288 = vmatmul.mubr.f32.gmra.mrb[0].mxu0 %v7280
      %v8289 = vpop.f32.mrb[0].mxu0
      %v8290 = vadd.f32 %v7391, %v8289
      %v8291 = vpop.f32.mrb[0].mxu0
      %8292 = vmatprep.mubr.f32.mxu0 0.0
      %8293 = vmatmul.mubr.f32.gmra.mrb[0].mxu0 %v7281
      %v8294 = vpop.f32.mrb[0].mxu0
      %v8295 = vadd.f32 %v7391, %v8294
      %v8296 = vpop.f32.mrb[0].mxu0
      %8297 = vmatprep.mubr.f32.mxu0 0.0
      %8298 = vmatmul.mubr.f32.gmra.mrb[0].mxu0 %v7282
      %v8299 = vpop.f32.mrb[0].mxu0
      %v8300 = vadd.f32 %v7391, %v8299
      %v8301 = vpop.f32.mrb[0].mxu0
      %8302 = vmatprep.mubr.f32.mxu0 0.0
      %8303 = vmatmul.mubr.f32.gmra.mrb[0].mxu0 %v7283
      %v8304 = vpop.f32.mrb[0].mxu0
      %v8305 = vadd.f32 %v7391, %v8304
      %v8306 = vpop.f32.mrb[0].mxu0
      %8307 = vmatprep.mubr.f32.mxu0 0.0
      %8308 = vmatmul.mubr.f32.gmra.mrb[0].mxu0 %v7284
      %v8309 = vpop.f32.mrb[0].mxu0
      %v8310 = vadd.f32 %v7391, %v8309
      %v8311 = vpop.f32.mrb[0].mxu0
      %8312 = vmatprep.mubr.f32.mxu0 0.0
      %8313 = vmatmul.mubr.f32.gmra.mrb[0].mxu0 %v7285
      %v8314 = vpop.f32.mrb[0].mxu0
      %v8315 = vadd.f32 %v7391, %v8314
      %v8316 = vpop.f32.mrb[0].mxu0
      %8317 = vmatprep.mubr.f32.mxu0 0.0
      %8318 = vmatmul.mubr.f32.gmra.mrb[0].mxu0 %v7286
      %v8319 = vpop.f32.mrb[0].mxu0
      %v8320 = vadd.f32 %v7391, %v8319
      %v8321 = vpop.f32.mrb[0].mxu0
      %8322 = vmatprep.mubr.f32.mxu0 0.0
      %8323 = vmatmul.mubr.f32.gmra.mrb[0].mxu0 %v7287
      %v8324 = vpop.f32.mrb[0].mxu0
      %v8325 = vadd.f32 %v7391, %v8324
      %v8326 = vpop.f32.mrb[0].mxu0
      %8327 = vmatprep.mubr.f32.mxu0 0.0
      %8328 = vmatmul.mubr.f32.gmra.mrb[0].mxu0 %v7288
      %v8329 = vpop.f32.mrb[0].mxu0
      %v8330 = vadd.f32 %v7391, %v8329
      %v8331 = vpop.f32.mrb[0].mxu0
      %8332 = vmatprep.mubr.f32.mxu0 0.0
      %8333 = vmatmul.mubr.f32.gmra.mrb[0].mxu0 %v7289
      %v8334 = vpop.f32.mrb[0].mxu0
      %v8335 = vadd.f32 %v7391, %v8334
      %v8336 = vpop.f32.mrb[0].mxu0
      %8337 = vmatprep.mubr.f32.mxu0 0.0
      %8338 = vmatmul.mubr.f32.gmra.mrb[0].mxu0 %v7290
      %v8339 = vpop.f32.mrb[0].mxu0
      %v8340 = vadd.f32 %v7391, %v8339
      %v8341 = vpop.f32.mrb[0].mxu0
      %8342 = vmatprep.mubr.f32.mxu0 0.0
      %8343 = vmatmul.mubr.f32.gmra.mrb[0].mxu0 %v7291
      %v8344 = vpop.f32.mrb[0].mxu0
      %v8345 = vadd.f32 %v7391, %v8344
      %v8346 = vpop.f32.mrb[0].mxu0
      %8347 = vmatprep.mubr.f32.mxu0 0.0
      %8348 = vmatmul.mubr.f32.gmra.mrb[0].mxu0 %v7292
      %v8349 = vpop.f32.mrb[0].mxu0
      %v8350 = vadd.f32 %v7391, %v8349
      %v8351 = vpop.f32.mrb[0].mxu0
      %8352 = vmatprep.mubr.f32.mxu0 0.0
      %8353 = vmatmul.mubr.f32.gmra.mrb[0].mxu0 %v7293
      %v8354 = vpop.f32.mrb[0].mxu0
      %v8355 = vadd.f32 %v7391, %v8354
      %v8356 = vpop.f32.mrb[0].mxu0
      %8357 = vmatprep.mubr.f32.mxu0 0.0
      %8358 = vmatmul.mubr.f32.gmra.mrb[0].mxu0 %v7294
      %v8359 = vpop.f32.mrb[0].mxu0
      %v8360 = vadd.f32 %v7391, %v8359
      %v8361 = vpop.f32.mrb[0].mxu0
      %8362 = vmatprep.mubr.f32.mxu0 0.0
      %8363 = vmatmul.mubr.f32.gmra.mrb[0].mxu0 %v7295
      %v8364 = vpop.f32.mrb[0].mxu0
      %v8365 = vadd.f32 %v7391, %v8364
      %v8366 = vpop.f32.mrb[0].mxu0
      %8367 = vmatprep.mubr.f32.mxu0 0.0
      %8368 = vmatmul.mubr.f32.gmra.mrb[0].mxu0 %v7296
      %v8369 = vpop.f32.mrb[0].mxu0
      %v8370 = vadd.f32 %v7391, %v8369
      %v8371 = vpop.f32.mrb[0].mxu0
      %8372 = vmatprep.mubr.f32.mxu0 0.0
      %8373 = vmatmul.mubr.f32.gmra.mrb[0].mxu0 %v7297
      %v8374 = vpop.f32.mrb[0].mxu0
      %v8375 = vadd.f32 %v7391, %v8374
      %v8376 = vpop.f32.mrb[0].mxu0
      %8377 = vmatprep.mubr.f32.mxu0 0.0
      %8378 = vmatmul.mubr.f32.gmra.mrb[0].mxu0 %v7298
      %v8379 = vpop.f32.mrb[0].mxu0
      %v8380 = vadd.f32 %v7391, %v8379
      %v8381 = vpop.f32.mrb[0].mxu0
      %8382 = vmatprep.mubr.f32.mxu0 0.0
      %8383 = vmatmul.mubr.f32.gmra.mrb[0].mxu0 %v7299
      %v8384 = vpop.f32.mrb[0].mxu0
      %v8385 = vadd.f32 %v7391, %v8384
      %v8386 = vpop.f32.mrb[0].mxu0
      %8387 = vmatprep.mubr.f32.mxu0 0.0
      %8388 = vmatmul.mubr.f32.gmra.mrb[0].mxu0 %v7300
      %v8389 = vpop.f32.mrb[0].mxu0
      %v8390 = vadd.f32 %v7391, %v8389
      %v8391 = vpop.f32.mrb[0].mxu0
      %8392 = vmatprep.mubr.f32.mxu0 0.0
      %8393 = vmatmul.mubr.f32.gmra.mrb[0].mxu0 %v7301
      %v8394 = vpop.f32.mrb[0].mxu0
      %v8395 = vadd.f32 %v7391, %v8394
      %v8396 = vpop.f32.mrb[0].mxu0
      %8397 = vmatprep.mubr.f32.mxu0 0.0
      %8398 = vmatmul.mubr.f32.gmra.mrb[0].mxu0 %v7302
      %v8399 = vpop.f32.mrb[0].mxu0
      %v8400 = vadd.f32 %v7391, %v8399
      %v8401 = vpop.f32.mrb[0].mxu0
      %8402 = vmatprep.mubr.f32.mxu0 0.0
      %8403 = vmatmul.mubr.f32.gmra.mrb[0].mxu0 %v7303
      %v8404 = vpop.f32.mrb[0].mxu0
      %v8405 = vadd.f32 %v7391, %v8404
      %v8406 = vpop.f32.mrb[0].mxu0
      %8407 = vmatprep.mubr.f32.mxu0 0.0
      %8408 = vmatmul.mubr.f32.gmra.mrb[0].mxu0 %v7304
      %v8409 = vpop.f32.mrb[0].mxu0
      %v8410 = vadd.f32 %v7391, %v8409
      %v8411 = vpop.f32.mrb[0].mxu0
      %8412 = vmatprep.mubr.f32.mxu0 0.0
      %8413 = vmatmul.mubr.f32.gmra.mrb[0].mxu0 %v7305
      %v8414 = vpop.f32.mrb[0].mxu0
      %v8415 = vadd.f32 %v7391, %v8414
      %v8416 = vpop.f32.mrb[0].mxu0
      %8417 = vmatprep.mubr.f32.mxu0 0.0
      %8418 = vmatmul.mubr.f32.gmra.mrb[0].mxu0 %v7306
      %v8419 = vpop.f32.mrb[0].mxu0
      %v8420 = vadd.f32 %v7391, %v8419
      %v8421 = vpop.f32.mrb[0].mxu0
      %8422 = vmatprep.mubr.f32.mxu0 0.0
      %8423 = vmatmul.mubr.f32.gmra.mrb[0].mxu0 %v7307
      %v8424 = vpop.f32.mrb[0].mxu0
      %v8425 = vadd.f32 %v7391, %v8424
      %v8426 = vpop.f32.mrb[0].mxu0
      %8427 = vmatprep.mubr.f32.mxu0 0.0
      %8428 = vmatmul.mubr.f32.gmra.mrb[0].mxu0 %v7308
      %v8429 = vpop.f32.mrb[0].mxu0
      %v8430 = vadd.f32 %v7391, %v8429
      %v8431 = vpop.f32.mrb[0].mxu0
      %8432 = vmatprep.mubr.f32.mxu0 0.0
      %8433 = vmatmul.mubr.f32.gmra.mrb[0].mxu0 %v7309
      %v8434 = vpop.f32.mrb[0].mxu0
      %v8435 = vadd.f32 %v7391, %v8434
      %v8436 = vpop.f32.mrb[0].mxu0
      %8437 = vmatprep.mubr.f32.mxu0 0.0
      %8438 = vmatmul.mubr.f32.gmra.mrb[0].mxu0 %v7310
      %v8439 = vpop.f32.mrb[0].mxu0
      %v8440 = vadd.f32 %v7391, %v8439
      %v8441 = vpop.f32.mrb[0].mxu0
      %8442 = vmatprep.mubr.f32.mxu0 0.0
      %8443 = vmatmul.mubr.f32.gmra.mrb[0].mxu0 %v7311
      %v8444 = vpop.f32.mrb[0].mxu0
      %v8445 = vadd.f32 %v7391, %v8444
      %v8446 = vpop.f32.mrb[0].mxu0
      %8447 = vmatprep.mubr.f32.mxu0 0.0
      %8448 = vmatmul.mubr.f32.gmra.mrb[0].mxu0 %v7312
      %v8449 = vpop.f32.mrb[0].mxu0
      %v8450 = vadd.f32 %v7391, %v8449
      %v8451 = vpop.f32.mrb[0].mxu0
      %8452 = vmatprep.mubr.f32.mxu0 0.0
      %8453 = vmatmul.mubr.f32.gmra.mrb[0].mxu0 %v7313
      %v8454 = vpop.f32.mrb[0].mxu0
      %v8455 = vadd.f32 %v7391, %v8454
      %v8456 = vpop.f32.mrb[0].mxu0
      %8457 = vmatprep.mubr.f32.mxu0 0.0
      %8458 = vmatmul.mubr.f32.gmra.mrb[0].mxu0 %v7314
      %v8459 = vpop.f32.mrb[0].mxu0
      %v8460 = vadd.f32 %v7391, %v8459
      %v8461 = vpop.f32.mrb[0].mxu0
      %8462 = vmatprep.mubr.f32.mxu0 0.0
      %8463 = vmatmul.mubr.f32.gmra.mrb[0].mxu0 %v7315
      %v8464 = vpop.f32.mrb[0].mxu0
      %v8465 = vadd.f32 %v7391, %v8464
      %v8466 = vpop.f32.mrb[0].mxu0
      %8467 = vmatprep.mubr.f32.mxu0 0.0
      %8468 = vmatmul.mubr.f32.gmra.mrb[0].mxu0 %v7316
      %v8469 = vpop.f32.mrb[0].mxu0
      %v8470 = vadd.f32 %v7391, %v8469
      %v8471 = vpop.f32.mrb[0].mxu0
      %8472 = vmatprep.mubr.f32.mxu0 0.0
      %8473 = vmatmul.mubr.f32.gmra.mrb[0].mxu0 %v7317
      %v8474 = vpop.f32.mrb[0].mxu0
      %v8475 = vadd.f32 %v7391, %v8474
      %v8476 = vpop.f32.mrb[0].mxu0
      %8477 = vmatprep.mubr.f32.mxu0 0.0
      %8478 = vmatmul.mubr.f32.gmra.mrb[0].mxu0 %v7318
      %v8479 = vpop.f32.mrb[0].mxu0
      %v8480 = vadd.f32 %v7391, %v8479
      %v8481 = vpop.f32.mrb[0].mxu0
      %8482 = vmatprep.mubr.f32.mxu0 0.0
      %8483 = vmatmul.mubr.f32.gmra.mrb[0].mxu0 %v7319
      %v8484 = vpop.f32.mrb[0].mxu0
      %v8485 = vadd.f32 %v7391, %v8484
      %v8486 = vpop.f32.mrb[0].mxu0
      %8487 = vmatprep.mubr.f32.mxu0 0.0
      %8488 = vmatmul.mubr.f32.gmra.mrb[0].mxu0 %v7320
      %v8489 = vpop.f32.mrb[0].mxu0
      %v8490 = vadd.f32 %v7391, %v8489
      %v8491 = vpop.f32.mrb[0].mxu0
      %8492 = vmatprep.mubr.f32.mxu0 0.0
      %8493 = vmatmul.mubr.f32.gmra.mrb[0].mxu0 %v7321
      %v8494 = vpop.f32.mrb[0].mxu0
      %v8495 = vadd.f32 %v7391, %v8494
      %v8496 = vpop.f32.mrb[0].mxu0
      %8497 = vmatprep.mubr.f32.mxu0 0.0
      %8498 = vmatmul.mubr.f32.gmra.mrb[0].mxu0 %v7322
      %v8499 = vpop.f32.mrb[0].mxu0
      %v8500 = vadd.f32 %v7391, %v8499
      %v8501 = vpop.f32.mrb[0].mxu0
      %8502 = vmatprep.mubr.f32.mxu0 0.0
      %8503 = vmatmul.mubr.f32.gmra.mrb[0].mxu0 %v7323
      %v8504 = vpop.f32.mrb[0].mxu0
      %v8505 = vadd.f32 %v7391, %v8504
      %v8506 = vpop.f32.mrb[0].mxu0
      %8507 = vmatprep.mubr.f32.mxu0 0.0
      %8508 = vmatmul.mubr.f32.gmra.mrb[0].mxu0 %v7324
      %v8509 = vpop.f32.mrb[0].mxu0
      %v8510 = vadd.f32 %v7391, %v8509
      %v8511 = vpop.f32.mrb[0].mxu0
      %8512 = vmatprep.mubr.f32.mxu0 0.0
      %8513 = vmatmul.mubr.f32.gmra.mrb[0].mxu0 %v7325
      %v8514 = vpop.f32.mrb[0].mxu0
      %v8515 = vadd.f32 %v7391, %v8514
      %v8516 = vpop.f32.mrb[0].mxu0
      %8517 = vmatprep.mubr.f32.mxu0 0.0
      %8518 = vmatmul.mubr.f32.gmra.mrb[0].mxu0 %v7326
      %v8519 = vpop.f32.mrb[0].mxu0
      %v8520 = vadd.f32 %v7391, %v8519
      %v8521 = vpop.f32.mrb[0].mxu0
      %8522 = vmatprep.mubr.f32.mxu0 0.0
      %8523 = vmatmul.mubr.f32.gmra.mrb[0].mxu0 %v7327
      %v8524 = vpop.f32.mrb[0].mxu0
      %v8525 = vadd.f32 %v7391, %v8524
      %v8526 = vpop.f32.mrb[0].mxu0
      %8527 = vmatprep.mubr.f32.mxu0 0.0
      %8528 = vmatmul.mubr.f32.gmra.mrb[0].mxu0 %v7328
      %v8529 = vpop.f32.mrb[0].mxu0
      %v8530 = vadd.f32 %v7391, %v8529
      %v8531 = vpop.f32.mrb[0].mxu0
      %8532 = vmatprep.mubr.f32.mxu0 0.0
      %8533 = vmatmul.mubr.f32.gmra.mrb[0].mxu0 %v7329
      %v8534 = vpop.f32.mrb[0].mxu0
      %v8535 = vadd.f32 %v7391, %v8534
      %v8536 = vpop.f32.mrb[0].mxu0
      %8537 = vmatprep.mubr.f32.mxu0 0.0
      %8538 = vmatmul.mubr.f32.gmra.mrb[0].mxu0 %v7330
      %v8539 = vpop.f32.mrb[0].mxu0
      %v8540 = vadd.f32 %v7391, %v8539
      %v8541 = vpop.f32.mrb[0].mxu0
      %8542 = vmatprep.mubr.f32.mxu0 0.0
      %8543 = vmatmul.mubr.f32.gmra.mrb[0].mxu0 %v7331
      %v8544 = vpop.f32.mrb[0].mxu0
      %v8545 = vadd.f32 %v7391, %v8544
      %v8546 = vpop.f32.mrb[0].mxu0
      %8547 = vmatprep.mubr.f32.mxu0 0.0
      %8548 = vmatmul.mubr.f32.gmra.mrb[0].mxu0 %v7332
      %v8549 = vpop.f32.mrb[0].mxu0
      %v8550 = vadd.f32 %v7391, %v8549
      %v8551 = vpop.f32.mrb[0].mxu0
      %8552 = vmatprep.mubr.f32.mxu0 0.0
      %8553 = vmatmul.mubr.f32.gmra.mrb[0].mxu0 %v7333
      %v8554 = vpop.f32.mrb[0].mxu0
      %v8555 = vadd.f32 %v7391, %v8554
      %v8556 = vpop.f32.mrb[0].mxu0
      %8557 = vmatprep.mubr.f32.mxu0 0.0
      %8558 = vmatmul.mubr.f32.gmra.mrb[0].mxu0 %v7334
      %v8559 = vpop.f32.mrb[0].mxu0
      %v8560 = vadd.f32 %v7391, %v8559
      %v8561 = vpop.f32.mrb[0].mxu0
      %8562 = vmatprep.mubr.f32.mxu0 0.0
      %8563 = vmatmul.mubr.f32.gmra.mrb[0].mxu0 %v7335
      %v8564 = vpop.f32.mrb[0].mxu0
      %v8565 = vadd.f32 %v7391, %v8564
      %v8566 = vpop.f32.mrb[0].mxu0
      %8567 = vmatprep.mubr.f32.mxu0 0.0
      %8568 = vmatmul.mubr.f32.gmra.mrb[0].mxu0 %v7336
      %v8569 = vpop.f32.mrb[0].mxu0
      %v8570 = vadd.f32 %v7391, %v8569
      %v8571 = vpop.f32.mrb[0].mxu0
      %8572 = vmatprep.mubr.f32.mxu0 0.0
      %8573 = vmatmul.mubr.f32.gmra.mrb[0].mxu0 %v7337
      %v8574 = vpop.f32.mrb[0].mxu0
      %v8575 = vadd.f32 %v7391, %v8574
      %v8576 = vpop.f32.mrb[0].mxu0
      %8577 = vmatprep.mubr.f32.mxu0 0.0
      %8578 = vmatmul.mubr.f32.gmra.mrb[0].mxu0 %v7338
      %v8579 = vpop.f32.mrb[0].mxu0
      %v8580 = vadd.f32 %v7391, %v8579
      %v8581 = vpop.f32.mrb[0].mxu0
      %8582 = vmatprep.mubr.f32.mxu0 0.0
      %8583 = vmatmul.mubr.f32.gmra.mrb[0].mxu0 %v7339
      %v8584 = vpop.f32.mrb[0].mxu0
      %v8585 = vadd.f32 %v7391, %v8584
      %v8586 = vpop.f32.mrb[0].mxu0
      %8587 = vmatprep.mubr.f32.mxu0 0.0
      %8588 = vmatmul.mubr.f32.gmra.mrb[0].mxu0 %v7340
      %v8589 = vpop.f32.mrb[0].mxu0
      %v8590 = vadd.f32 %v7391, %v8589
      %v8591 = vpop.f32.mrb[0].mxu0
      %8592 = vmatprep.mubr.f32.mxu0 0.0
      %8593 = vmatmul.mubr.f32.gmra.mrb[0].mxu0 %v7341
      %v8594 = vpop.f32.mrb[0].mxu0
      %v8595 = vadd.f32 %v7391, %v8594
      %v8596 = vpop.f32.mrb[0].mxu0
      %8597 = vmatprep.mubr.f32.mxu0 0.0
      %8598 = vmatmul.mubr.f32.gmra.mrb[0].mxu0 %v7342
      %v8599 = vpop.f32.mrb[0].mxu0
      %v8600 = vadd.f32 %v7391, %v8599
      %v8601 = vpop.f32.mrb[0].mxu0
      %8602 = vmatprep.mubr.f32.mxu0 0.0
      %8603 = vmatmul.mubr.f32.gmra.mrb[0].mxu0 %v7343
      %v8604 = vpop.f32.mrb[0].mxu0
      %v8605 = vadd.f32 %v7391, %v8604
      %v8606 = vpop.f32.mrb[0].mxu0
      %8607 = vmatprep.mubr.f32.mxu0 0.0
      %8608 = vmatmul.mubr.f32.gmra.mrb[0].mxu0 %v7344
      %v8609 = vpop.f32.mrb[0].mxu0
      %v8610 = vadd.f32 %v7391, %v8609
      %v8611 = vpop.f32.mrb[0].mxu0
      %8612 = vmatprep.mubr.f32.mxu0 0.0
      %8613 = vmatmul.mubr.f32.gmra.mrb[0].mxu0 %v7345
      %v8614 = vpop.f32.mrb[0].mxu0
      %v8615 = vadd.f32 %v7391, %v8614
      %v8616 = vpop.f32.mrb[0].mxu0
      %8617 = vmatprep.mubr.f32.mxu0 0.0
      %8618 = vmatmul.mubr.f32.gmra.mrb[0].mxu0 %v7346
      %v8619 = vpop.f32.mrb[0].mxu0
      %v8620 = vadd.f32 %v7391, %v8619
      %v8621 = vpop.f32.mrb[0].mxu0
      %8622 = vmatprep.mubr.f32.mxu0 0.0
      %8623 = vmatmul.mubr.f32.gmra.mrb[0].mxu0 %v7347
      %v8624 = vpop.f32.mrb[0].mxu0
      %v8625 = vadd.f32 %v7391, %v8624
      %v8626 = vpop.f32.mrb[0].mxu0
      %8627 = vmatprep.mubr.f32.mxu0 0.0
      %8628 = vmatmul.mubr.f32.gmra.mrb[0].mxu0 %v7348
      %v8629 = vpop.f32.mrb[0].mxu0
      %v8630 = vadd.f32 %v7391, %v8629
      %v8631 = vpop.f32.mrb[0].mxu0
      %8632 = vmatprep.mubr.f32.mxu0 0.0
      %8633 = vmatmul.mubr.f32.gmra.mrb[0].mxu0 %v7349
      %v8634 = vpop.f32.mrb[0].mxu0
      %v8635 = vadd.f32 %v7391, %v8634
      %v8636 = vpop.f32.mrb[0].mxu0
      %8637 = vmatprep.mubr.f32.mxu0 0.0
      %8638 = vmatmul.mubr.f32.gmra.mrb[0].mxu0 %v7350
      %v8639 = vpop.f32.mrb[0].mxu0
      %v8640 = vadd.f32 %v7391, %v8639
      %v8641 = vpop.f32.mrb[0].mxu0
      %8642 = vmatprep.mubr.f32.mxu0 0.0
      %8643 = vmatmul.mubr.f32.gmra.mrb[0].mxu0 %v7351
      %v8644 = vpop.f32.mrb[0].mxu0
      %v8645 = vadd.f32 %v7391, %v8644
      %v8646 = vpop.f32.mrb[0].mxu0
      %8647 = vmatprep.mubr.f32.mxu0 0.0
      %8648 = vmatmul.mubr.f32.gmra.mrb[0].mxu0 %v7352
      %v8649 = vpop.f32.mrb[0].mxu0
      %v8650 = vadd.f32 %v7391, %v8649
      %v8651 = vpop.f32.mrb[0].mxu0
      %8652 = vmatprep.mubr.f32.mxu0 0.0
      %8653 = vmatmul.mubr.f32.gmra.mrb[0].mxu0 %v7353
      %v8654 = vpop.f32.mrb[0].mxu0
      %v8655 = vadd.f32 %v7391, %v8654
      %v8656 = vpop.f32.mrb[0].mxu0
      %8657 = vmatprep.mubr.f32.mxu0 0.0
      %8658 = vmatmul.mubr.f32.gmra.mrb[0].mxu0 %v7354
      %v8659 = vpop.f32.mrb[0].mxu0
      %v8660 = vadd.f32 %v7391, %v8659
      %v8661 = vpop.f32.mrb[0].mxu0
      %8662 = vmatprep.mubr.f32.mxu0 0.0
      %8663 = vmatmul.mubr.f32.gmra.mrb[0].mxu0 %v7355
      %v8664 = vpop.f32.mrb[0].mxu0
      %v8665 = vadd.f32 %v7391, %v8664
      %v8666 = vpop.f32.mrb[0].mxu0
      %8667 = vmatprep.mubr.f32.mxu0 0.0
      %8668 = vmatmul.mubr.f32.gmra.mrb[0].mxu0 %v7356
      %v8669 = vpop.f32.mrb[0].mxu0
      %v8670 = vadd.f32 %v7391, %v8669
      %v8671 = vpop.f32.mrb[0].mxu0
      %8672 = vmatprep.mubr.f32.mxu0 0.0
      %8673 = vmatmul.mubr.f32.gmra.mrb[0].mxu0 %v7357
      %v8674 = vpop.f32.mrb[0].mxu0
      %v8675 = vadd.f32 %v7391, %v8674
      %v8676 = vpop.f32.mrb[0].mxu0
      %8677 = vmatprep.mubr.f32.mxu0 0.0
      %8678 = vmatmul.mubr.f32.gmra.mrb[0].mxu0 %v7358
      %v8679 = vpop.f32.mrb[0].mxu0
      %v8680 = vadd.f32 %v7391, %v8679
      %v8681 = vpop.f32.mrb[0].mxu0
      %8682 = vmatprep.mubr.f32.mxu0 0.0
      %8683 = vmatmul.mubr.f32.gmra.mrb[0].mxu0 %v7359
      %v8684 = vpop.f32.mrb[0].mxu0
      %v8685 = vadd.f32 %v7391, %v8684
      %v8686 = vpop.f32.mrb[0].mxu0
      %8687 = vmatprep.mubr.f32.mxu0 0.0
      %8688 = vmatmul.mubr.f32.gmra.mrb[0].mxu0 %v7360
      %v8689 = vpop.f32.mrb[0].mxu0
      %v8690 = vadd.f32 %v7391, %v8689
      %v8691 = vpop.f32.mrb[0].mxu0
      %8692 = vmatprep.mubr.f32.mxu0 0.0
      %8693 = vmatmul.mubr.f32.gmra.mrb[0].mxu0 %v7361
      %v8694 = vpop.f32.mrb[0].mxu0
      %v8695 = vadd.f32 %v7391, %v8694
      %v8696 = vpop.f32.mrb[0].mxu0
      %8697 = vmatprep.mubr.f32.mxu0 0.0
      %8698 = vmatmul.mubr.f32.gmra.mrb[0].mxu0 %v7362
      %v8699 = vpop.f32.mrb[0].mxu0
      %v8700 = vadd.f32 %v7391, %v8699
      %v8701 = vpop.f32.mrb[0].mxu0
      %8702 = vmatprep.mubr.f32.mxu0 0.0
      %8703 = vmatmul.mubr.f32.gmra.mrb[0].mxu0 %v7363
      %v8704 = vpop.f32.mrb[0].mxu0
      %v8705 = vadd.f32 %v7391, %v8704
      %v8706 = vpop.f32.mrb[0].mxu0
      %8707 = vmatprep.mubr.f32.mxu0 0.0
      %8708 = vmatmul.mubr.f32.gmra.mrb[0].mxu0 %v7364
      %v8709 = vpop.f32.mrb[0].mxu0
      %v8710 = vadd.f32 %v7391, %v8709
      %v8711 = vpop.f32.mrb[0].mxu0
      %8712 = vmatprep.mubr.f32.mxu0 0.0
      %8713 = vmatmul.mubr.f32.gmra.mrb[0].mxu0 %v7365
      %v8714 = vpop.f32.mrb[0].mxu0
      %v8715 = vadd.f32 %v7391, %v8714
      %v8716 = vpop.f32.mrb[0].mxu0
      %8717 = vmatprep.mubr.f32.mxu0 0.0
      %8718 = vmatmul.mubr.f32.gmra.mrb[0].mxu0 %v7366
      %v8719 = vpop.f32.mrb[0].mxu0
      %v8720 = vadd.f32 %v7391, %v8719
      %v8721 = vpop.f32.mrb[0].mxu0
      %8722 = vmatprep.mubr.f32.mxu0 0.0
      %8723 = vmatmul.mubr.f32.gmra.mrb[0].mxu0 %v7367
      %v8724 = vpop.f32.mrb[0].mxu0
      %v8725 = vadd.f32 %v7391, %v8724
      %v8726 = vpop.f32.mrb[0].mxu0
      %8727 = vmatprep.mubr.f32.mxu0 0.0
      %8728 = vmatmul.mubr.f32.gmra.mrb[0].mxu0 %v7368
      %v8729 = vpop.f32.mrb[0].mxu0
      %v8730 = vadd.f32 %v7391, %v8729
      %v8731 = vpop.f32.mrb[0].mxu0
      %8732 = vmatprep.mubr.f32.mxu0 0.0
      %8733 = vmatmul.mubr.f32.gmra.mrb[0].mxu0 %v7369
      %v8734 = vpop.f32.mrb[0].mxu0
      %v8735 = vadd.f32 %v7391, %v8734
      %v8736 = vpop.f32.mrb[0].mxu0
      %8737 = vdwg.mxu0
      %8738 = vst [vmem:[#allocation2] sm:$0xff] %v7460
      %8739 = vst [vmem:[#allocation2 + $0x20] sm:$0xff] %v7465
      %8740 = vst [vmem:[#allocation2 + $0x40] sm:$0xff] %v7470
      %8741 = vst [vmem:[#allocation2 + $0x60] sm:$0xff] %v7475
      %8742 = vst [vmem:[#allocation2 + $0x80] sm:$0xff] %v7480
      %8743 = vst [vmem:[#allocation2 + $0xa0] sm:$0xff] %v7485
      %8744 = vst [vmem:[#allocation2 + $0xc0] sm:$0xff] %v7490
      %8745 = vst [vmem:[#allocation2 + $0xe0] sm:$0xff] %v7495
      %8746 = vst [vmem:[#allocation2 + $0x100] sm:$0xff] %v7500
      %8747 = vst [vmem:[#allocation2 + $0x120] sm:$0xff] %v7505
      %8748 = vst [vmem:[#allocation2 + $0x140] sm:$0xff] %v7510
      %8749 = vst [vmem:[#allocation2 + $0x160] sm:$0xff] %v7515
      %8750 = vst [vmem:[#allocation2 + $0x180] sm:$0xff] %v7520
      %8751 = vst [vmem:[#allocation2 + $0x1a0] sm:$0xff] %v7525
      %8752 = vst [vmem:[#allocation2 + $0x1c0] sm:$0xff] %v7530
      %8753 = vst [vmem:[#allocation2 + $0x1e0] sm:$0xff] %v7535
      %8754 = vst [vmem:[#allocation2 + $0x200] sm:$0xff] %v7540
      %8755 = vst [vmem:[#allocation2 + $0x220] sm:$0xff] %v7545
      %8756 = vst [vmem:[#allocation2 + $0x240] sm:$0xff] %v7550
      %8757 = vst [vmem:[#allocation2 + $0x260] sm:$0xff] %v7555
      %8758 = vst [vmem:[#allocation2 + $0x280] sm:$0xff] %v7560
      %8759 = vst [vmem:[#allocation2 + $0x2a0] sm:$0xff] %v7565
      %8760 = vst [vmem:[#allocation2 + $0x2c0] sm:$0xff] %v7570
      %8761 = vst [vmem:[#allocation2 + $0x2e0] sm:$0xff] %v7575
      %8762 = vst [vmem:[#allocation2 + $0x300] sm:$0xff] %v7580
      %8763 = vst [vmem:[#allocation2 + $0x320] sm:$0xff] %v7585
      %8764 = vst [vmem:[#allocation2 + $0x340] sm:$0xff] %v7590
      %8765 = vst [vmem:[#allocation2 + $0x360] sm:$0xff] %v7595
      %8766 = vst [vmem:[#allocation2 + $0x380] sm:$0xff] %v7600
      %8767 = vst [vmem:[#allocation2 + $0x3a0] sm:$0xff] %v7605
      %8768 = vst [vmem:[#allocation2 + $0x3c0] sm:$0xff] %v7610
      %8769 = vst [vmem:[#allocation2 + $0x3e0] sm:$0xff] %v7615
      %8770 = vst [vmem:[#allocation2 + $0x400] sm:$0xff] %v7620
      %8771 = vst [vmem:[#allocation2 + $0x420] sm:$0xff] %v7625
      %8772 = vst [vmem:[#allocation2 + $0x440] sm:$0xff] %v7630
      %8773 = vst [vmem:[#allocation2 + $0x460] sm:$0xff] %v7635
      %8774 = vst [vmem:[#allocation2 + $0x480] sm:$0xff] %v7640
      %8775 = vst [vmem:[#allocation2 + $0x4a0] sm:$0xff] %v7645
      %8776 = vst [vmem:[#allocation2 + $0x4c0] sm:$0xff] %v7650
      %8777 = vst [vmem:[#allocation2 + $0x4e0] sm:$0xff] %v7655
      %8778 = vst [vmem:[#allocation2 + $0x500] sm:$0xff] %v7660
      %8779 = vst [vmem:[#allocation2 + $0x520] sm:$0xff] %v7665
      %8780 = vst [vmem:[#allocation2 + $0x540] sm:$0xff] %v7670
      %8781 = vst [vmem:[#allocation2 + $0x560] sm:$0xff] %v7675
      %8782 = vst [vmem:[#allocation2 + $0x580] sm:$0xff] %v7680
      %8783 = vst [vmem:[#allocation2 + $0x5a0] sm:$0xff] %v7685
      %8784 = vst [vmem:[#allocation2 + $0x5c0] sm:$0xff] %v7690
      %8785 = vst [vmem:[#allocation2 + $0x5e0] sm:$0xff] %v7695
      %8786 = vst [vmem:[#allocation2 + $0x600] sm:$0xff] %v7700
      %8787 = vst [vmem:[#allocation2 + $0x620] sm:$0xff] %v7705
      %8788 = vst [vmem:[#allocation2 + $0x640] sm:$0xff] %v7710
      %8789 = vst [vmem:[#allocation2 + $0x660] sm:$0xff] %v7715
      %8790 = vst [vmem:[#allocation2 + $0x680] sm:$0xff] %v7720
      %8791 = vst [vmem:[#allocation2 + $0x6a0] sm:$0xff] %v7725
      %8792 = vst [vmem:[#allocation2 + $0x6c0] sm:$0xff] %v7730
      %8793 = vst [vmem:[#allocation2 + $0x6e0] sm:$0xff] %v7735
      %8794 = vst [vmem:[#allocation2 + $0x700] sm:$0xff] %v7740
      %8795 = vst [vmem:[#allocation2 + $0x720] sm:$0xff] %v7745
      %8796 = vst [vmem:[#allocation2 + $0x740] sm:$0xff] %v7750
      %8797 = vst [vmem:[#allocation2 + $0x760] sm:$0xff] %v7755
      %8798 = vst [vmem:[#allocation2 + $0x780] sm:$0xff] %v7760
      %8799 = vst [vmem:[#allocation2 + $0x7a0] sm:$0xff] %v7765
      %8800 = vst [vmem:[#allocation2 + $0x7c0] sm:$0xff] %v7770
      %8801 = vst [vmem:[#allocation2 + $0x7e0] sm:$0xff] %v7775
      %8802 = vst [vmem:[#allocation2 + $0x8] sm:$0xff] %v7780
      %8803 = vst [vmem:[#allocation2 + $0x28] sm:$0xff] %v7785
      %8804 = vst [vmem:[#allocation2 + $0x48] sm:$0xff] %v7790
      %8805 = vst [vmem:[#allocation2 + $0x68] sm:$0xff] %v7795
      %8806 = vst [vmem:[#allocation2 + $0x88] sm:$0xff] %v7800
      %8807 = vst [vmem:[#allocation2 + $0xa8] sm:$0xff] %v7805
      %8808 = vst [vmem:[#allocation2 + $0xc8] sm:$0xff] %v7810
      %8809 = vst [vmem:[#allocation2 + $0xe8] sm:$0xff] %v7815
      %8810 = vst [vmem:[#allocation2 + $0x108] sm:$0xff] %v7820
      %8811 = vst [vmem:[#allocation2 + $0x128] sm:$0xff] %v7825
      %8812 = vst [vmem:[#allocation2 + $0x148] sm:$0xff] %v7830
      %8813 = vst [vmem:[#allocation2 + $0x168] sm:$0xff] %v7835
      %8814 = vst [vmem:[#allocation2 + $0x188] sm:$0xff] %v7840
      %8815 = vst [vmem:[#allocation2 + $0x1a8] sm:$0xff] %v7845
      %8816 = vst [vmem:[#allocation2 + $0x1c8] sm:$0xff] %v7850
      %8817 = vst [vmem:[#allocation2 + $0x1e8] sm:$0xff] %v7855
      %8818 = vst [vmem:[#allocation2 + $0x208] sm:$0xff] %v7860
      %8819 = vst [vmem:[#allocation2 + $0x228] sm:$0xff] %v7865
      %8820 = vst [vmem:[#allocation2 + $0x248] sm:$0xff] %v7870
      %8821 = vst [vmem:[#allocation2 + $0x268] sm:$0xff] %v7875
      %8822 = vst [vmem:[#allocation2 + $0x288] sm:$0xff] %v7880
      %8823 = vst [vmem:[#allocation2 + $0x2a8] sm:$0xff] %v7885
      %8824 = vst [vmem:[#allocation2 + $0x2c8] sm:$0xff] %v7890
      %8825 = vst [vmem:[#allocation2 + $0x2e8] sm:$0xff] %v7895
      %8826 = vst [vmem:[#allocation2 + $0x308] sm:$0xff] %v7900
      %8827 = vst [vmem:[#allocation2 + $0x328] sm:$0xff] %v7905
      %8828 = vst [vmem:[#allocation2 + $0x348] sm:$0xff] %v7910
      %8829 = vst [vmem:[#allocation2 + $0x368] sm:$0xff] %v7915
      %8830 = vst [vmem:[#allocation2 + $0x388] sm:$0xff] %v7920
      %8831 = vst [vmem:[#allocation2 + $0x3a8] sm:$0xff] %v7925
      %8832 = vst [vmem:[#allocation2 + $0x3c8] sm:$0xff] %v7930
      %8833 = vst [vmem:[#allocation2 + $0x3e8] sm:$0xff] %v7935
      %8834 = vst [vmem:[#allocation2 + $0x408] sm:$0xff] %v7940
      %8835 = vst [vmem:[#allocation2 + $0x428] sm:$0xff] %v7945
      %8836 = vst [vmem:[#allocation2 + $0x448] sm:$0xff] %v7950
      %8837 = vst [vmem:[#allocation2 + $0x468] sm:$0xff] %v7955
      %8838 = vst [vmem:[#allocation2 + $0x488] sm:$0xff] %v7960
      %8839 = vst [vmem:[#allocation2 + $0x4a8] sm:$0xff] %v7965
      %8840 = vst [vmem:[#allocation2 + $0x4c8] sm:$0xff] %v7970
      %8841 = vst [vmem:[#allocation2 + $0x4e8] sm:$0xff] %v7975
      %8842 = vst [vmem:[#allocation2 + $0x508] sm:$0xff] %v7980
      %8843 = vst [vmem:[#allocation2 + $0x528] sm:$0xff] %v7985
      %8844 = vst [vmem:[#allocation2 + $0x548] sm:$0xff] %v7990
      %8845 = vst [vmem:[#allocation2 + $0x568] sm:$0xff] %v7995
      %8846 = vst [vmem:[#allocation2 + $0x588] sm:$0xff] %v8000
      %8847 = vst [vmem:[#allocation2 + $0x5a8] sm:$0xff] %v8005
      %8848 = vst [vmem:[#allocation2 + $0x5c8] sm:$0xff] %v8010
      %8849 = vst [vmem:[#allocation2 + $0x5e8] sm:$0xff] %v8015
      %8850 = vst [vmem:[#allocation2 + $0x608] sm:$0xff] %v8020
      %8851 = vst [vmem:[#allocation2 + $0x628] sm:$0xff] %v8025
      %8852 = vst [vmem:[#allocation2 + $0x648] sm:$0xff] %v8030
      %8853 = vst [vmem:[#allocation2 + $0x668] sm:$0xff] %v8035
      %8854 = vst [vmem:[#allocation2 + $0x688] sm:$0xff] %v8040
      %8855 = vst [vmem:[#allocation2 + $0x6a8] sm:$0xff] %v8045
      %8856 = vst [vmem:[#allocation2 + $0x6c8] sm:$0xff] %v8050
      %8857 = vst [vmem:[#allocation2 + $0x6e8] sm:$0xff] %v8055
      %8858 = vst [vmem:[#allocation2 + $0x708] sm:$0xff] %v8060
      %8859 = vst [vmem:[#allocation2 + $0x728] sm:$0xff] %v8065
      %8860 = vst [vmem:[#allocation2 + $0x748] sm:$0xff] %v8070
      %8861 = vst [vmem:[#allocation2 + $0x768] sm:$0xff] %v8075
      %8862 = vst [vmem:[#allocation2 + $0x788] sm:$0xff] %v8080
      %8863 = vst [vmem:[#allocation2 + $0x7a8] sm:$0xff] %v8085
      %8864 = vst [vmem:[#allocation2 + $0x7c8] sm:$0xff] %v8090
      %8865 = vst [vmem:[#allocation2 + $0x7e8] sm:$0xff] %v8095
      %8866 = vst [vmem:[#allocation2 + $0x10] sm:$0xff] %v8100
      %8867 = vst [vmem:[#allocation2 + $0x30] sm:$0xff] %v8105
      %8868 = vst [vmem:[#allocation2 + $0x50] sm:$0xff] %v8110
      %8869 = vst [vmem:[#allocation2 + $0x70] sm:$0xff] %v8115
      %8870 = vst [vmem:[#allocation2 + $0x90] sm:$0xff] %v8120
      %8871 = vst [vmem:[#allocation2 + $0xb0] sm:$0xff] %v8125
      %8872 = vst [vmem:[#allocation2 + $0xd0] sm:$0xff] %v8130
      %8873 = vst [vmem:[#allocation2 + $0xf0] sm:$0xff] %v8135
      %8874 = vst [vmem:[#allocation2 + $0x110] sm:$0xff] %v8140
      %8875 = vst [vmem:[#allocation2 + $0x130] sm:$0xff] %v8145
      %8876 = vst [vmem:[#allocation2 + $0x150] sm:$0xff] %v8150
      %8877 = vst [vmem:[#allocation2 + $0x170] sm:$0xff] %v8155
      %8878 = vst [vmem:[#allocation2 + $0x190] sm:$0xff] %v8160
      %8879 = vst [vmem:[#allocation2 + $0x1b0] sm:$0xff] %v8165
      %8880 = vst [vmem:[#allocation2 + $0x1d0] sm:$0xff] %v8170
      %8881 = vst [vmem:[#allocation2 + $0x1f0] sm:$0xff] %v8175
      %8882 = vst [vmem:[#allocation2 + $0x210] sm:$0xff] %v8180
      %8883 = vst [vmem:[#allocation2 + $0x230] sm:$0xff] %v8185
      %8884 = vst [vmem:[#allocation2 + $0x250] sm:$0xff] %v8190
      %8885 = vst [vmem:[#allocation2 + $0x270] sm:$0xff] %v8195
      %8886 = vst [vmem:[#allocation2 + $0x290] sm:$0xff] %v8200
      %8887 = vst [vmem:[#allocation2 + $0x2b0] sm:$0xff] %v8205
      %8888 = vst [vmem:[#allocation2 + $0x2d0] sm:$0xff] %v8210
      %8889 = vst [vmem:[#allocation2 + $0x2f0] sm:$0xff] %v8215
      %8890 = vst [vmem:[#allocation2 + $0x310] sm:$0xff] %v8220
      %8891 = vst [vmem:[#allocation2 + $0x330] sm:$0xff] %v8225
      %8892 = vst [vmem:[#allocation2 + $0x350] sm:$0xff] %v8230
      %8893 = vst [vmem:[#allocation2 + $0x370] sm:$0xff] %v8235
      %8894 = vst [vmem:[#allocation2 + $0x390] sm:$0xff] %v8240
      %8895 = vst [vmem:[#allocation2 + $0x3b0] sm:$0xff] %v8245
      %8896 = vst [vmem:[#allocation2 + $0x3d0] sm:$0xff] %v8250
      %8897 = vst [vmem:[#allocation2 + $0x3f0] sm:$0xff] %v8255
      %8898 = vst [vmem:[#allocation2 + $0x410] sm:$0xff] %v8260
      %8899 = vst [vmem:[#allocation2 + $0x430] sm:$0xff] %v8265
      %8900 = vst [vmem:[#allocation2 + $0x450] sm:$0xff] %v8270
      %8901 = vst [vmem:[#allocation2 + $0x470] sm:$0xff] %v8275
      %8902 = vst [vmem:[#allocation2 + $0x490] sm:$0xff] %v8280
      %8903 = vst [vmem:[#allocation2 + $0x4b0] sm:$0xff] %v8285
      %8904 = vst [vmem:[#allocation2 + $0x4d0] sm:$0xff] %v8290
      %8905 = vst [vmem:[#allocation2 + $0x4f0] sm:$0xff] %v8295
      %8906 = vst [vmem:[#allocation2 + $0x510] sm:$0xff] %v8300
      %8907 = vst [vmem:[#allocation2 + $0x530] sm:$0xff] %v8305
      %8908 = vst [vmem:[#allocation2 + $0x550] sm:$0xff] %v8310
      %8909 = vst [vmem:[#allocation2 + $0x570] sm:$0xff] %v8315
      %8910 = vst [vmem:[#allocation2 + $0x590] sm:$0xff] %v8320
      %8911 = vst [vmem:[#allocation2 + $0x5b0] sm:$0xff] %v8325
      %8912 = vst [vmem:[#allocation2 + $0x5d0] sm:$0xff] %v8330
      %8913 = vst [vmem:[#allocation2 + $0x5f0] sm:$0xff] %v8335
      %8914 = vst [vmem:[#allocation2 + $0x610] sm:$0xff] %v8340
      %8915 = vst [vmem:[#allocation2 + $0x630] sm:$0xff] %v8345
      %8916 = vst [vmem:[#allocation2 + $0x650] sm:$0xff] %v8350
      %8917 = vst [vmem:[#allocation2 + $0x670] sm:$0xff] %v8355
      %8918 = vst [vmem:[#allocation2 + $0x690] sm:$0xff] %v8360
      %8919 = vst [vmem:[#allocation2 + $0x6b0] sm:$0xff] %v8365
      %8920 = vst [vmem:[#allocation2 + $0x6d0] sm:$0xff] %v8370
      %8921 = vst [vmem:[#allocation2 + $0x6f0] sm:$0xff] %v8375
      %8922 = vst [vmem:[#allocation2 + $0x710] sm:$0xff] %v8380
      %8923 = vst [vmem:[#allocation2 + $0x730] sm:$0xff] %v8385
      %8924 = vst [vmem:[#allocation2 + $0x750] sm:$0xff] %v8390
      %8925 = vst [vmem:[#allocation2 + $0x770] sm:$0xff] %v8395
      %8926 = vst [vmem:[#allocation2 + $0x790] sm:$0xff] %v8400
      %8927 = vst [vmem:[#allocation2 + $0x7b0] sm:$0xff] %v8405
      %8928 = vst [vmem:[#allocation2 + $0x7d0] sm:$0xff] %v8410
      %8929 = vst [vmem:[#allocation2 + $0x7f0] sm:$0xff] %v8415
      %8930 = vst [vmem:[#allocation2 + $0x18] sm:$0xff] %v8420
      %8931 = vst [vmem:[#allocation2 + $0x38] sm:$0xff] %v8425
      %8932 = vst [vmem:[#allocation2 + $0x58] sm:$0xff] %v8430
      %8933 = vst [vmem:[#allocation2 + $0x78] sm:$0xff] %v8435
      %8934 = vst [vmem:[#allocation2 + $0x98] sm:$0xff] %v8440
      %8935 = vst [vmem:[#allocation2 + $0xb8] sm:$0xff] %v8445
      %8936 = vst [vmem:[#allocation2 + $0xd8] sm:$0xff] %v8450
      %8937 = vst [vmem:[#allocation2 + $0xf8] sm:$0xff] %v8455
      %8938 = vst [vmem:[#allocation2 + $0x118] sm:$0xff] %v8460
      %8939 = vst [vmem:[#allocation2 + $0x138] sm:$0xff] %v8465
      %8940 = vst [vmem:[#allocation2 + $0x158] sm:$0xff] %v8470
      %8941 = vst [vmem:[#allocation2 + $0x178] sm:$0xff] %v8475
      %8942 = vst [vmem:[#allocation2 + $0x198] sm:$0xff] %v8480
      %8943 = vst [vmem:[#allocation2 + $0x1b8] sm:$0xff] %v8485
      %8944 = vst [vmem:[#allocation2 + $0x1d8] sm:$0xff] %v8490
      %8945 = vst [vmem:[#allocation2 + $0x1f8] sm:$0xff] %v8495
      %8946 = vst [vmem:[#allocation2 + $0x218] sm:$0xff] %v8500
      %8947 = vst [vmem:[#allocation2 + $0x238] sm:$0xff] %v8505
      %8948 = vst [vmem:[#allocation2 + $0x258] sm:$0xff] %v8510
      %8949 = vst [vmem:[#allocation2 + $0x278] sm:$0xff] %v8515
      %8950 = vst [vmem:[#allocation2 + $0x298] sm:$0xff] %v8520
      %8951 = vst [vmem:[#allocation2 + $0x2b8] sm:$0xff] %v8525
      %8952 = vst [vmem:[#allocation2 + $0x2d8] sm:$0xff] %v8530
      %8953 = vst [vmem:[#allocation2 + $0x2f8] sm:$0xff] %v8535
      %8954 = vst [vmem:[#allocation2 + $0x318] sm:$0xff] %v8540
      %8955 = vst [vmem:[#allocation2 + $0x338] sm:$0xff] %v8545
      %8956 = vst [vmem:[#allocation2 + $0x358] sm:$0xff] %v8550
      %8957 = vst [vmem:[#allocation2 + $0x378] sm:$0xff] %v8555
      %8958 = vst [vmem:[#allocation2 + $0x398] sm:$0xff] %v8560
      %8959 = vst [vmem:[#allocation2 + $0x3b8] sm:$0xff] %v8565
      %8960 = vst [vmem:[#allocation2 + $0x3d8] sm:$0xff] %v8570
      %8961 = vst [vmem:[#allocation2 + $0x3f8] sm:$0xff] %v8575
      %8962 = vst [vmem:[#allocation2 + $0x418] sm:$0xff] %v8580
      %8963 = vst [vmem:[#allocation2 + $0x438] sm:$0xff] %v8585
      %8964 = vst [vmem:[#allocation2 + $0x458] sm:$0xff] %v8590
      %8965 = vst [vmem:[#allocation2 + $0x478] sm:$0xff] %v8595
      %8966 = vst [vmem:[#allocation2 + $0x498] sm:$0xff] %v8600
      %8967 = vst [vmem:[#allocation2 + $0x4b8] sm:$0xff] %v8605
      %8968 = vst [vmem:[#allocation2 + $0x4d8] sm:$0xff] %v8610
      %8969 = vst [vmem:[#allocation2 + $0x4f8] sm:$0xff] %v8615
      %8970 = vst [vmem:[#allocation2 + $0x518] sm:$0xff] %v8620
      %8971 = vst [vmem:[#allocation2 + $0x538] sm:$0xff] %v8625
      %8972 = vst [vmem:[#allocation2 + $0x558] sm:$0xff] %v8630
      %8973 = vst [vmem:[#allocation2 + $0x578] sm:$0xff] %v8635
      %8974 = vst [vmem:[#allocation2 + $0x598] sm:$0xff] %v8640
      %8975 = vst [vmem:[#allocation2 + $0x5b8] sm:$0xff] %v8645
      %8976 = vst [vmem:[#allocation2 + $0x5d8] sm:$0xff] %v8650
      %8977 = vst [vmem:[#allocation2 + $0x5f8] sm:$0xff] %v8655
      %8978 = vst [vmem:[#allocation2 + $0x618] sm:$0xff] %v8660
      %8979 = vst [vmem:[#allocation2 + $0x638] sm:$0xff] %v8665
      %8980 = vst [vmem:[#allocation2 + $0x658] sm:$0xff] %v8670
      %8981 = vst [vmem:[#allocation2 + $0x678] sm:$0xff] %v8675
      %8982 = vst [vmem:[#allocation2 + $0x698] sm:$0xff] %v8680
      %8983 = vst [vmem:[#allocation2 + $0x6b8] sm:$0xff] %v8685
      %8984 = vst [vmem:[#allocation2 + $0x6d8] sm:$0xff] %v8690
      %8985 = vst [vmem:[#allocation2 + $0x6f8] sm:$0xff] %v8695
      %8986 = vst [vmem:[#allocation2 + $0x718] sm:$0xff] %v8700
      %8987 = vst [vmem:[#allocation2 + $0x738] sm:$0xff] %v8705
      %8988 = vst [vmem:[#allocation2 + $0x758] sm:$0xff] %v8710
      %8989 = vst [vmem:[#allocation2 + $0x778] sm:$0xff] %v8715
      %8990 = vst [vmem:[#allocation2 + $0x798] sm:$0xff] %v8720
      %8991 = vst [vmem:[#allocation2 + $0x7b8] sm:$0xff] %v8725
      %8992 = vst [vmem:[#allocation2 + $0x7d8] sm:$0xff] %v8730
      %8993 = vst [vmem:[#allocation2 + $0x7f8] sm:$0xff] %v8735
    $region41: #{tpu_custom_call.1} parent=1 // pred_fallthru
      _
    %v8994 = vld [vmem:[#allocation2] sm:$0xff]
    %v8995 = vld [vmem:[#allocation2 + $0x8] sm:$0xff]
    %v8996 = vld [vmem:[#allocation2 + $0x10] sm:$0xff]
    %v8997 = vld [vmem:[#allocation2 + $0x18] sm:$0xff]
    %v8998 = vld [vmem:[#allocation2 + $0x20] sm:$0xff]
    %v8999 = vld [vmem:[#allocation2 + $0x28] sm:$0xff]
    %v9000 = vld [vmem:[#allocation2 + $0x30] sm:$0xff]
    %v9001 = vld [vmem:[#allocation2 + $0x38] sm:$0xff]
    %v9002 = vld [vmem:[#allocation2 + $0x40] sm:$0xff]
    %v9003 = vld [vmem:[#allocation2 + $0x48] sm:$0xff]
    %v9004 = vld [vmem:[#allocation2 + $0x50] sm:$0xff]
    %v9005 = vld [vmem:[#allocation2 + $0x58] sm:$0xff]
    %v9006 = vld [vmem:[#allocation2 + $0x60] sm:$0xff]
    %v9007 = vld [vmem:[#allocation2 + $0x68] sm:$0xff]
    %v9008 = vld [vmem:[#allocation2 + $0x70] sm:$0xff]
    %v9009 = vld [vmem:[#allocation2 + $0x78] sm:$0xff]
    %v9010 = vld [vmem:[#allocation2 + $0x80] sm:$0xff]
    %v9011 = vld [vmem:[#allocation2 + $0x88] sm:$0xff]
    %v9012 = vld [vmem:[#allocation2 + $0x90] sm:$0xff]
    %v9013 = vld [vmem:[#allocation2 + $0x98] sm:$0xff]
    %v9014 = vld [vmem:[#allocation2 + $0xa0] sm:$0xff]
    %v9015 = vld [vmem:[#allocation2 + $0xa8] sm:$0xff]
    %v9016 = vld [vmem:[#allocation2 + $0xb0] sm:$0xff]
    %v9017 = vld [vmem:[#allocation2 + $0xb8] sm:$0xff]
    %v9018 = vld [vmem:[#allocation2 + $0xc0] sm:$0xff]
    %v9019 = vld [vmem:[#allocation2 + $0xc8] sm:$0xff]
    %v9020 = vld [vmem:[#allocation2 + $0xd0] sm:$0xff]
    %v9021 = vld [vmem:[#allocation2 + $0xd8] sm:$0xff]
    %v9022 = vld [vmem:[#allocation2 + $0xe0] sm:$0xff]
    %v9023 = vld [vmem:[#allocation2 + $0xe8] sm:$0xff]
    %v9024 = vld [vmem:[#allocation2 + $0xf0] sm:$0xff]
    %v9025 = vld [vmem:[#allocation2 + $0xf8] sm:$0xff]
    %v9026 = vld [vmem:[#allocation2 + $0x100] sm:$0xff]
    %v9027 = vld [vmem:[#allocation2 + $0x108] sm:$0xff]
    %v9028 = vld [vmem:[#allocation2 + $0x110] sm:$0xff]
    %v9029 = vld [vmem:[#allocation2 + $0x118] sm:$0xff]
    %v9030 = vld [vmem:[#allocation2 + $0x120] sm:$0xff]
    %v9031 = vld [vmem:[#allocation2 + $0x128] sm:$0xff]
    %v9032 = vld [vmem:[#allocation2 + $0x130] sm:$0xff]
    %v9033 = vld [vmem:[#allocation2 + $0x138] sm:$0xff]
    %v9034 = vld [vmem:[#allocation2 + $0x140] sm:$0xff]
    %v9035 = vld [vmem:[#allocation2 + $0x148] sm:$0xff]
    %v9036 = vld [vmem:[#allocation2 + $0x150] sm:$0xff]
    %v9037 = vld [vmem:[#allocation2 + $0x158] sm:$0xff]
    %v9038 = vld [vmem:[#allocation2 + $0x160] sm:$0xff]
    %v9039 = vld [vmem:[#allocation2 + $0x168] sm:$0xff]
    %v9040 = vld [vmem:[#allocation2 + $0x170] sm:$0xff]
    %v9041 = vld [vmem:[#allocation2 + $0x178] sm:$0xff]
    %v9042 = vld [vmem:[#allocation2 + $0x180] sm:$0xff]
    %v9043 = vld [vmem:[#allocation2 + $0x188] sm:$0xff]
    %v9044 = vld [vmem:[#allocation2 + $0x190] sm:$0xff]
    %v9045 = vld [vmem:[#allocation2 + $0x198] sm:$0xff]
    %v9046 = vld [vmem:[#allocation2 + $0x1a0] sm:$0xff]
    %v9047 = vld [vmem:[#allocation2 + $0x1a8] sm:$0xff]
    %v9048 = vld [vmem:[#allocation2 + $0x1b0] sm:$0xff]
    %v9049 = vld [vmem:[#allocation2 + $0x1b8] sm:$0xff]
    %v9050 = vld [vmem:[#allocation2 + $0x1c0] sm:$0xff]
    %v9051 = vld [vmem:[#allocation2 + $0x1c8] sm:$0xff]
    %v9052 = vld [vmem:[#allocation2 + $0x1d0] sm:$0xff]
    %v9053 = vld [vmem:[#allocation2 + $0x1d8] sm:$0xff]
    %v9054 = vld [vmem:[#allocation2 + $0x1e0] sm:$0xff]
    %v9055 = vld [vmem:[#allocation2 + $0x1e8] sm:$0xff]
    %v9056 = vld [vmem:[#allocation2 + $0x1f0] sm:$0xff]
    %v9057 = vld [vmem:[#allocation2 + $0x1f8] sm:$0xff]
    %v9058 = vld [vmem:[#allocation2 + $0x200] sm:$0xff]
    %v9059 = vld [vmem:[#allocation2 + $0x208] sm:$0xff]
    %v9060 = vld [vmem:[#allocation2 + $0x210] sm:$0xff]
    %v9061 = vld [vmem:[#allocation2 + $0x218] sm:$0xff]
    %v9062 = vld [vmem:[#allocation2 + $0x220] sm:$0xff]
    %v9063 = vld [vmem:[#allocation2 + $0x228] sm:$0xff]
    %v9064 = vld [vmem:[#allocation2 + $0x230] sm:$0xff]
    %v9065 = vld [vmem:[#allocation2 + $0x238] sm:$0xff]
    %v9066 = vld [vmem:[#allocation2 + $0x240] sm:$0xff]
    %v9067 = vld [vmem:[#allocation2 + $0x248] sm:$0xff]
    %v9068 = vld [vmem:[#allocation2 + $0x250] sm:$0xff]
    %v9069 = vld [vmem:[#allocation2 + $0x258] sm:$0xff]
    %v9070 = vld [vmem:[#allocation2 + $0x260] sm:$0xff]
    %v9071 = vld [vmem:[#allocation2 + $0x268] sm:$0xff]
    %v9072 = vld [vmem:[#allocation2 + $0x270] sm:$0xff]
    %v9073 = vld [vmem:[#allocation2 + $0x278] sm:$0xff]
    %v9074 = vld [vmem:[#allocation2 + $0x280] sm:$0xff]
    %v9075 = vld [vmem:[#allocation2 + $0x288] sm:$0xff]
    %v9076 = vld [vmem:[#allocation2 + $0x290] sm:$0xff]
    %v9077 = vld [vmem:[#allocation2 + $0x298] sm:$0xff]
    %v9078 = vld [vmem:[#allocation2 + $0x2a0] sm:$0xff]
    %v9079 = vld [vmem:[#allocation2 + $0x2a8] sm:$0xff]
    %v9080 = vld [vmem:[#allocation2 + $0x2b0] sm:$0xff]
    %v9081 = vld [vmem:[#allocation2 + $0x2b8] sm:$0xff]
    %v9082 = vld [vmem:[#allocation2 + $0x2c0] sm:$0xff]
    %v9083 = vld [vmem:[#allocation2 + $0x2c8] sm:$0xff]
    %v9084 = vld [vmem:[#allocation2 + $0x2d0] sm:$0xff]
    %v9085 = vld [vmem:[#allocation2 + $0x2d8] sm:$0xff]
    %v9086 = vld [vmem:[#allocation2 + $0x2e0] sm:$0xff]
    %v9087 = vld [vmem:[#allocation2 + $0x2e8] sm:$0xff]
    %v9088 = vld [vmem:[#allocation2 + $0x2f0] sm:$0xff]
    %v9089 = vld [vmem:[#allocation2 + $0x2f8] sm:$0xff]
    %v9090 = vld [vmem:[#allocation2 + $0x300] sm:$0xff]
    %v9091 = vld [vmem:[#allocation2 + $0x308] sm:$0xff]
    %v9092 = vld [vmem:[#allocation2 + $0x310] sm:$0xff]
    %v9093 = vld [vmem:[#allocation2 + $0x318] sm:$0xff]
    %v9094 = vld [vmem:[#allocation2 + $0x320] sm:$0xff]
    %v9095 = vld [vmem:[#allocation2 + $0x328] sm:$0xff]
    %v9096 = vld [vmem:[#allocation2 + $0x330] sm:$0xff]
    %v9097 = vld [vmem:[#allocation2 + $0x338] sm:$0xff]
    %v9098 = vld [vmem:[#allocation2 + $0x340] sm:$0xff]
    %v9099 = vld [vmem:[#allocation2 + $0x348] sm:$0xff]
    %v9100 = vld [vmem:[#allocation2 + $0x350] sm:$0xff]
    %v9101 = vld [vmem:[#allocation2 + $0x358] sm:$0xff]
    %v9102 = vld [vmem:[#allocation2 + $0x360] sm:$0xff]
    %v9103 = vld [vmem:[#allocation2 + $0x368] sm:$0xff]
    %v9104 = vld [vmem:[#allocation2 + $0x370] sm:$0xff]
    %v9105 = vld [vmem:[#allocation2 + $0x378] sm:$0xff]
    %v9106 = vld [vmem:[#allocation2 + $0x380] sm:$0xff]
    %v9107 = vld [vmem:[#allocation2 + $0x388] sm:$0xff]
    %v9108 = vld [vmem:[#allocation2 + $0x390] sm:$0xff]
    %v9109 = vld [vmem:[#allocation2 + $0x398] sm:$0xff]
    %v9110 = vld [vmem:[#allocation2 + $0x3a0] sm:$0xff]
    %v9111 = vld [vmem:[#allocation2 + $0x3a8] sm:$0xff]
    %v9112 = vld [vmem:[#allocation2 + $0x3b0] sm:$0xff]
    %v9113 = vld [vmem:[#allocation2 + $0x3b8] sm:$0xff]
    %v9114 = vld [vmem:[#allocation2 + $0x3c0] sm:$0xff]
    %v9115 = vld [vmem:[#allocation2 + $0x3c8] sm:$0xff]
    %v9116 = vld [vmem:[#allocation2 + $0x3d0] sm:$0xff]
    %v9117 = vld [vmem:[#allocation2 + $0x3d8] sm:$0xff]
    %v9118 = vld [vmem:[#allocation2 + $0x3e0] sm:$0xff]
    %v9119 = vld [vmem:[#allocation2 + $0x3e8] sm:$0xff]
    %v9120 = vld [vmem:[#allocation2 + $0x3f0] sm:$0xff]
    %v9121 = vld [vmem:[#allocation2 + $0x3f8] sm:$0xff]
    %v9122 = vld [vmem:[#allocation2 + $0x400] sm:$0xff]
    %v9123 = vld [vmem:[#allocation2 + $0x408] sm:$0xff]
    %v9124 = vld [vmem:[#allocation2 + $0x410] sm:$0xff]
    %v9125 = vld [vmem:[#allocation2 + $0x418] sm:$0xff]
    %v9126 = vld [vmem:[#allocation2 + $0x420] sm:$0xff]
    %v9127 = vld [vmem:[#allocation2 + $0x428] sm:$0xff]
    %v9128 = vld [vmem:[#allocation2 + $0x430] sm:$0xff]
    %v9129 = vld [vmem:[#allocation2 + $0x438] sm:$0xff]
    %v9130 = vld [vmem:[#allocation2 + $0x440] sm:$0xff]
    %v9131 = vld [vmem:[#allocation2 + $0x448] sm:$0xff]
    %v9132 = vld [vmem:[#allocation2 + $0x450] sm:$0xff]
    %v9133 = vld [vmem:[#allocation2 + $0x458] sm:$0xff]
    %v9134 = vld [vmem:[#allocation2 + $0x460] sm:$0xff]
    %v9135 = vld [vmem:[#allocation2 + $0x468] sm:$0xff]
    %v9136 = vld [vmem:[#allocation2 + $0x470] sm:$0xff]
    %v9137 = vld [vmem:[#allocation2 + $0x478] sm:$0xff]
    %v9138 = vld [vmem:[#allocation2 + $0x480] sm:$0xff]
    %v9139 = vld [vmem:[#allocation2 + $0x488] sm:$0xff]
    %v9140 = vld [vmem:[#allocation2 + $0x490] sm:$0xff]
    %v9141 = vld [vmem:[#allocation2 + $0x498] sm:$0xff]
    %v9142 = vld [vmem:[#allocation2 + $0x4a0] sm:$0xff]
    %v9143 = vld [vmem:[#allocation2 + $0x4a8] sm:$0xff]
    %v9144 = vld [vmem:[#allocation2 + $0x4b0] sm:$0xff]
    %v9145 = vld [vmem:[#allocation2 + $0x4b8] sm:$0xff]
    %v9146 = vld [vmem:[#allocation2 + $0x4c0] sm:$0xff]
    %v9147 = vld [vmem:[#allocation2 + $0x4c8] sm:$0xff]
    %v9148 = vld [vmem:[#allocation2 + $0x4d0] sm:$0xff]
    %v9149 = vld [vmem:[#allocation2 + $0x4d8] sm:$0xff]
    %v9150 = vld [vmem:[#allocation2 + $0x4e0] sm:$0xff]
    %v9151 = vld [vmem:[#allocation2 + $0x4e8] sm:$0xff]
    %v9152 = vld [vmem:[#allocation2 + $0x4f0] sm:$0xff]
    %v9153 = vld [vmem:[#allocation2 + $0x4f8] sm:$0xff]
    %v9154 = vld [vmem:[#allocation2 + $0x500] sm:$0xff]
    %v9155 = vld [vmem:[#allocation2 + $0x508] sm:$0xff]
    %v9156 = vld [vmem:[#allocation2 + $0x510] sm:$0xff]
    %v9157 = vld [vmem:[#allocation2 + $0x518] sm:$0xff]
    %v9158 = vld [vmem:[#allocation2 + $0x520] sm:$0xff]
    %v9159 = vld [vmem:[#allocation2 + $0x528] sm:$0xff]
    %v9160 = vld [vmem:[#allocation2 + $0x530] sm:$0xff]
    %v9161 = vld [vmem:[#allocation2 + $0x538] sm:$0xff]
    %v9162 = vld [vmem:[#allocation2 + $0x540] sm:$0xff]
    %v9163 = vld [vmem:[#allocation2 + $0x548] sm:$0xff]
    %v9164 = vld [vmem:[#allocation2 + $0x550] sm:$0xff]
    %v9165 = vld [vmem:[#allocation2 + $0x558] sm:$0xff]
    %v9166 = vld [vmem:[#allocation2 + $0x560] sm:$0xff]
    %v9167 = vld [vmem:[#allocation2 + $0x568] sm:$0xff]
    %v9168 = vld [vmem:[#allocation2 + $0x570] sm:$0xff]
    %v9169 = vld [vmem:[#allocation2 + $0x578] sm:$0xff]
    %v9170 = vld [vmem:[#allocation2 + $0x580] sm:$0xff]
    %v9171 = vld [vmem:[#allocation2 + $0x588] sm:$0xff]
    %v9172 = vld [vmem:[#allocation2 + $0x590] sm:$0xff]
    %v9173 = vld [vmem:[#allocation2 + $0x598] sm:$0xff]
    %v9174 = vld [vmem:[#allocation2 + $0x5a0] sm:$0xff]
    %v9175 = vld [vmem:[#allocation2 + $0x5a8] sm:$0xff]
    %v9176 = vld [vmem:[#allocation2 + $0x5b0] sm:$0xff]
    %v9177 = vld [vmem:[#allocation2 + $0x5b8] sm:$0xff]
    %v9178 = vld [vmem:[#allocation2 + $0x5c0] sm:$0xff]
    %v9179 = vld [vmem:[#allocation2 + $0x5c8] sm:$0xff]
    %v9180 = vld [vmem:[#allocation2 + $0x5d0] sm:$0xff]
    %v9181 = vld [vmem:[#allocation2 + $0x5d8] sm:$0xff]
    %v9182 = vld [vmem:[#allocation2 + $0x5e0] sm:$0xff]
    %v9183 = vld [vmem:[#allocation2 + $0x5e8] sm:$0xff]
    %v9184 = vld [vmem:[#allocation2 + $0x5f0] sm:$0xff]
    %v9185 = vld [vmem:[#allocation2 + $0x5f8] sm:$0xff]
    %v9186 = vld [vmem:[#allocation2 + $0x600] sm:$0xff]
    %v9187 = vld [vmem:[#allocation2 + $0x608] sm:$0xff]
    %v9188 = vld [vmem:[#allocation2 + $0x610] sm:$0xff]
    %v9189 = vld [vmem:[#allocation2 + $0x618] sm:$0xff]
    %v9190 = vld [vmem:[#allocation2 + $0x620] sm:$0xff]
    %v9191 = vld [vmem:[#allocation2 + $0x628] sm:$0xff]
    %v9192 = vld [vmem:[#allocation2 + $0x630] sm:$0xff]
    %v9193 = vld [vmem:[#allocation2 + $0x638] sm:$0xff]
    %v9194 = vld [vmem:[#allocation2 + $0x640] sm:$0xff]
    %v9195 = vld [vmem:[#allocation2 + $0x648] sm:$0xff]
    %v9196 = vld [vmem:[#allocation2 + $0x650] sm:$0xff]
    %v9197 = vld [vmem:[#allocation2 + $0x658] sm:$0xff]
    %v9198 = vld [vmem:[#allocation2 + $0x660] sm:$0xff]
    %v9199 = vld [vmem:[#allocation2 + $0x668] sm:$0xff]
    %v9200 = vld [vmem:[#allocation2 + $0x670] sm:$0xff]
    %v9201 = vld [vmem:[#allocation2 + $0x678] sm:$0xff]
    %v9202 = vld [vmem:[#allocation2 + $0x680] sm:$0xff]
    %v9203 = vld [vmem:[#allocation2 + $0x688] sm:$0xff]
    %v9204 = vld [vmem:[#allocation2 + $0x690] sm:$0xff]
    %v9205 = vld [vmem:[#allocation2 + $0x698] sm:$0xff]
    %v9206 = vld [vmem:[#allocation2 + $0x6a0] sm:$0xff]
    %v9207 = vld [vmem:[#allocation2 + $0x6a8] sm:$0xff]
    %v9208 = vld [vmem:[#allocation2 + $0x6b0] sm:$0xff]
    %v9209 = vld [vmem:[#allocation2 + $0x6b8] sm:$0xff]
    %v9210 = vld [vmem:[#allocation2 + $0x6c0] sm:$0xff]
    %v9211 = vld [vmem:[#allocation2 + $0x6c8] sm:$0xff]
    %v9212 = vld [vmem:[#allocation2 + $0x6d0] sm:$0xff]
    %v9213 = vld [vmem:[#allocation2 + $0x6d8] sm:$0xff]
    %v9214 = vld [vmem:[#allocation2 + $0x6e0] sm:$0xff]
    %v9215 = vld [vmem:[#allocation2 + $0x6e8] sm:$0xff]
    %v9216 = vld [vmem:[#allocation2 + $0x6f0] sm:$0xff]
    %v9217 = vld [vmem:[#allocation2 + $0x6f8] sm:$0xff]
    %v9218 = vld [vmem:[#allocation2 + $0x700] sm:$0xff]
    %v9219 = vld [vmem:[#allocation2 + $0x708] sm:$0xff]
    %v9220 = vld [vmem:[#allocation2 + $0x710] sm:$0xff]
    %v9221 = vld [vmem:[#allocation2 + $0x718] sm:$0xff]
    %v9222 = vld [vmem:[#allocation2 + $0x720] sm:$0xff]
    %v9223 = vld [vmem:[#allocation2 + $0x728] sm:$0xff]
    %v9224 = vld [vmem:[#allocation2 + $0x730] sm:$0xff]
    %v9225 = vld [vmem:[#allocation2 + $0x738] sm:$0xff]
    %v9226 = vld [vmem:[#allocation2 + $0x740] sm:$0xff]
    %v9227 = vld [vmem:[#allocation2 + $0x748] sm:$0xff]
    %v9228 = vld [vmem:[#allocation2 + $0x750] sm:$0xff]
    %v9229 = vld [vmem:[#allocation2 + $0x758] sm:$0xff]
    %v9230 = vld [vmem:[#allocation2 + $0x760] sm:$0xff]
    %v9231 = vld [vmem:[#allocation2 + $0x768] sm:$0xff]
    %v9232 = vld [vmem:[#allocation2 + $0x770] sm:$0xff]
    %v9233 = vld [vmem:[#allocation2 + $0x778] sm:$0xff]
    %v9234 = vld [vmem:[#allocation2 + $0x780] sm:$0xff]
    %v9235 = vld [vmem:[#allocation2 + $0x788] sm:$0xff]
    %v9236 = vld [vmem:[#allocation2 + $0x790] sm:$0xff]
    %v9237 = vld [vmem:[#allocation2 + $0x798] sm:$0xff]
    %v9238 = vld [vmem:[#allocation2 + $0x7a0] sm:$0xff]
    %v9239 = vld [vmem:[#allocation2 + $0x7a8] sm:$0xff]
    %v9240 = vld [vmem:[#allocation2 + $0x7b0] sm:$0xff]
    %v9241 = vld [vmem:[#allocation2 + $0x7b8] sm:$0xff]
    %v9242 = vld [vmem:[#allocation2 + $0x7c0] sm:$0xff]
    %v9243 = vld [vmem:[#allocation2 + $0x7c8] sm:$0xff]
    %v9244 = vld [vmem:[#allocation2 + $0x7d0] sm:$0xff]
    %v9245 = vld [vmem:[#allocation2 + $0x7d8] sm:$0xff]
    %v9246 = vld [vmem:[#allocation2 + $0x7e0] sm:$0xff]
    %v9247 = vld [vmem:[#allocation2 + $0x7e8] sm:$0xff]
    %v9248 = vld [vmem:[#allocation2 + $0x7f0] sm:$0xff]
    %v9249 = vld [vmem:[#allocation2 + $0x7f8] sm:$0xff]
    %v9250 = vld [vmem:[%s7] sm:$0xff]
    %v9251 = vld [vmem:[%s7 + $0x8] sm:$0xff]
    %v9252 = vld [vmem:[%s7 + $0x10] sm:$0xff]
    %v9253 = vld [vmem:[%s7 + $0x18] sm:$0xff]
    %v9254 = vld [vmem:[%s7 + $0x20] sm:$0xff]
    %v9255 = vld [vmem:[%s7 + $0x28] sm:$0xff]
    %v9256 = vld [vmem:[%s7 + $0x30] sm:$0xff]
    %v9257 = vld [vmem:[%s7 + $0x38] sm:$0xff]
    %v9258 = vld [vmem:[%s7 + $0x40] sm:$0xff]
    %v9259 = vld [vmem:[%s7 + $0x48] sm:$0xff]
    %v9260 = vld [vmem:[%s7 + $0x50] sm:$0xff]
    %v9261 = vld [vmem:[%s7 + $0x58] sm:$0xff]
    %v9262 = vld [vmem:[%s7 + $0x60] sm:$0xff]
    %v9263 = vld [vmem:[%s7 + $0x68] sm:$0xff]
    %v9264 = vld [vmem:[%s7 + $0x70] sm:$0xff]
    %v9265 = vld [vmem:[%s7 + $0x78] sm:$0xff]
    %v9266 = vld [vmem:[%s7 + $0x80] sm:$0xff]
    %v9267 = vld [vmem:[%s7 + $0x88] sm:$0xff]
    %v9268 = vld [vmem:[%s7 + $0x90] sm:$0xff]
    %v9269 = vld [vmem:[%s7 + $0x98] sm:$0xff]
    %v9270 = vld [vmem:[%s7 + $0xa0] sm:$0xff]
    %v9271 = vld [vmem:[%s7 + $0xa8] sm:$0xff]
    %v9272 = vld [vmem:[%s7 + $0xb0] sm:$0xff]
    %v9273 = vld [vmem:[%s7 + $0xb8] sm:$0xff]
    %v9274 = vld [vmem:[%s7 + $0xc0] sm:$0xff]
    %v9275 = vld [vmem:[%s7 + $0xc8] sm:$0xff]
    %v9276 = vld [vmem:[%s7 + $0xd0] sm:$0xff]
    %v9277 = vld [vmem:[%s7 + $0xd8] sm:$0xff]
    %v9278 = vld [vmem:[%s7 + $0xe0] sm:$0xff]
    %v9279 = vld [vmem:[%s7 + $0xe8] sm:$0xff]
    %v9280 = vld [vmem:[%s7 + $0xf0] sm:$0xff]
    %v9281 = vld [vmem:[%s7 + $0xf8] sm:$0xff]
    %v9282 = vld [vmem:[%s7 + $0x100] sm:$0xff]
    %v9283 = vld [vmem:[%s7 + $0x108] sm:$0xff]
    %v9284 = vld [vmem:[%s7 + $0x110] sm:$0xff]
    %v9285 = vld [vmem:[%s7 + $0x118] sm:$0xff]
    %v9286 = vld [vmem:[%s7 + $0x120] sm:$0xff]
    %v9287 = vld [vmem:[%s7 + $0x128] sm:$0xff]
    %v9288 = vld [vmem:[%s7 + $0x130] sm:$0xff]
    %v9289 = vld [vmem:[%s7 + $0x138] sm:$0xff]
    %v9290 = vld [vmem:[%s7 + $0x140] sm:$0xff]
    %v9291 = vld [vmem:[%s7 + $0x148] sm:$0xff]
    %v9292 = vld [vmem:[%s7 + $0x150] sm:$0xff]
    %v9293 = vld [vmem:[%s7 + $0x158] sm:$0xff]
    %v9294 = vld [vmem:[%s7 + $0x160] sm:$0xff]
    %v9295 = vld [vmem:[%s7 + $0x168] sm:$0xff]
    %v9296 = vld [vmem:[%s7 + $0x170] sm:$0xff]
    %v9297 = vld [vmem:[%s7 + $0x178] sm:$0xff]
    %v9298 = vld [vmem:[%s7 + $0x180] sm:$0xff]
    %v9299 = vld [vmem:[%s7 + $0x188] sm:$0xff]
    %v9300 = vld [vmem:[%s7 + $0x190] sm:$0xff]
    %v9301 = vld [vmem:[%s7 + $0x198] sm:$0xff]
    %v9302 = vld [vmem:[%s7 + $0x1a0] sm:$0xff]
    %v9303 = vld [vmem:[%s7 + $0x1a8] sm:$0xff]
    %v9304 = vld [vmem:[%s7 + $0x1b0] sm:$0xff]
    %v9305 = vld [vmem:[%s7 + $0x1b8] sm:$0xff]
    %v9306 = vld [vmem:[%s7 + $0x1c0] sm:$0xff]
    %v9307 = vld [vmem:[%s7 + $0x1c8] sm:$0xff]
    %v9308 = vld [vmem:[%s7 + $0x1d0] sm:$0xff]
    %v9309 = vld [vmem:[%s7 + $0x1d8] sm:$0xff]
    %v9310 = vld [vmem:[%s7 + $0x1e0] sm:$0xff]
    %v9311 = vld [vmem:[%s7 + $0x1e8] sm:$0xff]
    %v9312 = vld [vmem:[%s7 + $0x1f0] sm:$0xff]
    %v9313 = vld [vmem:[%s7 + $0x1f8] sm:$0xff]
    %v9314 = vld [vmem:[%s7 + $0x200] sm:$0xff]
    %v9315 = vld [vmem:[%s7 + $0x208] sm:$0xff]
    %v9316 = vld [vmem:[%s7 + $0x210] sm:$0xff]
    %v9317 = vld [vmem:[%s7 + $0x218] sm:$0xff]
    %v9318 = vld [vmem:[%s7 + $0x220] sm:$0xff]
    %v9319 = vld [vmem:[%s7 + $0x228] sm:$0xff]
    %v9320 = vld [vmem:[%s7 + $0x230] sm:$0xff]
    %v9321 = vld [vmem:[%s7 + $0x238] sm:$0xff]
    %v9322 = vld [vmem:[%s7 + $0x240] sm:$0xff]
    %v9323 = vld [vmem:[%s7 + $0x248] sm:$0xff]
    %v9324 = vld [vmem:[%s7 + $0x250] sm:$0xff]
    %v9325 = vld [vmem:[%s7 + $0x258] sm:$0xff]
    %v9326 = vld [vmem:[%s7 + $0x260] sm:$0xff]
    %v9327 = vld [vmem:[%s7 + $0x268] sm:$0xff]
    %v9328 = vld [vmem:[%s7 + $0x270] sm:$0xff]
    %v9329 = vld [vmem:[%s7 + $0x278] sm:$0xff]
    %v9330 = vld [vmem:[%s7 + $0x280] sm:$0xff]
    %v9331 = vld [vmem:[%s7 + $0x288] sm:$0xff]
    %v9332 = vld [vmem:[%s7 + $0x290] sm:$0xff]
    %v9333 = vld [vmem:[%s7 + $0x298] sm:$0xff]
    %v9334 = vld [vmem:[%s7 + $0x2a0] sm:$0xff]
    %v9335 = vld [vmem:[%s7 + $0x2a8] sm:$0xff]
    %v9336 = vld [vmem:[%s7 + $0x2b0] sm:$0xff]
    %v9337 = vld [vmem:[%s7 + $0x2b8] sm:$0xff]
    %v9338 = vld [vmem:[%s7 + $0x2c0] sm:$0xff]
    %v9339 = vld [vmem:[%s7 + $0x2c8] sm:$0xff]
    %v9340 = vld [vmem:[%s7 + $0x2d0] sm:$0xff]
    %v9341 = vld [vmem:[%s7 + $0x2d8] sm:$0xff]
    %v9342 = vld [vmem:[%s7 + $0x2e0] sm:$0xff]
    %v9343 = vld [vmem:[%s7 + $0x2e8] sm:$0xff]
    %v9344 = vld [vmem:[%s7 + $0x2f0] sm:$0xff]
    %v9345 = vld [vmem:[%s7 + $0x2f8] sm:$0xff]
    %v9346 = vld [vmem:[%s7 + $0x300] sm:$0xff]
    %v9347 = vld [vmem:[%s7 + $0x308] sm:$0xff]
    %v9348 = vld [vmem:[%s7 + $0x310] sm:$0xff]
    %v9349 = vld [vmem:[%s7 + $0x318] sm:$0xff]
    %v9350 = vld [vmem:[%s7 + $0x320] sm:$0xff]
    %v9351 = vld [vmem:[%s7 + $0x328] sm:$0xff]
    %v9352 = vld [vmem:[%s7 + $0x330] sm:$0xff]
    %v9353 = vld [vmem:[%s7 + $0x338] sm:$0xff]
    %v9354 = vld [vmem:[%s7 + $0x340] sm:$0xff]
    %v9355 = vld [vmem:[%s7 + $0x348] sm:$0xff]
    %v9356 = vld [vmem:[%s7 + $0x350] sm:$0xff]
    %v9357 = vld [vmem:[%s7 + $0x358] sm:$0xff]
    %v9358 = vld [vmem:[%s7 + $0x360] sm:$0xff]
    %v9359 = vld [vmem:[%s7 + $0x368] sm:$0xff]
    %v9360 = vld [vmem:[%s7 + $0x370] sm:$0xff]
    %v9361 = vld [vmem:[%s7 + $0x378] sm:$0xff]
    %v9362 = vld [vmem:[%s7 + $0x380] sm:$0xff]
    %v9363 = vld [vmem:[%s7 + $0x388] sm:$0xff]
    %v9364 = vld [vmem:[%s7 + $0x390] sm:$0xff]
    %v9365 = vld [vmem:[%s7 + $0x398] sm:$0xff]
    %v9366 = vld [vmem:[%s7 + $0x3a0] sm:$0xff]
    %v9367 = vld [vmem:[%s7 + $0x3a8] sm:$0xff]
    %v9368 = vld [vmem:[%s7 + $0x3b0] sm:$0xff]
    %v9369 = vld [vmem:[%s7 + $0x3b8] sm:$0xff]
    %v9370 = vld [vmem:[%s7 + $0x3c0] sm:$0xff]
    %v9371 = vld [vmem:[%s7 + $0x3c8] sm:$0xff]
    %v9372 = vld [vmem:[%s7 + $0x3d0] sm:$0xff]
    %v9373 = vld [vmem:[%s7 + $0x3d8] sm:$0xff]
    %v9374 = vld [vmem:[%s7 + $0x3e0] sm:$0xff]
    %v9375 = vld [vmem:[%s7 + $0x3e8] sm:$0xff]
    %v9376 = vld [vmem:[%s7 + $0x3f0] sm:$0xff]
    %v9377 = vld [vmem:[%s7 + $0x3f8] sm:$0xff]
    %v9378 = vld [vmem:[%s8] sm:$0x3]
    %v9380 = vlaneseq
    %v9381 = vshrl.u32 %v9380, 7
    %v9382 = vsub.s32 0, %v9381
    %v9383 = vrot.slane %v9378, %v9382
    %v9384 = vlaneseq
    %v9385 = vshrl.u32 %v9384, 7
    %v9386 = vsub.s32 1, %v9385
    %v9387 = vrot.slane %v9378, %v9386
    %9390 = vmatprep.subr.mxu0 %v9251
    %9391 = vmatpush1.msra.mxu0 %v9250
    %9392 = vmatprep.subr.mxu0 %v9253
    %9393 = vmatpush1.msra.mxu0 %v9252
    %9394 = vmatprep.subr.mxu0 %v9255
    %9395 = vmatpush1.msra.mxu0 %v9254
    %9396 = vmatprep.subr.mxu0 %v9257
    %9397 = vmatpush1.msra.mxu0 %v9256
    %9398 = vmatprep.subr.mxu0 %v9259
    %9399 = vmatpush1.msra.mxu0 %v9258
    %9400 = vmatprep.subr.mxu0 %v9261
    %9401 = vmatpush1.msra.mxu0 %v9260
    %9402 = vmatprep.subr.mxu0 %v9263
    %9403 = vmatpush1.msra.mxu0 %v9262
    %9404 = vmatprep.subr.mxu0 %v9265
    %9405 = vmatpush1.msra.mxu0 %v9264
    %9406 = vmatprep.subr.mxu0 %v9267
    %9407 = vmatpush1.msra.mxu0 %v9266
    %9408 = vmatprep.subr.mxu0 %v9269
    %9409 = vmatpush1.msra.mxu0 %v9268
    %9410 = vmatprep.subr.mxu0 %v9271
    %9411 = vmatpush1.msra.mxu0 %v9270
    %9412 = vmatprep.subr.mxu0 %v9273
    %9413 = vmatpush1.msra.mxu0 %v9272
    %9414 = vmatprep.subr.mxu0 %v9275
    %9415 = vmatpush1.msra.mxu0 %v9274
    %9416 = vmatprep.subr.mxu0 %v9277
    %9417 = vmatpush1.msra.mxu0 %v9276
    %9418 = vmatprep.subr.mxu0 %v9279
    %9419 = vmatpush1.msra.mxu0 %v9278
    %9420 = vmatprep.subr.mxu0 %v9281
    %9421 = vmatpush1.msra.mxu0 %v9280
    %9422 = vmatprep.subr.mxu0 %v9283
    %9423 = vmatpush1.msra.mxu0 %v9282
    %9424 = vmatprep.subr.mxu0 %v9285
    %9425 = vmatpush1.msra.mxu0 %v9284
    %9426 = vmatprep.subr.mxu0 %v9287
    %9427 = vmatpush1.msra.mxu0 %v9286
    %9428 = vmatprep.subr.mxu0 %v9289
    %9429 = vmatpush1.msra.mxu0 %v9288
    %9430 = vmatprep.subr.mxu0 %v9291
    %9431 = vmatpush1.msra.mxu0 %v9290
    %9432 = vmatprep.subr.mxu0 %v9293
    %9433 = vmatpush1.msra.mxu0 %v9292
    %9434 = vmatprep.subr.mxu0 %v9295
    %9435 = vmatpush1.msra.mxu0 %v9294
    %9436 = vmatprep.subr.mxu0 %v9297
    %9437 = vmatpush1.msra.mxu0 %v9296
    %9438 = vmatprep.subr.mxu0 %v9299
    %9439 = vmatpush1.msra.mxu0 %v9298
    %9440 = vmatprep.subr.mxu0 %v9301
    %9441 = vmatpush1.msra.mxu0 %v9300
    %9442 = vmatprep.subr.mxu0 %v9303
    %9443 = vmatpush1.msra.mxu0 %v9302
    %9444 = vmatprep.subr.mxu0 %v9305
    %9445 = vmatpush1.msra.mxu0 %v9304
    %9446 = vmatprep.subr.mxu0 %v9307
    %9447 = vmatpush1.msra.mxu0 %v9306
    %9448 = vmatprep.subr.mxu0 %v9309
    %9449 = vmatpush1.msra.mxu0 %v9308
    %9450 = vmatprep.subr.mxu0 %v9311
    %9451 = vmatpush1.msra.mxu0 %v9310
    %9452 = vmatprep.subr.mxu0 %v9313
    %9453 = vmatpush1.msra.mxu0 %v9312
    %9454 = vmatprep.mubr.f32.mxu0 %v8995
    %9455 = vmatmul.mubr.f32.gmra.mrb[0].mxu0 %v8994
    %v9456 = vpop.f32.mrb[0].mxu0
    %v9457 = vadd.f32 %v9383, %v9456
    %v9458 = vpop.f32.mrb[0].mxu0
    %v9459 = vadd.f32 %v9387, %v9458
    %9460 = vmatprep.mubr.f32.mxu0 %v8999
    %9461 = vmatmul.mubr.f32.gmra.mrb[0].mxu0 %v8998
    %v9462 = vpop.f32.mrb[0].mxu0
    %v9463 = vadd.f32 %v9383, %v9462
    %v9464 = vpop.f32.mrb[0].mxu0
    %v9465 = vadd.f32 %v9387, %v9464
    %9466 = vmatprep.mubr.f32.mxu0 %v9003
    %9467 = vmatmul.mubr.f32.gmra.mrb[0].mxu0 %v9002
    %v9468 = vpop.f32.mrb[0].mxu0
    %v9469 = vadd.f32 %v9383, %v9468
    %v9470 = vpop.f32.mrb[0].mxu0
    %v9471 = vadd.f32 %v9387, %v9470
    %9472 = vmatprep.mubr.f32.mxu0 %v9007
    %9473 = vmatmul.mubr.f32.gmra.mrb[0].mxu0 %v9006
    %v9474 = vpop.f32.mrb[0].mxu0
    %v9475 = vadd.f32 %v9383, %v9474
    %v9476 = vpop.f32.mrb[0].mxu0
    %v9477 = vadd.f32 %v9387, %v9476
    %9478 = vmatprep.mubr.f32.mxu0 %v9011
    %9479 = vmatmul.mubr.f32.gmra.mrb[0].mxu0 %v9010
    %v9480 = vpop.f32.mrb[0].mxu0
    %v9481 = vadd.f32 %v9383, %v9480
    %v9482 = vpop.f32.mrb[0].mxu0
    %v9483 = vadd.f32 %v9387, %v9482
    %9484 = vmatprep.mubr.f32.mxu0 %v9015
    %9485 = vmatmul.mubr.f32.gmra.mrb[0].mxu0 %v9014
    %v9486 = vpop.f32.mrb[0].mxu0
    %v9487 = vadd.f32 %v9383, %v9486
    %v9488 = vpop.f32.mrb[0].mxu0
    %v9489 = vadd.f32 %v9387, %v9488
    %9490 = vmatprep.mubr.f32.mxu0 %v9019
    %9491 = vmatmul.mubr.f32.gmra.mrb[0].mxu0 %v9018
    %v9492 = vpop.f32.mrb[0].mxu0
    %v9493 = vadd.f32 %v9383, %v9492
    %v9494 = vpop.f32.mrb[0].mxu0
    %v9495 = vadd.f32 %v9387, %v9494
    %9496 = vmatprep.mubr.f32.mxu0 %v9023
    %9497 = vmatmul.mubr.f32.gmra.mrb[0].mxu0 %v9022
    %v9498 = vpop.f32.mrb[0].mxu0
    %v9499 = vadd.f32 %v9383, %v9498
    %v9500 = vpop.f32.mrb[0].mxu0
    %v9501 = vadd.f32 %v9387, %v9500
    %9502 = vmatprep.mubr.f32.mxu0 %v9027
    %9503 = vmatmul.mubr.f32.gmra.mrb[0].mxu0 %v9026
    %v9504 = vpop.f32.mrb[0].mxu0
    %v9505 = vadd.f32 %v9383, %v9504
    %v9506 = vpop.f32.mrb[0].mxu0
    %v9507 = vadd.f32 %v9387, %v9506
    %9508 = vmatprep.mubr.f32.mxu0 %v9031
    %9509 = vmatmul.mubr.f32.gmra.mrb[0].mxu0 %v9030
    %v9510 = vpop.f32.mrb[0].mxu0
    %v9511 = vadd.f32 %v9383, %v9510
    %v9512 = vpop.f32.mrb[0].mxu0
    %v9513 = vadd.f32 %v9387, %v9512
    %9514 = vmatprep.mubr.f32.mxu0 %v9035
    %9515 = vmatmul.mubr.f32.gmra.mrb[0].mxu0 %v9034
    %v9516 = vpop.f32.mrb[0].mxu0
    %v9517 = vadd.f32 %v9383, %v9516
    %v9518 = vpop.f32.mrb[0].mxu0
    %v9519 = vadd.f32 %v9387, %v9518
    %9520 = vmatprep.mubr.f32.mxu0 %v9039
    %9521 = vmatmul.mubr.f32.gmra.mrb[0].mxu0 %v9038
    %v9522 = vpop.f32.mrb[0].mxu0
    %v9523 = vadd.f32 %v9383, %v9522
    %v9524 = vpop.f32.mrb[0].mxu0
    %v9525 = vadd.f32 %v9387, %v9524
    %9526 = vmatprep.mubr.f32.mxu0 %v9043
    %9527 = vmatmul.mubr.f32.gmra.mrb[0].mxu0 %v9042
    %v9528 = vpop.f32.mrb[0].mxu0
    %v9529 = vadd.f32 %v9383, %v9528
    %v9530 = vpop.f32.mrb[0].mxu0
    %v9531 = vadd.f32 %v9387, %v9530
    %9532 = vmatprep.mubr.f32.mxu0 %v9047
    %9533 = vmatmul.mubr.f32.gmra.mrb[0].mxu0 %v9046
    %v9534 = vpop.f32.mrb[0].mxu0
    %v9535 = vadd.f32 %v9383, %v9534
    %v9536 = vpop.f32.mrb[0].mxu0
    %v9537 = vadd.f32 %v9387, %v9536
    %9538 = vmatprep.mubr.f32.mxu0 %v9051
    %9539 = vmatmul.mubr.f32.gmra.mrb[0].mxu0 %v9050
    %v9540 = vpop.f32.mrb[0].mxu0
    %v9541 = vadd.f32 %v9383, %v9540
    %v9542 = vpop.f32.mrb[0].mxu0
    %v9543 = vadd.f32 %v9387, %v9542
    %9544 = vmatprep.mubr.f32.mxu0 %v9055
    %9545 = vmatmul.mubr.f32.gmra.mrb[0].mxu0 %v9054
    %v9546 = vpop.f32.mrb[0].mxu0
    %v9547 = vadd.f32 %v9383, %v9546
    %v9548 = vpop.f32.mrb[0].mxu0
    %v9549 = vadd.f32 %v9387, %v9548
    %9550 = vmatprep.mubr.f32.mxu0 %v9059
    %9551 = vmatmul.mubr.f32.gmra.mrb[0].mxu0 %v9058
    %v9552 = vpop.f32.mrb[0].mxu0
    %v9553 = vadd.f32 %v9383, %v9552
    %v9554 = vpop.f32.mrb[0].mxu0
    %v9555 = vadd.f32 %v9387, %v9554
    %9556 = vmatprep.mubr.f32.mxu0 %v9063
    %9557 = vmatmul.mubr.f32.gmra.mrb[0].mxu0 %v9062
    %v9558 = vpop.f32.mrb[0].mxu0
    %v9559 = vadd.f32 %v9383, %v9558
    %v9560 = vpop.f32.mrb[0].mxu0
    %v9561 = vadd.f32 %v9387, %v9560
    %9562 = vmatprep.mubr.f32.mxu0 %v9067
    %9563 = vmatmul.mubr.f32.gmra.mrb[0].mxu0 %v9066
    %v9564 = vpop.f32.mrb[0].mxu0
    %v9565 = vadd.f32 %v9383, %v9564
    %v9566 = vpop.f32.mrb[0].mxu0
    %v9567 = vadd.f32 %v9387, %v9566
    %9568 = vmatprep.mubr.f32.mxu0 %v9071
    %9569 = vmatmul.mubr.f32.gmra.mrb[0].mxu0 %v9070
    %v9570 = vpop.f32.mrb[0].mxu0
    %v9571 = vadd.f32 %v9383, %v9570
    %v9572 = vpop.f32.mrb[0].mxu0
    %v9573 = vadd.f32 %v9387, %v9572
    %9574 = vmatprep.mubr.f32.mxu0 %v9075
    %9575 = vmatmul.mubr.f32.gmra.mrb[0].mxu0 %v9074
    %v9576 = vpop.f32.mrb[0].mxu0
    %v9577 = vadd.f32 %v9383, %v9576
    %v9578 = vpop.f32.mrb[0].mxu0
    %v9579 = vadd.f32 %v9387, %v9578
    %9580 = vmatprep.mubr.f32.mxu0 %v9079
    %9581 = vmatmul.mubr.f32.gmra.mrb[0].mxu0 %v9078
    %v9582 = vpop.f32.mrb[0].mxu0
    %v9583 = vadd.f32 %v9383, %v9582
    %v9584 = vpop.f32.mrb[0].mxu0
    %v9585 = vadd.f32 %v9387, %v9584
    %9586 = vmatprep.mubr.f32.mxu0 %v9083
    %9587 = vmatmul.mubr.f32.gmra.mrb[0].mxu0 %v9082
    %v9588 = vpop.f32.mrb[0].mxu0
    %v9589 = vadd.f32 %v9383, %v9588
    %v9590 = vpop.f32.mrb[0].mxu0
    %v9591 = vadd.f32 %v9387, %v9590
    %9592 = vmatprep.mubr.f32.mxu0 %v9087
    %9593 = vmatmul.mubr.f32.gmra.mrb[0].mxu0 %v9086
    %v9594 = vpop.f32.mrb[0].mxu0
    %v9595 = vadd.f32 %v9383, %v9594
    %v9596 = vpop.f32.mrb[0].mxu0
    %v9597 = vadd.f32 %v9387, %v9596
    %9598 = vmatprep.mubr.f32.mxu0 %v9091
    %9599 = vmatmul.mubr.f32.gmra.mrb[0].mxu0 %v9090
    %v9600 = vpop.f32.mrb[0].mxu0
    %v9601 = vadd.f32 %v9383, %v9600
    %v9602 = vpop.f32.mrb[0].mxu0
    %v9603 = vadd.f32 %v9387, %v9602
    %9604 = vmatprep.mubr.f32.mxu0 %v9095
    %9605 = vmatmul.mubr.f32.gmra.mrb[0].mxu0 %v9094
    %v9606 = vpop.f32.mrb[0].mxu0
    %v9607 = vadd.f32 %v9383, %v9606
    %v9608 = vpop.f32.mrb[0].mxu0
    %v9609 = vadd.f32 %v9387, %v9608
    %9610 = vmatprep.mubr.f32.mxu0 %v9099
    %9611 = vmatmul.mubr.f32.gmra.mrb[0].mxu0 %v9098
    %v9612 = vpop.f32.mrb[0].mxu0
    %v9613 = vadd.f32 %v9383, %v9612
    %v9614 = vpop.f32.mrb[0].mxu0
    %v9615 = vadd.f32 %v9387, %v9614
    %9616 = vmatprep.mubr.f32.mxu0 %v9103
    %9617 = vmatmul.mubr.f32.gmra.mrb[0].mxu0 %v9102
    %v9618 = vpop.f32.mrb[0].mxu0
    %v9619 = vadd.f32 %v9383, %v9618
    %v9620 = vpop.f32.mrb[0].mxu0
    %v9621 = vadd.f32 %v9387, %v9620
    %9622 = vmatprep.mubr.f32.mxu0 %v9107
    %9623 = vmatmul.mubr.f32.gmra.mrb[0].mxu0 %v9106
    %v9624 = vpop.f32.mrb[0].mxu0
    %v9625 = vadd.f32 %v9383, %v9624
    %v9626 = vpop.f32.mrb[0].mxu0
    %v9627 = vadd.f32 %v9387, %v9626
    %9628 = vmatprep.mubr.f32.mxu0 %v9111
    %9629 = vmatmul.mubr.f32.gmra.mrb[0].mxu0 %v9110
    %v9630 = vpop.f32.mrb[0].mxu0
    %v9631 = vadd.f32 %v9383, %v9630
    %v9632 = vpop.f32.mrb[0].mxu0
    %v9633 = vadd.f32 %v9387, %v9632
    %9634 = vmatprep.mubr.f32.mxu0 %v9115
    %9635 = vmatmul.mubr.f32.gmra.mrb[0].mxu0 %v9114
    %v9636 = vpop.f32.mrb[0].mxu0
    %v9637 = vadd.f32 %v9383, %v9636
    %v9638 = vpop.f32.mrb[0].mxu0
    %v9639 = vadd.f32 %v9387, %v9638
    %9640 = vmatprep.mubr.f32.mxu0 %v9119
    %9641 = vmatmul.mubr.f32.gmra.mrb[0].mxu0 %v9118
    %v9642 = vpop.f32.mrb[0].mxu0
    %v9643 = vadd.f32 %v9383, %v9642
    %v9644 = vpop.f32.mrb[0].mxu0
    %v9645 = vadd.f32 %v9387, %v9644
    %9646 = vmatprep.mubr.f32.mxu0 %v9123
    %9647 = vmatmul.mubr.f32.gmra.mrb[0].mxu0 %v9122
    %v9648 = vpop.f32.mrb[0].mxu0
    %v9649 = vadd.f32 %v9383, %v9648
    %v9650 = vpop.f32.mrb[0].mxu0
    %v9651 = vadd.f32 %v9387, %v9650
    %9652 = vmatprep.mubr.f32.mxu0 %v9127
    %9653 = vmatmul.mubr.f32.gmra.mrb[0].mxu0 %v9126
    %v9654 = vpop.f32.mrb[0].mxu0
    %v9655 = vadd.f32 %v9383, %v9654
    %v9656 = vpop.f32.mrb[0].mxu0
    %v9657 = vadd.f32 %v9387, %v9656
    %9658 = vmatprep.mubr.f32.mxu0 %v9131
    %9659 = vmatmul.mubr.f32.gmra.mrb[0].mxu0 %v9130
    %v9660 = vpop.f32.mrb[0].mxu0
    %v9661 = vadd.f32 %v9383, %v9660
    %v9662 = vpop.f32.mrb[0].mxu0
    %v9663 = vadd.f32 %v9387, %v9662
    %9664 = vmatprep.mubr.f32.mxu0 %v9135
    %9665 = vmatmul.mubr.f32.gmra.mrb[0].mxu0 %v9134
    %v9666 = vpop.f32.mrb[0].mxu0
    %v9667 = vadd.f32 %v9383, %v9666
    %v9668 = vpop.f32.mrb[0].mxu0
    %v9669 = vadd.f32 %v9387, %v9668
    %9670 = vmatprep.mubr.f32.mxu0 %v9139
    %9671 = vmatmul.mubr.f32.gmra.mrb[0].mxu0 %v9138
    %v9672 = vpop.f32.mrb[0].mxu0
    %v9673 = vadd.f32 %v9383, %v9672
    %v9674 = vpop.f32.mrb[0].mxu0
    %v9675 = vadd.f32 %v9387, %v9674
    %9676 = vmatprep.mubr.f32.mxu0 %v9143
    %9677 = vmatmul.mubr.f32.gmra.mrb[0].mxu0 %v9142
    %v9678 = vpop.f32.mrb[0].mxu0
    %v9679 = vadd.f32 %v9383, %v9678
    %v9680 = vpop.f32.mrb[0].mxu0
    %v9681 = vadd.f32 %v9387, %v9680
    %9682 = vmatprep.mubr.f32.mxu0 %v9147
    %9683 = vmatmul.mubr.f32.gmra.mrb[0].mxu0 %v9146
    %v9684 = vpop.f32.mrb[0].mxu0
    %v9685 = vadd.f32 %v9383, %v9684
    %v9686 = vpop.f32.mrb[0].mxu0
    %v9687 = vadd.f32 %v9387, %v9686
    %9688 = vmatprep.mubr.f32.mxu0 %v9151
    %9689 = vmatmul.mubr.f32.gmra.mrb[0].mxu0 %v9150
    %v9690 = vpop.f32.mrb[0].mxu0
    %v9691 = vadd.f32 %v9383, %v9690
    %v9692 = vpop.f32.mrb[0].mxu0
    %v9693 = vadd.f32 %v9387, %v9692
    %9694 = vmatprep.mubr.f32.mxu0 %v9155
    %9695 = vmatmul.mubr.f32.gmra.mrb[0].mxu0 %v9154
    %v9696 = vpop.f32.mrb[0].mxu0
    %v9697 = vadd.f32 %v9383, %v9696
    %v9698 = vpop.f32.mrb[0].mxu0
    %v9699 = vadd.f32 %v9387, %v9698
    %9700 = vmatprep.mubr.f32.mxu0 %v9159
    %9701 = vmatmul.mubr.f32.gmra.mrb[0].mxu0 %v9158
    %v9702 = vpop.f32.mrb[0].mxu0
    %v9703 = vadd.f32 %v9383, %v9702
    %v9704 = vpop.f32.mrb[0].mxu0
    %v9705 = vadd.f32 %v9387, %v9704
    %9706 = vmatprep.mubr.f32.mxu0 %v9163
    %9707 = vmatmul.mubr.f32.gmra.mrb[0].mxu0 %v9162
    %v9708 = vpop.f32.mrb[0].mxu0
    %v9709 = vadd.f32 %v9383, %v9708
    %v9710 = vpop.f32.mrb[0].mxu0
    %v9711 = vadd.f32 %v9387, %v9710
    %9712 = vmatprep.mubr.f32.mxu0 %v9167
    %9713 = vmatmul.mubr.f32.gmra.mrb[0].mxu0 %v9166
    %v9714 = vpop.f32.mrb[0].mxu0
    %v9715 = vadd.f32 %v9383, %v9714
    %v9716 = vpop.f32.mrb[0].mxu0
    %v9717 = vadd.f32 %v9387, %v9716
    %9718 = vmatprep.mubr.f32.mxu0 %v9171
    %9719 = vmatmul.mubr.f32.gmra.mrb[0].mxu0 %v9170
    %v9720 = vpop.f32.mrb[0].mxu0
    %v9721 = vadd.f32 %v9383, %v9720
    %v9722 = vpop.f32.mrb[0].mxu0
    %v9723 = vadd.f32 %v9387, %v9722
    %9724 = vmatprep.mubr.f32.mxu0 %v9175
    %9725 = vmatmul.mubr.f32.gmra.mrb[0].mxu0 %v9174
    %v9726 = vpop.f32.mrb[0].mxu0
    %v9727 = vadd.f32 %v9383, %v9726
    %v9728 = vpop.f32.mrb[0].mxu0
    %v9729 = vadd.f32 %v9387, %v9728
    %9730 = vmatprep.mubr.f32.mxu0 %v9179
    %9731 = vmatmul.mubr.f32.gmra.mrb[0].mxu0 %v9178
    %v9732 = vpop.f32.mrb[0].mxu0
    %v9733 = vadd.f32 %v9383, %v9732
    %v9734 = vpop.f32.mrb[0].mxu0
    %v9735 = vadd.f32 %v9387, %v9734
    %9736 = vmatprep.mubr.f32.mxu0 %v9183
    %9737 = vmatmul.mubr.f32.gmra.mrb[0].mxu0 %v9182
    %v9738 = vpop.f32.mrb[0].mxu0
    %v9739 = vadd.f32 %v9383, %v9738
    %v9740 = vpop.f32.mrb[0].mxu0
    %v9741 = vadd.f32 %v9387, %v9740
    %9742 = vmatprep.mubr.f32.mxu0 %v9187
    %9743 = vmatmul.mubr.f32.gmra.mrb[0].mxu0 %v9186
    %v9744 = vpop.f32.mrb[0].mxu0
    %v9745 = vadd.f32 %v9383, %v9744
    %v9746 = vpop.f32.mrb[0].mxu0
    %v9747 = vadd.f32 %v9387, %v9746
    %9748 = vmatprep.mubr.f32.mxu0 %v9191
    %9749 = vmatmul.mubr.f32.gmra.mrb[0].mxu0 %v9190
    %v9750 = vpop.f32.mrb[0].mxu0
    %v9751 = vadd.f32 %v9383, %v9750
    %v9752 = vpop.f32.mrb[0].mxu0
    %v9753 = vadd.f32 %v9387, %v9752
    %9754 = vmatprep.mubr.f32.mxu0 %v9195
    %9755 = vmatmul.mubr.f32.gmra.mrb[0].mxu0 %v9194
    %v9756 = vpop.f32.mrb[0].mxu0
    %v9757 = vadd.f32 %v9383, %v9756
    %v9758 = vpop.f32.mrb[0].mxu0
    %v9759 = vadd.f32 %v9387, %v9758
    %9760 = vmatprep.mubr.f32.mxu0 %v9199
    %9761 = vmatmul.mubr.f32.gmra.mrb[0].mxu0 %v9198
    %v9762 = vpop.f32.mrb[0].mxu0
    %v9763 = vadd.f32 %v9383, %v9762
    %v9764 = vpop.f32.mrb[0].mxu0
    %v9765 = vadd.f32 %v9387, %v9764
    %9766 = vmatprep.mubr.f32.mxu0 %v9203
    %9767 = vmatmul.mubr.f32.gmra.mrb[0].mxu0 %v9202
    %v9768 = vpop.f32.mrb[0].mxu0
    %v9769 = vadd.f32 %v9383, %v9768
    %v9770 = vpop.f32.mrb[0].mxu0
    %v9771 = vadd.f32 %v9387, %v9770
    %9772 = vmatprep.mubr.f32.mxu0 %v9207
    %9773 = vmatmul.mubr.f32.gmra.mrb[0].mxu0 %v9206
    %v9774 = vpop.f32.mrb[0].mxu0
    %v9775 = vadd.f32 %v9383, %v9774
    %v9776 = vpop.f32.mrb[0].mxu0
    %v9777 = vadd.f32 %v9387, %v9776
    %9778 = vmatprep.mubr.f32.mxu0 %v9211
    %9779 = vmatmul.mubr.f32.gmra.mrb[0].mxu0 %v9210
    %v9780 = vpop.f32.mrb[0].mxu0
    %v9781 = vadd.f32 %v9383, %v9780
    %v9782 = vpop.f32.mrb[0].mxu0
    %v9783 = vadd.f32 %v9387, %v9782
    %9784 = vmatprep.mubr.f32.mxu0 %v9215
    %9785 = vmatmul.mubr.f32.gmra.mrb[0].mxu0 %v9214
    %v9786 = vpop.f32.mrb[0].mxu0
    %v9787 = vadd.f32 %v9383, %v9786
    %v9788 = vpop.f32.mrb[0].mxu0
    %v9789 = vadd.f32 %v9387, %v9788
    %9790 = vmatprep.mubr.f32.mxu0 %v9219
    %9791 = vmatmul.mubr.f32.gmra.mrb[0].mxu0 %v9218
    %v9792 = vpop.f32.mrb[0].mxu0
    %v9793 = vadd.f32 %v9383, %v9792
    %v9794 = vpop.f32.mrb[0].mxu0
    %v9795 = vadd.f32 %v9387, %v9794
    %9796 = vmatprep.mubr.f32.mxu0 %v9223
    %9797 = vmatmul.mubr.f32.gmra.mrb[0].mxu0 %v9222
    %v9798 = vpop.f32.mrb[0].mxu0
    %v9799 = vadd.f32 %v9383, %v9798
    %v9800 = vpop.f32.mrb[0].mxu0
    %v9801 = vadd.f32 %v9387, %v9800
    %9802 = vmatprep.mubr.f32.mxu0 %v9227
    %9803 = vmatmul.mubr.f32.gmra.mrb[0].mxu0 %v9226
    %v9804 = vpop.f32.mrb[0].mxu0
    %v9805 = vadd.f32 %v9383, %v9804
    %v9806 = vpop.f32.mrb[0].mxu0
    %v9807 = vadd.f32 %v9387, %v9806
    %9808 = vmatprep.mubr.f32.mxu0 %v9231
    %9809 = vmatmul.mubr.f32.gmra.mrb[0].mxu0 %v9230
    %v9810 = vpop.f32.mrb[0].mxu0
    %v9811 = vadd.f32 %v9383, %v9810
    %v9812 = vpop.f32.mrb[0].mxu0
    %v9813 = vadd.f32 %v9387, %v9812
    %9814 = vmatprep.mubr.f32.mxu0 %v9235
    %9815 = vmatmul.mubr.f32.gmra.mrb[0].mxu0 %v9234
    %v9816 = vpop.f32.mrb[0].mxu0
    %v9817 = vadd.f32 %v9383, %v9816
    %v9818 = vpop.f32.mrb[0].mxu0
    %v9819 = vadd.f32 %v9387, %v9818
    %9820 = vmatprep.mubr.f32.mxu0 %v9239
    %9821 = vmatmul.mubr.f32.gmra.mrb[0].mxu0 %v9238
    %v9822 = vpop.f32.mrb[0].mxu0
    %v9823 = vadd.f32 %v9383, %v9822
    %v9824 = vpop.f32.mrb[0].mxu0
    %v9825 = vadd.f32 %v9387, %v9824
    %9826 = vmatprep.mubr.f32.mxu0 %v9243
    %9827 = vmatmul.mubr.f32.gmra.mrb[0].mxu0 %v9242
    %v9828 = vpop.f32.mrb[0].mxu0
    %v9829 = vadd.f32 %v9383, %v9828
    %v9830 = vpop.f32.mrb[0].mxu0
    %v9831 = vadd.f32 %v9387, %v9830
    %9832 = vmatprep.mubr.f32.mxu0 %v9247
    %9833 = vmatmul.mubr.f32.gmra.mrb[0].mxu0 %v9246
    %v9834 = vpop.f32.mrb[0].mxu0
    %v9835 = vadd.f32 %v9383, %v9834
    %v9836 = vpop.f32.mrb[0].mxu0
    %v9837 = vadd.f32 %v9387, %v9836
    %9838 = vdwg.mxu0
    %9839 = vmatprep.subr.mxu0 %v9315
    %9840 = vmatpush1.msra.mxu0 %v9314
    %9841 = vmatprep.subr.mxu0 %v9317
    %9842 = vmatpush1.msra.mxu0 %v9316
    %9843 = vmatprep.subr.mxu0 %v9319
    %9844 = vmatpush1.msra.mxu0 %v9318
    %9845 = vmatprep.subr.mxu0 %v9321
    %9846 = vmatpush1.msra.mxu0 %v9320
    %9847 = vmatprep.subr.mxu0 %v9323
    %9848 = vmatpush1.msra.mxu0 %v9322
    %9849 = vmatprep.subr.mxu0 %v9325
    %9850 = vmatpush1.msra.mxu0 %v9324
    %9851 = vmatprep.subr.mxu0 %v9327
    %9852 = vmatpush1.msra.mxu0 %v9326
    %9853 = vmatprep.subr.mxu0 %v9329
    %9854 = vmatpush1.msra.mxu0 %v9328
    %9855 = vmatprep.subr.mxu0 %v9331
    %9856 = vmatpush1.msra.mxu0 %v9330
    %9857 = vmatprep.subr.mxu0 %v9333
    %9858 = vmatpush1.msra.mxu0 %v9332
    %9859 = vmatprep.subr.mxu0 %v9335
    %9860 = vmatpush1.msra.mxu0 %v9334
    %9861 = vmatprep.subr.mxu0 %v9337
    %9862 = vmatpush1.msra.mxu0 %v9336
    %9863 = vmatprep.subr.mxu0 %v9339
    %9864 = vmatpush1.msra.mxu0 %v9338
    %9865 = vmatprep.subr.mxu0 %v9341
    %9866 = vmatpush1.msra.mxu0 %v9340
    %9867 = vmatprep.subr.mxu0 %v9343
    %9868 = vmatpush1.msra.mxu0 %v9342
    %9869 = vmatprep.subr.mxu0 %v9345
    %9870 = vmatpush1.msra.mxu0 %v9344
    %9871 = vmatprep.subr.mxu0 %v9347
    %9872 = vmatpush1.msra.mxu0 %v9346
    %9873 = vmatprep.subr.mxu0 %v9349
    %9874 = vmatpush1.msra.mxu0 %v9348
    %9875 = vmatprep.subr.mxu0 %v9351
    %9876 = vmatpush1.msra.mxu0 %v9350
    %9877 = vmatprep.subr.mxu0 %v9353
    %9878 = vmatpush1.msra.mxu0 %v9352
    %9879 = vmatprep.subr.mxu0 %v9355
    %9880 = vmatpush1.msra.mxu0 %v9354
    %9881 = vmatprep.subr.mxu0 %v9357
    %9882 = vmatpush1.msra.mxu0 %v9356
    %9883 = vmatprep.subr.mxu0 %v9359
    %9884 = vmatpush1.msra.mxu0 %v9358
    %9885 = vmatprep.subr.mxu0 %v9361
    %9886 = vmatpush1.msra.mxu0 %v9360
    %9887 = vmatprep.subr.mxu0 %v9363
    %9888 = vmatpush1.msra.mxu0 %v9362
    %9889 = vmatprep.subr.mxu0 %v9365
    %9890 = vmatpush1.msra.mxu0 %v9364
    %9891 = vmatprep.subr.mxu0 %v9367
    %9892 = vmatpush1.msra.mxu0 %v9366
    %9893 = vmatprep.subr.mxu0 %v9369
    %9894 = vmatpush1.msra.mxu0 %v9368
    %9895 = vmatprep.subr.mxu0 %v9371
    %9896 = vmatpush1.msra.mxu0 %v9370
    %9897 = vmatprep.subr.mxu0 %v9373
    %9898 = vmatpush1.msra.mxu0 %v9372
    %9899 = vmatprep.subr.mxu0 %v9375
    %9900 = vmatpush1.msra.mxu0 %v9374
    %9901 = vmatprep.subr.mxu0 %v9377
    %9902 = vmatpush1.msra.mxu0 %v9376
    %9903 = vmatprep.mubr.f32.mxu0 %v8997
    %9904 = vmatmul.mubr.f32.gmra.mrb[0].mxu0 %v8996
    %v9905 = vpop.f32.mrb[0].mxu0
    %v9906 = vadd.f32 %v9457, %v9905
    %v9907 = vpop.f32.mrb[0].mxu0
    %v9908 = vadd.f32 %v9459, %v9907
    %9909 = vmatprep.mubr.f32.mxu0 %v9001
    %9910 = vmatmul.mubr.f32.gmra.mrb[0].mxu0 %v9000
    %v9911 = vpop.f32.mrb[0].mxu0
    %v9912 = vadd.f32 %v9463, %v9911
    %v9913 = vpop.f32.mrb[0].mxu0
    %v9914 = vadd.f32 %v9465, %v9913
    %9915 = vmatprep.mubr.f32.mxu0 %v9005
    %9916 = vmatmul.mubr.f32.gmra.mrb[0].mxu0 %v9004
    %v9917 = vpop.f32.mrb[0].mxu0
    %v9918 = vadd.f32 %v9469, %v9917
    %v9919 = vpop.f32.mrb[0].mxu0
    %v9920 = vadd.f32 %v9471, %v9919
    %9921 = vmatprep.mubr.f32.mxu0 %v9009
    %9922 = vmatmul.mubr.f32.gmra.mrb[0].mxu0 %v9008
    %v9923 = vpop.f32.mrb[0].mxu0
    %v9924 = vadd.f32 %v9475, %v9923
    %v9925 = vpop.f32.mrb[0].mxu0
    %v9926 = vadd.f32 %v9477, %v9925
    %9927 = vmatprep.mubr.f32.mxu0 %v9013
    %9928 = vmatmul.mubr.f32.gmra.mrb[0].mxu0 %v9012
    %v9929 = vpop.f32.mrb[0].mxu0
    %v9930 = vadd.f32 %v9481, %v9929
    %v9931 = vpop.f32.mrb[0].mxu0
    %v9932 = vadd.f32 %v9483, %v9931
    %9933 = vmatprep.mubr.f32.mxu0 %v9017
    %9934 = vmatmul.mubr.f32.gmra.mrb[0].mxu0 %v9016
    %v9935 = vpop.f32.mrb[0].mxu0
    %v9936 = vadd.f32 %v9487, %v9935
    %v9937 = vpop.f32.mrb[0].mxu0
    %v9938 = vadd.f32 %v9489, %v9937
    %9939 = vmatprep.mubr.f32.mxu0 %v9021
    %9940 = vmatmul.mubr.f32.gmra.mrb[0].mxu0 %v9020
    %v9941 = vpop.f32.mrb[0].mxu0
    %v9942 = vadd.f32 %v9493, %v9941
    %v9943 = vpop.f32.mrb[0].mxu0
    %v9944 = vadd.f32 %v9495, %v9943
    %9945 = vmatprep.mubr.f32.mxu0 %v9025
    %9946 = vmatmul.mubr.f32.gmra.mrb[0].mxu0 %v9024
    %v9947 = vpop.f32.mrb[0].mxu0
    %v9948 = vadd.f32 %v9499, %v9947
    %v9949 = vpop.f32.mrb[0].mxu0
    %v9950 = vadd.f32 %v9501, %v9949
    %9951 = vmatprep.mubr.f32.mxu0 %v9029
    %9952 = vmatmul.mubr.f32.gmra.mrb[0].mxu0 %v9028
    %v9953 = vpop.f32.mrb[0].mxu0
    %v9954 = vadd.f32 %v9505, %v9953
    %v9955 = vpop.f32.mrb[0].mxu0
    %v9956 = vadd.f32 %v9507, %v9955
    %9957 = vmatprep.mubr.f32.mxu0 %v9033
    %9958 = vmatmul.mubr.f32.gmra.mrb[0].mxu0 %v9032
    %v9959 = vpop.f32.mrb[0].mxu0
    %v9960 = vadd.f32 %v9511, %v9959
    %v9961 = vpop.f32.mrb[0].mxu0
    %v9962 = vadd.f32 %v9513, %v9961
    %9963 = vmatprep.mubr.f32.mxu0 %v9037
    %9964 = vmatmul.mubr.f32.gmra.mrb[0].mxu0 %v9036
    %v9965 = vpop.f32.mrb[0].mxu0
    %v9966 = vadd.f32 %v9517, %v9965
    %v9967 = vpop.f32.mrb[0].mxu0
    %v9968 = vadd.f32 %v9519, %v9967
    %9969 = vmatprep.mubr.f32.mxu0 %v9041
    %9970 = vmatmul.mubr.f32.gmra.mrb[0].mxu0 %v9040
    %v9971 = vpop.f32.mrb[0].mxu0
    %v9972 = vadd.f32 %v9523, %v9971
    %v9973 = vpop.f32.mrb[0].mxu0
    %v9974 = vadd.f32 %v9525, %v9973
    %9975 = vmatprep.mubr.f32.mxu0 %v9045
    %9976 = vmatmul.mubr.f32.gmra.mrb[0].mxu0 %v9044
    %v9977 = vpop.f32.mrb[0].mxu0
    %v9978 = vadd.f32 %v9529, %v9977
    %v9979 = vpop.f32.mrb[0].mxu0
    %v9980 = vadd.f32 %v9531, %v9979
    %9981 = vmatprep.mubr.f32.mxu0 %v9049
    %9982 = vmatmul.mubr.f32.gmra.mrb[0].mxu0 %v9048
    %v9983 = vpop.f32.mrb[0].mxu0
    %v9984 = vadd.f32 %v9535, %v9983
    %v9985 = vpop.f32.mrb[0].mxu0
    %v9986 = vadd.f32 %v9537, %v9985
    %9987 = vmatprep.mubr.f32.mxu0 %v9053
    %9988 = vmatmul.mubr.f32.gmra.mrb[0].mxu0 %v9052
    %v9989 = vpop.f32.mrb[0].mxu0
    %v9990 = vadd.f32 %v9541, %v9989
    %v9991 = vpop.f32.mrb[0].mxu0
    %v9992 = vadd.f32 %v9543, %v9991
    %9993 = vmatprep.mubr.f32.mxu0 %v9057
    %9994 = vmatmul.mubr.f32.gmra.mrb[0].mxu0 %v9056
    %v9995 = vpop.f32.mrb[0].mxu0
    %v9996 = vadd.f32 %v9547, %v9995
    %v9997 = vpop.f32.mrb[0].mxu0
    %v9998 = vadd.f32 %v9549, %v9997
    %9999 = vmatprep.mubr.f32.mxu0 %v9061
    %10000 = vmatmul.mubr.f32.gmra.mrb[0].mxu0 %v9060
    %v10001 = vpop.f32.mrb[0].mxu0
    %v10002 = vadd.f32 %v9553, %v10001
    %v10003 = vpop.f32.mrb[0].mxu0
    %v10004 = vadd.f32 %v9555, %v10003
    %10005 = vmatprep.mubr.f32.mxu0 %v9065
    %10006 = vmatmul.mubr.f32.gmra.mrb[0].mxu0 %v9064
    %v10007 = vpop.f32.mrb[0].mxu0
    %v10008 = vadd.f32 %v9559, %v10007
    %v10009 = vpop.f32.mrb[0].mxu0
    %v10010 = vadd.f32 %v9561, %v10009
    %10011 = vmatprep.mubr.f32.mxu0 %v9069
    %10012 = vmatmul.mubr.f32.gmra.mrb[0].mxu0 %v9068
    %v10013 = vpop.f32.mrb[0].mxu0
    %v10014 = vadd.f32 %v9565, %v10013
    %v10015 = vpop.f32.mrb[0].mxu0
    %v10016 = vadd.f32 %v9567, %v10015
    %10017 = vmatprep.mubr.f32.mxu0 %v9073
    %10018 = vmatmul.mubr.f32.gmra.mrb[0].mxu0 %v9072
    %v10019 = vpop.f32.mrb[0].mxu0
    %v10020 = vadd.f32 %v9571, %v10019
    %v10021 = vpop.f32.mrb[0].mxu0
    %v10022 = vadd.f32 %v9573, %v10021
    %10023 = vmatprep.mubr.f32.mxu0 %v9077
    %10024 = vmatmul.mubr.f32.gmra.mrb[0].mxu0 %v9076
    %v10025 = vpop.f32.mrb[0].mxu0
    %v10026 = vadd.f32 %v9577, %v10025
    %v10027 = vpop.f32.mrb[0].mxu0
    %v10028 = vadd.f32 %v9579, %v10027
    %10029 = vmatprep.mubr.f32.mxu0 %v9081
    %10030 = vmatmul.mubr.f32.gmra.mrb[0].mxu0 %v9080
    %v10031 = vpop.f32.mrb[0].mxu0
    %v10032 = vadd.f32 %v9583, %v10031
    %v10033 = vpop.f32.mrb[0].mxu0
    %v10034 = vadd.f32 %v9585, %v10033
    %10035 = vmatprep.mubr.f32.mxu0 %v9085
    %10036 = vmatmul.mubr.f32.gmra.mrb[0].mxu0 %v9084
    %v10037 = vpop.f32.mrb[0].mxu0
    %v10038 = vadd.f32 %v9589, %v10037
    %v10039 = vpop.f32.mrb[0].mxu0
    %v10040 = vadd.f32 %v9591, %v10039
    %10041 = vmatprep.mubr.f32.mxu0 %v9089
    %10042 = vmatmul.mubr.f32.gmra.mrb[0].mxu0 %v9088
    %v10043 = vpop.f32.mrb[0].mxu0
    %v10044 = vadd.f32 %v9595, %v10043
    %v10045 = vpop.f32.mrb[0].mxu0
    %v10046 = vadd.f32 %v9597, %v10045
    %10047 = vmatprep.mubr.f32.mxu0 %v9093
    %10048 = vmatmul.mubr.f32.gmra.mrb[0].mxu0 %v9092
    %v10049 = vpop.f32.mrb[0].mxu0
    %v10050 = vadd.f32 %v9601, %v10049
    %v10051 = vpop.f32.mrb[0].mxu0
    %v10052 = vadd.f32 %v9603, %v10051
    %10053 = vmatprep.mubr.f32.mxu0 %v9097
    %10054 = vmatmul.mubr.f32.gmra.mrb[0].mxu0 %v9096
    %v10055 = vpop.f32.mrb[0].mxu0
    %v10056 = vadd.f32 %v9607, %v10055
    %v10057 = vpop.f32.mrb[0].mxu0
    %v10058 = vadd.f32 %v9609, %v10057
    %10059 = vmatprep.mubr.f32.mxu0 %v9101
    %10060 = vmatmul.mubr.f32.gmra.mrb[0].mxu0 %v9100
    %v10061 = vpop.f32.mrb[0].mxu0
    %v10062 = vadd.f32 %v9613, %v10061
    %v10063 = vpop.f32.mrb[0].mxu0
    %v10064 = vadd.f32 %v9615, %v10063
    %10065 = vmatprep.mubr.f32.mxu0 %v9105
    %10066 = vmatmul.mubr.f32.gmra.mrb[0].mxu0 %v9104
    %v10067 = vpop.f32.mrb[0].mxu0
    %v10068 = vadd.f32 %v9619, %v10067
    %v10069 = vpop.f32.mrb[0].mxu0
    %v10070 = vadd.f32 %v9621, %v10069
    %10071 = vmatprep.mubr.f32.mxu0 %v9109
    %10072 = vmatmul.mubr.f32.gmra.mrb[0].mxu0 %v9108
    %v10073 = vpop.f32.mrb[0].mxu0
    %v10074 = vadd.f32 %v9625, %v10073
    %v10075 = vpop.f32.mrb[0].mxu0
    %v10076 = vadd.f32 %v9627, %v10075
    %10077 = vmatprep.mubr.f32.mxu0 %v9113
    %10078 = vmatmul.mubr.f32.gmra.mrb[0].mxu0 %v9112
    %v10079 = vpop.f32.mrb[0].mxu0
    %v10080 = vadd.f32 %v9631, %v10079
    %v10081 = vpop.f32.mrb[0].mxu0
    %v10082 = vadd.f32 %v9633, %v10081
    %10083 = vmatprep.mubr.f32.mxu0 %v9117
    %10084 = vmatmul.mubr.f32.gmra.mrb[0].mxu0 %v9116
    %v10085 = vpop.f32.mrb[0].mxu0
    %v10086 = vadd.f32 %v9637, %v10085
    %v10087 = vpop.f32.mrb[0].mxu0
    %v10088 = vadd.f32 %v9639, %v10087
    %10089 = vmatprep.mubr.f32.mxu0 %v9121
    %10090 = vmatmul.mubr.f32.gmra.mrb[0].mxu0 %v9120
    %v10091 = vpop.f32.mrb[0].mxu0
    %v10092 = vadd.f32 %v9643, %v10091
    %v10093 = vpop.f32.mrb[0].mxu0
    %v10094 = vadd.f32 %v9645, %v10093
    %10095 = vmatprep.mubr.f32.mxu0 %v9125
    %10096 = vmatmul.mubr.f32.gmra.mrb[0].mxu0 %v9124
    %v10097 = vpop.f32.mrb[0].mxu0
    %v10098 = vadd.f32 %v9649, %v10097
    %v10099 = vpop.f32.mrb[0].mxu0
    %v10100 = vadd.f32 %v9651, %v10099
    %10101 = vmatprep.mubr.f32.mxu0 %v9129
    %10102 = vmatmul.mubr.f32.gmra.mrb[0].mxu0 %v9128
    %v10103 = vpop.f32.mrb[0].mxu0
    %v10104 = vadd.f32 %v9655, %v10103
    %v10105 = vpop.f32.mrb[0].mxu0
    %v10106 = vadd.f32 %v9657, %v10105
    %10107 = vmatprep.mubr.f32.mxu0 %v9133
    %10108 = vmatmul.mubr.f32.gmra.mrb[0].mxu0 %v9132
    %v10109 = vpop.f32.mrb[0].mxu0
    %v10110 = vadd.f32 %v9661, %v10109
    %v10111 = vpop.f32.mrb[0].mxu0
    %v10112 = vadd.f32 %v9663, %v10111
    %10113 = vmatprep.mubr.f32.mxu0 %v9137
    %10114 = vmatmul.mubr.f32.gmra.mrb[0].mxu0 %v9136
    %v10115 = vpop.f32.mrb[0].mxu0
    %v10116 = vadd.f32 %v9667, %v10115
    %v10117 = vpop.f32.mrb[0].mxu0
    %v10118 = vadd.f32 %v9669, %v10117
    %10119 = vmatprep.mubr.f32.mxu0 %v9141
    %10120 = vmatmul.mubr.f32.gmra.mrb[0].mxu0 %v9140
    %v10121 = vpop.f32.mrb[0].mxu0
    %v10122 = vadd.f32 %v9673, %v10121
    %v10123 = vpop.f32.mrb[0].mxu0
    %v10124 = vadd.f32 %v9675, %v10123
    %10125 = vmatprep.mubr.f32.mxu0 %v9145
    %10126 = vmatmul.mubr.f32.gmra.mrb[0].mxu0 %v9144
    %v10127 = vpop.f32.mrb[0].mxu0
    %v10128 = vadd.f32 %v9679, %v10127
    %v10129 = vpop.f32.mrb[0].mxu0
    %v10130 = vadd.f32 %v9681, %v10129
    %10131 = vmatprep.mubr.f32.mxu0 %v9149
    %10132 = vmatmul.mubr.f32.gmra.mrb[0].mxu0 %v9148
    %v10133 = vpop.f32.mrb[0].mxu0
    %v10134 = vadd.f32 %v9685, %v10133
    %v10135 = vpop.f32.mrb[0].mxu0
    %v10136 = vadd.f32 %v9687, %v10135
    %10137 = vmatprep.mubr.f32.mxu0 %v9153
    %10138 = vmatmul.mubr.f32.gmra.mrb[0].mxu0 %v9152
    %v10139 = vpop.f32.mrb[0].mxu0
    %v10140 = vadd.f32 %v9691, %v10139
    %v10141 = vpop.f32.mrb[0].mxu0
    %v10142 = vadd.f32 %v9693, %v10141
    %10143 = vmatprep.mubr.f32.mxu0 %v9157
    %10144 = vmatmul.mubr.f32.gmra.mrb[0].mxu0 %v9156
    %v10145 = vpop.f32.mrb[0].mxu0
    %v10146 = vadd.f32 %v9697, %v10145
    %v10147 = vpop.f32.mrb[0].mxu0
    %v10148 = vadd.f32 %v9699, %v10147
    %10149 = vmatprep.mubr.f32.mxu0 %v9161
    %10150 = vmatmul.mubr.f32.gmra.mrb[0].mxu0 %v9160
    %v10151 = vpop.f32.mrb[0].mxu0
    %v10152 = vadd.f32 %v9703, %v10151
    %v10153 = vpop.f32.mrb[0].mxu0
    %v10154 = vadd.f32 %v9705, %v10153
    %10155 = vmatprep.mubr.f32.mxu0 %v9165
    %10156 = vmatmul.mubr.f32.gmra.mrb[0].mxu0 %v9164
    %v10157 = vpop.f32.mrb[0].mxu0
    %v10158 = vadd.f32 %v9709, %v10157
    %v10159 = vpop.f32.mrb[0].mxu0
    %v10160 = vadd.f32 %v9711, %v10159
    %10161 = vmatprep.mubr.f32.mxu0 %v9169
    %10162 = vmatmul.mubr.f32.gmra.mrb[0].mxu0 %v9168
    %v10163 = vpop.f32.mrb[0].mxu0
    %v10164 = vadd.f32 %v9715, %v10163
    %v10165 = vpop.f32.mrb[0].mxu0
    %v10166 = vadd.f32 %v9717, %v10165
    %10167 = vmatprep.mubr.f32.mxu0 %v9173
    %10168 = vmatmul.mubr.f32.gmra.mrb[0].mxu0 %v9172
    %v10169 = vpop.f32.mrb[0].mxu0
    %v10170 = vadd.f32 %v9721, %v10169
    %v10171 = vpop.f32.mrb[0].mxu0
    %v10172 = vadd.f32 %v9723, %v10171
    %10173 = vmatprep.mubr.f32.mxu0 %v9177
    %10174 = vmatmul.mubr.f32.gmra.mrb[0].mxu0 %v9176
    %v10175 = vpop.f32.mrb[0].mxu0
    %v10176 = vadd.f32 %v9727, %v10175
    %v10177 = vpop.f32.mrb[0].mxu0
    %v10178 = vadd.f32 %v9729, %v10177
    %10179 = vmatprep.mubr.f32.mxu0 %v9181
    %10180 = vmatmul.mubr.f32.gmra.mrb[0].mxu0 %v9180
    %v10181 = vpop.f32.mrb[0].mxu0
    %v10182 = vadd.f32 %v9733, %v10181
    %v10183 = vpop.f32.mrb[0].mxu0
    %v10184 = vadd.f32 %v9735, %v10183
    %10185 = vmatprep.mubr.f32.mxu0 %v9185
    %10186 = vmatmul.mubr.f32.gmra.mrb[0].mxu0 %v9184
    %v10187 = vpop.f32.mrb[0].mxu0
    %v10188 = vadd.f32 %v9739, %v10187
    %v10189 = vpop.f32.mrb[0].mxu0
    %v10190 = vadd.f32 %v9741, %v10189
    %10191 = vmatprep.mubr.f32.mxu0 %v9189
    %10192 = vmatmul.mubr.f32.gmra.mrb[0].mxu0 %v9188
    %v10193 = vpop.f32.mrb[0].mxu0
    %v10194 = vadd.f32 %v9745, %v10193
    %v10195 = vpop.f32.mrb[0].mxu0
    %v10196 = vadd.f32 %v9747, %v10195
    %10197 = vmatprep.mubr.f32.mxu0 %v9193
    %10198 = vmatmul.mubr.f32.gmra.mrb[0].mxu0 %v9192
    %v10199 = vpop.f32.mrb[0].mxu0
    %v10200 = vadd.f32 %v9751, %v10199
    %v10201 = vpop.f32.mrb[0].mxu0
    %v10202 = vadd.f32 %v9753, %v10201
    %10203 = vmatprep.mubr.f32.mxu0 %v9197
    %10204 = vmatmul.mubr.f32.gmra.mrb[0].mxu0 %v9196
    %v10205 = vpop.f32.mrb[0].mxu0
    %v10206 = vadd.f32 %v9757, %v10205
    %v10207 = vpop.f32.mrb[0].mxu0
    %v10208 = vadd.f32 %v9759, %v10207
    %10209 = vmatprep.mubr.f32.mxu0 %v9201
    %10210 = vmatmul.mubr.f32.gmra.mrb[0].mxu0 %v9200
    %v10211 = vpop.f32.mrb[0].mxu0
    %v10212 = vadd.f32 %v9763, %v10211
    %v10213 = vpop.f32.mrb[0].mxu0
    %v10214 = vadd.f32 %v9765, %v10213
    %10215 = vmatprep.mubr.f32.mxu0 %v9205
    %10216 = vmatmul.mubr.f32.gmra.mrb[0].mxu0 %v9204
    %v10217 = vpop.f32.mrb[0].mxu0
    %v10218 = vadd.f32 %v9769, %v10217
    %v10219 = vpop.f32.mrb[0].mxu0
    %v10220 = vadd.f32 %v9771, %v10219
    %10221 = vmatprep.mubr.f32.mxu0 %v9209
    %10222 = vmatmul.mubr.f32.gmra.mrb[0].mxu0 %v9208
    %v10223 = vpop.f32.mrb[0].mxu0
    %v10224 = vadd.f32 %v9775, %v10223
    %v10225 = vpop.f32.mrb[0].mxu0
    %v10226 = vadd.f32 %v9777, %v10225
    %10227 = vmatprep.mubr.f32.mxu0 %v9213
    %10228 = vmatmul.mubr.f32.gmra.mrb[0].mxu0 %v9212
    %v10229 = vpop.f32.mrb[0].mxu0
    %v10230 = vadd.f32 %v9781, %v10229
    %v10231 = vpop.f32.mrb[0].mxu0
    %v10232 = vadd.f32 %v9783, %v10231
    %10233 = vmatprep.mubr.f32.mxu0 %v9217
    %10234 = vmatmul.mubr.f32.gmra.mrb[0].mxu0 %v9216
    %v10235 = vpop.f32.mrb[0].mxu0
    %v10236 = vadd.f32 %v9787, %v10235
    %v10237 = vpop.f32.mrb[0].mxu0
    %v10238 = vadd.f32 %v9789, %v10237
    %10239 = vmatprep.mubr.f32.mxu0 %v9221
    %10240 = vmatmul.mubr.f32.gmra.mrb[0].mxu0 %v9220
    %v10241 = vpop.f32.mrb[0].mxu0
    %v10242 = vadd.f32 %v9793, %v10241
    %v10243 = vpop.f32.mrb[0].mxu0
    %v10244 = vadd.f32 %v9795, %v10243
    %10245 = vmatprep.mubr.f32.mxu0 %v9225
    %10246 = vmatmul.mubr.f32.gmra.mrb[0].mxu0 %v9224
    %v10247 = vpop.f32.mrb[0].mxu0
    %v10248 = vadd.f32 %v9799, %v10247
    %v10249 = vpop.f32.mrb[0].mxu0
    %v10250 = vadd.f32 %v9801, %v10249
    %10251 = vmatprep.mubr.f32.mxu0 %v9229
    %10252 = vmatmul.mubr.f32.gmra.mrb[0].mxu0 %v9228
    %v10253 = vpop.f32.mrb[0].mxu0
    %v10254 = vadd.f32 %v9805, %v10253
    %v10255 = vpop.f32.mrb[0].mxu0
    %v10256 = vadd.f32 %v9807, %v10255
    %10257 = vmatprep.mubr.f32.mxu0 %v9233
    %10258 = vmatmul.mubr.f32.gmra.mrb[0].mxu0 %v9232
    %v10259 = vpop.f32.mrb[0].mxu0
    %v10260 = vadd.f32 %v9811, %v10259
    %v10261 = vpop.f32.mrb[0].mxu0
    %v10262 = vadd.f32 %v9813, %v10261
    %10263 = vmatprep.mubr.f32.mxu0 %v9237
    %10264 = vmatmul.mubr.f32.gmra.mrb[0].mxu0 %v9236
    %v10265 = vpop.f32.mrb[0].mxu0
    %v10266 = vadd.f32 %v9817, %v10265
    %v10267 = vpop.f32.mrb[0].mxu0
    %v10268 = vadd.f32 %v9819, %v10267
    %10269 = vmatprep.mubr.f32.mxu0 %v9241
    %10270 = vmatmul.mubr.f32.gmra.mrb[0].mxu0 %v9240
    %v10271 = vpop.f32.mrb[0].mxu0
    %v10272 = vadd.f32 %v9823, %v10271
    %v10273 = vpop.f32.mrb[0].mxu0
    %v10274 = vadd.f32 %v9825, %v10273
    %10275 = vmatprep.mubr.f32.mxu0 %v9245
    %10276 = vmatmul.mubr.f32.gmra.mrb[0].mxu0 %v9244
    %v10277 = vpop.f32.mrb[0].mxu0
    %v10278 = vadd.f32 %v9829, %v10277
    %v10279 = vpop.f32.mrb[0].mxu0
    %v10280 = vadd.f32 %v9831, %v10279
    %10281 = vmatprep.mubr.f32.mxu0 %v9249
    %10282 = vmatmul.mubr.f32.gmra.mrb[0].mxu0 %v9248
    %v10283 = vpop.f32.mrb[0].mxu0
    %v10284 = vadd.f32 %v9835, %v10283
    %v10285 = vpop.f32.mrb[0].mxu0
    %v10286 = vadd.f32 %v9837, %v10285
    %10287 = vdwg.mxu0
    %10288 = vst [vmem:[#allocation3] sm:$0xff] %v9906
    %10289 = vst [vmem:[#allocation3 + $0x8] sm:$0xff] %v9908
    %10290 = vst [vmem:[#allocation3 + $0x10] sm:$0xff] %v9912
    %10291 = vst [vmem:[#allocation3 + $0x18] sm:$0xff] %v9914
    %10292 = vst [vmem:[#allocation3 + $0x20] sm:$0xff] %v9918
    %10293 = vst [vmem:[#allocation3 + $0x28] sm:$0xff] %v9920
    %10294 = vst [vmem:[#allocation3 + $0x30] sm:$0xff] %v9924
    %10295 = vst [vmem:[#allocation3 + $0x38] sm:$0xff] %v9926
    %10296 = vst [vmem:[#allocation3 + $0x40] sm:$0xff] %v9930
    %10297 = vst [vmem:[#allocation3 + $0x48] sm:$0xff] %v9932
    %10298 = vst [vmem:[#allocation3 + $0x50] sm:$0xff] %v9936
    %10299 = vst [vmem:[#allocation3 + $0x58] sm:$0xff] %v9938
    %10300 = vst [vmem:[#allocation3 + $0x60] sm:$0xff] %v9942
    %10301 = vst [vmem:[#allocation3 + $0x68] sm:$0xff] %v9944
    %10302 = vst [vmem:[#allocation3 + $0x70] sm:$0xff] %v9948
    %10303 = vst [vmem:[#allocation3 + $0x78] sm:$0xff] %v9950
    %10304 = vst [vmem:[#allocation3 + $0x80] sm:$0xff] %v9954
    %10305 = vst [vmem:[#allocation3 + $0x88] sm:$0xff] %v9956
    %10306 = vst [vmem:[#allocation3 + $0x90] sm:$0xff] %v9960
    %10307 = vst [vmem:[#allocation3 + $0x98] sm:$0xff] %v9962
    %10308 = vst [vmem:[#allocation3 + $0xa0] sm:$0xff] %v9966
    %10309 = vst [vmem:[#allocation3 + $0xa8] sm:$0xff] %v9968
    %10310 = vst [vmem:[#allocation3 + $0xb0] sm:$0xff] %v9972
    %10311 = vst [vmem:[#allocation3 + $0xb8] sm:$0xff] %v9974
    %10312 = vst [vmem:[#allocation3 + $0xc0] sm:$0xff] %v9978
    %10313 = vst [vmem:[#allocation3 + $0xc8] sm:$0xff] %v9980
    %10314 = vst [vmem:[#allocation3 + $0xd0] sm:$0xff] %v9984
    %10315 = vst [vmem:[#allocation3 + $0xd8] sm:$0xff] %v9986
    %10316 = vst [vmem:[#allocation3 + $0xe0] sm:$0xff] %v9990
    %10317 = vst [vmem:[#allocation3 + $0xe8] sm:$0xff] %v9992
    %10318 = vst [vmem:[#allocation3 + $0xf0] sm:$0xff] %v9996
    %10319 = vst [vmem:[#allocation3 + $0xf8] sm:$0xff] %v9998
    %10320 = vst [vmem:[#allocation3 + $0x100] sm:$0xff] %v10002
    %10321 = vst [vmem:[#allocation3 + $0x108] sm:$0xff] %v10004
    %10322 = vst [vmem:[#allocation3 + $0x110] sm:$0xff] %v10008
    %10323 = vst [vmem:[#allocation3 + $0x118] sm:$0xff] %v10010
    %10324 = vst [vmem:[#allocation3 + $0x120] sm:$0xff] %v10014
    %10325 = vst [vmem:[#allocation3 + $0x128] sm:$0xff] %v10016
    %10326 = vst [vmem:[#allocation3 + $0x130] sm:$0xff] %v10020
    %10327 = vst [vmem:[#allocation3 + $0x138] sm:$0xff] %v10022
    %10328 = vst [vmem:[#allocation3 + $0x140] sm:$0xff] %v10026
    %10329 = vst [vmem:[#allocation3 + $0x148] sm:$0xff] %v10028
    %10330 = vst [vmem:[#allocation3 + $0x150] sm:$0xff] %v10032
    %10331 = vst [vmem:[#allocation3 + $0x158] sm:$0xff] %v10034
    %10332 = vst [vmem:[#allocation3 + $0x160] sm:$0xff] %v10038
    %10333 = vst [vmem:[#allocation3 + $0x168] sm:$0xff] %v10040
    %10334 = vst [vmem:[#allocation3 + $0x170] sm:$0xff] %v10044
    %10335 = vst [vmem:[#allocation3 + $0x178] sm:$0xff] %v10046
    %10336 = vst [vmem:[#allocation3 + $0x180] sm:$0xff] %v10050
    %10337 = vst [vmem:[#allocation3 + $0x188] sm:$0xff] %v10052
    %10338 = vst [vmem:[#allocation3 + $0x190] sm:$0xff] %v10056
    %10339 = vst [vmem:[#allocation3 + $0x198] sm:$0xff] %v10058
    %10340 = vst [vmem:[#allocation3 + $0x1a0] sm:$0xff] %v10062
    %10341 = vst [vmem:[#allocation3 + $0x1a8] sm:$0xff] %v10064
    %10342 = vst [vmem:[#allocation3 + $0x1b0] sm:$0xff] %v10068
    %10343 = vst [vmem:[#allocation3 + $0x1b8] sm:$0xff] %v10070
    %10344 = vst [vmem:[#allocation3 + $0x1c0] sm:$0xff] %v10074
    %10345 = vst [vmem:[#allocation3 + $0x1c8] sm:$0xff] %v10076
    %10346 = vst [vmem:[#allocation3 + $0x1d0] sm:$0xff] %v10080
    %10347 = vst [vmem:[#allocation3 + $0x1d8] sm:$0xff] %v10082
    %10348 = vst [vmem:[#allocation3 + $0x1e0] sm:$0xff] %v10086
    %10349 = vst [vmem:[#allocation3 + $0x1e8] sm:$0xff] %v10088
    %10350 = vst [vmem:[#allocation3 + $0x1f0] sm:$0xff] %v10092
    %10351 = vst [vmem:[#allocation3 + $0x1f8] sm:$0xff] %v10094
    %10352 = vst [vmem:[#allocation3 + $0x200] sm:$0xff] %v10098
    %10353 = vst [vmem:[#allocation3 + $0x208] sm:$0xff] %v10100
    %10354 = vst [vmem:[#allocation3 + $0x210] sm:$0xff] %v10104
    %10355 = vst [vmem:[#allocation3 + $0x218] sm:$0xff] %v10106
    %10356 = vst [vmem:[#allocation3 + $0x220] sm:$0xff] %v10110
    %10357 = vst [vmem:[#allocation3 + $0x228] sm:$0xff] %v10112
    %10358 = vst [vmem:[#allocation3 + $0x230] sm:$0xff] %v10116
    %10359 = vst [vmem:[#allocation3 + $0x238] sm:$0xff] %v10118
    %10360 = vst [vmem:[#allocation3 + $0x240] sm:$0xff] %v10122
    %10361 = vst [vmem:[#allocation3 + $0x248] sm:$0xff] %v10124
    %10362 = vst [vmem:[#allocation3 + $0x250] sm:$0xff] %v10128
    %10363 = vst [vmem:[#allocation3 + $0x258] sm:$0xff] %v10130
    %10364 = vst [vmem:[#allocation3 + $0x260] sm:$0xff] %v10134
    %10365 = vst [vmem:[#allocation3 + $0x268] sm:$0xff] %v10136
    %10366 = vst [vmem:[#allocation3 + $0x270] sm:$0xff] %v10140
    %10367 = vst [vmem:[#allocation3 + $0x278] sm:$0xff] %v10142
    %10368 = vst [vmem:[#allocation3 + $0x280] sm:$0xff] %v10146
    %10369 = vst [vmem:[#allocation3 + $0x288] sm:$0xff] %v10148
    %10370 = vst [vmem:[#allocation3 + $0x290] sm:$0xff] %v10152
    %10371 = vst [vmem:[#allocation3 + $0x298] sm:$0xff] %v10154
    %10372 = vst [vmem:[#allocation3 + $0x2a0] sm:$0xff] %v10158
    %10373 = vst [vmem:[#allocation3 + $0x2a8] sm:$0xff] %v10160
    %10374 = vst [vmem:[#allocation3 + $0x2b0] sm:$0xff] %v10164
    %10375 = vst [vmem:[#allocation3 + $0x2b8] sm:$0xff] %v10166
    %10376 = vst [vmem:[#allocation3 + $0x2c0] sm:$0xff] %v10170
    %10377 = vst [vmem:[#allocation3 + $0x2c8] sm:$0xff] %v10172
    %10378 = vst [vmem:[#allocation3 + $0x2d0] sm:$0xff] %v10176
    %10379 = vst [vmem:[#allocation3 + $0x2d8] sm:$0xff] %v10178
    %10380 = vst [vmem:[#allocation3 + $0x2e0] sm:$0xff] %v10182
    %10381 = vst [vmem:[#allocation3 + $0x2e8] sm:$0xff] %v10184
    %10382 = vst [vmem:[#allocation3 + $0x2f0] sm:$0xff] %v10188
    %10383 = vst [vmem:[#allocation3 + $0x2f8] sm:$0xff] %v10190
    %10384 = vst [vmem:[#allocation3 + $0x300] sm:$0xff] %v10194
    %10385 = vst [vmem:[#allocation3 + $0x308] sm:$0xff] %v10196
    %10386 = vst [vmem:[#allocation3 + $0x310] sm:$0xff] %v10200
    %10387 = vst [vmem:[#allocation3 + $0x318] sm:$0xff] %v10202
    %10388 = vst [vmem:[#allocation3 + $0x320] sm:$0xff] %v10206
    %10389 = vst [vmem:[#allocation3 + $0x328] sm:$0xff] %v10208
    %10390 = vst [vmem:[#allocation3 + $0x330] sm:$0xff] %v10212
    %10391 = vst [vmem:[#allocation3 + $0x338] sm:$0xff] %v10214
    %10392 = vst [vmem:[#allocation3 + $0x340] sm:$0xff] %v10218
    %10393 = vst [vmem:[#allocation3 + $0x348] sm:$0xff] %v10220
    %10394 = vst [vmem:[#allocation3 + $0x350] sm:$0xff] %v10224
    %10395 = vst [vmem:[#allocation3 + $0x358] sm:$0xff] %v10226
    %10396 = vst [vmem:[#allocation3 + $0x360] sm:$0xff] %v10230
    %10397 = vst [vmem:[#allocation3 + $0x368] sm:$0xff] %v10232
    %10398 = vst [vmem:[#allocation3 + $0x370] sm:$0xff] %v10236
    %10399 = vst [vmem:[#allocation3 + $0x378] sm:$0xff] %v10238
    %10400 = vst [vmem:[#allocation3 + $0x380] sm:$0xff] %v10242
    %10401 = vst [vmem:[#allocation3 + $0x388] sm:$0xff] %v10244
    %10402 = vst [vmem:[#allocation3 + $0x390] sm:$0xff] %v10248
    %10403 = vst [vmem:[#allocation3 + $0x398] sm:$0xff] %v10250
    %10404 = vst [vmem:[#allocation3 + $0x3a0] sm:$0xff] %v10254
    %10405 = vst [vmem:[#allocation3 + $0x3a8] sm:$0xff] %v10256
    %10406 = vst [vmem:[#allocation3 + $0x3b0] sm:$0xff] %v10260
    %10407 = vst [vmem:[#allocation3 + $0x3b8] sm:$0xff] %v10262
    %10408 = vst [vmem:[#allocation3 + $0x3c0] sm:$0xff] %v10266
    %10409 = vst [vmem:[#allocation3 + $0x3c8] sm:$0xff] %v10268
    %10410 = vst [vmem:[#allocation3 + $0x3d0] sm:$0xff] %v10272
    %10411 = vst [vmem:[#allocation3 + $0x3d8] sm:$0xff] %v10274
    %10412 = vst [vmem:[#allocation3 + $0x3e0] sm:$0xff] %v10278
    %10413 = vst [vmem:[#allocation3 + $0x3e8] sm:$0xff] %v10280
    %10414 = vst [vmem:[#allocation3 + $0x3f0] sm:$0xff] %v10284
    %10415 = vst [vmem:[#allocation3 + $0x3f8] sm:$0xff] %v10286
    // Predicated region
    $region42: #{tpu_custom_call.1} parent=1 // pred_check
      _
    $region43: #{tpu_custom_call.1} parent=1 // pred_check_branch
      %10417 = sbr.rel (0) target = $region45
    $region44: #{tpu_custom_call.1} parent=1 // pred_region
      %s10419 = ssub.s32 16384, 16384
      %10420 = vsyncadd [#allocation4], %s10419
      %s10421 = sshll.u32 [#allocation3], 4
      %s10422 = int_to_ptr.vmem [resolvable:$true] %s10421
      %10427 = dma.vmem_to_hbm [thread:$0]  %s10422, 16384, %s9, [#allocation4], 256, 256, 16
    $region45: #{tpu_custom_call.1} parent=1 // pred_fallthru
      _
    // Predicated region
    $region46: #{tpu_custom_call.1} parent=1 // pred_check
      _
    $region47: #{tpu_custom_call.1} parent=1 // pred_check_branch
      %10429 = sbr.rel (0) target = $region49
    $region48: #{tpu_custom_call.1} parent=1 // pred_region
      %10430 = dma.done [#allocation4], 16384
    $region49: #{tpu_custom_call.1} parent=1 // pred_fallthru
      _
    %10431 = vsyncpa [#allocation4], 1

</llo_original>
